<compile_context>
chip_gen: v7x
topology: tpu7x:2x2x1
jax: 0.10.0
libtpu: 0.0.40
codegen_flags: <defaults>
</compile_context>

<pallas_src>
import functools

import jax
import jax.numpy as jnp
from jax import lax
from jax.experimental import pallas as pl
from jax.experimental.pallas import tpu as pltpu


_CX_INV_H = 2.0       # 1 / bandwidth (h = 0.5)
_CX_EPS = 1e-5


# -----------------------------------------------------------------------------
# VMEM budgeting helpers (padding-aware estimate + hardware-derived ceiling)
# -----------------------------------------------------------------------------
def _vmem_cap_bytes():
    try:
        return int(pltpu.get_tpu_info().vmem_capacity_bytes)
    except Exception:  # noqa: BLE001 - fall back to the smallest generation (v7x, 64 MiB)
        return 64 << 20


def _tile_bytes(shape, itemsize):
    """Bytes one VMEM buffer of `shape` really occupies (last two dims padded to (8,128))."""
    if len(shape) == 0:
        return itemsize
    if len(shape) == 1:
        return max(-(-shape[0] // 128) * 128, 128) * itemsize
    *lead, s, l = shape
    b = (-(-s // 8) * 8) * (-(-l // 128) * 128) * itemsize
    for d in lead:
        b *= max(int(d), 1)
    return b


def _vmem_limit(est_bytes):
    cap = _vmem_cap_bytes()
    hi = max(32 << 20, cap // 2)
    return int(min(max(2 * est_bytes, 16 << 20), hi))


# -----------------------------------------------------------------------------
# Pallas kernel 1: fused direct 3x3 conv (pad=1) + bias + ReLU
#   - the padded NHWC image stays resident in VMEM; the 9 shifted windows are gathered
#     in-kernel with pl.ds and packed into a (TH*W, 9*Cin) VMEM patch (in-VMEM im2col),
#     so ONE K=9*Cin GEMM feeds the MXU per tile instead of 9 small dots.
#   - output tile is (Cout, TH*W): spatial positions on the 128-lane axis (lane-dense stores).
#   - grid = (batch, output-row tiles), both "parallel".
# -----------------------------------------------------------------------------
def _conv3x3_relu_kernel(x_ref, w_ref, b_ref, o_ref, patch_ref, *, th, w_dim):
    # x_ref:     (1, H+2, W+2, Cin) f32   padded image (resident across row tiles)
    # w_ref:     (Cout, 9*Cin) f32        taps flattened as (ki*3+kj)*Cin + c
    # b_ref:     (Cout, 1) f32
    # o_ref:     (1, Cout, TH*W) f32      lane-dense output tile
    # patch_ref: (TH*W, 9*Cin) f32        VMEM scratch (fully overwritten every step)
    cin = x_ref.shape[3]
    t = pl.program_id(1)
    row0 = pl.multiple_of(t * th, th)

    for ki in range(3):
        for kj in range(3):
            q = ki * 3 + kj
            win = x_ref[0, pl.ds(row0 + ki, th), pl.ds(kj, w_dim), :]    # (TH, W, Cin)
            patch_ref[:, pl.ds(q * cin, cin)] = win.reshape(th * w_dim, cin)

    # One fused GEMM: (Cout, 9Cin) x (TH*W, 9Cin)^T -> (Cout, TH*W), f32 accumulation.
    acc = lax.dot_general(
        w_ref[...], patch_ref[...],
        dimension_numbers=(((1,), (1,)), ((), ())),
        preferred_element_type=jnp.float32)
    o_ref[0] = jnp.maximum(acc + b_ref[...], 0.0)


def _pick_row_tile(h, w, target_elems=1024):
    """Rows per output tile: ~target_elems spatial positions, divides H, TH*W % 128 == 0."""
    th = max(1, min(h, target_elems // max(w, 1)))
    while th > 1 and h % th != 0:
        th -= 1
    if th < h and (th * w) % 128 != 0:
        th = h          # fall back to a single full-image tile
    return th


def conv3x3_relu(x, weight, bias):
    """x: (N, H, W, Cin) f32, weight: (Cout, Cin, 3, 3), bias: (Cout,)
       -> relu(conv3x3(x, pad=1) + bias) as channel-first flat features (N, Cout, H*W)."""
    n, h, w, cin = x.shape
    cout = weight.shape[0]

    xp = jnp.pad(x.astype(jnp.float32), ((0, 0), (1, 1), (1, 1), (0, 0)))
    # taps laid out to match the in-kernel patch assembly: column (ki*3+kj)*Cin + c
    wk = jnp.transpose(weight, (0, 2, 3, 1)).reshape(cout, 9 * cin).astype(jnp.float32)
    bk = bias.reshape(cout, 1).astype(jnp.float32)

    th = _pick_row_tile(h, w)
    n_row_tiles = h // th

    est = (2 * _tile_bytes((h + 2, w + 2, cin), 4)       # resident padded image (double-buffered)
           + _tile_bytes((cout, 9 * cin), 4)
           + _tile_bytes((cout, 1), 4)
           + _tile_bytes((th * w, 9 * cin), 4)           # patch scratch
           + 2 * _tile_bytes((cout, th * w), 4))         # output tile

    out = pl.pallas_call(
        functools.partial(_conv3x3_relu_kernel, th=th, w_dim=w),
        grid=(n, n_row_tiles),
        in_specs=[
            pl.BlockSpec((1, h + 2, w + 2, cin), lambda b, t: (b, 0, 0, 0)),
            pl.BlockSpec((cout, 9 * cin), lambda b, t: (0, 0)),
            pl.BlockSpec((cout, 1), lambda b, t: (0, 0)),
        ],
        out_specs=pl.BlockSpec((1, cout, th * w), lambda b, t: (b, 0, t)),
        out_shape=jax.ShapeDtypeStruct((n, cout, h * w), jnp.float32),
        scratch_shapes=[pltpu.VMEM((th * w, 9 * cin), jnp.float32)],
        compiler_params=pltpu.CompilerParams(
            dimension_semantics=("parallel", "parallel"),
            vmem_limit_bytes=_vmem_limit(est)),
    )(xp, wk, bk)
    return out                                            # (N, Cout, H*W)


def _cf_to_nhwc(f, h, w):
    """(N, C, H*W) channel-first flat -> (N, H, W, C)."""
    n, c, _ = f.shape
    return jnp.transpose(f.reshape(n, c, h, w), (0, 2, 3, 1))


def maxpool2x2(x):
    """x: (N, H, W, C) with even H, W (true for all stages at the test sizes)."""
    n, h, w, c = x.shape
    return x.reshape(n, h // 2, 2, w // 2, 2, c).max(axis=(2, 4))


# -----------------------------------------------------------------------------
# Pallas kernel 2: contextual (CX) loss
#   grid = (batch, query-row tiles, channel tiles); batch and row tiles are "parallel"
#   (per-row-tile partial sums are reduced in the wrapper), channel tiles accumulate
#   into an f32 VMEM scratch.  Softmax-stabilized algebraic epilogue (no MxM cx_ij matrix).
# -----------------------------------------------------------------------------
def _cx_kernel(x_ref, y_ref, o_ref, sim_acc, *, m_valid, tm):
    # x_ref: (1, TM, TK) bf16 queries (channel-last)
    # y_ref: (1, TK, M)  bf16 keys    (channel-first, spatial lane-dense)
    # o_ref: (1, 1, 1, 1) f32         partial sum of cx_max over this query-row tile
    # sim_acc: (TM, M) f32 scratch    accumulator over channel tiles
    i = pl.program_id(1)
    k = pl.program_id(2)
    nk = pl.num_programs(2)

    @pl.when(k == 0)
    def _():
        sim_acc[...] = jnp.zeros_like(sim_acc)

    # Cosine-similarity block: plain (TM, K) x (K, M) MXU matmul, f32 accumulation.
    sim_acc[...] += jnp.dot(x_ref[0], y_ref[0], preferred_element_type=jnp.float32)

    @pl.when(k == nk - 1)
    def _():
        sim = sim_acc[...]                                     # (TM, M) f32
        sim_max = jnp.max(sim, axis=1, keepdims=True)          # (TM, 1)
        d_min = jnp.maximum(1.0 - sim_max, 0.0)                # clamp: bf16 can give sim > 1
        scale = _CX_INV_H / (d_min + _CX_EPS)                  # > 0, so w_ij increases with sim
        # cx_max_i = max_j w_ij / sum_j w_ij = 1 / sum_j exp(scale_i * (sim_ij - sim_max_i))
        e = jnp.exp(scale * (sim - sim_max))                   # every term <= 1: no overflow
        denom = jnp.sum(e, axis=1, keepdims=True)              # (TM, 1)
        cx_row = pl.reciprocal(denom, approx=True)             # (TM, 1)
        # mask rows that only exist because of zero-padding of the query axis
        row = i * tm + lax.broadcasted_iota(jnp.int32, (tm, 1), 0)
        cx_row = jnp.where(row < m_valid, cx_row, 0.0)
        o_ref[...] = jnp.sum(cx_row, keepdims=True).reshape(1, 1, 1, 1)


def cx_loss(fx, fy, *, tm_target=128, tk_target=512):
    """fx, fy: (N, C, M) channel-first features -> scalar contextual loss (mean over batch).

    tm_target: query-row tile (raise to 256-512 on v5e/v6e when VMEM allows - review item).
    tk_target: contraction-axis tile; full C is used when C <= tk_target.
    """
    n, c, m = fx.shape
    fx = fx.astype(jnp.float32)
    fy = fy.astype(jnp.float32)

    # Centering by the gt spatial mean + per-position L2 normalization (cheap elementwise,
    # done once here so the kernel is pure dot + tiny epilogue).
    mu = jnp.mean(fy, axis=2, keepdims=True)                     # (N, C, 1)
    xc = fx - mu
    yc = fy - mu
    xn = xc * lax.rsqrt(jnp.sum(xc * xc, axis=1, keepdims=True) + _CX_EPS)
    yn = yc * lax.rsqrt(jnp.sum(yc * yc, axis=1, keepdims=True) + _CX_EPS)

    # bf16 operands for the MXU (f32 accumulation in-kernel); queries go channel-last so the
    # similarity is a standard NN matmul; keys stay channel-first (spatial axis lane-dense).
    xq = jnp.transpose(xn, (0, 2, 1)).astype(jnp.bfloat16)       # (N, M, C)
    yk = yn.astype(jnp.bfloat16)                                 # (N, C, M)

    # Contraction (channel) tiling: zero-padded channels are exact for dot products.
    if c > tk_target:
        tk = tk_target
        cp = pl.cdiv(c, tk) * tk
        xq = jnp.pad(xq, ((0, 0), (0, 0), (0, cp - c)))
        yk = jnp.pad(yk, ((0, 0), (0, cp - c), (0, 0)))
    else:
        tk, cp = c, c

    # Query-row tiling: cdiv tiles + zero-pad + in-kernel mask; never an (M, M) scratch
    # for large unaligned M.
    if m > tm_target:
        tm = tm_target
        mp = pl.cdiv(m, tm) * tm
        if mp != m:
            xq = jnp.pad(xq, ((0, 0), (0, mp - m), (0, 0)))
    else:
        tm, mp = m, m
    ni = mp // tm
    nk = cp // tk

    est = (2 * _tile_bytes((tm, tk), 2)      # query block (double-buffered)
           + 2 * _tile_bytes((tk, m), 2)     # key block
           + 2 * _tile_bytes((tm, m), 4)     # sim accumulator + epilogue temporary
           + (64 << 10))

    per_tile = pl.pallas_call(
        functools.partial(_cx_kernel, m_valid=m, tm=tm),
        grid=(n, ni, nk),
        in_specs=[
            pl.BlockSpec((1, tm, tk), lambda b, i, k: (b, i, k)),
            pl.BlockSpec((1, tk, m), lambda b, i, k: (b, k, 0)),
        ],
        out_specs=pl.BlockSpec((1, 1, 1, 1), lambda b, i, k: (b, i, 0, 0)),
        out_shape=jax.ShapeDtypeStruct((n, ni, 1, 1), jnp.float32),
        scratch_shapes=[pltpu.VMEM((tm, m), jnp.float32)],
        compiler_params=pltpu.CompilerParams(
            dimension_semantics=("parallel", "parallel", "arbitrary"),
            vmem_limit_bytes=_vmem_limit(est)),
    )(xq, yk)

    cx = jnp.sum(per_tile, axis=(1, 2, 3)) / float(m)            # mean over valid query rows
    return jnp.mean(-jnp.log(cx + _CX_EPS))


# -----------------------------------------------------------------------------
# Glue: patch extraction (unfold semantics)
# -----------------------------------------------------------------------------
def extract_patches(x, size):
    """Mirror of extractpatch: unfold(size) -> transpose(1,2) -> reshape(N,-1,size,size)."""
    n, c, h, w = x.shape
    oh, ow = h - size + 1, w - size + 1
    cols = []
    for ki in range(size):
        for kj in range(size):
            cols.append(x[:, :, ki:ki + oh, kj:kj + ow])         # (N, C, oh, ow)
    p = jnp.stack(cols, axis=2)                                  # (N, C, size*size, oh, ow)
    p = p.reshape(n, c * size * size, oh * ow)                   # torch.unfold layout
    p = jnp.transpose(p, (0, 2, 1))                              # (N, L, C*size*size)
    return p.reshape(n, oh * ow * c, size, size)                 # (N, L*C, size, size)


# -----------------------------------------------------------------------------
# Synthetic deterministic "VGG19" feature extractor (3 stages)
# -----------------------------------------------------------------------------
def make_vgg_params():
    key = jax.random.PRNGKey(42)
    k1, k2, k3 = jax.random.split(key, 3)
    return {
        "w1": jax.random.normal(k1, (8, 3, 3, 3), jnp.float32) * 0.1,
        "b1": jnp.zeros((8,), jnp.float32),
        "w2": jax.random.normal(k2, (16, 8, 3, 3), jnp.float32) * 0.1,
        "b2": jnp.zeros((16,), jnp.float32),
        "w3": jax.random.normal(k3, (32, 16, 3, 3), jnp.float32) * 0.1,
        "b3": jnp.zeros((32,), jnp.float32),
    }


def vgg_features(x_nhwc, params):
    """Returns channel-first flat features [(N, C_l, M_l)] for 3 levels."""
    n, h, w, _ = x_nhwc.shape
    f1 = conv3x3_relu(x_nhwc, params["w1"], params["b1"])                  # (N,  8, H*W)
    x2 = maxpool2x2(_cf_to_nhwc(f1, h, w))
    f2 = conv3x3_relu(x2, params["w2"], params["b2"])                      # (N, 16, H/2*W/2)
    x3 = maxpool2x2(_cf_to_nhwc(f2, h // 2, w // 2))
    f3 = conv3x3_relu(x3, params["w3"], params["b3"])                      # (N, 32, H/4*W/4)
    return [f1, f2, f3]


# -----------------------------------------------------------------------------
# COBIRGBLoss forward
# -----------------------------------------------------------------------------
def cobi_rgb_loss(output, gt, params):
    """output, gt: (N, 3, H, W) like the PyTorch module."""
    n = output.shape[0]
    # Shared-weight extractor: run output and gt through the SAME pallas_calls (3 instead of 6).
    both = jnp.concatenate([output, gt], axis=0).astype(jnp.float32)        # (2N, 3, H, W)
    both_nhwc = jnp.transpose(both, (0, 2, 3, 1))

    feats = vgg_features(both_nhwc, params)                                 # [(2N, C, M)] * 3
    L = [cx_loss(f[:n], f[n:]) for f in feats]
    vggloss = L[0] * 1.0 + L[1] * 1.0 + L[2] * 0.5

    patches = extract_patches(both, 10)                                     # (2N, L*C, 10, 10)
    pn, pc = patches.shape[0], patches.shape[1]
    pf = patches.reshape(pn, pc, -1)                                        # channel-first (2N, L*C, 100)
    patch_cx = cx_loss(pf[:n], pf[n:])

    return vggloss, patch_cx


if __name__ == "__main__":
    params = make_vgg_params()
    key = jax.random.PRNGKey(0)
    ko, kg = jax.random.split(key)
    output = jax.random.uniform(ko, (2, 3, 16, 16), dtype=jnp.float32)
    gt = jax.random.uniform(kg, (2, 3, 16, 16), dtype=jnp.float32)

    vggloss, patch_cx = jax.jit(cobi_rgb_loss)(output, gt, params)
    jax.block_until_ready((vggloss, patch_cx))
    print("KERNEL_OK")
</pallas_src>

<mosaic_0001>
module attributes {stable_mosaic.version = 11 : i64} {
  func.func @_cx_kernel(%arg0: i32, %arg1: i32, %arg2: i32, %arg3: memref<1x100x147xbf16, #tpu.memory_space<vmem>>, %arg4: memref<1x147x100xbf16, #tpu.memory_space<vmem>>, %arg5: memref<1x1x1x1xf32, #tpu.memory_space<vmem>>, %arg6: memref<100x100xf32, #tpu.memory_space<vmem>>) attributes {dimension_semantics = [#tpu.dimension_semantics<parallel>, #tpu.dimension_semantics<parallel>, #tpu.dimension_semantics<arbitrary>], iteration_bounds = array<i64: 2, 1, 1>, scalar_prefetch = 0 : i64, scratch_operands = 1 : i64, tpu.core_type = #tpu.core_type<tc>, window_params = [{transform_indices = @transform_0, window_bounds = array<i64: 1, 100, 147>}, {transform_indices = @transform_1, window_bounds = array<i64: 1, 147, 100>}, {transform_indices = @transform_2, window_bounds = array<i64: 1, 1, 1, 1>}]} {
    %c0_i32 = arith.constant 0 : i32
    %0 = arith.cmpi eq, %arg2, %c0_i32 : i32
    %1 = arith.extui %0 : i1 to i32
    %c0_i32_0 = arith.constant 0 : i32
    %2 = arith.cmpi ne, %1, %c0_i32_0 : i32
    scf.if %2 {
      %cst_12 = arith.constant 0.000000e+00 : f32
      %14 = vector.broadcast %cst_12 : f32 to vector<100x100xf32>
      %c0_13 = arith.constant 0 : index
      %c0_14 = arith.constant 0 : index
      %15 = vector.load %arg6[%c0_13, %c0_14] : memref<100x100xf32, #tpu.memory_space<vmem>>, vector<100x100xf32>
      tpu.vector_store %arg6[%c0_13, %c0_14], %14 {strides = array<i32>} : memref<100x100xf32, #tpu.memory_space<vmem>>, vector<100x100xf32>,
    } else {
    }
    %c0 = arith.constant 0 : index
    %c0_1 = arith.constant 0 : index
    %3 = vector.load %arg6[%c0, %c0_1] : memref<100x100xf32, #tpu.memory_space<vmem>>, vector<100x100xf32>
    %c0_2 = arith.constant 0 : index
    %c0_3 = arith.constant 0 : index
    %c0_4 = arith.constant 0 : index
    %4 = vector.load %arg3[%c0_2, %c0_3, %c0_4] : memref<1x100x147xbf16, #tpu.memory_space<vmem>>, vector<1x100x147xbf16>
    %5 = vector.shape_cast %4 : vector<1x100x147xbf16> to vector<100x147xbf16>
    %c0_5 = arith.constant 0 : index
    %c0_6 = arith.constant 0 : index
    %c0_7 = arith.constant 0 : index
    %6 = vector.load %arg4[%c0_5, %c0_6, %c0_7] : memref<1x147x100xbf16, #tpu.memory_space<vmem>>, vector<1x147x100xbf16>
    %7 = vector.shape_cast %6 : vector<1x147x100xbf16> to vector<147x100xbf16>
    %cst = arith.constant dense<0.000000e+00> : vector<100x100xf32>
    %8 = tpu.matmul %5, %7, %cst {dimension_numbers = #tpu.dot_dimension_numbers<[1], [0], [0], [1], [0, 0, 1, 1], [], []>} : vector<100x147xbf16>, vector<147x100xbf16>, vector<100x100xf32> -> vector<100x100xf32>
    %9 = arith.addf %3, %8 : vector<100x100xf32>
    %c0_8 = arith.constant 0 : index
    %c0_9 = arith.constant 0 : index
    %10 = vector.load %arg6[%c0_8, %c0_9] : memref<100x100xf32, #tpu.memory_space<vmem>>, vector<100x100xf32>
    tpu.vector_store %arg6[%c0_8, %c0_9], %9 {strides = array<i32>} : memref<100x100xf32, #tpu.memory_space<vmem>>, vector<100x100xf32>,
    %c0_i32_10 = arith.constant 0 : i32
    %11 = arith.cmpi eq, %arg2, %c0_i32_10 : i32
    %12 = arith.extui %11 : i1 to i32
    %c0_i32_11 = arith.constant 0 : i32
    %13 = arith.cmpi ne, %12, %c0_i32_11 : i32
    scf.if %13 {
      %c0_12 = arith.constant 0 : index
      %c0_13 = arith.constant 0 : index
      %14 = vector.load %arg6[%c0_12, %c0_13] : memref<100x100xf32, #tpu.memory_space<vmem>>, vector<100x100xf32>
      %cst_14 = arith.constant dense<0xFF800000> : vector<100xf32>
      %15 = vector.multi_reduction <maximumf>, %14, %cst_14 [1] : vector<100x100xf32> to vector<100xf32>
      %16 = vector.shape_cast %15 : vector<100xf32> to vector<100x1xf32>
      %cst_15 = arith.constant 1.000000e+00 : f32
      %17 = vector.broadcast %cst_15 : f32 to vector<100x1xf32>
      %18 = arith.subf %17, %16 : vector<100x1xf32>
      %cst_16 = arith.constant 0.000000e+00 : f32
      %19 = vector.broadcast %cst_16 : f32 to vector<100x1xf32>
      %20 = arith.maximumf %18, %19 : vector<100x1xf32>
      %cst_17 = arith.constant 9.99999974E-6 : f32
      %21 = vector.broadcast %cst_17 : f32 to vector<100x1xf32>
      %22 = arith.addf %20, %21 : vector<100x1xf32>
      %cst_18 = arith.constant 2.000000e+00 : f32
      %23 = vector.broadcast %cst_18 : f32 to vector<100x1xf32>
      %24 = arith.divf %23, %22 : vector<100x1xf32>
      %25 = vector.broadcast %16 : vector<100x1xf32> to vector<100x100xf32>
      %26 = arith.subf %14, %25 : vector<100x100xf32>
      %27 = vector.broadcast %24 : vector<100x1xf32> to vector<100x100xf32>
      %28 = arith.mulf %27, %26 : vector<100x100xf32>
      %29 = math.exp %28 : vector<100x100xf32>
      %cst_19 = arith.constant dense<0.000000e+00> : vector<100xf32>
      %30 = vector.multi_reduction <add>, %29, %cst_19 [1] : vector<100x100xf32> to vector<100xf32>
      %31 = vector.shape_cast %30 : vector<100xf32> to vector<100x1xf32>
      %32 = tpu.reciprocal %31 {approx = true} : vector<100x1xf32> -> vector<100x1xf32>
      %c100_i32 = arith.constant 100 : i32
      %33 = arith.muli %arg1, %c100_i32 : i32
      %34 = tpu.iota {dimensions = array<i32: 0>} : vector<100x1xi32>
      %35 = vector.broadcast %33 : i32 to vector<100x1xi32>
      %36 = arith.addi %35, %34 : vector<100x1xi32>
      %c100_i32_20 = arith.constant 100 : i32
      %37 = vector.broadcast %c100_i32_20 : i32 to vector<100x1xi32>
      %38 = arith.cmpi slt, %36, %37 : vector<100x1xi32>
      %cst_21 = arith.constant 0.000000e+00 : f32
      %39 = vector.broadcast %cst_21 : f32 to vector<100x1xf32>
      %40 = arith.select %38, %32, %39 : vector<100x1xi1>, vector<100x1xf32>
      %41 = vector.shape_cast %40 : vector<100x1xf32> to vector<1x100x1xf32>
      %cst_22 = arith.constant dense<0.000000e+00> : vector<1xf32>
      %42 = vector.multi_reduction <add>, %41, %cst_22 [1, 2] : vector<1x100x1xf32> to vector<1xf32>
      %43 = vector.shape_cast %42 : vector<1xf32> to vector<1x1x1xf32>
      %44 = vector.extract %43[0, 0, 0] : f32 from vector<1x1x1xf32>
      %45 = vector.broadcast %44 : f32 to vector<1x1xf32>
      %46 = vector.shape_cast %45 : vector<1x1xf32> to vector<1x1x1x1xf32>
      %c0_23 = arith.constant 0 : index
      %c0_24 = arith.constant 0 : index
      %c0_25 = arith.constant 0 : index
      %c0_26 = arith.constant 0 : index
      %47 = vector.load %arg5[%c0_23, %c0_24, %c0_25, %c0_26] : memref<1x1x1x1xf32, #tpu.memory_space<vmem>>, vector<1x1x1x1xf32>
      tpu.vector_store %arg5[%c0_23, %c0_24, %c0_25, %c0_26], %46 {strides = array<i32>} : memref<1x1x1x1xf32, #tpu.memory_space<vmem>>, vector<1x1x1x1xf32>,
    } else {
    }
    return
  }
  func.func @transform_0(%arg0: i32, %arg1: i32, %arg2: i32) -> (i32, i32, i32) {
    %c0_i32 = arith.constant 0 : i32
    return %arg0, %arg1, %arg2 : i32, i32, i32
  }
  func.func @transform_1(%arg0: i32, %arg1: i32, %arg2: i32) -> (i32, i32, i32) {
    %c0_i32 = arith.constant 0 : i32
    %c0_i32_0 = arith.constant 0 : i32
    return %arg0, %arg2, %c0_i32 : i32, i32, i32
  }
  func.func @transform_2(%arg0: i32, %arg1: i32, %arg2: i32) -> (i32, i32, i32, i32) {
    %c0_i32 = arith.constant 0 : i32
    %c0_i32_0 = arith.constant 0 : i32
    %c0_i32_1 = arith.constant 0 : i32
    return %arg0, %arg1, %c0_i32, %c0_i32_0 : i32, i32, i32, i32
  }
}

module attributes {stable_mosaic.version = 11 : i64} {
  func.func @_conv3x3_relu_kernel(%arg0: i32, %arg1: i32, %arg2: memref<1x18x18x3xf32, #tpu.memory_space<vmem>>, %arg3: memref<8x27xf32, #tpu.memory_space<vmem>>, %arg4: memref<8x1xf32, #tpu.memory_space<vmem>>, %arg5: memref<1x8x256xf32, #tpu.memory_space<vmem>>, %arg6: memref<256x27xf32, #tpu.memory_space<vmem>>) attributes {dimension_semantics = [#tpu.dimension_semantics<parallel>, #tpu.dimension_semantics<parallel>], iteration_bounds = array<i64: 4, 1>, scalar_prefetch = 0 : i64, scratch_operands = 1 : i64, tpu.core_type = #tpu.core_type<tc>, window_params = [{transform_indices = @transform_0, window_bounds = array<i64: 1, 18, 18, 3>}, {pipeline_mode = #tpu.pipeline_mode<synchronous>, transform_indices = @transform_1, window_bounds = array<i64: 8, 27>}, {pipeline_mode = #tpu.pipeline_mode<synchronous>, transform_indices = @transform_2, window_bounds = array<i64: 8, 1>}, {transform_indices = @transform_3, window_bounds = array<i64: 1, 8, 256>}]} {
    %c16_i32 = arith.constant 16 : i32
    %0 = arith.muli %arg1, %c16_i32 : i32
    %1 = tpu.assume_multiple %0, 16 : i32
    %c0_i32 = arith.constant 0 : i32
    %2 = arith.addi %1, %c0_i32 : i32
    %c0 = arith.constant 0 : index
    %3 = arith.index_cast %2 : i32 to index
    %c0_0 = arith.constant 0 : index
    %c0_1 = arith.constant 0 : index
    %4 = vector.load %arg2[%c0, %3, %c0_0, %c0_1] : memref<1x18x18x3xf32, #tpu.memory_space<vmem>>, vector<1x16x16x3xf32>
    %5 = vector.shape_cast %4 : vector<1x16x16x3xf32> to vector<16x16x3xf32>
    %6 = vector.shape_cast %5 : vector<16x16x3xf32> to vector<256x3xf32>
    %c0_2 = arith.constant 0 : index
    %c0_3 = arith.constant 0 : index
    %7 = vector.load %arg6[%c0_2, %c0_3] : memref<256x27xf32, #tpu.memory_space<vmem>>, vector<256x3xf32>
    tpu.vector_store %arg6[%c0_2, %c0_3], %6 {strides = array<i32>} : memref<256x27xf32, #tpu.memory_space<vmem>>, vector<256x3xf32>,
    %c0_i32_4 = arith.constant 0 : i32
    %8 = arith.addi %1, %c0_i32_4 : i32
    %c0_5 = arith.constant 0 : index
    %9 = arith.index_cast %8 : i32 to index
    %c1 = arith.constant 1 : index
    %c0_6 = arith.constant 0 : index
    %10 = vector.load %arg2[%c0_5, %9, %c1, %c0_6] : memref<1x18x18x3xf32, #tpu.memory_space<vmem>>, vector<1x16x16x3xf32>
    %11 = vector.shape_cast %10 : vector<1x16x16x3xf32> to vector<16x16x3xf32>
    %12 = vector.shape_cast %11 : vector<16x16x3xf32> to vector<256x3xf32>
    %c0_7 = arith.constant 0 : index
    %c3 = arith.constant 3 : index
    %13 = vector.load %arg6[%c0_7, %c3] : memref<256x27xf32, #tpu.memory_space<vmem>>, vector<256x3xf32>
    tpu.vector_store %arg6[%c0_7, %c3], %12 {strides = array<i32>} : memref<256x27xf32, #tpu.memory_space<vmem>>, vector<256x3xf32>,
    %c0_i32_8 = arith.constant 0 : i32
    %14 = arith.addi %1, %c0_i32_8 : i32
    %c0_9 = arith.constant 0 : index
    %15 = arith.index_cast %14 : i32 to index
    %c2 = arith.constant 2 : index
    %c0_10 = arith.constant 0 : index
    %16 = vector.load %arg2[%c0_9, %15, %c2, %c0_10] : memref<1x18x18x3xf32, #tpu.memory_space<vmem>>, vector<1x16x16x3xf32>
    %17 = vector.shape_cast %16 : vector<1x16x16x3xf32> to vector<16x16x3xf32>
    %18 = vector.shape_cast %17 : vector<16x16x3xf32> to vector<256x3xf32>
    %c0_11 = arith.constant 0 : index
    %c6 = arith.constant 6 : index
    %19 = vector.load %arg6[%c0_11, %c6] : memref<256x27xf32, #tpu.memory_space<vmem>>, vector<256x3xf32>
    tpu.vector_store %arg6[%c0_11, %c6], %18 {strides = array<i32>} : memref<256x27xf32, #tpu.memory_space<vmem>>, vector<256x3xf32>,
    %c1_i32 = arith.constant 1 : i32
    %20 = arith.addi %1, %c1_i32 : i32
    %c0_12 = arith.constant 0 : index
    %21 = arith.index_cast %20 : i32 to index
    %c0_13 = arith.constant 0 : index
    %c0_14 = arith.constant 0 : index
    %22 = vector.load %arg2[%c0_12, %21, %c0_13, %c0_14] : memref<1x18x18x3xf32, #tpu.memory_space<vmem>>, vector<1x16x16x3xf32>
    %23 = vector.shape_cast %22 : vector<1x16x16x3xf32> to vector<16x16x3xf32>
    %24 = vector.shape_cast %23 : vector<16x16x3xf32> to vector<256x3xf32>
    %c0_15 = arith.constant 0 : index
    %c9 = arith.constant 9 : index
    %25 = vector.load %arg6[%c0_15, %c9] : memref<256x27xf32, #tpu.memory_space<vmem>>, vector<256x3xf32>
    tpu.vector_store %arg6[%c0_15, %c9], %24 {strides = array<i32>} : memref<256x27xf32, #tpu.memory_space<vmem>>, vector<256x3xf32>,
    %c1_i32_16 = arith.constant 1 : i32
    %26 = arith.addi %1, %c1_i32_16 : i32
    %c0_17 = arith.constant 0 : index
    %27 = arith.index_cast %26 : i32 to index
    %c1_18 = arith.constant 1 : index
    %c0_19 = arith.constant 0 : index
    %28 = vector.load %arg2[%c0_17, %27, %c1_18, %c0_19] : memref<1x18x18x3xf32, #tpu.memory_space<vmem>>, vector<1x16x16x3xf32>
    %29 = vector.shape_cast %28 : vector<1x16x16x3xf32> to vector<16x16x3xf32>
    %30 = vector.shape_cast %29 : vector<16x16x3xf32> to vector<256x3xf32>
    %c0_20 = arith.constant 0 : index
    %c12 = arith.constant 12 : index
    %31 = vector.load %arg6[%c0_20, %c12] : memref<256x27xf32, #tpu.memory_space<vmem>>, vector<256x3xf32>
    tpu.vector_store %arg6[%c0_20, %c12], %30 {strides = array<i32>} : memref<256x27xf32, #tpu.memory_space<vmem>>, vector<256x3xf32>,
    %c1_i32_21 = arith.constant 1 : i32
    %32 = arith.addi %1, %c1_i32_21 : i32
    %c0_22 = arith.constant 0 : index
    %33 = arith.index_cast %32 : i32 to index
    %c2_23 = arith.constant 2 : index
    %c0_24 = arith.constant 0 : index
    %34 = vector.load %arg2[%c0_22, %33, %c2_23, %c0_24] : memref<1x18x18x3xf32, #tpu.memory_space<vmem>>, vector<1x16x16x3xf32>
    %35 = vector.shape_cast %34 : vector<1x16x16x3xf32> to vector<16x16x3xf32>
    %36 = vector.shape_cast %35 : vector<16x16x3xf32> to vector<256x3xf32>
    %c0_25 = arith.constant 0 : index
    %c15 = arith.constant 15 : index
    %37 = vector.load %arg6[%c0_25, %c15] : memref<256x27xf32, #tpu.memory_space<vmem>>, vector<256x3xf32>
    tpu.vector_store %arg6[%c0_25, %c15], %36 {strides = array<i32>} : memref<256x27xf32, #tpu.memory_space<vmem>>, vector<256x3xf32>,
    %c2_i32 = arith.constant 2 : i32
    %38 = arith.addi %1, %c2_i32 : i32
    %c0_26 = arith.constant 0 : index
    %39 = arith.index_cast %38 : i32 to index
    %c0_27 = arith.constant 0 : index
    %c0_28 = arith.constant 0 : index
    %40 = vector.load %arg2[%c0_26, %39, %c0_27, %c0_28] : memref<1x18x18x3xf32, #tpu.memory_space<vmem>>, vector<1x16x16x3xf32>
    %41 = vector.shape_cast %40 : vector<1x16x16x3xf32> to vector<16x16x3xf32>
    %42 = vector.shape_cast %41 : vector<16x16x3xf32> to vector<256x3xf32>
    %c0_29 = arith.constant 0 : index
    %c18 = arith.constant 18 : index
    %43 = vector.load %arg6[%c0_29, %c18] : memref<256x27xf32, #tpu.memory_space<vmem>>, vector<256x3xf32>
    tpu.vector_store %arg6[%c0_29, %c18], %42 {strides = array<i32>} : memref<256x27xf32, #tpu.memory_space<vmem>>, vector<256x3xf32>,
    %c2_i32_30 = arith.constant 2 : i32
    %44 = arith.addi %1, %c2_i32_30 : i32
    %c0_31 = arith.constant 0 : index
    %45 = arith.index_cast %44 : i32 to index
    %c1_32 = arith.constant 1 : index
    %c0_33 = arith.constant 0 : index
    %46 = vector.load %arg2[%c0_31, %45, %c1_32, %c0_33] : memref<1x18x18x3xf32, #tpu.memory_space<vmem>>, vector<1x16x16x3xf32>
    %47 = vector.shape_cast %46 : vector<1x16x16x3xf32> to vector<16x16x3xf32>
    %48 = vector.shape_cast %47 : vector<16x16x3xf32> to vector<256x3xf32>
    %c0_34 = arith.constant 0 : index
    %c21 = arith.constant 21 : index
    %49 = vector.load %arg6[%c0_34, %c21] : memref<256x27xf32, #tpu.memory_space<vmem>>, vector<256x3xf32>
    tpu.vector_store %arg6[%c0_34, %c21], %48 {strides = array<i32>} : memref<256x27xf32, #tpu.memory_space<vmem>>, vector<256x3xf32>,
    %c2_i32_35 = arith.constant 2 : i32
    %50 = arith.addi %1, %c2_i32_35 : i32
    %c0_36 = arith.constant 0 : index
    %51 = arith.index_cast %50 : i32 to index
    %c2_37 = arith.constant 2 : index
    %c0_38 = arith.constant 0 : index
    %52 = vector.load %arg2[%c0_36, %51, %c2_37, %c0_38] : memref<1x18x18x3xf32, #tpu.memory_space<vmem>>, vector<1x16x16x3xf32>
    %53 = vector.shape_cast %52 : vector<1x16x16x3xf32> to vector<16x16x3xf32>
    %54 = vector.shape_cast %53 : vector<16x16x3xf32> to vector<256x3xf32>
    %c0_39 = arith.constant 0 : index
    %c24 = arith.constant 24 : index
    %55 = vector.load %arg6[%c0_39, %c24] : memref<256x27xf32, #tpu.memory_space<vmem>>, vector<256x3xf32>
    tpu.vector_store %arg6[%c0_39, %c24], %54 {strides = array<i32>} : memref<256x27xf32, #tpu.memory_space<vmem>>, vector<256x3xf32>,
    %c0_40 = arith.constant 0 : index
    %c0_41 = arith.constant 0 : index
    %56 = vector.load %arg3[%c0_40, %c0_41] : memref<8x27xf32, #tpu.memory_space<vmem>>, vector<8x27xf32>
    %c0_42 = arith.constant 0 : index
    %c0_43 = arith.constant 0 : index
    %57 = vector.load %arg6[%c0_42, %c0_43] : memref<256x27xf32, #tpu.memory_space<vmem>>, vector<256x27xf32>
    %cst = arith.constant dense<0.000000e+00> : vector<8x256xf32>
    %58 = tpu.matmul %56, %57, %cst {dimension_numbers = #tpu.dot_dimension_numbers<[1], [1], [0], [0], [0, 0, 1, 0], [], []>} : vector<8x27xf32>, vector<256x27xf32>, vector<8x256xf32> -> vector<8x256xf32>
    %c0_44 = arith.constant 0 : index
    %c0_45 = arith.constant 0 : index
    %59 = vector.load %arg4[%c0_44, %c0_45] : memref<8x1xf32, #tpu.memory_space<vmem>>, vector<8x1xf32>
    %60 = vector.broadcast %59 : vector<8x1xf32> to vector<8x256xf32>
    %61 = arith.addf %58, %60 : vector<8x256xf32>
    %cst_46 = arith.constant 0.000000e+00 : f32
    %62 = vector.broadcast %cst_46 : f32 to vector<8x256xf32>
    %63 = arith.maximumf %61, %62 : vector<8x256xf32>
    %c0_47 = arith.constant 0 : index
    %c0_48 = arith.constant 0 : index
    %c0_49 = arith.constant 0 : index
    %64 = vector.load %arg5[%c0_47, %c0_48, %c0_49] : memref<1x8x256xf32, #tpu.memory_space<vmem>>, vector<1x8x256xf32>
    %65 = vector.shape_cast %64 : vector<1x8x256xf32> to vector<8x256xf32>
    %66 = vector.shape_cast %63 : vector<8x256xf32> to vector<1x8x256xf32>
    tpu.vector_store %arg5[%c0_47, %c0_48, %c0_49], %66 {strides = array<i32>} : memref<1x8x256xf32, #tpu.memory_space<vmem>>, vector<1x8x256xf32>,
    return
  }
  func.func @transform_0(%arg0: i32, %arg1: i32) -> (i32, i32, i32, i32) {
    %c0_i32 = arith.constant 0 : i32
    %c0_i32_0 = arith.constant 0 : i32
    %c0_i32_1 = arith.constant 0 : i32
    %c0_i32_2 = arith.constant 0 : i32
    return %arg0, %c0_i32, %c0_i32_0, %c0_i32_1 : i32, i32, i32, i32
  }
  func.func @transform_1(%arg0: i32, %arg1: i32) -> (i32, i32) {
    %c0_i32 = arith.constant 0 : i32
    %c0_i32_0 = arith.constant 0 : i32
    %c0_i32_1 = arith.constant 0 : i32
    return %c0_i32, %c0_i32_0 : i32, i32
  }
  func.func @transform_2(%arg0: i32, %arg1: i32) -> (i32, i32) {
    %c0_i32 = arith.constant 0 : i32
    %c0_i32_0 = arith.constant 0 : i32
    %c0_i32_1 = arith.constant 0 : i32
    return %c0_i32, %c0_i32_0 : i32, i32
  }
  func.func @transform_3(%arg0: i32, %arg1: i32) -> (i32, i32, i32) {
    %c0_i32 = arith.constant 0 : i32
    %c0_i32_0 = arith.constant 0 : i32
    return %arg0, %c0_i32, %arg1 : i32, i32, i32
  }
}

module attributes {stable_mosaic.version = 11 : i64} {
  func.func @_conv3x3_relu_kernel(%arg0: i32, %arg1: i32, %arg2: memref<1x10x10x8xf32, #tpu.memory_space<vmem>>, %arg3: memref<16x72xf32, #tpu.memory_space<vmem>>, %arg4: memref<16x1xf32, #tpu.memory_space<vmem>>, %arg5: memref<1x16x64xf32, #tpu.memory_space<vmem>>, %arg6: memref<64x72xf32, #tpu.memory_space<vmem>>) attributes {dimension_semantics = [#tpu.dimension_semantics<parallel>, #tpu.dimension_semantics<parallel>], iteration_bounds = array<i64: 4, 1>, scalar_prefetch = 0 : i64, scratch_operands = 1 : i64, tpu.core_type = #tpu.core_type<tc>, window_params = [{transform_indices = @transform_0, window_bounds = array<i64: 1, 10, 10, 8>}, {pipeline_mode = #tpu.pipeline_mode<synchronous>, transform_indices = @transform_1, window_bounds = array<i64: 16, 72>}, {pipeline_mode = #tpu.pipeline_mode<synchronous>, transform_indices = @transform_2, window_bounds = array<i64: 16, 1>}, {transform_indices = @transform_3, window_bounds = array<i64: 1, 16, 64>}]} {
    %c8_i32 = arith.constant 8 : i32
    %0 = arith.muli %arg1, %c8_i32 : i32
    %1 = tpu.assume_multiple %0, 8 : i32
    %c0_i32 = arith.constant 0 : i32
    %2 = arith.addi %1, %c0_i32 : i32
    %c0 = arith.constant 0 : index
    %3 = arith.index_cast %2 : i32 to index
    %c0_0 = arith.constant 0 : index
    %c0_1 = arith.constant 0 : index
    %4 = vector.load %arg2[%c0, %3, %c0_0, %c0_1] : memref<1x10x10x8xf32, #tpu.memory_space<vmem>>, vector<1x8x8x8xf32>
    %5 = vector.shape_cast %4 : vector<1x8x8x8xf32> to vector<8x8x8xf32>
    %6 = vector.shape_cast %5 : vector<8x8x8xf32> to vector<64x8xf32>
    %c0_2 = arith.constant 0 : index
    %c0_3 = arith.constant 0 : index
    %7 = vector.load %arg6[%c0_2, %c0_3] : memref<64x72xf32, #tpu.memory_space<vmem>>, vector<64x8xf32>
    tpu.vector_store %arg6[%c0_2, %c0_3], %6 {strides = array<i32>} : memref<64x72xf32, #tpu.memory_space<vmem>>, vector<64x8xf32>,
    %c0_i32_4 = arith.constant 0 : i32
    %8 = arith.addi %1, %c0_i32_4 : i32
    %c0_5 = arith.constant 0 : index
    %9 = arith.index_cast %8 : i32 to index
    %c1 = arith.constant 1 : index
    %c0_6 = arith.constant 0 : index
    %10 = vector.load %arg2[%c0_5, %9, %c1, %c0_6] : memref<1x10x10x8xf32, #tpu.memory_space<vmem>>, vector<1x8x8x8xf32>
    %11 = vector.shape_cast %10 : vector<1x8x8x8xf32> to vector<8x8x8xf32>
    %12 = vector.shape_cast %11 : vector<8x8x8xf32> to vector<64x8xf32>
    %c0_7 = arith.constant 0 : index
    %c8 = arith.constant 8 : index
    %13 = vector.load %arg6[%c0_7, %c8] : memref<64x72xf32, #tpu.memory_space<vmem>>, vector<64x8xf32>
    tpu.vector_store %arg6[%c0_7, %c8], %12 {strides = array<i32>} : memref<64x72xf32, #tpu.memory_space<vmem>>, vector<64x8xf32>,
    %c0_i32_8 = arith.constant 0 : i32
    %14 = arith.addi %1, %c0_i32_8 : i32
    %c0_9 = arith.constant 0 : index
    %15 = arith.index_cast %14 : i32 to index
    %c2 = arith.constant 2 : index
    %c0_10 = arith.constant 0 : index
    %16 = vector.load %arg2[%c0_9, %15, %c2, %c0_10] : memref<1x10x10x8xf32, #tpu.memory_space<vmem>>, vector<1x8x8x8xf32>
    %17 = vector.shape_cast %16 : vector<1x8x8x8xf32> to vector<8x8x8xf32>
    %18 = vector.shape_cast %17 : vector<8x8x8xf32> to vector<64x8xf32>
    %c0_11 = arith.constant 0 : index
    %c16 = arith.constant 16 : index
    %19 = vector.load %arg6[%c0_11, %c16] : memref<64x72xf32, #tpu.memory_space<vmem>>, vector<64x8xf32>
    tpu.vector_store %arg6[%c0_11, %c16], %18 {strides = array<i32>} : memref<64x72xf32, #tpu.memory_space<vmem>>, vector<64x8xf32>,
    %c1_i32 = arith.constant 1 : i32
    %20 = arith.addi %1, %c1_i32 : i32
    %c0_12 = arith.constant 0 : index
    %21 = arith.index_cast %20 : i32 to index
    %c0_13 = arith.constant 0 : index
    %c0_14 = arith.constant 0 : index
    %22 = vector.load %arg2[%c0_12, %21, %c0_13, %c0_14] : memref<1x10x10x8xf32, #tpu.memory_space<vmem>>, vector<1x8x8x8xf32>
    %23 = vector.shape_cast %22 : vector<1x8x8x8xf32> to vector<8x8x8xf32>
    %24 = vector.shape_cast %23 : vector<8x8x8xf32> to vector<64x8xf32>
    %c0_15 = arith.constant 0 : index
    %c24 = arith.constant 24 : index
    %25 = vector.load %arg6[%c0_15, %c24] : memref<64x72xf32, #tpu.memory_space<vmem>>, vector<64x8xf32>
    tpu.vector_store %arg6[%c0_15, %c24], %24 {strides = array<i32>} : memref<64x72xf32, #tpu.memory_space<vmem>>, vector<64x8xf32>,
    %c1_i32_16 = arith.constant 1 : i32
    %26 = arith.addi %1, %c1_i32_16 : i32
    %c0_17 = arith.constant 0 : index
    %27 = arith.index_cast %26 : i32 to index
    %c1_18 = arith.constant 1 : index
    %c0_19 = arith.constant 0 : index
    %28 = vector.load %arg2[%c0_17, %27, %c1_18, %c0_19] : memref<1x10x10x8xf32, #tpu.memory_space<vmem>>, vector<1x8x8x8xf32>
    %29 = vector.shape_cast %28 : vector<1x8x8x8xf32> to vector<8x8x8xf32>
    %30 = vector.shape_cast %29 : vector<8x8x8xf32> to vector<64x8xf32>
    %c0_20 = arith.constant 0 : index
    %c32 = arith.constant 32 : index
    %31 = vector.load %arg6[%c0_20, %c32] : memref<64x72xf32, #tpu.memory_space<vmem>>, vector<64x8xf32>
    tpu.vector_store %arg6[%c0_20, %c32], %30 {strides = array<i32>} : memref<64x72xf32, #tpu.memory_space<vmem>>, vector<64x8xf32>,
    %c1_i32_21 = arith.constant 1 : i32
    %32 = arith.addi %1, %c1_i32_21 : i32
    %c0_22 = arith.constant 0 : index
    %33 = arith.index_cast %32 : i32 to index
    %c2_23 = arith.constant 2 : index
    %c0_24 = arith.constant 0 : index
    %34 = vector.load %arg2[%c0_22, %33, %c2_23, %c0_24] : memref<1x10x10x8xf32, #tpu.memory_space<vmem>>, vector<1x8x8x8xf32>
    %35 = vector.shape_cast %34 : vector<1x8x8x8xf32> to vector<8x8x8xf32>
    %36 = vector.shape_cast %35 : vector<8x8x8xf32> to vector<64x8xf32>
    %c0_25 = arith.constant 0 : index
    %c40 = arith.constant 40 : index
    %37 = vector.load %arg6[%c0_25, %c40] : memref<64x72xf32, #tpu.memory_space<vmem>>, vector<64x8xf32>
    tpu.vector_store %arg6[%c0_25, %c40], %36 {strides = array<i32>} : memref<64x72xf32, #tpu.memory_space<vmem>>, vector<64x8xf32>,
    %c2_i32 = arith.constant 2 : i32
    %38 = arith.addi %1, %c2_i32 : i32
    %c0_26 = arith.constant 0 : index
    %39 = arith.index_cast %38 : i32 to index
    %c0_27 = arith.constant 0 : index
    %c0_28 = arith.constant 0 : index
    %40 = vector.load %arg2[%c0_26, %39, %c0_27, %c0_28] : memref<1x10x10x8xf32, #tpu.memory_space<vmem>>, vector<1x8x8x8xf32>
    %41 = vector.shape_cast %40 : vector<1x8x8x8xf32> to vector<8x8x8xf32>
    %42 = vector.shape_cast %41 : vector<8x8x8xf32> to vector<64x8xf32>
    %c0_29 = arith.constant 0 : index
    %c48 = arith.constant 48 : index
    %43 = vector.load %arg6[%c0_29, %c48] : memref<64x72xf32, #tpu.memory_space<vmem>>, vector<64x8xf32>
    tpu.vector_store %arg6[%c0_29, %c48], %42 {strides = array<i32>} : memref<64x72xf32, #tpu.memory_space<vmem>>, vector<64x8xf32>,
    %c2_i32_30 = arith.constant 2 : i32
    %44 = arith.addi %1, %c2_i32_30 : i32
    %c0_31 = arith.constant 0 : index
    %45 = arith.index_cast %44 : i32 to index
    %c1_32 = arith.constant 1 : index
    %c0_33 = arith.constant 0 : index
    %46 = vector.load %arg2[%c0_31, %45, %c1_32, %c0_33] : memref<1x10x10x8xf32, #tpu.memory_space<vmem>>, vector<1x8x8x8xf32>
    %47 = vector.shape_cast %46 : vector<1x8x8x8xf32> to vector<8x8x8xf32>
    %48 = vector.shape_cast %47 : vector<8x8x8xf32> to vector<64x8xf32>
    %c0_34 = arith.constant 0 : index
    %c56 = arith.constant 56 : index
    %49 = vector.load %arg6[%c0_34, %c56] : memref<64x72xf32, #tpu.memory_space<vmem>>, vector<64x8xf32>
    tpu.vector_store %arg6[%c0_34, %c56], %48 {strides = array<i32>} : memref<64x72xf32, #tpu.memory_space<vmem>>, vector<64x8xf32>,
    %c2_i32_35 = arith.constant 2 : i32
    %50 = arith.addi %1, %c2_i32_35 : i32
    %c0_36 = arith.constant 0 : index
    %51 = arith.index_cast %50 : i32 to index
    %c2_37 = arith.constant 2 : index
    %c0_38 = arith.constant 0 : index
    %52 = vector.load %arg2[%c0_36, %51, %c2_37, %c0_38] : memref<1x10x10x8xf32, #tpu.memory_space<vmem>>, vector<1x8x8x8xf32>
    %53 = vector.shape_cast %52 : vector<1x8x8x8xf32> to vector<8x8x8xf32>
    %54 = vector.shape_cast %53 : vector<8x8x8xf32> to vector<64x8xf32>
    %c0_39 = arith.constant 0 : index
    %c64 = arith.constant 64 : index
    %55 = vector.load %arg6[%c0_39, %c64] : memref<64x72xf32, #tpu.memory_space<vmem>>, vector<64x8xf32>
    tpu.vector_store %arg6[%c0_39, %c64], %54 {strides = array<i32>} : memref<64x72xf32, #tpu.memory_space<vmem>>, vector<64x8xf32>,
    %c0_40 = arith.constant 0 : index
    %c0_41 = arith.constant 0 : index
    %56 = vector.load %arg3[%c0_40, %c0_41] : memref<16x72xf32, #tpu.memory_space<vmem>>, vector<16x72xf32>
    %c0_42 = arith.constant 0 : index
    %c0_43 = arith.constant 0 : index
    %57 = vector.load %arg6[%c0_42, %c0_43] : memref<64x72xf32, #tpu.memory_space<vmem>>, vector<64x72xf32>
    %cst = arith.constant dense<0.000000e+00> : vector<16x64xf32>
    %58 = tpu.matmul %56, %57, %cst {dimension_numbers = #tpu.dot_dimension_numbers<[1], [1], [0], [0], [0, 0, 1, 0], [], []>} : vector<16x72xf32>, vector<64x72xf32>, vector<16x64xf32> -> vector<16x64xf32>
    %c0_44 = arith.constant 0 : index
    %c0_45 = arith.constant 0 : index
    %59 = vector.load %arg4[%c0_44, %c0_45] : memref<16x1xf32, #tpu.memory_space<vmem>>, vector<16x1xf32>
    %60 = vector.broadcast %59 : vector<16x1xf32> to vector<16x64xf32>
    %61 = arith.addf %58, %60 : vector<16x64xf32>
    %cst_46 = arith.constant 0.000000e+00 : f32
    %62 = vector.broadcast %cst_46 : f32 to vector<16x64xf32>
    %63 = arith.maximumf %61, %62 : vector<16x64xf32>
    %c0_47 = arith.constant 0 : index
    %c0_48 = arith.constant 0 : index
    %c0_49 = arith.constant 0 : index
    %64 = vector.load %arg5[%c0_47, %c0_48, %c0_49] : memref<1x16x64xf32, #tpu.memory_space<vmem>>, vector<1x16x64xf32>
    %65 = vector.shape_cast %64 : vector<1x16x64xf32> to vector<16x64xf32>
    %66 = vector.shape_cast %63 : vector<16x64xf32> to vector<1x16x64xf32>
    tpu.vector_store %arg5[%c0_47, %c0_48, %c0_49], %66 {strides = array<i32>} : memref<1x16x64xf32, #tpu.memory_space<vmem>>, vector<1x16x64xf32>,
    return
  }
  func.func @transform_0(%arg0: i32, %arg1: i32) -> (i32, i32, i32, i32) {
    %c0_i32 = arith.constant 0 : i32
    %c0_i32_0 = arith.constant 0 : i32
    %c0_i32_1 = arith.constant 0 : i32
    %c0_i32_2 = arith.constant 0 : i32
    return %arg0, %c0_i32, %c0_i32_0, %c0_i32_1 : i32, i32, i32, i32
  }
  func.func @transform_1(%arg0: i32, %arg1: i32) -> (i32, i32) {
    %c0_i32 = arith.constant 0 : i32
    %c0_i32_0 = arith.constant 0 : i32
    %c0_i32_1 = arith.constant 0 : i32
    return %c0_i32, %c0_i32_0 : i32, i32
  }
  func.func @transform_2(%arg0: i32, %arg1: i32) -> (i32, i32) {
    %c0_i32 = arith.constant 0 : i32
    %c0_i32_0 = arith.constant 0 : i32
    %c0_i32_1 = arith.constant 0 : i32
    return %c0_i32, %c0_i32_0 : i32, i32
  }
  func.func @transform_3(%arg0: i32, %arg1: i32) -> (i32, i32, i32) {
    %c0_i32 = arith.constant 0 : i32
    %c0_i32_0 = arith.constant 0 : i32
    return %arg0, %c0_i32, %arg1 : i32, i32, i32
  }
}

module attributes {stable_mosaic.version = 11 : i64} {
  func.func @_conv3x3_relu_kernel(%arg0: i32, %arg1: i32, %arg2: memref<1x6x6x16xf32, #tpu.memory_space<vmem>>, %arg3: memref<32x144xf32, #tpu.memory_space<vmem>>, %arg4: memref<32x1xf32, #tpu.memory_space<vmem>>, %arg5: memref<1x32x16xf32, #tpu.memory_space<vmem>>, %arg6: memref<16x144xf32, #tpu.memory_space<vmem>>) attributes {dimension_semantics = [#tpu.dimension_semantics<parallel>, #tpu.dimension_semantics<parallel>], iteration_bounds = array<i64: 4, 1>, scalar_prefetch = 0 : i64, scratch_operands = 1 : i64, tpu.core_type = #tpu.core_type<tc>, window_params = [{transform_indices = @transform_0, window_bounds = array<i64: 1, 6, 6, 16>}, {pipeline_mode = #tpu.pipeline_mode<synchronous>, transform_indices = @transform_1, window_bounds = array<i64: 32, 144>}, {pipeline_mode = #tpu.pipeline_mode<synchronous>, transform_indices = @transform_2, window_bounds = array<i64: 32, 1>}, {transform_indices = @transform_3, window_bounds = array<i64: 1, 32, 16>}]} {
    %c4_i32 = arith.constant 4 : i32
    %0 = arith.muli %arg1, %c4_i32 : i32
    %1 = tpu.assume_multiple %0, 4 : i32
    %c0_i32 = arith.constant 0 : i32
    %2 = arith.addi %1, %c0_i32 : i32
    %c0 = arith.constant 0 : index
    %3 = arith.index_cast %2 : i32 to index
    %c0_0 = arith.constant 0 : index
    %c0_1 = arith.constant 0 : index
    %4 = vector.load %arg2[%c0, %3, %c0_0, %c0_1] : memref<1x6x6x16xf32, #tpu.memory_space<vmem>>, vector<1x4x4x16xf32>
    %5 = vector.shape_cast %4 : vector<1x4x4x16xf32> to vector<4x4x16xf32>
    %6 = vector.shape_cast %5 : vector<4x4x16xf32> to vector<16x16xf32>
    %c0_2 = arith.constant 0 : index
    %c0_3 = arith.constant 0 : index
    %7 = vector.load %arg6[%c0_2, %c0_3] : memref<16x144xf32, #tpu.memory_space<vmem>>, vector<16x16xf32>
    tpu.vector_store %arg6[%c0_2, %c0_3], %6 {strides = array<i32>} : memref<16x144xf32, #tpu.memory_space<vmem>>, vector<16x16xf32>,
    %c0_i32_4 = arith.constant 0 : i32
    %8 = arith.addi %1, %c0_i32_4 : i32
    %c0_5 = arith.constant 0 : index
    %9 = arith.index_cast %8 : i32 to index
    %c1 = arith.constant 1 : index
    %c0_6 = arith.constant 0 : index
    %10 = vector.load %arg2[%c0_5, %9, %c1, %c0_6] : memref<1x6x6x16xf32, #tpu.memory_space<vmem>>, vector<1x4x4x16xf32>
    %11 = vector.shape_cast %10 : vector<1x4x4x16xf32> to vector<4x4x16xf32>
    %12 = vector.shape_cast %11 : vector<4x4x16xf32> to vector<16x16xf32>
    %c0_7 = arith.constant 0 : index
    %c16 = arith.constant 16 : index
    %13 = vector.load %arg6[%c0_7, %c16] : memref<16x144xf32, #tpu.memory_space<vmem>>, vector<16x16xf32>
    tpu.vector_store %arg6[%c0_7, %c16], %12 {strides = array<i32>} : memref<16x144xf32, #tpu.memory_space<vmem>>, vector<16x16xf32>,
    %c0_i32_8 = arith.constant 0 : i32
    %14 = arith.addi %1, %c0_i32_8 : i32
    %c0_9 = arith.constant 0 : index
    %15 = arith.index_cast %14 : i32 to index
    %c2 = arith.constant 2 : index
    %c0_10 = arith.constant 0 : index
    %16 = vector.load %arg2[%c0_9, %15, %c2, %c0_10] : memref<1x6x6x16xf32, #tpu.memory_space<vmem>>, vector<1x4x4x16xf32>
    %17 = vector.shape_cast %16 : vector<1x4x4x16xf32> to vector<4x4x16xf32>
    %18 = vector.shape_cast %17 : vector<4x4x16xf32> to vector<16x16xf32>
    %c0_11 = arith.constant 0 : index
    %c32 = arith.constant 32 : index
    %19 = vector.load %arg6[%c0_11, %c32] : memref<16x144xf32, #tpu.memory_space<vmem>>, vector<16x16xf32>
    tpu.vector_store %arg6[%c0_11, %c32], %18 {strides = array<i32>} : memref<16x144xf32, #tpu.memory_space<vmem>>, vector<16x16xf32>,
    %c1_i32 = arith.constant 1 : i32
    %20 = arith.addi %1, %c1_i32 : i32
    %c0_12 = arith.constant 0 : index
    %21 = arith.index_cast %20 : i32 to index
    %c0_13 = arith.constant 0 : index
    %c0_14 = arith.constant 0 : index
    %22 = vector.load %arg2[%c0_12, %21, %c0_13, %c0_14] : memref<1x6x6x16xf32, #tpu.memory_space<vmem>>, vector<1x4x4x16xf32>
    %23 = vector.shape_cast %22 : vector<1x4x4x16xf32> to vector<4x4x16xf32>
    %24 = vector.shape_cast %23 : vector<4x4x16xf32> to vector<16x16xf32>
    %c0_15 = arith.constant 0 : index
    %c48 = arith.constant 48 : index
    %25 = vector.load %arg6[%c0_15, %c48] : memref<16x144xf32, #tpu.memory_space<vmem>>, vector<16x16xf32>
    tpu.vector_store %arg6[%c0_15, %c48], %24 {strides = array<i32>} : memref<16x144xf32, #tpu.memory_space<vmem>>, vector<16x16xf32>,
    %c1_i32_16 = arith.constant 1 : i32
    %26 = arith.addi %1, %c1_i32_16 : i32
    %c0_17 = arith.constant 0 : index
    %27 = arith.index_cast %26 : i32 to index
    %c1_18 = arith.constant 1 : index
    %c0_19 = arith.constant 0 : index
    %28 = vector.load %arg2[%c0_17, %27, %c1_18, %c0_19] : memref<1x6x6x16xf32, #tpu.memory_space<vmem>>, vector<1x4x4x16xf32>
    %29 = vector.shape_cast %28 : vector<1x4x4x16xf32> to vector<4x4x16xf32>
    %30 = vector.shape_cast %29 : vector<4x4x16xf32> to vector<16x16xf32>
    %c0_20 = arith.constant 0 : index
    %c64 = arith.constant 64 : index
    %31 = vector.load %arg6[%c0_20, %c64] : memref<16x144xf32, #tpu.memory_space<vmem>>, vector<16x16xf32>
    tpu.vector_store %arg6[%c0_20, %c64], %30 {strides = array<i32>} : memref<16x144xf32, #tpu.memory_space<vmem>>, vector<16x16xf32>,
    %c1_i32_21 = arith.constant 1 : i32
    %32 = arith.addi %1, %c1_i32_21 : i32
    %c0_22 = arith.constant 0 : index
    %33 = arith.index_cast %32 : i32 to index
    %c2_23 = arith.constant 2 : index
    %c0_24 = arith.constant 0 : index
    %34 = vector.load %arg2[%c0_22, %33, %c2_23, %c0_24] : memref<1x6x6x16xf32, #tpu.memory_space<vmem>>, vector<1x4x4x16xf32>
    %35 = vector.shape_cast %34 : vector<1x4x4x16xf32> to vector<4x4x16xf32>
    %36 = vector.shape_cast %35 : vector<4x4x16xf32> to vector<16x16xf32>
    %c0_25 = arith.constant 0 : index
    %c80 = arith.constant 80 : index
    %37 = vector.load %arg6[%c0_25, %c80] : memref<16x144xf32, #tpu.memory_space<vmem>>, vector<16x16xf32>
    tpu.vector_store %arg6[%c0_25, %c80], %36 {strides = array<i32>} : memref<16x144xf32, #tpu.memory_space<vmem>>, vector<16x16xf32>,
    %c2_i32 = arith.constant 2 : i32
    %38 = arith.addi %1, %c2_i32 : i32
    %c0_26 = arith.constant 0 : index
    %39 = arith.index_cast %38 : i32 to index
    %c0_27 = arith.constant 0 : index
    %c0_28 = arith.constant 0 : index
    %40 = vector.load %arg2[%c0_26, %39, %c0_27, %c0_28] : memref<1x6x6x16xf32, #tpu.memory_space<vmem>>, vector<1x4x4x16xf32>
    %41 = vector.shape_cast %40 : vector<1x4x4x16xf32> to vector<4x4x16xf32>
    %42 = vector.shape_cast %41 : vector<4x4x16xf32> to vector<16x16xf32>
    %c0_29 = arith.constant 0 : index
    %c96 = arith.constant 96 : index
    %43 = vector.load %arg6[%c0_29, %c96] : memref<16x144xf32, #tpu.memory_space<vmem>>, vector<16x16xf32>
    tpu.vector_store %arg6[%c0_29, %c96], %42 {strides = array<i32>} : memref<16x144xf32, #tpu.memory_space<vmem>>, vector<16x16xf32>,
    %c2_i32_30 = arith.constant 2 : i32
    %44 = arith.addi %1, %c2_i32_30 : i32
    %c0_31 = arith.constant 0 : index
    %45 = arith.index_cast %44 : i32 to index
    %c1_32 = arith.constant 1 : index
    %c0_33 = arith.constant 0 : index
    %46 = vector.load %arg2[%c0_31, %45, %c1_32, %c0_33] : memref<1x6x6x16xf32, #tpu.memory_space<vmem>>, vector<1x4x4x16xf32>
    %47 = vector.shape_cast %46 : vector<1x4x4x16xf32> to vector<4x4x16xf32>
    %48 = vector.shape_cast %47 : vector<4x4x16xf32> to vector<16x16xf32>
    %c0_34 = arith.constant 0 : index
    %c112 = arith.constant 112 : index
    %49 = vector.load %arg6[%c0_34, %c112] : memref<16x144xf32, #tpu.memory_space<vmem>>, vector<16x16xf32>
    tpu.vector_store %arg6[%c0_34, %c112], %48 {strides = array<i32>} : memref<16x144xf32, #tpu.memory_space<vmem>>, vector<16x16xf32>,
    %c2_i32_35 = arith.constant 2 : i32
    %50 = arith.addi %1, %c2_i32_35 : i32
    %c0_36 = arith.constant 0 : index
    %51 = arith.index_cast %50 : i32 to index
    %c2_37 = arith.constant 2 : index
    %c0_38 = arith.constant 0 : index
    %52 = vector.load %arg2[%c0_36, %51, %c2_37, %c0_38] : memref<1x6x6x16xf32, #tpu.memory_space<vmem>>, vector<1x4x4x16xf32>
    %53 = vector.shape_cast %52 : vector<1x4x4x16xf32> to vector<4x4x16xf32>
    %54 = vector.shape_cast %53 : vector<4x4x16xf32> to vector<16x16xf32>
    %c0_39 = arith.constant 0 : index
    %c128 = arith.constant 128 : index
    %55 = vector.load %arg6[%c0_39, %c128] : memref<16x144xf32, #tpu.memory_space<vmem>>, vector<16x16xf32>
    tpu.vector_store %arg6[%c0_39, %c128], %54 {strides = array<i32>} : memref<16x144xf32, #tpu.memory_space<vmem>>, vector<16x16xf32>,
    %c0_40 = arith.constant 0 : index
    %c0_41 = arith.constant 0 : index
    %56 = vector.load %arg3[%c0_40, %c0_41] : memref<32x144xf32, #tpu.memory_space<vmem>>, vector<32x144xf32>
    %c0_42 = arith.constant 0 : index
    %c0_43 = arith.constant 0 : index
    %57 = vector.load %arg6[%c0_42, %c0_43] : memref<16x144xf32, #tpu.memory_space<vmem>>, vector<16x144xf32>
    %cst = arith.constant dense<0.000000e+00> : vector<32x16xf32>
    %58 = tpu.matmul %56, %57, %cst {dimension_numbers = #tpu.dot_dimension_numbers<[1], [1], [0], [0], [0, 0, 1, 0], [], []>} : vector<32x144xf32>, vector<16x144xf32>, vector<32x16xf32> -> vector<32x16xf32>
    %c0_44 = arith.constant 0 : index
    %c0_45 = arith.constant 0 : index
    %59 = vector.load %arg4[%c0_44, %c0_45] : memref<32x1xf32, #tpu.memory_space<vmem>>, vector<32x1xf32>
    %60 = vector.broadcast %59 : vector<32x1xf32> to vector<32x16xf32>
    %61 = arith.addf %58, %60 : vector<32x16xf32>
    %cst_46 = arith.constant 0.000000e+00 : f32
    %62 = vector.broadcast %cst_46 : f32 to vector<32x16xf32>
    %63 = arith.maximumf %61, %62 : vector<32x16xf32>
    %c0_47 = arith.constant 0 : index
    %c0_48 = arith.constant 0 : index
    %c0_49 = arith.constant 0 : index
    %64 = vector.load %arg5[%c0_47, %c0_48, %c0_49] : memref<1x32x16xf32, #tpu.memory_space<vmem>>, vector<1x32x16xf32>
    %65 = vector.shape_cast %64 : vector<1x32x16xf32> to vector<32x16xf32>
    %66 = vector.shape_cast %63 : vector<32x16xf32> to vector<1x32x16xf32>
    tpu.vector_store %arg5[%c0_47, %c0_48, %c0_49], %66 {strides = array<i32>} : memref<1x32x16xf32, #tpu.memory_space<vmem>>, vector<1x32x16xf32>,
    return
  }
  func.func @transform_0(%arg0: i32, %arg1: i32) -> (i32, i32, i32, i32) {
    %c0_i32 = arith.constant 0 : i32
    %c0_i32_0 = arith.constant 0 : i32
    %c0_i32_1 = arith.constant 0 : i32
    %c0_i32_2 = arith.constant 0 : i32
    return %arg0, %c0_i32, %c0_i32_0, %c0_i32_1 : i32, i32, i32, i32
  }
  func.func @transform_1(%arg0: i32, %arg1: i32) -> (i32, i32) {
    %c0_i32 = arith.constant 0 : i32
    %c0_i32_0 = arith.constant 0 : i32
    %c0_i32_1 = arith.constant 0 : i32
    return %c0_i32, %c0_i32_0 : i32, i32
  }
  func.func @transform_2(%arg0: i32, %arg1: i32) -> (i32, i32) {
    %c0_i32 = arith.constant 0 : i32
    %c0_i32_0 = arith.constant 0 : i32
    %c0_i32_1 = arith.constant 0 : i32
    return %c0_i32, %c0_i32_0 : i32, i32
  }
  func.func @transform_3(%arg0: i32, %arg1: i32) -> (i32, i32, i32) {
    %c0_i32 = arith.constant 0 : i32
    %c0_i32_0 = arith.constant 0 : i32
    return %arg0, %c0_i32, %arg1 : i32, i32, i32
  }
}

module attributes {stable_mosaic.version = 11 : i64} {
  func.func @_cx_kernel(%arg0: i32, %arg1: i32, %arg2: i32, %arg3: memref<1x16x32xbf16, #tpu.memory_space<vmem>>, %arg4: memref<1x32x16xbf16, #tpu.memory_space<vmem>>, %arg5: memref<1x1x1x1xf32, #tpu.memory_space<vmem>>, %arg6: memref<16x16xf32, #tpu.memory_space<vmem>>) attributes {dimension_semantics = [#tpu.dimension_semantics<parallel>, #tpu.dimension_semantics<parallel>, #tpu.dimension_semantics<arbitrary>], iteration_bounds = array<i64: 2, 1, 1>, scalar_prefetch = 0 : i64, scratch_operands = 1 : i64, tpu.core_type = #tpu.core_type<tc>, window_params = [{transform_indices = @transform_0, window_bounds = array<i64: 1, 16, 32>}, {transform_indices = @transform_1, window_bounds = array<i64: 1, 32, 16>}, {transform_indices = @transform_2, window_bounds = array<i64: 1, 1, 1, 1>}]} {
    %c0_i32 = arith.constant 0 : i32
    %0 = arith.cmpi eq, %arg2, %c0_i32 : i32
    %1 = arith.extui %0 : i1 to i32
    %c0_i32_0 = arith.constant 0 : i32
    %2 = arith.cmpi ne, %1, %c0_i32_0 : i32
    scf.if %2 {
      %cst_12 = arith.constant 0.000000e+00 : f32
      %14 = vector.broadcast %cst_12 : f32 to vector<16x16xf32>
      %c0_13 = arith.constant 0 : index
      %c0_14 = arith.constant 0 : index
      %15 = vector.load %arg6[%c0_13, %c0_14] : memref<16x16xf32, #tpu.memory_space<vmem>>, vector<16x16xf32>
      tpu.vector_store %arg6[%c0_13, %c0_14], %14 {strides = array<i32>} : memref<16x16xf32, #tpu.memory_space<vmem>>, vector<16x16xf32>,
    } else {
    }
    %c0 = arith.constant 0 : index
    %c0_1 = arith.constant 0 : index
    %3 = vector.load %arg6[%c0, %c0_1] : memref<16x16xf32, #tpu.memory_space<vmem>>, vector<16x16xf32>
    %c0_2 = arith.constant 0 : index
    %c0_3 = arith.constant 0 : index
    %c0_4 = arith.constant 0 : index
    %4 = vector.load %arg3[%c0_2, %c0_3, %c0_4] : memref<1x16x32xbf16, #tpu.memory_space<vmem>>, vector<1x16x32xbf16>
    %5 = vector.shape_cast %4 : vector<1x16x32xbf16> to vector<16x32xbf16>
    %c0_5 = arith.constant 0 : index
    %c0_6 = arith.constant 0 : index
    %c0_7 = arith.constant 0 : index
    %6 = vector.load %arg4[%c0_5, %c0_6, %c0_7] : memref<1x32x16xbf16, #tpu.memory_space<vmem>>, vector<1x32x16xbf16>
    %7 = vector.shape_cast %6 : vector<1x32x16xbf16> to vector<32x16xbf16>
    %cst = arith.constant dense<0.000000e+00> : vector<16x16xf32>
    %8 = tpu.matmul %5, %7, %cst {dimension_numbers = #tpu.dot_dimension_numbers<[1], [0], [0], [1], [0, 0, 1, 1], [], []>} : vector<16x32xbf16>, vector<32x16xbf16>, vector<16x16xf32> -> vector<16x16xf32>
    %9 = arith.addf %3, %8 : vector<16x16xf32>
    %c0_8 = arith.constant 0 : index
    %c0_9 = arith.constant 0 : index
    %10 = vector.load %arg6[%c0_8, %c0_9] : memref<16x16xf32, #tpu.memory_space<vmem>>, vector<16x16xf32>
    tpu.vector_store %arg6[%c0_8, %c0_9], %9 {strides = array<i32>} : memref<16x16xf32, #tpu.memory_space<vmem>>, vector<16x16xf32>,
    %c0_i32_10 = arith.constant 0 : i32
    %11 = arith.cmpi eq, %arg2, %c0_i32_10 : i32
    %12 = arith.extui %11 : i1 to i32
    %c0_i32_11 = arith.constant 0 : i32
    %13 = arith.cmpi ne, %12, %c0_i32_11 : i32
    scf.if %13 {
      %c0_12 = arith.constant 0 : index
      %c0_13 = arith.constant 0 : index
      %14 = vector.load %arg6[%c0_12, %c0_13] : memref<16x16xf32, #tpu.memory_space<vmem>>, vector<16x16xf32>
      %cst_14 = arith.constant dense<0xFF800000> : vector<16xf32>
      %15 = vector.multi_reduction <maximumf>, %14, %cst_14 [1] : vector<16x16xf32> to vector<16xf32>
      %16 = vector.shape_cast %15 : vector<16xf32> to vector<16x1xf32>
      %cst_15 = arith.constant 1.000000e+00 : f32
      %17 = vector.broadcast %cst_15 : f32 to vector<16x1xf32>
      %18 = arith.subf %17, %16 : vector<16x1xf32>
      %cst_16 = arith.constant 0.000000e+00 : f32
      %19 = vector.broadcast %cst_16 : f32 to vector<16x1xf32>
      %20 = arith.maximumf %18, %19 : vector<16x1xf32>
      %cst_17 = arith.constant 9.99999974E-6 : f32
      %21 = vector.broadcast %cst_17 : f32 to vector<16x1xf32>
      %22 = arith.addf %20, %21 : vector<16x1xf32>
      %cst_18 = arith.constant 2.000000e+00 : f32
      %23 = vector.broadcast %cst_18 : f32 to vector<16x1xf32>
      %24 = arith.divf %23, %22 : vector<16x1xf32>
      %25 = vector.broadcast %16 : vector<16x1xf32> to vector<16x16xf32>
      %26 = arith.subf %14, %25 : vector<16x16xf32>
      %27 = vector.broadcast %24 : vector<16x1xf32> to vector<16x16xf32>
      %28 = arith.mulf %27, %26 : vector<16x16xf32>
      %29 = math.exp %28 : vector<16x16xf32>
      %cst_19 = arith.constant dense<0.000000e+00> : vector<16xf32>
      %30 = vector.multi_reduction <add>, %29, %cst_19 [1] : vector<16x16xf32> to vector<16xf32>
      %31 = vector.shape_cast %30 : vector<16xf32> to vector<16x1xf32>
      %32 = tpu.reciprocal %31 {approx = true} : vector<16x1xf32> -> vector<16x1xf32>
      %c16_i32 = arith.constant 16 : i32
      %33 = arith.muli %arg1, %c16_i32 : i32
      %34 = tpu.iota {dimensions = array<i32: 0>} : vector<16x1xi32>
      %35 = vector.broadcast %33 : i32 to vector<16x1xi32>
      %36 = arith.addi %35, %34 : vector<16x1xi32>
      %c16_i32_20 = arith.constant 16 : i32
      %37 = vector.broadcast %c16_i32_20 : i32 to vector<16x1xi32>
      %38 = arith.cmpi slt, %36, %37 : vector<16x1xi32>
      %cst_21 = arith.constant 0.000000e+00 : f32
      %39 = vector.broadcast %cst_21 : f32 to vector<16x1xf32>
      %40 = arith.select %38, %32, %39 : vector<16x1xi1>, vector<16x1xf32>
      %41 = vector.shape_cast %40 : vector<16x1xf32> to vector<1x16x1xf32>
      %cst_22 = arith.constant dense<0.000000e+00> : vector<1xf32>
      %42 = vector.multi_reduction <add>, %41, %cst_22 [1, 2] : vector<1x16x1xf32> to vector<1xf32>
      %43 = vector.shape_cast %42 : vector<1xf32> to vector<1x1x1xf32>
      %44 = vector.extract %43[0, 0, 0] : f32 from vector<1x1x1xf32>
      %45 = vector.broadcast %44 : f32 to vector<1x1xf32>
      %46 = vector.shape_cast %45 : vector<1x1xf32> to vector<1x1x1x1xf32>
      %c0_23 = arith.constant 0 : index
      %c0_24 = arith.constant 0 : index
      %c0_25 = arith.constant 0 : index
      %c0_26 = arith.constant 0 : index
      %47 = vector.load %arg5[%c0_23, %c0_24, %c0_25, %c0_26] : memref<1x1x1x1xf32, #tpu.memory_space<vmem>>, vector<1x1x1x1xf32>
      tpu.vector_store %arg5[%c0_23, %c0_24, %c0_25, %c0_26], %46 {strides = array<i32>} : memref<1x1x1x1xf32, #tpu.memory_space<vmem>>, vector<1x1x1x1xf32>,
    } else {
    }
    return
  }
  func.func @transform_0(%arg0: i32, %arg1: i32, %arg2: i32) -> (i32, i32, i32) {
    %c0_i32 = arith.constant 0 : i32
    return %arg0, %arg1, %arg2 : i32, i32, i32
  }
  func.func @transform_1(%arg0: i32, %arg1: i32, %arg2: i32) -> (i32, i32, i32) {
    %c0_i32 = arith.constant 0 : i32
    %c0_i32_0 = arith.constant 0 : i32
    return %arg0, %arg2, %c0_i32 : i32, i32, i32
  }
  func.func @transform_2(%arg0: i32, %arg1: i32, %arg2: i32) -> (i32, i32, i32, i32) {
    %c0_i32 = arith.constant 0 : i32
    %c0_i32_0 = arith.constant 0 : i32
    %c0_i32_1 = arith.constant 0 : i32
    return %arg0, %arg1, %c0_i32, %c0_i32_0 : i32, i32, i32, i32
  }
}

module attributes {stable_mosaic.version = 11 : i64} {
  func.func @_cx_kernel(%arg0: i32, %arg1: i32, %arg2: i32, %arg3: memref<1x64x16xbf16, #tpu.memory_space<vmem>>, %arg4: memref<1x16x64xbf16, #tpu.memory_space<vmem>>, %arg5: memref<1x1x1x1xf32, #tpu.memory_space<vmem>>, %arg6: memref<64x64xf32, #tpu.memory_space<vmem>>) attributes {dimension_semantics = [#tpu.dimension_semantics<parallel>, #tpu.dimension_semantics<parallel>, #tpu.dimension_semantics<arbitrary>], iteration_bounds = array<i64: 2, 1, 1>, scalar_prefetch = 0 : i64, scratch_operands = 1 : i64, tpu.core_type = #tpu.core_type<tc>, window_params = [{transform_indices = @transform_0, window_bounds = array<i64: 1, 64, 16>}, {transform_indices = @transform_1, window_bounds = array<i64: 1, 16, 64>}, {transform_indices = @transform_2, window_bounds = array<i64: 1, 1, 1, 1>}]} {
    %c0_i32 = arith.constant 0 : i32
    %0 = arith.cmpi eq, %arg2, %c0_i32 : i32
    %1 = arith.extui %0 : i1 to i32
    %c0_i32_0 = arith.constant 0 : i32
    %2 = arith.cmpi ne, %1, %c0_i32_0 : i32
    scf.if %2 {
      %cst_12 = arith.constant 0.000000e+00 : f32
      %14 = vector.broadcast %cst_12 : f32 to vector<64x64xf32>
      %c0_13 = arith.constant 0 : index
      %c0_14 = arith.constant 0 : index
      %15 = vector.load %arg6[%c0_13, %c0_14] : memref<64x64xf32, #tpu.memory_space<vmem>>, vector<64x64xf32>
      tpu.vector_store %arg6[%c0_13, %c0_14], %14 {strides = array<i32>} : memref<64x64xf32, #tpu.memory_space<vmem>>, vector<64x64xf32>,
    } else {
    }
    %c0 = arith.constant 0 : index
    %c0_1 = arith.constant 0 : index
    %3 = vector.load %arg6[%c0, %c0_1] : memref<64x64xf32, #tpu.memory_space<vmem>>, vector<64x64xf32>
    %c0_2 = arith.constant 0 : index
    %c0_3 = arith.constant 0 : index
    %c0_4 = arith.constant 0 : index
    %4 = vector.load %arg3[%c0_2, %c0_3, %c0_4] : memref<1x64x16xbf16, #tpu.memory_space<vmem>>, vector<1x64x16xbf16>
    %5 = vector.shape_cast %4 : vector<1x64x16xbf16> to vector<64x16xbf16>
    %c0_5 = arith.constant 0 : index
    %c0_6 = arith.constant 0 : index
    %c0_7 = arith.constant 0 : index
    %6 = vector.load %arg4[%c0_5, %c0_6, %c0_7] : memref<1x16x64xbf16, #tpu.memory_space<vmem>>, vector<1x16x64xbf16>
    %7 = vector.shape_cast %6 : vector<1x16x64xbf16> to vector<16x64xbf16>
    %cst = arith.constant dense<0.000000e+00> : vector<64x64xf32>
    %8 = tpu.matmul %5, %7, %cst {dimension_numbers = #tpu.dot_dimension_numbers<[1], [0], [0], [1], [0, 0, 1, 1], [], []>} : vector<64x16xbf16>, vector<16x64xbf16>, vector<64x64xf32> -> vector<64x64xf32>
    %9 = arith.addf %3, %8 : vector<64x64xf32>
    %c0_8 = arith.constant 0 : index
    %c0_9 = arith.constant 0 : index
    %10 = vector.load %arg6[%c0_8, %c0_9] : memref<64x64xf32, #tpu.memory_space<vmem>>, vector<64x64xf32>
    tpu.vector_store %arg6[%c0_8, %c0_9], %9 {strides = array<i32>} : memref<64x64xf32, #tpu.memory_space<vmem>>, vector<64x64xf32>,
    %c0_i32_10 = arith.constant 0 : i32
    %11 = arith.cmpi eq, %arg2, %c0_i32_10 : i32
    %12 = arith.extui %11 : i1 to i32
    %c0_i32_11 = arith.constant 0 : i32
    %13 = arith.cmpi ne, %12, %c0_i32_11 : i32
    scf.if %13 {
      %c0_12 = arith.constant 0 : index
      %c0_13 = arith.constant 0 : index
      %14 = vector.load %arg6[%c0_12, %c0_13] : memref<64x64xf32, #tpu.memory_space<vmem>>, vector<64x64xf32>
      %cst_14 = arith.constant dense<0xFF800000> : vector<64xf32>
      %15 = vector.multi_reduction <maximumf>, %14, %cst_14 [1] : vector<64x64xf32> to vector<64xf32>
      %16 = vector.shape_cast %15 : vector<64xf32> to vector<64x1xf32>
      %cst_15 = arith.constant 1.000000e+00 : f32
      %17 = vector.broadcast %cst_15 : f32 to vector<64x1xf32>
      %18 = arith.subf %17, %16 : vector<64x1xf32>
      %cst_16 = arith.constant 0.000000e+00 : f32
      %19 = vector.broadcast %cst_16 : f32 to vector<64x1xf32>
      %20 = arith.maximumf %18, %19 : vector<64x1xf32>
      %cst_17 = arith.constant 9.99999974E-6 : f32
      %21 = vector.broadcast %cst_17 : f32 to vector<64x1xf32>
      %22 = arith.addf %20, %21 : vector<64x1xf32>
      %cst_18 = arith.constant 2.000000e+00 : f32
      %23 = vector.broadcast %cst_18 : f32 to vector<64x1xf32>
      %24 = arith.divf %23, %22 : vector<64x1xf32>
      %25 = vector.broadcast %16 : vector<64x1xf32> to vector<64x64xf32>
      %26 = arith.subf %14, %25 : vector<64x64xf32>
      %27 = vector.broadcast %24 : vector<64x1xf32> to vector<64x64xf32>
      %28 = arith.mulf %27, %26 : vector<64x64xf32>
      %29 = math.exp %28 : vector<64x64xf32>
      %cst_19 = arith.constant dense<0.000000e+00> : vector<64xf32>
      %30 = vector.multi_reduction <add>, %29, %cst_19 [1] : vector<64x64xf32> to vector<64xf32>
      %31 = vector.shape_cast %30 : vector<64xf32> to vector<64x1xf32>
      %32 = tpu.reciprocal %31 {approx = true} : vector<64x1xf32> -> vector<64x1xf32>
      %c64_i32 = arith.constant 64 : i32
      %33 = arith.muli %arg1, %c64_i32 : i32
      %34 = tpu.iota {dimensions = array<i32: 0>} : vector<64x1xi32>
      %35 = vector.broadcast %33 : i32 to vector<64x1xi32>
      %36 = arith.addi %35, %34 : vector<64x1xi32>
      %c64_i32_20 = arith.constant 64 : i32
      %37 = vector.broadcast %c64_i32_20 : i32 to vector<64x1xi32>
      %38 = arith.cmpi slt, %36, %37 : vector<64x1xi32>
      %cst_21 = arith.constant 0.000000e+00 : f32
      %39 = vector.broadcast %cst_21 : f32 to vector<64x1xf32>
      %40 = arith.select %38, %32, %39 : vector<64x1xi1>, vector<64x1xf32>
      %41 = vector.shape_cast %40 : vector<64x1xf32> to vector<1x64x1xf32>
      %cst_22 = arith.constant dense<0.000000e+00> : vector<1xf32>
      %42 = vector.multi_reduction <add>, %41, %cst_22 [1, 2] : vector<1x64x1xf32> to vector<1xf32>
      %43 = vector.shape_cast %42 : vector<1xf32> to vector<1x1x1xf32>
      %44 = vector.extract %43[0, 0, 0] : f32 from vector<1x1x1xf32>
      %45 = vector.broadcast %44 : f32 to vector<1x1xf32>
      %46 = vector.shape_cast %45 : vector<1x1xf32> to vector<1x1x1x1xf32>
      %c0_23 = arith.constant 0 : index
      %c0_24 = arith.constant 0 : index
      %c0_25 = arith.constant 0 : index
      %c0_26 = arith.constant 0 : index
      %47 = vector.load %arg5[%c0_23, %c0_24, %c0_25, %c0_26] : memref<1x1x1x1xf32, #tpu.memory_space<vmem>>, vector<1x1x1x1xf32>
      tpu.vector_store %arg5[%c0_23, %c0_24, %c0_25, %c0_26], %46 {strides = array<i32>} : memref<1x1x1x1xf32, #tpu.memory_space<vmem>>, vector<1x1x1x1xf32>,
    } else {
    }
    return
  }
  func.func @transform_0(%arg0: i32, %arg1: i32, %arg2: i32) -> (i32, i32, i32) {
    %c0_i32 = arith.constant 0 : i32
    return %arg0, %arg1, %arg2 : i32, i32, i32
  }
  func.func @transform_1(%arg0: i32, %arg1: i32, %arg2: i32) -> (i32, i32, i32) {
    %c0_i32 = arith.constant 0 : i32
    %c0_i32_0 = arith.constant 0 : i32
    return %arg0, %arg2, %c0_i32 : i32, i32, i32
  }
  func.func @transform_2(%arg0: i32, %arg1: i32, %arg2: i32) -> (i32, i32, i32, i32) {
    %c0_i32 = arith.constant 0 : i32
    %c0_i32_0 = arith.constant 0 : i32
    %c0_i32_1 = arith.constant 0 : i32
    return %arg0, %arg1, %c0_i32, %c0_i32_0 : i32, i32, i32, i32
  }
}

module attributes {stable_mosaic.version = 11 : i64} {
  func.func @_cx_kernel(%arg0: i32, %arg1: i32, %arg2: i32, %arg3: memref<1x128x8xbf16, #tpu.memory_space<vmem>>, %arg4: memref<1x8x256xbf16, #tpu.memory_space<vmem>>, %arg5: memref<1x1x1x1xf32, #tpu.memory_space<vmem>>, %arg6: memref<128x256xf32, #tpu.memory_space<vmem>>) attributes {dimension_semantics = [#tpu.dimension_semantics<parallel>, #tpu.dimension_semantics<parallel>, #tpu.dimension_semantics<arbitrary>], iteration_bounds = array<i64: 2, 2, 1>, scalar_prefetch = 0 : i64, scratch_operands = 1 : i64, tpu.core_type = #tpu.core_type<tc>, window_params = [{transform_indices = @transform_0, window_bounds = array<i64: 1, 128, 8>}, {transform_indices = @transform_1, window_bounds = array<i64: 1, 8, 256>}, {transform_indices = @transform_2, window_bounds = array<i64: 1, 1, 1, 1>}]} {
    %c0_i32 = arith.constant 0 : i32
    %0 = arith.cmpi eq, %arg2, %c0_i32 : i32
    %1 = arith.extui %0 : i1 to i32
    %c0_i32_0 = arith.constant 0 : i32
    %2 = arith.cmpi ne, %1, %c0_i32_0 : i32
    scf.if %2 {
      %cst_12 = arith.constant 0.000000e+00 : f32
      %14 = vector.broadcast %cst_12 : f32 to vector<128x256xf32>
      %c0_13 = arith.constant 0 : index
      %c0_14 = arith.constant 0 : index
      %15 = vector.load %arg6[%c0_13, %c0_14] : memref<128x256xf32, #tpu.memory_space<vmem>>, vector<128x256xf32>
      tpu.vector_store %arg6[%c0_13, %c0_14], %14 {strides = array<i32>} : memref<128x256xf32, #tpu.memory_space<vmem>>, vector<128x256xf32>,
    } else {
    }
    %c0 = arith.constant 0 : index
    %c0_1 = arith.constant 0 : index
    %3 = vector.load %arg6[%c0, %c0_1] : memref<128x256xf32, #tpu.memory_space<vmem>>, vector<128x256xf32>
    %c0_2 = arith.constant 0 : index
    %c0_3 = arith.constant 0 : index
    %c0_4 = arith.constant 0 : index
    %4 = vector.load %arg3[%c0_2, %c0_3, %c0_4] : memref<1x128x8xbf16, #tpu.memory_space<vmem>>, vector<1x128x8xbf16>
    %5 = vector.shape_cast %4 : vector<1x128x8xbf16> to vector<128x8xbf16>
    %c0_5 = arith.constant 0 : index
    %c0_6 = arith.constant 0 : index
    %c0_7 = arith.constant 0 : index
    %6 = vector.load %arg4[%c0_5, %c0_6, %c0_7] : memref<1x8x256xbf16, #tpu.memory_space<vmem>>, vector<1x8x256xbf16>
    %7 = vector.shape_cast %6 : vector<1x8x256xbf16> to vector<8x256xbf16>
    %cst = arith.constant dense<0.000000e+00> : vector<128x256xf32>
    %8 = tpu.matmul %5, %7, %cst {dimension_numbers = #tpu.dot_dimension_numbers<[1], [0], [0], [1], [0, 0, 1, 1], [], []>} : vector<128x8xbf16>, vector<8x256xbf16>, vector<128x256xf32> -> vector<128x256xf32>
    %9 = arith.addf %3, %8 : vector<128x256xf32>
    %c0_8 = arith.constant 0 : index
    %c0_9 = arith.constant 0 : index
    %10 = vector.load %arg6[%c0_8, %c0_9] : memref<128x256xf32, #tpu.memory_space<vmem>>, vector<128x256xf32>
    tpu.vector_store %arg6[%c0_8, %c0_9], %9 {strides = array<i32>} : memref<128x256xf32, #tpu.memory_space<vmem>>, vector<128x256xf32>,
    %c0_i32_10 = arith.constant 0 : i32
    %11 = arith.cmpi eq, %arg2, %c0_i32_10 : i32
    %12 = arith.extui %11 : i1 to i32
    %c0_i32_11 = arith.constant 0 : i32
    %13 = arith.cmpi ne, %12, %c0_i32_11 : i32
    scf.if %13 {
      %c0_12 = arith.constant 0 : index
      %c0_13 = arith.constant 0 : index
      %14 = vector.load %arg6[%c0_12, %c0_13] : memref<128x256xf32, #tpu.memory_space<vmem>>, vector<128x256xf32>
      %cst_14 = arith.constant dense<0xFF800000> : vector<128xf32>
      %15 = vector.multi_reduction <maximumf>, %14, %cst_14 [1] : vector<128x256xf32> to vector<128xf32>
      %16 = vector.shape_cast %15 : vector<128xf32> to vector<128x1xf32>
      %cst_15 = arith.constant 1.000000e+00 : f32
      %17 = vector.broadcast %cst_15 : f32 to vector<128x1xf32>
      %18 = arith.subf %17, %16 : vector<128x1xf32>
      %cst_16 = arith.constant 0.000000e+00 : f32
      %19 = vector.broadcast %cst_16 : f32 to vector<128x1xf32>
      %20 = arith.maximumf %18, %19 : vector<128x1xf32>
      %cst_17 = arith.constant 9.99999974E-6 : f32
      %21 = vector.broadcast %cst_17 : f32 to vector<128x1xf32>
      %22 = arith.addf %20, %21 : vector<128x1xf32>
      %cst_18 = arith.constant 2.000000e+00 : f32
      %23 = vector.broadcast %cst_18 : f32 to vector<128x1xf32>
      %24 = arith.divf %23, %22 : vector<128x1xf32>
      %25 = vector.broadcast %16 : vector<128x1xf32> to vector<128x256xf32>
      %26 = arith.subf %14, %25 : vector<128x256xf32>
      %27 = vector.broadcast %24 : vector<128x1xf32> to vector<128x256xf32>
      %28 = arith.mulf %27, %26 : vector<128x256xf32>
      %29 = math.exp %28 : vector<128x256xf32>
      %cst_19 = arith.constant dense<0.000000e+00> : vector<128xf32>
      %30 = vector.multi_reduction <add>, %29, %cst_19 [1] : vector<128x256xf32> to vector<128xf32>
      %31 = vector.shape_cast %30 : vector<128xf32> to vector<128x1xf32>
      %32 = tpu.reciprocal %31 {approx = true} : vector<128x1xf32> -> vector<128x1xf32>
      %c128_i32 = arith.constant 128 : i32
      %33 = arith.muli %arg1, %c128_i32 : i32
      %34 = tpu.iota {dimensions = array<i32: 0>} : vector<128x1xi32>
      %35 = vector.broadcast %33 : i32 to vector<128x1xi32>
      %36 = arith.addi %35, %34 : vector<128x1xi32>
      %c256_i32 = arith.constant 256 : i32
      %37 = vector.broadcast %c256_i32 : i32 to vector<128x1xi32>
      %38 = arith.cmpi slt, %36, %37 : vector<128x1xi32>
      %cst_20 = arith.constant 0.000000e+00 : f32
      %39 = vector.broadcast %cst_20 : f32 to vector<128x1xf32>
      %40 = arith.select %38, %32, %39 : vector<128x1xi1>, vector<128x1xf32>
      %41 = vector.shape_cast %40 : vector<128x1xf32> to vector<1x128x1xf32>
      %cst_21 = arith.constant dense<0.000000e+00> : vector<1xf32>
      %42 = vector.multi_reduction <add>, %41, %cst_21 [1, 2] : vector<1x128x1xf32> to vector<1xf32>
      %43 = vector.shape_cast %42 : vector<1xf32> to vector<1x1x1xf32>
      %44 = vector.extract %43[0, 0, 0] : f32 from vector<1x1x1xf32>
      %45 = vector.broadcast %44 : f32 to vector<1x1xf32>
      %46 = vector.shape_cast %45 : vector<1x1xf32> to vector<1x1x1x1xf32>
      %c0_22 = arith.constant 0 : index
      %c0_23 = arith.constant 0 : index
      %c0_24 = arith.constant 0 : index
      %c0_25 = arith.constant 0 : index
      %47 = vector.load %arg5[%c0_22, %c0_23, %c0_24, %c0_25] : memref<1x1x1x1xf32, #tpu.memory_space<vmem>>, vector<1x1x1x1xf32>
      tpu.vector_store %arg5[%c0_22, %c0_23, %c0_24, %c0_25], %46 {strides = array<i32>} : memref<1x1x1x1xf32, #tpu.memory_space<vmem>>, vector<1x1x1x1xf32>,
    } else {
    }
    return
  }
  func.func @transform_0(%arg0: i32, %arg1: i32, %arg2: i32) -> (i32, i32, i32) {
    %c0_i32 = arith.constant 0 : i32
    return %arg0, %arg1, %arg2 : i32, i32, i32
  }
  func.func @transform_1(%arg0: i32, %arg1: i32, %arg2: i32) -> (i32, i32, i32) {
    %c0_i32 = arith.constant 0 : i32
    %c0_i32_0 = arith.constant 0 : i32
    return %arg0, %arg2, %c0_i32 : i32, i32, i32
  }
  func.func @transform_2(%arg0: i32, %arg1: i32, %arg2: i32) -> (i32, i32, i32, i32) {
    %c0_i32 = arith.constant 0 : i32
    %c0_i32_0 = arith.constant 0 : i32
    %c0_i32_1 = arith.constant 0 : i32
    return %arg0, %arg1, %c0_i32, %c0_i32_0 : i32, i32, i32, i32
  }
}

</mosaic_0001>

<llo_original>
// kernel: cobi_rgb_loss.13
$region0: #{cobi_rgb_loss.13}
  #allocation0 [shape = 'u32[]', space=smem, size = 0x4, offset = 0x4, fixed_abs, tag = 'smem constant byte address 0x4 - core index']
  #allocation1 [shape = 'u32[144,128]{1,0:T(1,128)}', space=vmem, size = 0x12000, scoped, tag = 'internal scratch']
  #allocation2 [shape = 'f32[100,100]{1,0:T(8,128)}', space=vmem, size = 0xd000, scoped, tag = 'scratch operand']
  %s0 = inlined_call_operand.vmem [shape: bf16[2,100,147], index: 0, kind: input, shape index: {}]
  %s1 = inlined_call_operand.vmem [shape: bf16[2,147,100], index: 1, kind: input, shape index: {}]
  %s2 = inlined_call_operand.vmem [shape: f32[2,1,1,1], index: 2, kind: output, shape index: {}]
  %s3 = sld [smem:[#allocation0]]
  $region49: #{cobi_rgb_loss.13} parent=0
    _
  %s5 = ssub.s32 1, %s3
  %s6 = scalar_select 0, %s5, %s3
  loop: start=0, step=1, limit=4
  $region2: #{cobi_rgb_loss.13} parent=0 // loop_pre_header
    _
  $region3: #{cobi_rgb_loss.13} parent=0 // loop_header
    %s8 = sphi 0, %s12
    %p9 = scmp.ge.s32.totalorder %s8, 4
    %s15 = sphi 0, %s34
    %s16 = sphi 0, %s30
    %s17 = sphi 0, %s26
    %s18 = sphi 0, %s15
    %s19 = sphi 0, %s16
    %s20 = sphi 0, %s17
    %s21 = sphi 0, %s18
    %s22 = sphi 0, %s19
    %s23 = sphi 0, %s20
    %s41 = sphi 0, %s43
    %s44 = sphi 0, %s41
    %s45 = sphi 0, %s44
    %s61 = sphi 0, %s45
    %s69 = sphi 0, %s71
    %s72 = sphi 0, %s69
    %s73 = sphi 0, %s72
    %s89 = sphi 0, %s73
    %s97 = sphi 0, %s99
    %s100 = sphi 0, %s97
    %s101 = sphi 0, %s100
    %s117 = sphi 0, %s101
  $region4: #{cobi_rgb_loss.13} parent=0 // loop_header_branch
    %11 = sbr.rel (%p9) target = $region8
  $region5: #{cobi_rgb_loss.13} parent=0 // loop_body
    %s13 = ssub.s32 %s8, 1
    %s14 = ssub.s32 %s8, 2
    %s24 = sadd.s32 1, %s17
    %p25 = scmp.ge.s32.totalorder %s24, 1
    %s26 = scalar_select %p25, 0, %s24
    %s27 = sadd.s32 1, %s16
    %s28 = scalar_select %p25, %s27, %s16
    %p29 = scmp.ge.s32.totalorder %s28, 1
    %s30 = scalar_select %p29, 0, %s28
    %s31 = sadd.s32 1, %s15
    %s32 = scalar_select %p29, %s31, %s15
    %p33 = scmp.ge.s32.totalorder %s32, 2
    %s34 = scalar_select %p33, 0, %s32
    %s35 = ssub.s32 %s15, %s34
    %s36 = ssub.s32 %s16, %s30
    %s37 = sor.u32 %s35, %s36
    %s38 = ssub.s32 %s17, %s26
    %s39 = sor.u32 %s37, %s38
    %p40 = scmp.eq.s32.totalorder %s39, 0
    %s42 = sadd.s32 %s41, 1
    %s43 = scalar_select %p40, %s41, %s42
    %p46 = pneg %p40
    %p47 = scmp.eq.s32.totalorder %s8, 1
    %p48 = por %p46, %p47
    %p49 = scmp.ne.s32.totalorder %s41, %s44
    %p50 = scmp.eq.s32.totalorder %s8, 0
    %p51 = por %p49, %p50
    %p52 = scmp.ne.s32.totalorder %s41, %s44
    %p53 = scmp.eq.s32.totalorder %s13, 1
    %p54 = por %p52, %p53
    %p55 = scmp.ne.s32.totalorder %s44, %s45
    %p56 = scmp.eq.s32.totalorder %s13, 0
    %p57 = por %p55, %p56
    %p58 = scmp.ne.s32.totalorder %s44, %s45
    %p59 = scmp.eq.s32.totalorder %s14, 1
    %p60 = por %p58, %p59
    %p62 = scmp.ne.s32.totalorder %s45, %s61
    %p63 = scmp.eq.s32.totalorder %s14, 0
    %p64 = por %p62, %p63
    %s65 = ssub.s32 %s15, %s34
    %s66 = ssub.s32 %s17, %s26
    %s67 = sor.u32 %s65, %s66
    %p68 = scmp.eq.s32.totalorder %s67, 0
    %s70 = sadd.s32 %s69, 1
    %s71 = scalar_select %p68, %s69, %s70
    %p74 = pneg %p68
    %p75 = scmp.eq.s32.totalorder %s8, 1
    %p76 = por %p74, %p75
    %p77 = scmp.ne.s32.totalorder %s69, %s72
    %p78 = scmp.eq.s32.totalorder %s8, 0
    %p79 = por %p77, %p78
    %p80 = scmp.ne.s32.totalorder %s69, %s72
    %p81 = scmp.eq.s32.totalorder %s13, 1
    %p82 = por %p80, %p81
    %p83 = scmp.ne.s32.totalorder %s72, %s73
    %p84 = scmp.eq.s32.totalorder %s13, 0
    %p85 = por %p83, %p84
    %p86 = scmp.ne.s32.totalorder %s72, %s73
    %p87 = scmp.eq.s32.totalorder %s14, 1
    %p88 = por %p86, %p87
    %p90 = scmp.ne.s32.totalorder %s73, %s89
    %p91 = scmp.eq.s32.totalorder %s14, 0
    %p92 = por %p90, %p91
    %s93 = ssub.s32 %s15, %s34
    %s94 = ssub.s32 %s16, %s30
    %s95 = sor.u32 %s93, %s94
    %p96 = scmp.eq.s32.totalorder %s95, 0
    %s98 = sadd.s32 %s97, 1
    %s99 = scalar_select %p96, %s97, %s98
    %p102 = pneg %p96
    %p103 = scmp.eq.s32.totalorder %s8, 1
    %p104 = por %p102, %p103
    %p105 = scmp.ne.s32.totalorder %s97, %s100
    %p106 = scmp.eq.s32.totalorder %s8, 0
    %p107 = por %p105, %p106
    %p108 = scmp.ne.s32.totalorder %s97, %s100
    %p109 = scmp.eq.s32.totalorder %s13, 1
    %p110 = por %p108, %p109
    %p111 = scmp.ne.s32.totalorder %s100, %s101
    %p112 = scmp.eq.s32.totalorder %s13, 0
    %p113 = por %p111, %p112
    %p114 = scmp.ne.s32.totalorder %s100, %s101
    %p115 = scmp.eq.s32.totalorder %s14, 1
    %p116 = por %p114, %p115
    %p118 = scmp.ne.s32.totalorder %s101, %s117
    %p119 = scmp.eq.s32.totalorder %s14, 0
    %p120 = por %p118, %p119
    %p121 = scmp.le.s32.totalorder 1, %s8
    %p122 = scmp.lt.s32.totalorder %s8, 3
    %p123 = pnand %p121, %p122
    %p124 = pneg %p123
    // Predicated region
    $region9: #{cobi_rgb_loss.13} parent=5 // pred_check
      _
    $region10: #{cobi_rgb_loss.13} parent=5 // pred_check_branch
      %126 = sbr.rel (%p123) target = $region12
    $region11: #{cobi_rgb_loss.13} parent=5 // pred_region
      %s127 = ssub.s32 %s8, 1
    $region12: #{cobi_rgb_loss.13} parent=5 // pred_fallthru
      _
    %p128 = scmp.lt.s32.totalorder %s8, 2
    // Predicated region
    $region13: #{cobi_rgb_loss.13} parent=5 // pred_check
      %p129 = pneg %p128
    $region14: #{cobi_rgb_loss.13} parent=5 // pred_check_branch
      %131 = sbr.rel (%p129) target = $region16
    $region15: #{cobi_rgb_loss.13} parent=5 // pred_region
      // Predicated region
      $region17: #{cobi_rgb_loss.13} parent=15 // pred_check
        %p132 = pneg %p51
      $region18: #{cobi_rgb_loss.13} parent=15 // pred_check_branch
        %134 = sbr.rel (%p132) target = $region20
      $region19: #{cobi_rgb_loss.13} parent=15 // pred_region
        %s135 = smul.u32 13, %s16
        %s136 = smul.u32 2, %s17
        %p137 = scmp.lt.s32.totalorder %s15, 1
        %s138 = scalar_select %p137, %s15, 1
        %p139 = scmp.lt.s32.totalorder %s135, 12
        %s140 = scalar_select %p139, %s135, 12
        %p141 = scmp.lt.s32.totalorder %s136, 1
        %s142 = scalar_select %p141, %s136, 1
        %s143 = smul.addr %s140, 2
        %s144 = sadd.s32 %s142, %s143
        %s145 = smul.addr %s138, 26
        %s146 = sadd.s32 %s144, %s145
        %s147 = smul.addr %s146, 4
        %s148 = scalar_lea.vmem %s0, %s147
        %s149 = smul.u32 13, %s16
        %s150 = smul.u32 2, %s17
      $region20: #{cobi_rgb_loss.13} parent=15 // pred_fallthru
        _
      // Predicated region
      $region21: #{cobi_rgb_loss.13} parent=15 // pred_check
        %p151 = pneg %p79
      $region22: #{cobi_rgb_loss.13} parent=15 // pred_check_branch
        %153 = sbr.rel (%p151) target = $region24
      $region23: #{cobi_rgb_loss.13} parent=15 // pred_region
        %s154 = smul.u32 19, %s17
        %p155 = scmp.lt.s32.totalorder %s15, 1
        %s156 = scalar_select %p155, %s15, 1
        %p157 = scmp.lt.s32.totalorder %s154, 18
        %s158 = scalar_select %p157, %s154, 18
        %s159 = smul.addr %s156, 19
        %s160 = sadd.s32 %s158, %s159
        %s161 = smul.addr %s160, 4
        %s162 = scalar_lea.vmem %s1, %s161
        %s163 = smul.u32 19, %s17
      $region24: #{cobi_rgb_loss.13} parent=15 // pred_fallthru
        _
    $region16: #{cobi_rgb_loss.13} parent=5 // pred_fallthru
      _
    %p164 = scmp.le.s32.totalorder 1, %s8
    %p165 = scmp.lt.s32.totalorder %s8, 3
    %p166 = pnand %p164, %p165
    %p167 = pneg %p166
    // Predicated region
    $region25: #{cobi_rgb_loss.13} parent=5 // pred_check
      _
    $region26: #{cobi_rgb_loss.13} parent=5 // pred_check_branch
      %169 = sbr.rel (%p166) target = $region28
    $region27: #{cobi_rgb_loss.13} parent=5 // pred_region
      %s170 = ssub.s32 %s8, 1
      %s171 = smul.u32 13, %s19
      %s172 = smul.u32 2, %s20
      %p173 = scmp.lt.s32.totalorder %s18, 1
      %s174 = scalar_select %p173, %s18, 1
      %p175 = scmp.lt.s32.totalorder %s171, 12
      %s176 = scalar_select %p175, %s171, 12
      %p177 = scmp.lt.s32.totalorder %s172, 1
      %s178 = scalar_select %p177, %s172, 1
      %s179 = smul.addr %s176, 2
      %s180 = sadd.s32 %s178, %s179
      %s181 = smul.addr %s174, 26
      %s182 = sadd.s32 %s180, %s181
      %s183 = smul.addr %s182, 4
      %s184 = scalar_lea.vmem %s0, %s183
      %p185 = pneg %p57
      %p186 = pneg %p54
      %s187 = smul.u32 19, %s20
      %p188 = scmp.lt.s32.totalorder %s18, 1
      %s189 = scalar_select %p188, %s18, 1
      %p190 = scmp.lt.s32.totalorder %s187, 18
      %s191 = scalar_select %p190, %s187, 18
      %s192 = smul.addr %s189, 19
      %s193 = sadd.s32 %s191, %s192
      %s194 = smul.addr %s193, 4
      %s195 = scalar_lea.vmem %s1, %s194
      %p196 = pneg %p85
      %p197 = pneg %p82
      %p198 = pneg %p113
      %p199 = pneg %p110
      %p200 = scmp.lt.s32.totalorder %s18, 1
      %s201 = scalar_select %p200, %s18, 1
      %p202 = scmp.lt.s32.totalorder %s19, 0
      %s203 = scalar_select %p202, %s19, 0
      %s204 = sadd.s32 %s203, %s201
      %s205 = scalar_lea.vmem %s2, %s204
      %s206 = smul.u32 13, %s19
      %s207 = smul.u32 2, %s20
      %p208 = scmp.lt.s32.totalorder %s18, 1
      %s209 = scalar_select %p208, %s18, 1
      %p210 = scmp.lt.s32.totalorder %s206, 12
      %s211 = scalar_select %p210, %s206, 12
      %p212 = scmp.lt.s32.totalorder %s207, 1
      %s213 = scalar_select %p212, %s207, 1
      %s214 = smul.addr %s211, 2
      %s215 = sadd.s32 %s213, %s214
      %s216 = smul.addr %s209, 26
      %s217 = sadd.s32 %s215, %s216
      %s218 = smul.addr %s217, 4
      %s219 = scalar_lea.vmem %s0, %s218
      %s220 = smul.u32 13, %s19
      %s221 = smul.u32 2, %s20
      %s222 = smul.u32 19, %s20
      %p223 = scmp.lt.s32.totalorder %s18, 1
      %s224 = scalar_select %p223, %s18, 1
      %p225 = scmp.lt.s32.totalorder %s222, 18
      %s226 = scalar_select %p225, %s222, 18
      %s227 = smul.addr %s224, 19
      %s228 = sadd.s32 %s226, %s227
      %s229 = smul.addr %s228, 4
      %s230 = scalar_lea.vmem %s1, %s229
      %s231 = smul.u32 19, %s20
      %p232 = scmp.lt.s32.totalorder %s18, 1
      %s233 = scalar_select %p232, %s18, 1
      %p234 = scmp.lt.s32.totalorder %s19, 0
      %s235 = scalar_select %p234, %s19, 0
      %s236 = sadd.s32 %s235, %s233
      %s237 = scalar_lea.vmem %s2, %s236
      %p239 = scmp.eq.s32.totalorder %s20, 0
      // Predicated region
      $region29: #{cobi_rgb_loss.13} parent=27 // pred_check
        %p240 = pneg %p239
      $region30: #{cobi_rgb_loss.13} parent=27 // pred_check_branch
        %242 = sbr.rel (%p240) target = $region32
      $region31: #{cobi_rgb_loss.13} parent=27 // pred_region
        %vm243 = vcmask 818176
        %244 = vst.msk [vmem:[#allocation2] sm:$0xff] %vm243, 0.0
        %245 = vst.msk [vmem:[#allocation2 + $0x8] sm:$0xff] %vm243, 0.0
        %246 = vst.msk [vmem:[#allocation2 + $0x10] sm:$0xff] %vm243, 0.0
        %247 = vst.msk [vmem:[#allocation2 + $0x18] sm:$0xff] %vm243, 0.0
        %248 = vst.msk [vmem:[#allocation2 + $0x20] sm:$0xff] %vm243, 0.0
        %249 = vst.msk [vmem:[#allocation2 + $0x28] sm:$0xff] %vm243, 0.0
        %250 = vst.msk [vmem:[#allocation2 + $0x30] sm:$0xff] %vm243, 0.0
        %251 = vst.msk [vmem:[#allocation2 + $0x38] sm:$0xff] %vm243, 0.0
        %252 = vst.msk [vmem:[#allocation2 + $0x40] sm:$0xff] %vm243, 0.0
        %253 = vst.msk [vmem:[#allocation2 + $0x48] sm:$0xff] %vm243, 0.0
        %254 = vst.msk [vmem:[#allocation2 + $0x50] sm:$0xff] %vm243, 0.0
        %255 = vst.msk [vmem:[#allocation2 + $0x58] sm:$0xff] %vm243, 0.0
        %vm256 = vcmask 814080
        %257 = vst.msk [vmem:[#allocation2 + $0x60] sm:$0xf] %vm256, 0.0
      $region32: #{cobi_rgb_loss.13} parent=27 // pred_fallthru
        _
      %v258 = vld [vmem:[#allocation2] sm:$0xff]
      %v259 = vld [vmem:[#allocation2 + $0x8] sm:$0xff]
      %v260 = vld [vmem:[#allocation2 + $0x10] sm:$0xff]
      %v261 = vld [vmem:[#allocation2 + $0x18] sm:$0xff]
      %v262 = vld [vmem:[#allocation2 + $0x20] sm:$0xff]
      %v263 = vld [vmem:[#allocation2 + $0x28] sm:$0xff]
      %v264 = vld [vmem:[#allocation2 + $0x30] sm:$0xff]
      %v265 = vld [vmem:[#allocation2 + $0x38] sm:$0xff]
      %v266 = vld [vmem:[#allocation2 + $0x40] sm:$0xff]
      %v267 = vld [vmem:[#allocation2 + $0x48] sm:$0xff]
      %v268 = vld [vmem:[#allocation2 + $0x50] sm:$0xff]
      %v269 = vld [vmem:[#allocation2 + $0x58] sm:$0xff]
      %v270 = vld [vmem:[#allocation2 + $0x60] sm:$0xf]
      %v271 = vld [vmem:[%s219] sm:$0xff]
      %v272 = vld [vmem:[%s219 + $0x8] sm:$0xff]
      %v273 = vld [vmem:[%s219 + $0x10] sm:$0xff]
      %v274 = vld [vmem:[%s219 + $0x18] sm:$0xff]
      %v275 = vld [vmem:[%s219 + $0x20] sm:$0xff]
      %v276 = vld [vmem:[%s219 + $0x28] sm:$0xff]
      %v277 = vld [vmem:[%s219 + $0x30] sm:$0xff]
      %v278 = vld [vmem:[%s219 + $0x38] sm:$0xff]
      %v279 = vld [vmem:[%s219 + $0x40] sm:$0xff]
      %v280 = vld [vmem:[%s219 + $0x48] sm:$0xff]
      %v281 = vld [vmem:[%s219 + $0x50] sm:$0xff]
      %v282 = vld [vmem:[%s219 + $0x58] sm:$0xff]
      %v283 = vld [vmem:[%s219 + $0x60] sm:$0x33]
      %v284 = vld [vmem:[%s230] sm:$0xf]
      %v285 = vld [vmem:[%s230 + $0x4] sm:$0xf]
      %v286 = vld [vmem:[%s230 + $0x8] sm:$0xf]
      %v287 = vld [vmem:[%s230 + $0xc] sm:$0xf]
      %v288 = vld [vmem:[%s230 + $0x10] sm:$0xf]
      %v289 = vld [vmem:[%s230 + $0x14] sm:$0xf]
      %v290 = vld [vmem:[%s230 + $0x18] sm:$0xf]
      %v291 = vld [vmem:[%s230 + $0x1c] sm:$0xf]
      %v292 = vld [vmem:[%s230 + $0x20] sm:$0xf]
      %v293 = vld [vmem:[%s230 + $0x24] sm:$0xf]
      %v294 = vld [vmem:[%s230 + $0x28] sm:$0xf]
      %v295 = vld [vmem:[%s230 + $0x2c] sm:$0xf]
      %v296 = vld [vmem:[%s230 + $0x30] sm:$0xf]
      %v297 = vld [vmem:[%s230 + $0x34] sm:$0xf]
      %v298 = vld [vmem:[%s230 + $0x38] sm:$0xf]
      %v299 = vld [vmem:[%s230 + $0x3c] sm:$0xf]
      %v300 = vld [vmem:[%s230 + $0x40] sm:$0xf]
      %v301 = vld [vmem:[%s230 + $0x44] sm:$0xf]
      %v302 = vld [vmem:[%s230 + $0x48] sm:$0x3]
      %v316 = vunpack.c.l.b16 %v271
      %v317 = vunpack.c.h.b16 %v271
      %v318 = vunpack.c.l.b16 %v272
      %v319 = vunpack.c.h.b16 %v272
      %v320 = vunpack.c.l.b16 %v273
      %v321 = vunpack.c.h.b16 %v273
      %v322 = vunpack.c.l.b16 %v274
      %v323 = vunpack.c.h.b16 %v274
      %v324 = vunpack.c.l.b16 %v275
      %v325 = vunpack.c.h.b16 %v275
      %v326 = vunpack.c.l.b16 %v276
      %v327 = vunpack.c.h.b16 %v276
      %v328 = vunpack.c.l.b16 %v277
      %v329 = vunpack.c.h.b16 %v277
      %v330 = vunpack.c.l.b16 %v278
      %v331 = vunpack.c.h.b16 %v278
      %v332 = vunpack.c.l.b16 %v279
      %v333 = vunpack.c.h.b16 %v279
      %v334 = vunpack.c.l.b16 %v280
      %v335 = vunpack.c.h.b16 %v280
      %v336 = vunpack.c.l.b16 %v281
      %v337 = vunpack.c.h.b16 %v281
      %v338 = vunpack.c.l.b16 %v282
      %v339 = vunpack.c.h.b16 %v282
      %v340 = vunpack.c.l.b16 %v283
      %v341 = vunpack.c.h.b16 %v283
      %v342 = vpack.c.b16 %v318, %v316
      %v343 = vpack.c.b16 %v319, %v317
      %v344 = vpack.c.b16 %v322, %v320
      %v345 = vpack.c.b16 %v323, %v321
      %v346 = vpack.c.b16 %v326, %v324
      %v347 = vpack.c.b16 %v327, %v325
      %v348 = vpack.c.b16 %v330, %v328
      %v349 = vpack.c.b16 %v331, %v329
      %v350 = vpack.c.b16 %v334, %v332
      %v351 = vpack.c.b16 %v335, %v333
      %v352 = vpack.c.b16 %v338, %v336
      %v353 = vpack.c.b16 %v339, %v337
      %v354 = vpack.c.b16 %v340, %v340
      %v355 = vpack.c.b16 %v341, %v341
      %v382 = vunpack.c.l.b16 %v284
      %v383 = vunpack.c.l.b16 %v285
      %v384 = vunpack.c.l.b16 %v286
      %v385 = vunpack.c.l.b16 %v287
      %v386 = vunpack.c.l.b16 %v288
      %v387 = vunpack.c.l.b16 %v289
      %v388 = vunpack.c.l.b16 %v290
      %v389 = vunpack.c.l.b16 %v291
      %v390 = vunpack.c.l.b16 %v292
      %v391 = vunpack.c.l.b16 %v293
      %v392 = vunpack.c.l.b16 %v294
      %v393 = vunpack.c.l.b16 %v295
      %v394 = vunpack.c.l.b16 %v296
      %v395 = vunpack.c.l.b16 %v297
      %v396 = vunpack.c.l.b16 %v298
      %v397 = vunpack.c.l.b16 %v299
      %v398 = vunpack.c.l.b16 %v300
      %v399 = vunpack.c.l.b16 %v301
      %v400 = vunpack.c.l.b16 %v302
      %v401 = vpack.c.b16 %v383, %v382
      %v402 = vpack.c.b16 %v385, %v384
      %v403 = vpack.c.b16 %v387, %v386
      %v404 = vpack.c.b16 %v389, %v388
      %v405 = vpack.c.b16 %v391, %v390
      %v406 = vpack.c.b16 %v393, %v392
      %v407 = vpack.c.b16 %v395, %v394
      %v408 = vpack.c.b16 %v397, %v396
      %v409 = vpack.c.b16 %v399, %v398
      %v410 = vpack.c.b16 %v400, %v400
      %vm420 = vcmask 154624
      %v422 = vsel %vm420, %v343, 0
      %v425 = vsel %vm420, %v345, 0
      %v428 = vsel %vm420, %v347, 0
      %v431 = vsel %vm420, %v349, 0
      %v434 = vsel %vm420, %v351, 0
      %v437 = vsel %vm420, %v353, 0
      %v440 = vsel %vm420, %v355, 0
      %vm442 = vcmask 1040384
      %vm443 = vcmask 1041408
      %v444 = vsel %vm442, 4294967295, 65535
      %v445 = vsel %vm443, %v444, 0
      %v447 = vand.u32 %v410, %v445
      %449 = vmatprep.subr.bf16.mxu0 0
      %450 = vmatpush1.bf16.msra.mxu0 %v401
      %451 = vmatprep.subr.bf16.mxu0 0
      %452 = vmatpush1.bf16.msra.mxu0 %v402
      %453 = vmatprep.subr.bf16.mxu0 0
      %454 = vmatpush1.bf16.msra.mxu0 %v403
      %455 = vmatprep.subr.bf16.mxu0 0
      %456 = vmatpush1.bf16.msra.mxu0 %v404
      %457 = vmatprep.subr.bf16.mxu0 0
      %458 = vmatpush1.bf16.msra.mxu0 %v405
      %459 = vmatprep.subr.bf16.mxu0 0
      %460 = vmatpush1.bf16.msra.mxu0 %v406
      %461 = vmatprep.subr.bf16.mxu0 0
      %462 = vmatpush1.bf16.msra.mxu0 %v407
      %463 = vmatprep.subr.bf16.mxu0 0
      %464 = vmatpush1.bf16.msra.mxu0 %v408
      %465 = vmatprep.subr.bf16.mxu0 0
      %466 = vmatpush1.bf16.msra.mxu0 %v409
      %467 = vmatprep.subr.bf16.mxu0 0
      %468 = vmatpush1.bf16.msra.mxu0 %v447
      %469 = vmatprep.subr.bf16.mxu0 0
      %470 = vmatpush1.bf16.msra.mxu0 0
      %471 = vmatprep.subr.bf16.mxu0 0
      %472 = vmatpush1.bf16.msra.mxu0 0
      %473 = vmatprep.subr.bf16.mxu0 0
      %474 = vmatpush1.bf16.msra.mxu0 0
      %475 = vmatprep.subr.bf16.mxu0 0
      %476 = vmatpush1.bf16.msra.mxu0 0
      %477 = vmatprep.subr.bf16.mxu0 0
      %478 = vmatpush1.bf16.msra.mxu0 0
      %479 = vmatprep.subr.bf16.mxu0 0
      %480 = vmatpush1.bf16.msra.mxu0 0
      %481 = vmatprep.mubr.bf16.mxu0 %v422
      %482 = vmatmul.mubr.bf16.gmra.mrb[0].mxu0 %v342
      %v483 = vpop.f32.mrb[0].mxu0
      %v484 = vadd.f32 0.0, %v483
      %v485 = vpop.f32.mrb[0].mxu0
      %v486 = vpop.f32.mrb[0].mxu0
      %v487 = vadd.f32 0.0, %v486
      %v488 = vpop.f32.mrb[0].mxu0
      %489 = vmatprep.mubr.bf16.mxu0 %v425
      %490 = vmatmul.mubr.bf16.gmra.mrb[0].mxu0 %v344
      %v491 = vpop.f32.mrb[0].mxu0
      %v492 = vadd.f32 0.0, %v491
      %v493 = vpop.f32.mrb[0].mxu0
      %v494 = vpop.f32.mrb[0].mxu0
      %v495 = vadd.f32 0.0, %v494
      %v496 = vpop.f32.mrb[0].mxu0
      %497 = vmatprep.mubr.bf16.mxu0 %v428
      %498 = vmatmul.mubr.bf16.gmra.mrb[0].mxu0 %v346
      %v499 = vpop.f32.mrb[0].mxu0
      %v500 = vadd.f32 0.0, %v499
      %v501 = vpop.f32.mrb[0].mxu0
      %v502 = vpop.f32.mrb[0].mxu0
      %v503 = vadd.f32 0.0, %v502
      %v504 = vpop.f32.mrb[0].mxu0
      %505 = vmatprep.mubr.bf16.mxu0 %v431
      %506 = vmatmul.mubr.bf16.gmra.mrb[0].mxu0 %v348
      %v507 = vpop.f32.mrb[0].mxu0
      %v508 = vadd.f32 0.0, %v507
      %v509 = vpop.f32.mrb[0].mxu0
      %v510 = vpop.f32.mrb[0].mxu0
      %v511 = vadd.f32 0.0, %v510
      %v512 = vpop.f32.mrb[0].mxu0
      %513 = vmatprep.mubr.bf16.mxu0 %v434
      %514 = vmatmul.mubr.bf16.gmra.mrb[0].mxu0 %v350
      %v515 = vpop.f32.mrb[0].mxu0
      %v516 = vadd.f32 0.0, %v515
      %v517 = vpop.f32.mrb[0].mxu0
      %v518 = vpop.f32.mrb[0].mxu0
      %v519 = vadd.f32 0.0, %v518
      %v520 = vpop.f32.mrb[0].mxu0
      %521 = vmatprep.mubr.bf16.mxu0 %v437
      %522 = vmatmul.mubr.bf16.gmra.mrb[0].mxu0 %v352
      %v523 = vpop.f32.mrb[0].mxu0
      %v524 = vadd.f32 0.0, %v523
      %v525 = vpop.f32.mrb[0].mxu0
      %v526 = vpop.f32.mrb[0].mxu0
      %v527 = vadd.f32 0.0, %v526
      %v528 = vpop.f32.mrb[0].mxu0
      %529 = vmatprep.mubr.bf16.mxu0 %v440
      %530 = vmatmul.mubr.bf16.gmra.mrb[0].mxu0 %v354
      %v531 = vpop.f32.mrb[0].mxu0
      %v532 = vadd.f32 0.0, %v531
      %v533 = vpop.f32.mrb[0].mxu0
      %v534 = vpop.f32.mrb[0].mxu0
      %v535 = vpop.f32.mrb[0].mxu0
      %536 = vdwg.mxu0
      %v537 = vadd.f32 %v258, %v484
      %v538 = vadd.f32 %v259, %v487
      %v539 = vadd.f32 %v260, %v492
      %v540 = vadd.f32 %v261, %v495
      %v541 = vadd.f32 %v262, %v500
      %v542 = vadd.f32 %v263, %v503
      %v543 = vadd.f32 %v264, %v508
      %v544 = vadd.f32 %v265, %v511
      %v545 = vadd.f32 %v266, %v516
      %v546 = vadd.f32 %v267, %v519
      %v547 = vadd.f32 %v268, %v524
      %v548 = vadd.f32 %v269, %v527
      %v549 = vadd.f32 %v270, %v532
      %vm550 = vcmask 818176
      %551 = vst.msk [vmem:[#allocation2] sm:$0xff] %vm550, %v537
      %552 = vst.msk [vmem:[#allocation2 + $0x8] sm:$0xff] %vm550, %v538
      %553 = vst.msk [vmem:[#allocation2 + $0x10] sm:$0xff] %vm550, %v539
      %554 = vst.msk [vmem:[#allocation2 + $0x18] sm:$0xff] %vm550, %v540
      %555 = vst.msk [vmem:[#allocation2 + $0x20] sm:$0xff] %vm550, %v541
      %556 = vst.msk [vmem:[#allocation2 + $0x28] sm:$0xff] %vm550, %v542
      %557 = vst.msk [vmem:[#allocation2 + $0x30] sm:$0xff] %vm550, %v543
      %558 = vst.msk [vmem:[#allocation2 + $0x38] sm:$0xff] %vm550, %v544
      %559 = vst.msk [vmem:[#allocation2 + $0x40] sm:$0xff] %vm550, %v545
      %560 = vst.msk [vmem:[#allocation2 + $0x48] sm:$0xff] %vm550, %v546
      %561 = vst.msk [vmem:[#allocation2 + $0x50] sm:$0xff] %vm550, %v547
      %562 = vst.msk [vmem:[#allocation2 + $0x58] sm:$0xff] %vm550, %v548
      %vm563 = vcmask 814080
      %564 = vst.msk [vmem:[#allocation2 + $0x60] sm:$0xf] %vm563, %v549
      // Predicated region
      $region33: #{cobi_rgb_loss.13} parent=27 // pred_check
        %p565 = pneg %p239
      $region34: #{cobi_rgb_loss.13} parent=27 // pred_check_branch
        %567 = sbr.rel (%p565) target = $region36
      $region35: #{cobi_rgb_loss.13} parent=27 // pred_region
        %v568 = vld [vmem:[#allocation2] sm:$0xff]
        %v569 = vld [vmem:[#allocation2 + $0x8] sm:$0xff]
        %v570 = vld [vmem:[#allocation2 + $0x10] sm:$0xff]
        %v571 = vld [vmem:[#allocation2 + $0x18] sm:$0xff]
        %v572 = vld [vmem:[#allocation2 + $0x20] sm:$0xff]
        %v573 = vld [vmem:[#allocation2 + $0x28] sm:$0xff]
        %v574 = vld [vmem:[#allocation2 + $0x30] sm:$0xff]
        %v575 = vld [vmem:[#allocation2 + $0x38] sm:$0xff]
        %v576 = vld [vmem:[#allocation2 + $0x40] sm:$0xff]
        %v577 = vld [vmem:[#allocation2 + $0x48] sm:$0xff]
        %v578 = vld [vmem:[#allocation2 + $0x50] sm:$0xff]
        %v579 = vld [vmem:[#allocation2 + $0x58] sm:$0xff]
        %v580 = vld [vmem:[#allocation2 + $0x60] sm:$0xf]
        %v581 = vsel %vm550, %v568, -inf
        %582 = vmax.xlane.f32.xlu0 %v581
        %v583 = vpop.xlane.xlu0 %582
        %v584 = vsel %vm550, %v569, -inf
        %585 = vmax.xlane.f32.xlu0 %v584
        %v586 = vpop.xlane.xlu0 %585
        %v587 = vsel %vm550, %v570, -inf
        %588 = vmax.xlane.f32.xlu0 %v587
        %v589 = vpop.xlane.xlu0 %588
        %v590 = vsel %vm550, %v571, -inf
        %591 = vmax.xlane.f32.xlu0 %v590
        %v592 = vpop.xlane.xlu0 %591
        %v593 = vsel %vm550, %v572, -inf
        %594 = vmax.xlane.f32.xlu0 %v593
        %v595 = vpop.xlane.xlu0 %594
        %v596 = vsel %vm550, %v573, -inf
        %597 = vmax.xlane.f32.xlu0 %v596
        %v598 = vpop.xlane.xlu0 %597
        %v599 = vsel %vm550, %v574, -inf
        %600 = vmax.xlane.f32.xlu0 %v599
        %v601 = vpop.xlane.xlu0 %600
        %v602 = vsel %vm550, %v575, -inf
        %603 = vmax.xlane.f32.xlu0 %v602
        %v604 = vpop.xlane.xlu0 %603
        %v605 = vsel %vm550, %v576, -inf
        %606 = vmax.xlane.f32.xlu0 %v605
        %v607 = vpop.xlane.xlu0 %606
        %v608 = vsel %vm550, %v577, -inf
        %609 = vmax.xlane.f32.xlu0 %v608
        %v610 = vpop.xlane.xlu0 %609
        %v611 = vsel %vm550, %v578, -inf
        %612 = vmax.xlane.f32.xlu0 %v611
        %v613 = vpop.xlane.xlu0 %612
        %v614 = vsel %vm550, %v579, -inf
        %615 = vmax.xlane.f32.xlu0 %v614
        %v616 = vpop.xlane.xlu0 %615
        %v617 = vsel %vm563, %v580, -inf
        %618 = vmax.xlane.f32.xlu0 %v617
        %v619 = vpop.xlane.xlu0 %618
        %v620 = vsub.f32 1.0, %v583
        %v621 = vsub.f32 1.0, %v586
        %v622 = vsub.f32 1.0, %v589
        %v623 = vsub.f32 1.0, %v592
        %v624 = vsub.f32 1.0, %v595
        %v625 = vsub.f32 1.0, %v598
        %v626 = vsub.f32 1.0, %v601
        %v627 = vsub.f32 1.0, %v604
        %v628 = vsub.f32 1.0, %v607
        %v629 = vsub.f32 1.0, %v610
        %v630 = vsub.f32 1.0, %v613
        %v631 = vsub.f32 1.0, %v616
        %v632 = vsub.f32 1.0, %v619
        %v633 = vmax.f32 %v620, 0.0
        %v634 = vmax.f32 %v621, 0.0
        %v635 = vmax.f32 %v622, 0.0
        %v636 = vmax.f32 %v623, 0.0
        %v637 = vmax.f32 %v624, 0.0
        %v638 = vmax.f32 %v625, 0.0
        %v639 = vmax.f32 %v626, 0.0
        %v640 = vmax.f32 %v627, 0.0
        %v641 = vmax.f32 %v628, 0.0
        %v642 = vmax.f32 %v629, 0.0
        %v643 = vmax.f32 %v630, 0.0
        %v644 = vmax.f32 %v631, 0.0
        %v645 = vmax.f32 %v632, 0.0
        %v646 = vadd.f32 %v633, 1e-05
        %v647 = vadd.f32 %v634, 1e-05
        %v648 = vadd.f32 %v635, 1e-05
        %v649 = vadd.f32 %v636, 1e-05
        %v650 = vadd.f32 %v637, 1e-05
        %v651 = vadd.f32 %v638, 1e-05
        %v652 = vadd.f32 %v639, 1e-05
        %v653 = vadd.f32 %v640, 1e-05
        %v654 = vadd.f32 %v641, 1e-05
        %v655 = vadd.f32 %v642, 1e-05
        %v656 = vadd.f32 %v643, 1e-05
        %v657 = vadd.f32 %v644, 1e-05
        %v658 = vadd.f32 %v645, 1e-05
        %v659 = vrcp.pop %v646
        %v660 = vmul.f32 2.0, %v659
        %v661 = vrcp.pop %v647
        %v662 = vmul.f32 2.0, %v661
        %v663 = vrcp.pop %v648
        %v664 = vmul.f32 2.0, %v663
        %v665 = vrcp.pop %v649
        %v666 = vmul.f32 2.0, %v665
        %v667 = vrcp.pop %v650
        %v668 = vmul.f32 2.0, %v667
        %v669 = vrcp.pop %v651
        %v670 = vmul.f32 2.0, %v669
        %v671 = vrcp.pop %v652
        %v672 = vmul.f32 2.0, %v671
        %v673 = vrcp.pop %v653
        %v674 = vmul.f32 2.0, %v673
        %v675 = vrcp.pop %v654
        %v676 = vmul.f32 2.0, %v675
        %v677 = vrcp.pop %v655
        %v678 = vmul.f32 2.0, %v677
        %v679 = vrcp.pop %v656
        %v680 = vmul.f32 2.0, %v679
        %v681 = vrcp.pop %v657
        %v682 = vmul.f32 2.0, %v681
        %v683 = vrcp.pop %v658
        %v684 = vmul.f32 2.0, %v683
        %v685 = vsub.f32 %v568, %v583
        %v686 = vsub.f32 %v569, %v586
        %v687 = vsub.f32 %v570, %v589
        %v688 = vsub.f32 %v571, %v592
        %v689 = vsub.f32 %v572, %v595
        %v690 = vsub.f32 %v573, %v598
        %v691 = vsub.f32 %v574, %v601
        %v692 = vsub.f32 %v575, %v604
        %v693 = vsub.f32 %v576, %v607
        %v694 = vsub.f32 %v577, %v610
        %v695 = vsub.f32 %v578, %v613
        %v696 = vsub.f32 %v579, %v616
        %v697 = vsub.f32 %v580, %v619
        %v698 = vmul.f32 %v660, %v685
        %v699 = vmul.f32 %v662, %v686
        %v700 = vmul.f32 %v664, %v687
        %v701 = vmul.f32 %v666, %v688
        %v702 = vmul.f32 %v668, %v689
        %v703 = vmul.f32 %v670, %v690
        %v704 = vmul.f32 %v672, %v691
        %v705 = vmul.f32 %v674, %v692
        %v706 = vmul.f32 %v676, %v693
        %v707 = vmul.f32 %v678, %v694
        %v708 = vmul.f32 %v680, %v695
        %v709 = vmul.f32 %v682, %v696
        %v710 = vmul.f32 %v684, %v697
        %v711 = vmul.f32 %v698, 1.442695
        %v712 = vpow.pop %v711
        %v713 = vmul.f32 %v699, 1.442695
        %v714 = vpow.pop %v713
        %v715 = vmul.f32 %v700, 1.442695
        %v716 = vpow.pop %v715
        %v717 = vmul.f32 %v701, 1.442695
        %v718 = vpow.pop %v717
        %v719 = vmul.f32 %v702, 1.442695
        %v720 = vpow.pop %v719
        %v721 = vmul.f32 %v703, 1.442695
        %v722 = vpow.pop %v721
        %v723 = vmul.f32 %v704, 1.442695
        %v724 = vpow.pop %v723
        %v725 = vmul.f32 %v705, 1.442695
        %v726 = vpow.pop %v725
        %v727 = vmul.f32 %v706, 1.442695
        %v728 = vpow.pop %v727
        %v729 = vmul.f32 %v707, 1.442695
        %v730 = vpow.pop %v729
        %v731 = vmul.f32 %v708, 1.442695
        %v732 = vpow.pop %v731
        %v733 = vmul.f32 %v709, 1.442695
        %v734 = vpow.pop %v733
        %v735 = vmul.f32 %v710, 1.442695
        %v736 = vpow.pop %v735
        %v737 = vsel %vm550, %v712, 0.0
        %738 = vadd.xlane.f32.xlu0 %v737
        %v739 = vpop.xlane.xlu0 %738
        %v740 = vsel %vm550, %v714, 0.0
        %741 = vadd.xlane.f32.xlu0 %v740
        %v742 = vpop.xlane.xlu0 %741
        %v743 = vsel %vm550, %v716, 0.0
        %744 = vadd.xlane.f32.xlu0 %v743
        %v745 = vpop.xlane.xlu0 %744
        %v746 = vsel %vm550, %v718, 0.0
        %747 = vadd.xlane.f32.xlu0 %v746
        %v748 = vpop.xlane.xlu0 %747
        %v749 = vsel %vm550, %v720, 0.0
        %750 = vadd.xlane.f32.xlu0 %v749
        %v751 = vpop.xlane.xlu0 %750
        %v752 = vsel %vm550, %v722, 0.0
        %753 = vadd.xlane.f32.xlu0 %v752
        %v754 = vpop.xlane.xlu0 %753
        %v755 = vsel %vm550, %v724, 0.0
        %756 = vadd.xlane.f32.xlu0 %v755
        %v757 = vpop.xlane.xlu0 %756
        %v758 = vsel %vm550, %v726, 0.0
        %759 = vadd.xlane.f32.xlu0 %v758
        %v760 = vpop.xlane.xlu0 %759
        %v761 = vsel %vm550, %v728, 0.0
        %762 = vadd.xlane.f32.xlu0 %v761
        %v763 = vpop.xlane.xlu0 %762
        %v764 = vsel %vm550, %v730, 0.0
        %765 = vadd.xlane.f32.xlu0 %v764
        %v766 = vpop.xlane.xlu0 %765
        %v767 = vsel %vm550, %v732, 0.0
        %768 = vadd.xlane.f32.xlu0 %v767
        %v769 = vpop.xlane.xlu0 %768
        %v770 = vsel %vm550, %v734, 0.0
        %771 = vadd.xlane.f32.xlu0 %v770
        %v772 = vpop.xlane.xlu0 %771
        %v773 = vsel %vm563, %v736, 0.0
        %774 = vadd.xlane.f32.xlu0 %v773
        %v775 = vpop.xlane.xlu0 %774
        %v776 = vrcp.pop %v739
        %v777 = vrcp.pop %v742
        %v778 = vrcp.pop %v745
        %v779 = vrcp.pop %v748
        %v780 = vrcp.pop %v751
        %v781 = vrcp.pop %v754
        %v782 = vrcp.pop %v757
        %v783 = vrcp.pop %v760
        %v784 = vrcp.pop %v763
        %v785 = vrcp.pop %v766
        %v786 = vrcp.pop %v769
        %v787 = vrcp.pop %v772
        %v788 = vrcp.pop %v775
        %s789 = smul.u32 %s19, 100
        %v790 = vlaneseq
        %v791 = vshrl.u32 %v790, 7
        %v792 = vadd.s32 %v791, 8
        %v793 = vadd.s32 %v791, 16
        %v794 = vadd.s32 %v791, 24
        %v795 = vadd.s32 %v791, 32
        %v796 = vadd.s32 %v791, 40
        %v797 = vadd.s32 %v791, 48
        %v798 = vadd.s32 %v791, 56
        %v799 = vadd.s32 %v791, 64
        %v800 = vadd.s32 %v791, 72
        %v801 = vadd.s32 %v791, 80
        %v802 = vadd.s32 %v791, 88
        %v803 = vadd.s32 %v791, 96
        %v804 = vstv %s789
        %v805 = vadd.s32 %v804, %v791
        %v806 = vadd.s32 %v804, %v792
        %v807 = vadd.s32 %v804, %v793
        %v808 = vadd.s32 %v804, %v794
        %v809 = vadd.s32 %v804, %v795
        %v810 = vadd.s32 %v804, %v796
        %v811 = vadd.s32 %v804, %v797
        %v812 = vadd.s32 %v804, %v798
        %v813 = vadd.s32 %v804, %v799
        %v814 = vadd.s32 %v804, %v800
        %v815 = vadd.s32 %v804, %v801
        %v816 = vadd.s32 %v804, %v802
        %v817 = vadd.s32 %v804, %v803
        %vm818 = vcmp.lt.s32.totalorder %v805, 100
        %vm819 = vcmp.lt.s32.totalorder %v806, 100
        %vm820 = vcmp.lt.s32.totalorder %v807, 100
        %vm821 = vcmp.lt.s32.totalorder %v808, 100
        %vm822 = vcmp.lt.s32.totalorder %v809, 100
        %vm823 = vcmp.lt.s32.totalorder %v810, 100
        %vm824 = vcmp.lt.s32.totalorder %v811, 100
        %vm825 = vcmp.lt.s32.totalorder %v812, 100
        %vm826 = vcmp.lt.s32.totalorder %v813, 100
        %vm827 = vcmp.lt.s32.totalorder %v814, 100
        %vm828 = vcmp.lt.s32.totalorder %v815, 100
        %vm829 = vcmp.lt.s32.totalorder %v816, 100
        %vm830 = vcmp.lt.s32.totalorder %v817, 100
        %v831 = vsel %vm818, %v776, 0.0
        %v832 = vsel %vm819, %v777, 0.0
        %v833 = vsel %vm820, %v778, 0.0
        %v834 = vsel %vm821, %v779, 0.0
        %v835 = vsel %vm822, %v780, 0.0
        %v836 = vsel %vm823, %v781, 0.0
        %v837 = vsel %vm824, %v782, 0.0
        %v838 = vsel %vm825, %v783, 0.0
        %v839 = vsel %vm826, %v784, 0.0
        %v840 = vsel %vm827, %v785, 0.0
        %v841 = vsel %vm828, %v786, 0.0
        %v842 = vsel %vm829, %v787, 0.0
        %v843 = vsel %vm830, %v788, 0.0
        %vm844 = vcmask 7168
        %v845 = vsel %vm844, %v831, 0.0
        %v846 = vsel %vm844, %v832, 0.0
        %v847 = vadd.f32 %v845, %v846
        %v848 = vsel %vm844, %v833, 0.0
        %v849 = vadd.f32 %v847, %v848
        %v850 = vsel %vm844, %v834, 0.0
        %v851 = vadd.f32 %v849, %v850
        %v852 = vsel %vm844, %v835, 0.0
        %v853 = vadd.f32 %v851, %v852
        %v854 = vsel %vm844, %v836, 0.0
        %v855 = vadd.f32 %v853, %v854
        %v856 = vsel %vm844, %v837, 0.0
        %v857 = vadd.f32 %v855, %v856
        %v858 = vsel %vm844, %v838, 0.0
        %v859 = vadd.f32 %v857, %v858
        %v860 = vsel %vm844, %v839, 0.0
        %v861 = vadd.f32 %v859, %v860
        %v862 = vsel %vm844, %v840, 0.0
        %v863 = vadd.f32 %v861, %v862
        %v864 = vsel %vm844, %v841, 0.0
        %v865 = vadd.f32 %v863, %v864
        %v866 = vsel %vm844, %v842, 0.0
        %v867 = vadd.f32 %v865, %v866
        %vm868 = vcmask 3072
        %v869 = vsel %vm868, %v843, 0.0
        %v870 = vadd.f32 %v867, %v869
        %871 = vadd.xlane.f32.xlu0 %v870
        %v872 = vpop.xlane.xlu0 %871
        %v873 = vrot.slane %v872, 4
        %v874 = vadd.f32 %v872, %v873
        %v875 = vrot.slane %v874, 2
        %v876 = vadd.f32 %v874, %v875
        %v877 = vrot.slane %v876, 1
        %v878 = vadd.f32 %v876, %v877
        %s879 = vtos %v878
        %v880 = vstv %s879
        %vm881 = vcmask 0
        %882 = vst.msk [vmem:[%s237] sm:$0x1] %vm881, %v880
      $region36: #{cobi_rgb_loss.13} parent=27 // pred_fallthru
        _
      %p883 = scmp.lt.s32.totalorder %s18, 1
      %s884 = scalar_select %p883, %s18, 1
      %p885 = scmp.lt.s32.totalorder %s19, 0
      %s886 = scalar_select %p885, %s19, 0
      %s887 = sadd.s32 %s886, %s884
      %s888 = scalar_lea.vmem %s2, %s887
      // Predicated region
      $region37: #{cobi_rgb_loss.13} parent=27 // pred_check
        %p889 = pneg %p110
      $region38: #{cobi_rgb_loss.13} parent=27 // pred_check_branch
        %891 = sbr.rel (%p889) target = $region40
      $region39: #{cobi_rgb_loss.13} parent=27 // pred_region
        _
      $region40: #{cobi_rgb_loss.13} parent=27 // pred_fallthru
        _
    $region28: #{cobi_rgb_loss.13} parent=5 // pred_fallthru
      _
    %p892 = scmp.le.s32.totalorder 2, %s8
    // Predicated region
    $region41: #{cobi_rgb_loss.13} parent=5 // pred_check
      %p893 = pneg %p892
    $region42: #{cobi_rgb_loss.13} parent=5 // pred_check_branch
      %895 = sbr.rel (%p893) target = $region44
    $region43: #{cobi_rgb_loss.13} parent=5 // pred_region
      %s896 = ssub.s32 %s8, 2
      // Predicated region
      $region45: #{cobi_rgb_loss.13} parent=43 // pred_check
        %p897 = pneg %p116
      $region46: #{cobi_rgb_loss.13} parent=43 // pred_check_branch
        %899 = sbr.rel (%p897) target = $region48
      $region47: #{cobi_rgb_loss.13} parent=43 // pred_region
        %p900 = scmp.lt.s32.totalorder %s21, 1
        %s901 = scalar_select %p900, %s21, 1
        %p902 = scmp.lt.s32.totalorder %s22, 0
        %s903 = scalar_select %p902, %s22, 0
        %s904 = sadd.s32 %s903, %s901
        %s905 = scalar_lea.vmem %s2, %s904
      $region48: #{cobi_rgb_loss.13} parent=43 // pred_fallthru
        _
    $region44: #{cobi_rgb_loss.13} parent=5 // pred_fallthru
      _
  $region6: #{cobi_rgb_loss.13} parent=0 // loop_footer
    %s12 = sadd.s32 1, %s8
  $region7: #{cobi_rgb_loss.13} parent=0 // loop_footer_branch
    %7 = sbr.rel target = $region3
  $region8: #{cobi_rgb_loss.13} parent=0 // loop_exit
    _

// kernel: cobi_rgb_loss.7
$region0: #{cobi_rgb_loss.7}
  #allocation0 [shape = 'u32[]', space=smem, size = 0x4, offset = 0x4, fixed_abs, tag = 'smem constant byte address 0x4 - core index']
  #allocation1 [shape = 'u32[144,128]{1,0:T(1,128)}', space=vmem, size = 0x12000, scoped, tag = 'internal scratch']
  #allocation2 [shape = 'f32[256,27]{1,0:T(8,128)}', space=vmem, size = 0x20000, scoped, tag = 'scratch operand']
  %s0 = inlined_call_operand.vmem [shape: f32[4,18,18,3], index: 0, kind: input, shape index: {}]
  %s1 = inlined_call_operand.vmem [shape: f32[8,27], index: 1, kind: input, shape index: {}]
  %s2 = inlined_call_operand.vmem [shape: f32[8,1], index: 2, kind: input, shape index: {}]
  %s3 = inlined_call_operand.vmem [shape: f32[4,8,256], index: 3, kind: output, shape index: {}]
  %s4 = sld [smem:[#allocation0]]
  $region45: #{cobi_rgb_loss.7} parent=0
    _
  %s6 = ssub.s32 1, %s4
  %s7 = scalar_select 0, %s6, %s4
  loop: start=0, step=1, limit=6
  $region2: #{cobi_rgb_loss.7} parent=0 // loop_pre_header
    _
  $region3: #{cobi_rgb_loss.7} parent=0 // loop_header
    %s9 = sphi 0, %s13
    %p10 = scmp.ge.s32.totalorder %s9, 6
    %s16 = sphi 0, %s28
    %s17 = sphi 0, %s24
    %s18 = sphi 0, %s16
    %s19 = sphi 0, %s17
    %s20 = sphi 0, %s18
    %s21 = sphi 0, %s19
    %s31 = sphi 0, %s33
    %s34 = sphi 0, %s31
    %s35 = sphi 0, %s34
    %s51 = sphi 0, %s35
    %s55 = sphi 0, %s55
    %s57 = sphi 0, %s55
    %s58 = sphi 0, %s57
    %s72 = sphi 0, %s58
    %s76 = sphi 0, %s76
    %s78 = sphi 0, %s76
    %s79 = sphi 0, %s78
    %s93 = sphi 0, %s79
    %s101 = sphi 0, %s103
    %s104 = sphi 0, %s101
    %s105 = sphi 0, %s104
    %s121 = sphi 0, %s105
  $region4: #{cobi_rgb_loss.7} parent=0 // loop_header_branch
    %12 = sbr.rel (%p10) target = $region8
  $region5: #{cobi_rgb_loss.7} parent=0 // loop_body
    %s14 = ssub.s32 %s9, 1
    %s15 = ssub.s32 %s9, 2
    %s22 = sadd.s32 1, %s17
    %p23 = scmp.ge.s32.totalorder %s22, 1
    %s24 = scalar_select %p23, 0, %s22
    %s25 = sadd.s32 1, %s16
    %s26 = scalar_select %p23, %s25, %s16
    %p27 = scmp.ge.s32.totalorder %s26, 4
    %s28 = scalar_select %p27, 0, %s26
    %s29 = ssub.s32 %s16, %s28
    %p30 = scmp.eq.s32.totalorder %s29, 0
    %s32 = sadd.s32 %s31, 1
    %s33 = scalar_select %p30, %s31, %s32
    %p36 = pneg %p30
    %p37 = scmp.eq.s32.totalorder %s9, 3
    %p38 = por %p36, %p37
    %p39 = scmp.ne.s32.totalorder %s31, %s34
    %p40 = scmp.eq.s32.totalorder %s9, 0
    %p41 = por %p39, %p40
    %p42 = scmp.ne.s32.totalorder %s31, %s34
    %p43 = scmp.eq.s32.totalorder %s14, 3
    %p44 = por %p42, %p43
    %p45 = scmp.ne.s32.totalorder %s34, %s35
    %p46 = scmp.eq.s32.totalorder %s14, 0
    %p47 = por %p45, %p46
    %p48 = scmp.ne.s32.totalorder %s34, %s35
    %p49 = scmp.eq.s32.totalorder %s15, 3
    %p50 = por %p48, %p49
    %p52 = scmp.ne.s32.totalorder %s35, %s51
    %p53 = scmp.eq.s32.totalorder %s15, 0
    %p54 = por %p52, %p53
    %s56 = sadd.s32 %s55, 1
    %p59 = scmp.eq.s32.totalorder %s9, 3
    %p60 = scmp.ne.s32.totalorder %s55, %s57
    %p61 = scmp.eq.s32.totalorder %s9, 0
    %p62 = por %p60, %p61
    %p63 = scmp.ne.s32.totalorder %s55, %s57
    %p64 = scmp.eq.s32.totalorder %s14, 3
    %p65 = por %p63, %p64
    %p66 = scmp.ne.s32.totalorder %s57, %s58
    %p67 = scmp.eq.s32.totalorder %s14, 0
    %p68 = por %p66, %p67
    %p69 = scmp.ne.s32.totalorder %s57, %s58
    %p70 = scmp.eq.s32.totalorder %s15, 3
    %p71 = por %p69, %p70
    %p73 = scmp.ne.s32.totalorder %s58, %s72
    %p74 = scmp.eq.s32.totalorder %s15, 0
    %p75 = por %p73, %p74
    %s77 = sadd.s32 %s76, 1
    %p80 = scmp.eq.s32.totalorder %s9, 3
    %p81 = scmp.ne.s32.totalorder %s76, %s78
    %p82 = scmp.eq.s32.totalorder %s9, 0
    %p83 = por %p81, %p82
    %p84 = scmp.ne.s32.totalorder %s76, %s78
    %p85 = scmp.eq.s32.totalorder %s14, 3
    %p86 = por %p84, %p85
    %p87 = scmp.ne.s32.totalorder %s78, %s79
    %p88 = scmp.eq.s32.totalorder %s14, 0
    %p89 = por %p87, %p88
    %p90 = scmp.ne.s32.totalorder %s78, %s79
    %p91 = scmp.eq.s32.totalorder %s15, 3
    %p92 = por %p90, %p91
    %p94 = scmp.ne.s32.totalorder %s79, %s93
    %p95 = scmp.eq.s32.totalorder %s15, 0
    %p96 = por %p94, %p95
    %s97 = ssub.s32 %s16, %s28
    %s98 = ssub.s32 %s17, %s24
    %s99 = sor.u32 %s97, %s98
    %p100 = scmp.eq.s32.totalorder %s99, 0
    %s102 = sadd.s32 %s101, 1
    %s103 = scalar_select %p100, %s101, %s102
    %p106 = pneg %p100
    %p107 = scmp.eq.s32.totalorder %s9, 3
    %p108 = por %p106, %p107
    %p109 = scmp.ne.s32.totalorder %s101, %s104
    %p110 = scmp.eq.s32.totalorder %s9, 0
    %p111 = por %p109, %p110
    %p112 = scmp.ne.s32.totalorder %s101, %s104
    %p113 = scmp.eq.s32.totalorder %s14, 3
    %p114 = por %p112, %p113
    %p115 = scmp.ne.s32.totalorder %s104, %s105
    %p116 = scmp.eq.s32.totalorder %s14, 0
    %p117 = por %p115, %p116
    %p118 = scmp.ne.s32.totalorder %s104, %s105
    %p119 = scmp.eq.s32.totalorder %s15, 3
    %p120 = por %p118, %p119
    %p122 = scmp.ne.s32.totalorder %s105, %s121
    %p123 = scmp.eq.s32.totalorder %s15, 0
    %p124 = por %p122, %p123
    %p125 = scmp.le.s32.totalorder 1, %s9
    %p126 = scmp.lt.s32.totalorder %s9, 5
    %p127 = pnand %p125, %p126
    %p128 = pneg %p127
    // Predicated region
    $region9: #{cobi_rgb_loss.7} parent=5 // pred_check
      _
    $region10: #{cobi_rgb_loss.7} parent=5 // pred_check_branch
      %130 = sbr.rel (%p127) target = $region12
    $region11: #{cobi_rgb_loss.7} parent=5 // pred_region
      %s131 = ssub.s32 %s9, 1
      // Predicated region
      $region13: #{cobi_rgb_loss.7} parent=11 // pred_check
        %p132 = pneg %p68
      $region14: #{cobi_rgb_loss.7} parent=11 // pred_check_branch
        %134 = sbr.rel (%p132) target = $region16
      $region15: #{cobi_rgb_loss.7} parent=11 // pred_region
        _
      $region16: #{cobi_rgb_loss.7} parent=11 // pred_fallthru
        _
      // Predicated region
      $region17: #{cobi_rgb_loss.7} parent=11 // pred_check
        %p135 = pneg %p89
      $region18: #{cobi_rgb_loss.7} parent=11 // pred_check_branch
        %137 = sbr.rel (%p135) target = $region20
      $region19: #{cobi_rgb_loss.7} parent=11 // pred_region
        _
      $region20: #{cobi_rgb_loss.7} parent=11 // pred_fallthru
        _
    $region12: #{cobi_rgb_loss.7} parent=5 // pred_fallthru
      _
    %p138 = scmp.lt.s32.totalorder %s9, 4
    // Predicated region
    $region21: #{cobi_rgb_loss.7} parent=5 // pred_check
      %p139 = pneg %p138
    $region22: #{cobi_rgb_loss.7} parent=5 // pred_check_branch
      %141 = sbr.rel (%p139) target = $region24
    $region23: #{cobi_rgb_loss.7} parent=5 // pred_region
      // Predicated region
      $region25: #{cobi_rgb_loss.7} parent=23 // pred_check
        %p142 = pneg %p41
      $region26: #{cobi_rgb_loss.7} parent=23 // pred_check_branch
        %144 = sbr.rel (%p142) target = $region28
      $region27: #{cobi_rgb_loss.7} parent=23 // pred_region
        %p145 = scmp.lt.s32.totalorder %s16, 3
        %s146 = scalar_select %p145, %s16, 3
        %s147 = smul.addr %s146, 54
        %s148 = smul.addr %s147, 8
        %s149 = scalar_lea.vmem %s0, %s148
      $region28: #{cobi_rgb_loss.7} parent=23 // pred_fallthru
        _
    $region24: #{cobi_rgb_loss.7} parent=5 // pred_fallthru
      _
    %p150 = scmp.le.s32.totalorder 1, %s9
    %p151 = scmp.lt.s32.totalorder %s9, 5
    %p152 = pnand %p150, %p151
    %p153 = pneg %p152
    // Predicated region
    $region29: #{cobi_rgb_loss.7} parent=5 // pred_check
      _
    $region30: #{cobi_rgb_loss.7} parent=5 // pred_check_branch
      %155 = sbr.rel (%p152) target = $region32
    $region31: #{cobi_rgb_loss.7} parent=5 // pred_region
      %s156 = ssub.s32 %s9, 1
      %p157 = scmp.lt.s32.totalorder %s18, 3
      %s158 = scalar_select %p157, %s18, 3
      %s159 = smul.addr %s158, 54
      %s160 = smul.addr %s159, 8
      %s161 = scalar_lea.vmem %s0, %s160
      %p162 = pneg %p47
      %p163 = pneg %p44
      %p164 = pneg %p68
      %p165 = pneg %p65
      %p166 = pneg %p89
      %p167 = pneg %p86
      %p168 = pneg %p117
      %p169 = pneg %p114
      %s170 = smul.u32 2, %s19
      %p171 = scmp.lt.s32.totalorder %s18, 3
      %s172 = scalar_select %p171, %s18, 3
      %p173 = scmp.lt.s32.totalorder %s170, 1
      %s174 = scalar_select %p173, %s170, 1
      %s175 = smul.addr %s172, 2
      %s176 = sadd.s32 %s174, %s175
      %s177 = smul.addr %s176, 8
      %s178 = scalar_lea.vmem %s3, %s177
      %p179 = scmp.lt.s32.totalorder %s18, 3
      %s180 = scalar_select %p179, %s18, 3
      %s181 = smul.addr %s180, 54
      %s182 = smul.addr %s181, 8
      %s183 = scalar_lea.vmem %s0, %s182
      %s184 = smul.u32 2, %s19
      %p185 = scmp.lt.s32.totalorder %s18, 3
      %s186 = scalar_select %p185, %s18, 3
      %p187 = scmp.lt.s32.totalorder %s184, 1
      %s188 = scalar_select %p187, %s184, 1
      %s189 = smul.addr %s186, 2
      %s190 = sadd.s32 %s188, %s189
      %s191 = smul.addr %s190, 8
      %s192 = scalar_lea.vmem %s3, %s191
      %s193 = smul.u32 2, %s19
      %s194 = smul.u32 %s19, 16
      %s195 = smul.u32 %s194, 24
      %s196 = scalar_lea.vmem %s183, %s195
      %v197 = vld [vmem:[%s196] sm:$0xff]
      %v198 = vld [vmem:[%s196 + $0x8] sm:$0xff]
      %v199 = vld [vmem:[%s196 + $0x18] sm:$0xff]
      %v200 = vld [vmem:[%s196 + $0x20] sm:$0xff]
      %v201 = vld [vmem:[%s196 + $0x30] sm:$0xff]
      %v202 = vld [vmem:[%s196 + $0x38] sm:$0xff]
      %v203 = vld [vmem:[%s196 + $0x48] sm:$0xff]
      %v204 = vld [vmem:[%s196 + $0x50] sm:$0xff]
      %v205 = vld [vmem:[%s196 + $0x60] sm:$0xff]
      %v206 = vld [vmem:[%s196 + $0x68] sm:$0xff]
      %v207 = vld [vmem:[%s196 + $0x78] sm:$0xff]
      %v208 = vld [vmem:[%s196 + $0x80] sm:$0xff]
      %v209 = vld [vmem:[%s196 + $0x90] sm:$0xff]
      %v210 = vld [vmem:[%s196 + $0x98] sm:$0xff]
      %v211 = vld [vmem:[%s196 + $0xa8] sm:$0xff]
      %v212 = vld [vmem:[%s196 + $0xb0] sm:$0xff]
      %v213 = vld [vmem:[%s196 + $0xc0] sm:$0xff]
      %v214 = vld [vmem:[%s196 + $0xc8] sm:$0xff]
      %v215 = vld [vmem:[%s196 + $0xd8] sm:$0xff]
      %v216 = vld [vmem:[%s196 + $0xe0] sm:$0xff]
      %v217 = vld [vmem:[%s196 + $0xf0] sm:$0xff]
      %v218 = vld [vmem:[%s196 + $0xf8] sm:$0xff]
      %v219 = vld [vmem:[%s196 + $0x108] sm:$0xff]
      %v220 = vld [vmem:[%s196 + $0x110] sm:$0xff]
      %v221 = vld [vmem:[%s196 + $0x120] sm:$0xff]
      %v222 = vld [vmem:[%s196 + $0x128] sm:$0xff]
      %v223 = vld [vmem:[%s196 + $0x138] sm:$0xff]
      %v224 = vld [vmem:[%s196 + $0x140] sm:$0xff]
      %v225 = vld [vmem:[%s196 + $0x150] sm:$0xff]
      %v226 = vld [vmem:[%s196 + $0x158] sm:$0xff]
      %v227 = vld [vmem:[%s196 + $0x168] sm:$0xff]
      %v228 = vld [vmem:[%s196 + $0x170] sm:$0xff]
      %vm229 = vcmask 23552
      %230 = vst.msk [vmem:[#allocation2] sm:$0xff] %vm229, %v197
      %231 = vst.msk [vmem:[#allocation2 + $0x8] sm:$0xff] %vm229, %v198
      %232 = vst.msk [vmem:[#allocation2 + $0x10] sm:$0xff] %vm229, %v199
      %233 = vst.msk [vmem:[#allocation2 + $0x18] sm:$0xff] %vm229, %v200
      %234 = vst.msk [vmem:[#allocation2 + $0x20] sm:$0xff] %vm229, %v201
      %235 = vst.msk [vmem:[#allocation2 + $0x28] sm:$0xff] %vm229, %v202
      %236 = vst.msk [vmem:[#allocation2 + $0x30] sm:$0xff] %vm229, %v203
      %237 = vst.msk [vmem:[#allocation2 + $0x38] sm:$0xff] %vm229, %v204
      %238 = vst.msk [vmem:[#allocation2 + $0x40] sm:$0xff] %vm229, %v205
      %239 = vst.msk [vmem:[#allocation2 + $0x48] sm:$0xff] %vm229, %v206
      %240 = vst.msk [vmem:[#allocation2 + $0x50] sm:$0xff] %vm229, %v207
      %241 = vst.msk [vmem:[#allocation2 + $0x58] sm:$0xff] %vm229, %v208
      %242 = vst.msk [vmem:[#allocation2 + $0x60] sm:$0xff] %vm229, %v209
      %243 = vst.msk [vmem:[#allocation2 + $0x68] sm:$0xff] %vm229, %v210
      %244 = vst.msk [vmem:[#allocation2 + $0x70] sm:$0xff] %vm229, %v211
      %245 = vst.msk [vmem:[#allocation2 + $0x78] sm:$0xff] %vm229, %v212
      %246 = vst.msk [vmem:[#allocation2 + $0x80] sm:$0xff] %vm229, %v213
      %247 = vst.msk [vmem:[#allocation2 + $0x88] sm:$0xff] %vm229, %v214
      %248 = vst.msk [vmem:[#allocation2 + $0x90] sm:$0xff] %vm229, %v215
      %249 = vst.msk [vmem:[#allocation2 + $0x98] sm:$0xff] %vm229, %v216
      %250 = vst.msk [vmem:[#allocation2 + $0xa0] sm:$0xff] %vm229, %v217
      %251 = vst.msk [vmem:[#allocation2 + $0xa8] sm:$0xff] %vm229, %v218
      %252 = vst.msk [vmem:[#allocation2 + $0xb0] sm:$0xff] %vm229, %v219
      %253 = vst.msk [vmem:[#allocation2 + $0xb8] sm:$0xff] %vm229, %v220
      %254 = vst.msk [vmem:[#allocation2 + $0xc0] sm:$0xff] %vm229, %v221
      %255 = vst.msk [vmem:[#allocation2 + $0xc8] sm:$0xff] %vm229, %v222
      %256 = vst.msk [vmem:[#allocation2 + $0xd0] sm:$0xff] %vm229, %v223
      %257 = vst.msk [vmem:[#allocation2 + $0xd8] sm:$0xff] %vm229, %v224
      %258 = vst.msk [vmem:[#allocation2 + $0xe0] sm:$0xff] %vm229, %v225
      %259 = vst.msk [vmem:[#allocation2 + $0xe8] sm:$0xff] %vm229, %v226
      %260 = vst.msk [vmem:[#allocation2 + $0xf0] sm:$0xff] %vm229, %v227
      %261 = vst.msk [vmem:[#allocation2 + $0xf8] sm:$0xff] %vm229, %v228
      %v262 = vld [vmem:[%s196 + $0x1] sm:$0xff]
      %v263 = vld [vmem:[%s196 + $0x9] sm:$0xff]
      %v264 = vld [vmem:[%s196 + $0x19] sm:$0xff]
      %v265 = vld [vmem:[%s196 + $0x21] sm:$0xff]
      %v266 = vld [vmem:[%s196 + $0x31] sm:$0xff]
      %v267 = vld [vmem:[%s196 + $0x39] sm:$0xff]
      %v268 = vld [vmem:[%s196 + $0x49] sm:$0xff]
      %v269 = vld [vmem:[%s196 + $0x51] sm:$0xff]
      %v270 = vld [vmem:[%s196 + $0x61] sm:$0xff]
      %v271 = vld [vmem:[%s196 + $0x69] sm:$0xff]
      %v272 = vld [vmem:[%s196 + $0x79] sm:$0xff]
      %v273 = vld [vmem:[%s196 + $0x81] sm:$0xff]
      %v274 = vld [vmem:[%s196 + $0x91] sm:$0xff]
      %v275 = vld [vmem:[%s196 + $0x99] sm:$0xff]
      %v276 = vld [vmem:[%s196 + $0xa9] sm:$0xff]
      %v277 = vld [vmem:[%s196 + $0xb1] sm:$0xff]
      %v278 = vld [vmem:[%s196 + $0xc1] sm:$0xff]
      %v279 = vld [vmem:[%s196 + $0xc9] sm:$0xff]
      %v280 = vld [vmem:[%s196 + $0xd9] sm:$0xff]
      %v281 = vld [vmem:[%s196 + $0xe1] sm:$0xff]
      %v282 = vld [vmem:[%s196 + $0xf1] sm:$0xff]
      %v283 = vld [vmem:[%s196 + $0xf9] sm:$0xff]
      %v284 = vld [vmem:[%s196 + $0x109] sm:$0xff]
      %v285 = vld [vmem:[%s196 + $0x111] sm:$0xff]
      %v286 = vld [vmem:[%s196 + $0x121] sm:$0xff]
      %v287 = vld [vmem:[%s196 + $0x129] sm:$0xff]
      %v288 = vld [vmem:[%s196 + $0x139] sm:$0xff]
      %v289 = vld [vmem:[%s196 + $0x141] sm:$0xff]
      %v290 = vld [vmem:[%s196 + $0x151] sm:$0xff]
      %v291 = vld [vmem:[%s196 + $0x159] sm:$0xff]
      %v292 = vld [vmem:[%s196 + $0x169] sm:$0xff]
      %v293 = vld [vmem:[%s196 + $0x171] sm:$0xff]
      %326 = vrot.lane.b32.xlu0 %v262, 3
      %v327 = vpop.permute.xlu0 %326
      %328 = vrot.lane.b32.xlu0 %v263, 3
      %v329 = vpop.permute.xlu0 %328
      %330 = vrot.lane.b32.xlu0 %v264, 3
      %v331 = vpop.permute.xlu0 %330
      %332 = vrot.lane.b32.xlu0 %v265, 3
      %v333 = vpop.permute.xlu0 %332
      %334 = vrot.lane.b32.xlu0 %v266, 3
      %v335 = vpop.permute.xlu0 %334
      %336 = vrot.lane.b32.xlu0 %v267, 3
      %v337 = vpop.permute.xlu0 %336
      %338 = vrot.lane.b32.xlu0 %v268, 3
      %v339 = vpop.permute.xlu0 %338
      %340 = vrot.lane.b32.xlu0 %v269, 3
      %v341 = vpop.permute.xlu0 %340
      %342 = vrot.lane.b32.xlu0 %v270, 3
      %v343 = vpop.permute.xlu0 %342
      %344 = vrot.lane.b32.xlu0 %v271, 3
      %v345 = vpop.permute.xlu0 %344
      %346 = vrot.lane.b32.xlu0 %v272, 3
      %v347 = vpop.permute.xlu0 %346
      %348 = vrot.lane.b32.xlu0 %v273, 3
      %v349 = vpop.permute.xlu0 %348
      %350 = vrot.lane.b32.xlu0 %v274, 3
      %v351 = vpop.permute.xlu0 %350
      %352 = vrot.lane.b32.xlu0 %v275, 3
      %v353 = vpop.permute.xlu0 %352
      %354 = vrot.lane.b32.xlu0 %v276, 3
      %v355 = vpop.permute.xlu0 %354
      %356 = vrot.lane.b32.xlu0 %v277, 3
      %v357 = vpop.permute.xlu0 %356
      %358 = vrot.lane.b32.xlu0 %v278, 3
      %v359 = vpop.permute.xlu0 %358
      %360 = vrot.lane.b32.xlu0 %v279, 3
      %v361 = vpop.permute.xlu0 %360
      %362 = vrot.lane.b32.xlu0 %v280, 3
      %v363 = vpop.permute.xlu0 %362
      %364 = vrot.lane.b32.xlu0 %v281, 3
      %v365 = vpop.permute.xlu0 %364
      %366 = vrot.lane.b32.xlu0 %v282, 3
      %v367 = vpop.permute.xlu0 %366
      %368 = vrot.lane.b32.xlu0 %v283, 3
      %v369 = vpop.permute.xlu0 %368
      %370 = vrot.lane.b32.xlu0 %v284, 3
      %v371 = vpop.permute.xlu0 %370
      %372 = vrot.lane.b32.xlu0 %v285, 3
      %v373 = vpop.permute.xlu0 %372
      %374 = vrot.lane.b32.xlu0 %v286, 3
      %v375 = vpop.permute.xlu0 %374
      %376 = vrot.lane.b32.xlu0 %v287, 3
      %v377 = vpop.permute.xlu0 %376
      %378 = vrot.lane.b32.xlu0 %v288, 3
      %v379 = vpop.permute.xlu0 %378
      %380 = vrot.lane.b32.xlu0 %v289, 3
      %v381 = vpop.permute.xlu0 %380
      %382 = vrot.lane.b32.xlu0 %v290, 3
      %v383 = vpop.permute.xlu0 %382
      %384 = vrot.lane.b32.xlu0 %v291, 3
      %v385 = vpop.permute.xlu0 %384
      %386 = vrot.lane.b32.xlu0 %v292, 3
      %v387 = vpop.permute.xlu0 %386
      %388 = vrot.lane.b32.xlu0 %v293, 3
      %v389 = vpop.permute.xlu0 %388
      %vm422 = vcmask 48152
      %423 = vst.msk [vmem:[#allocation2] sm:$0xff] %vm422, %v327
      %424 = vst.msk [vmem:[#allocation2 + $0x8] sm:$0xff] %vm422, %v329
      %425 = vst.msk [vmem:[#allocation2 + $0x10] sm:$0xff] %vm422, %v331
      %426 = vst.msk [vmem:[#allocation2 + $0x18] sm:$0xff] %vm422, %v333
      %427 = vst.msk [vmem:[#allocation2 + $0x20] sm:$0xff] %vm422, %v335
      %428 = vst.msk [vmem:[#allocation2 + $0x28] sm:$0xff] %vm422, %v337
      %429 = vst.msk [vmem:[#allocation2 + $0x30] sm:$0xff] %vm422, %v339
      %430 = vst.msk [vmem:[#allocation2 + $0x38] sm:$0xff] %vm422, %v341
      %431 = vst.msk [vmem:[#allocation2 + $0x40] sm:$0xff] %vm422, %v343
      %432 = vst.msk [vmem:[#allocation2 + $0x48] sm:$0xff] %vm422, %v345
      %433 = vst.msk [vmem:[#allocation2 + $0x50] sm:$0xff] %vm422, %v347
      %434 = vst.msk [vmem:[#allocation2 + $0x58] sm:$0xff] %vm422, %v349
      %435 = vst.msk [vmem:[#allocation2 + $0x60] sm:$0xff] %vm422, %v351
      %436 = vst.msk [vmem:[#allocation2 + $0x68] sm:$0xff] %vm422, %v353
      %437 = vst.msk [vmem:[#allocation2 + $0x70] sm:$0xff] %vm422, %v355
      %438 = vst.msk [vmem:[#allocation2 + $0x78] sm:$0xff] %vm422, %v357
      %439 = vst.msk [vmem:[#allocation2 + $0x80] sm:$0xff] %vm422, %v359
      %440 = vst.msk [vmem:[#allocation2 + $0x88] sm:$0xff] %vm422, %v361
      %441 = vst.msk [vmem:[#allocation2 + $0x90] sm:$0xff] %vm422, %v363
      %442 = vst.msk [vmem:[#allocation2 + $0x98] sm:$0xff] %vm422, %v365
      %443 = vst.msk [vmem:[#allocation2 + $0xa0] sm:$0xff] %vm422, %v367
      %444 = vst.msk [vmem:[#allocation2 + $0xa8] sm:$0xff] %vm422, %v369
      %445 = vst.msk [vmem:[#allocation2 + $0xb0] sm:$0xff] %vm422, %v371
      %446 = vst.msk [vmem:[#allocation2 + $0xb8] sm:$0xff] %vm422, %v373
      %447 = vst.msk [vmem:[#allocation2 + $0xc0] sm:$0xff] %vm422, %v375
      %448 = vst.msk [vmem:[#allocation2 + $0xc8] sm:$0xff] %vm422, %v377
      %449 = vst.msk [vmem:[#allocation2 + $0xd0] sm:$0xff] %vm422, %v379
      %450 = vst.msk [vmem:[#allocation2 + $0xd8] sm:$0xff] %vm422, %v381
      %451 = vst.msk [vmem:[#allocation2 + $0xe0] sm:$0xff] %vm422, %v383
      %452 = vst.msk [vmem:[#allocation2 + $0xe8] sm:$0xff] %vm422, %v385
      %453 = vst.msk [vmem:[#allocation2 + $0xf0] sm:$0xff] %vm422, %v387
      %454 = vst.msk [vmem:[#allocation2 + $0xf8] sm:$0xff] %vm422, %v389
      %v455 = vld [vmem:[%s196 + $0x2] sm:$0xff]
      %v456 = vld [vmem:[%s196 + $0xa] sm:$0xff]
      %v457 = vld [vmem:[%s196 + $0x1a] sm:$0xff]
      %v458 = vld [vmem:[%s196 + $0x22] sm:$0xff]
      %v459 = vld [vmem:[%s196 + $0x32] sm:$0xff]
      %v460 = vld [vmem:[%s196 + $0x3a] sm:$0xff]
      %v461 = vld [vmem:[%s196 + $0x4a] sm:$0xff]
      %v462 = vld [vmem:[%s196 + $0x52] sm:$0xff]
      %v463 = vld [vmem:[%s196 + $0x62] sm:$0xff]
      %v464 = vld [vmem:[%s196 + $0x6a] sm:$0xff]
      %v465 = vld [vmem:[%s196 + $0x7a] sm:$0xff]
      %v466 = vld [vmem:[%s196 + $0x82] sm:$0xff]
      %v467 = vld [vmem:[%s196 + $0x92] sm:$0xff]
      %v468 = vld [vmem:[%s196 + $0x9a] sm:$0xff]
      %v469 = vld [vmem:[%s196 + $0xaa] sm:$0xff]
      %v470 = vld [vmem:[%s196 + $0xb2] sm:$0xff]
      %v471 = vld [vmem:[%s196 + $0xc2] sm:$0xff]
      %v472 = vld [vmem:[%s196 + $0xca] sm:$0xff]
      %v473 = vld [vmem:[%s196 + $0xda] sm:$0xff]
      %v474 = vld [vmem:[%s196 + $0xe2] sm:$0xff]
      %v475 = vld [vmem:[%s196 + $0xf2] sm:$0xff]
      %v476 = vld [vmem:[%s196 + $0xfa] sm:$0xff]
      %v477 = vld [vmem:[%s196 + $0x10a] sm:$0xff]
      %v478 = vld [vmem:[%s196 + $0x112] sm:$0xff]
      %v479 = vld [vmem:[%s196 + $0x122] sm:$0xff]
      %v480 = vld [vmem:[%s196 + $0x12a] sm:$0xff]
      %v481 = vld [vmem:[%s196 + $0x13a] sm:$0xff]
      %v482 = vld [vmem:[%s196 + $0x142] sm:$0xff]
      %v483 = vld [vmem:[%s196 + $0x152] sm:$0xff]
      %v484 = vld [vmem:[%s196 + $0x15a] sm:$0xff]
      %v485 = vld [vmem:[%s196 + $0x16a] sm:$0xff]
      %v486 = vld [vmem:[%s196 + $0x172] sm:$0xff]
      %519 = vrot.lane.b32.xlu0 %v455, 6
      %v520 = vpop.permute.xlu0 %519
      %521 = vrot.lane.b32.xlu0 %v456, 6
      %v522 = vpop.permute.xlu0 %521
      %523 = vrot.lane.b32.xlu0 %v457, 6
      %v524 = vpop.permute.xlu0 %523
      %525 = vrot.lane.b32.xlu0 %v458, 6
      %v526 = vpop.permute.xlu0 %525
      %527 = vrot.lane.b32.xlu0 %v459, 6
      %v528 = vpop.permute.xlu0 %527
      %529 = vrot.lane.b32.xlu0 %v460, 6
      %v530 = vpop.permute.xlu0 %529
      %531 = vrot.lane.b32.xlu0 %v461, 6
      %v532 = vpop.permute.xlu0 %531
      %533 = vrot.lane.b32.xlu0 %v462, 6
      %v534 = vpop.permute.xlu0 %533
      %535 = vrot.lane.b32.xlu0 %v463, 6
      %v536 = vpop.permute.xlu0 %535
      %537 = vrot.lane.b32.xlu0 %v464, 6
      %v538 = vpop.permute.xlu0 %537
      %539 = vrot.lane.b32.xlu0 %v465, 6
      %v540 = vpop.permute.xlu0 %539
      %541 = vrot.lane.b32.xlu0 %v466, 6
      %v542 = vpop.permute.xlu0 %541
      %543 = vrot.lane.b32.xlu0 %v467, 6
      %v544 = vpop.permute.xlu0 %543
      %545 = vrot.lane.b32.xlu0 %v468, 6
      %v546 = vpop.permute.xlu0 %545
      %547 = vrot.lane.b32.xlu0 %v469, 6
      %v548 = vpop.permute.xlu0 %547
      %549 = vrot.lane.b32.xlu0 %v470, 6
      %v550 = vpop.permute.xlu0 %549
      %551 = vrot.lane.b32.xlu0 %v471, 6
      %v552 = vpop.permute.xlu0 %551
      %553 = vrot.lane.b32.xlu0 %v472, 6
      %v554 = vpop.permute.xlu0 %553
      %555 = vrot.lane.b32.xlu0 %v473, 6
      %v556 = vpop.permute.xlu0 %555
      %557 = vrot.lane.b32.xlu0 %v474, 6
      %v558 = vpop.permute.xlu0 %557
      %559 = vrot.lane.b32.xlu0 %v475, 6
      %v560 = vpop.permute.xlu0 %559
      %561 = vrot.lane.b32.xlu0 %v476, 6
      %v562 = vpop.permute.xlu0 %561
      %563 = vrot.lane.b32.xlu0 %v477, 6
      %v564 = vpop.permute.xlu0 %563
      %565 = vrot.lane.b32.xlu0 %v478, 6
      %v566 = vpop.permute.xlu0 %565
      %567 = vrot.lane.b32.xlu0 %v479, 6
      %v568 = vpop.permute.xlu0 %567
      %569 = vrot.lane.b32.xlu0 %v480, 6
      %v570 = vpop.permute.xlu0 %569
      %571 = vrot.lane.b32.xlu0 %v481, 6
      %v572 = vpop.permute.xlu0 %571
      %573 = vrot.lane.b32.xlu0 %v482, 6
      %v574 = vpop.permute.xlu0 %573
      %575 = vrot.lane.b32.xlu0 %v483, 6
      %v576 = vpop.permute.xlu0 %575
      %577 = vrot.lane.b32.xlu0 %v484, 6
      %v578 = vpop.permute.xlu0 %577
      %579 = vrot.lane.b32.xlu0 %v485, 6
      %v580 = vpop.permute.xlu0 %579
      %581 = vrot.lane.b32.xlu0 %v486, 6
      %v582 = vpop.permute.xlu0 %581
      %vm615 = vcmask 72752
      %616 = vst.msk [vmem:[#allocation2] sm:$0xff] %vm615, %v520
      %617 = vst.msk [vmem:[#allocation2 + $0x8] sm:$0xff] %vm615, %v522
      %618 = vst.msk [vmem:[#allocation2 + $0x10] sm:$0xff] %vm615, %v524
      %619 = vst.msk [vmem:[#allocation2 + $0x18] sm:$0xff] %vm615, %v526
      %620 = vst.msk [vmem:[#allocation2 + $0x20] sm:$0xff] %vm615, %v528
      %621 = vst.msk [vmem:[#allocation2 + $0x28] sm:$0xff] %vm615, %v530
      %622 = vst.msk [vmem:[#allocation2 + $0x30] sm:$0xff] %vm615, %v532
      %623 = vst.msk [vmem:[#allocation2 + $0x38] sm:$0xff] %vm615, %v534
      %624 = vst.msk [vmem:[#allocation2 + $0x40] sm:$0xff] %vm615, %v536
      %625 = vst.msk [vmem:[#allocation2 + $0x48] sm:$0xff] %vm615, %v538
      %626 = vst.msk [vmem:[#allocation2 + $0x50] sm:$0xff] %vm615, %v540
      %627 = vst.msk [vmem:[#allocation2 + $0x58] sm:$0xff] %vm615, %v542
      %628 = vst.msk [vmem:[#allocation2 + $0x60] sm:$0xff] %vm615, %v544
      %629 = vst.msk [vmem:[#allocation2 + $0x68] sm:$0xff] %vm615, %v546
      %630 = vst.msk [vmem:[#allocation2 + $0x70] sm:$0xff] %vm615, %v548
      %631 = vst.msk [vmem:[#allocation2 + $0x78] sm:$0xff] %vm615, %v550
      %632 = vst.msk [vmem:[#allocation2 + $0x80] sm:$0xff] %vm615, %v552
      %633 = vst.msk [vmem:[#allocation2 + $0x88] sm:$0xff] %vm615, %v554
      %634 = vst.msk [vmem:[#allocation2 + $0x90] sm:$0xff] %vm615, %v556
      %635 = vst.msk [vmem:[#allocation2 + $0x98] sm:$0xff] %vm615, %v558
      %636 = vst.msk [vmem:[#allocation2 + $0xa0] sm:$0xff] %vm615, %v560
      %637 = vst.msk [vmem:[#allocation2 + $0xa8] sm:$0xff] %vm615, %v562
      %638 = vst.msk [vmem:[#allocation2 + $0xb0] sm:$0xff] %vm615, %v564
      %639 = vst.msk [vmem:[#allocation2 + $0xb8] sm:$0xff] %vm615, %v566
      %640 = vst.msk [vmem:[#allocation2 + $0xc0] sm:$0xff] %vm615, %v568
      %641 = vst.msk [vmem:[#allocation2 + $0xc8] sm:$0xff] %vm615, %v570
      %642 = vst.msk [vmem:[#allocation2 + $0xd0] sm:$0xff] %vm615, %v572
      %643 = vst.msk [vmem:[#allocation2 + $0xd8] sm:$0xff] %vm615, %v574
      %644 = vst.msk [vmem:[#allocation2 + $0xe0] sm:$0xff] %vm615, %v576
      %645 = vst.msk [vmem:[#allocation2 + $0xe8] sm:$0xff] %vm615, %v578
      %646 = vst.msk [vmem:[#allocation2 + $0xf0] sm:$0xff] %vm615, %v580
      %647 = vst.msk [vmem:[#allocation2 + $0xf8] sm:$0xff] %vm615, %v582
      %s648 = sadd.s32 %s194, 1
      %s649 = smul.u32 %s648, 24
      %s650 = scalar_lea.vmem %s183, %s649
      %v651 = vld [vmem:[%s650] sm:$0xff]
      %v652 = vld [vmem:[%s650 + $0x8] sm:$0xff]
      %v653 = vld [vmem:[%s650 + $0x18] sm:$0xff]
      %v654 = vld [vmem:[%s650 + $0x20] sm:$0xff]
      %v655 = vld [vmem:[%s650 + $0x30] sm:$0xff]
      %v656 = vld [vmem:[%s650 + $0x38] sm:$0xff]
      %v657 = vld [vmem:[%s650 + $0x48] sm:$0xff]
      %v658 = vld [vmem:[%s650 + $0x50] sm:$0xff]
      %v659 = vld [vmem:[%s650 + $0x60] sm:$0xff]
      %v660 = vld [vmem:[%s650 + $0x68] sm:$0xff]
      %v661 = vld [vmem:[%s650 + $0x78] sm:$0xff]
      %v662 = vld [vmem:[%s650 + $0x80] sm:$0xff]
      %v663 = vld [vmem:[%s650 + $0x90] sm:$0xff]
      %v664 = vld [vmem:[%s650 + $0x98] sm:$0xff]
      %v665 = vld [vmem:[%s650 + $0xa8] sm:$0xff]
      %v666 = vld [vmem:[%s650 + $0xb0] sm:$0xff]
      %v667 = vld [vmem:[%s650 + $0xc0] sm:$0xff]
      %v668 = vld [vmem:[%s650 + $0xc8] sm:$0xff]
      %v669 = vld [vmem:[%s650 + $0xd8] sm:$0xff]
      %v670 = vld [vmem:[%s650 + $0xe0] sm:$0xff]
      %v671 = vld [vmem:[%s650 + $0xf0] sm:$0xff]
      %v672 = vld [vmem:[%s650 + $0xf8] sm:$0xff]
      %v673 = vld [vmem:[%s650 + $0x108] sm:$0xff]
      %v674 = vld [vmem:[%s650 + $0x110] sm:$0xff]
      %v675 = vld [vmem:[%s650 + $0x120] sm:$0xff]
      %v676 = vld [vmem:[%s650 + $0x128] sm:$0xff]
      %v677 = vld [vmem:[%s650 + $0x138] sm:$0xff]
      %v678 = vld [vmem:[%s650 + $0x140] sm:$0xff]
      %v679 = vld [vmem:[%s650 + $0x150] sm:$0xff]
      %v680 = vld [vmem:[%s650 + $0x158] sm:$0xff]
      %v681 = vld [vmem:[%s650 + $0x168] sm:$0xff]
      %v682 = vld [vmem:[%s650 + $0x170] sm:$0xff]
      %715 = vrot.lane.b32.xlu0 %v651, 9
      %v716 = vpop.permute.xlu0 %715
      %717 = vrot.lane.b32.xlu0 %v652, 9
      %v718 = vpop.permute.xlu0 %717
      %719 = vrot.lane.b32.xlu0 %v653, 9
      %v720 = vpop.permute.xlu0 %719
      %721 = vrot.lane.b32.xlu0 %v654, 9
      %v722 = vpop.permute.xlu0 %721
      %723 = vrot.lane.b32.xlu0 %v655, 9
      %v724 = vpop.permute.xlu0 %723
      %725 = vrot.lane.b32.xlu0 %v656, 9
      %v726 = vpop.permute.xlu0 %725
      %727 = vrot.lane.b32.xlu0 %v657, 9
      %v728 = vpop.permute.xlu0 %727
      %729 = vrot.lane.b32.xlu0 %v658, 9
      %v730 = vpop.permute.xlu0 %729
      %731 = vrot.lane.b32.xlu0 %v659, 9
      %v732 = vpop.permute.xlu0 %731
      %733 = vrot.lane.b32.xlu0 %v660, 9
      %v734 = vpop.permute.xlu0 %733
      %735 = vrot.lane.b32.xlu0 %v661, 9
      %v736 = vpop.permute.xlu0 %735
      %737 = vrot.lane.b32.xlu0 %v662, 9
      %v738 = vpop.permute.xlu0 %737
      %739 = vrot.lane.b32.xlu0 %v663, 9
      %v740 = vpop.permute.xlu0 %739
      %741 = vrot.lane.b32.xlu0 %v664, 9
      %v742 = vpop.permute.xlu0 %741
      %743 = vrot.lane.b32.xlu0 %v665, 9
      %v744 = vpop.permute.xlu0 %743
      %745 = vrot.lane.b32.xlu0 %v666, 9
      %v746 = vpop.permute.xlu0 %745
      %747 = vrot.lane.b32.xlu0 %v667, 9
      %v748 = vpop.permute.xlu0 %747
      %749 = vrot.lane.b32.xlu0 %v668, 9
      %v750 = vpop.permute.xlu0 %749
      %751 = vrot.lane.b32.xlu0 %v669, 9
      %v752 = vpop.permute.xlu0 %751
      %753 = vrot.lane.b32.xlu0 %v670, 9
      %v754 = vpop.permute.xlu0 %753
      %755 = vrot.lane.b32.xlu0 %v671, 9
      %v756 = vpop.permute.xlu0 %755
      %757 = vrot.lane.b32.xlu0 %v672, 9
      %v758 = vpop.permute.xlu0 %757
      %759 = vrot.lane.b32.xlu0 %v673, 9
      %v760 = vpop.permute.xlu0 %759
      %761 = vrot.lane.b32.xlu0 %v674, 9
      %v762 = vpop.permute.xlu0 %761
      %763 = vrot.lane.b32.xlu0 %v675, 9
      %v764 = vpop.permute.xlu0 %763
      %765 = vrot.lane.b32.xlu0 %v676, 9
      %v766 = vpop.permute.xlu0 %765
      %767 = vrot.lane.b32.xlu0 %v677, 9
      %v768 = vpop.permute.xlu0 %767
      %769 = vrot.lane.b32.xlu0 %v678, 9
      %v770 = vpop.permute.xlu0 %769
      %771 = vrot.lane.b32.xlu0 %v679, 9
      %v772 = vpop.permute.xlu0 %771
      %773 = vrot.lane.b32.xlu0 %v680, 9
      %v774 = vpop.permute.xlu0 %773
      %775 = vrot.lane.b32.xlu0 %v681, 9
      %v776 = vpop.permute.xlu0 %775
      %777 = vrot.lane.b32.xlu0 %v682, 9
      %v778 = vpop.permute.xlu0 %777
      %vm811 = vcmask 97352
      %812 = vst.msk [vmem:[#allocation2] sm:$0xff] %vm811, %v716
      %813 = vst.msk [vmem:[#allocation2 + $0x8] sm:$0xff] %vm811, %v718
      %814 = vst.msk [vmem:[#allocation2 + $0x10] sm:$0xff] %vm811, %v720
      %815 = vst.msk [vmem:[#allocation2 + $0x18] sm:$0xff] %vm811, %v722
      %816 = vst.msk [vmem:[#allocation2 + $0x20] sm:$0xff] %vm811, %v724
      %817 = vst.msk [vmem:[#allocation2 + $0x28] sm:$0xff] %vm811, %v726
      %818 = vst.msk [vmem:[#allocation2 + $0x30] sm:$0xff] %vm811, %v728
      %819 = vst.msk [vmem:[#allocation2 + $0x38] sm:$0xff] %vm811, %v730
      %820 = vst.msk [vmem:[#allocation2 + $0x40] sm:$0xff] %vm811, %v732
      %821 = vst.msk [vmem:[#allocation2 + $0x48] sm:$0xff] %vm811, %v734
      %822 = vst.msk [vmem:[#allocation2 + $0x50] sm:$0xff] %vm811, %v736
      %823 = vst.msk [vmem:[#allocation2 + $0x58] sm:$0xff] %vm811, %v738
      %824 = vst.msk [vmem:[#allocation2 + $0x60] sm:$0xff] %vm811, %v740
      %825 = vst.msk [vmem:[#allocation2 + $0x68] sm:$0xff] %vm811, %v742
      %826 = vst.msk [vmem:[#allocation2 + $0x70] sm:$0xff] %vm811, %v744
      %827 = vst.msk [vmem:[#allocation2 + $0x78] sm:$0xff] %vm811, %v746
      %828 = vst.msk [vmem:[#allocation2 + $0x80] sm:$0xff] %vm811, %v748
      %829 = vst.msk [vmem:[#allocation2 + $0x88] sm:$0xff] %vm811, %v750
      %830 = vst.msk [vmem:[#allocation2 + $0x90] sm:$0xff] %vm811, %v752
      %831 = vst.msk [vmem:[#allocation2 + $0x98] sm:$0xff] %vm811, %v754
      %832 = vst.msk [vmem:[#allocation2 + $0xa0] sm:$0xff] %vm811, %v756
      %833 = vst.msk [vmem:[#allocation2 + $0xa8] sm:$0xff] %vm811, %v758
      %834 = vst.msk [vmem:[#allocation2 + $0xb0] sm:$0xff] %vm811, %v760
      %835 = vst.msk [vmem:[#allocation2 + $0xb8] sm:$0xff] %vm811, %v762
      %836 = vst.msk [vmem:[#allocation2 + $0xc0] sm:$0xff] %vm811, %v764
      %837 = vst.msk [vmem:[#allocation2 + $0xc8] sm:$0xff] %vm811, %v766
      %838 = vst.msk [vmem:[#allocation2 + $0xd0] sm:$0xff] %vm811, %v768
      %839 = vst.msk [vmem:[#allocation2 + $0xd8] sm:$0xff] %vm811, %v770
      %840 = vst.msk [vmem:[#allocation2 + $0xe0] sm:$0xff] %vm811, %v772
      %841 = vst.msk [vmem:[#allocation2 + $0xe8] sm:$0xff] %vm811, %v774
      %842 = vst.msk [vmem:[#allocation2 + $0xf0] sm:$0xff] %vm811, %v776
      %843 = vst.msk [vmem:[#allocation2 + $0xf8] sm:$0xff] %vm811, %v778
      %v844 = vld [vmem:[%s650 + $0x1] sm:$0xff]
      %v845 = vld [vmem:[%s650 + $0x9] sm:$0xff]
      %v846 = vld [vmem:[%s650 + $0x19] sm:$0xff]
      %v847 = vld [vmem:[%s650 + $0x21] sm:$0xff]
      %v848 = vld [vmem:[%s650 + $0x31] sm:$0xff]
      %v849 = vld [vmem:[%s650 + $0x39] sm:$0xff]
      %v850 = vld [vmem:[%s650 + $0x49] sm:$0xff]
      %v851 = vld [vmem:[%s650 + $0x51] sm:$0xff]
      %v852 = vld [vmem:[%s650 + $0x61] sm:$0xff]
      %v853 = vld [vmem:[%s650 + $0x69] sm:$0xff]
      %v854 = vld [vmem:[%s650 + $0x79] sm:$0xff]
      %v855 = vld [vmem:[%s650 + $0x81] sm:$0xff]
      %v856 = vld [vmem:[%s650 + $0x91] sm:$0xff]
      %v857 = vld [vmem:[%s650 + $0x99] sm:$0xff]
      %v858 = vld [vmem:[%s650 + $0xa9] sm:$0xff]
      %v859 = vld [vmem:[%s650 + $0xb1] sm:$0xff]
      %v860 = vld [vmem:[%s650 + $0xc1] sm:$0xff]
      %v861 = vld [vmem:[%s650 + $0xc9] sm:$0xff]
      %v862 = vld [vmem:[%s650 + $0xd9] sm:$0xff]
      %v863 = vld [vmem:[%s650 + $0xe1] sm:$0xff]
      %v864 = vld [vmem:[%s650 + $0xf1] sm:$0xff]
      %v865 = vld [vmem:[%s650 + $0xf9] sm:$0xff]
      %v866 = vld [vmem:[%s650 + $0x109] sm:$0xff]
      %v867 = vld [vmem:[%s650 + $0x111] sm:$0xff]
      %v868 = vld [vmem:[%s650 + $0x121] sm:$0xff]
      %v869 = vld [vmem:[%s650 + $0x129] sm:$0xff]
      %v870 = vld [vmem:[%s650 + $0x139] sm:$0xff]
      %v871 = vld [vmem:[%s650 + $0x141] sm:$0xff]
      %v872 = vld [vmem:[%s650 + $0x151] sm:$0xff]
      %v873 = vld [vmem:[%s650 + $0x159] sm:$0xff]
      %v874 = vld [vmem:[%s650 + $0x169] sm:$0xff]
      %v875 = vld [vmem:[%s650 + $0x171] sm:$0xff]
      %908 = vrot.lane.b32.xlu0 %v844, 12
      %v909 = vpop.permute.xlu0 %908
      %910 = vrot.lane.b32.xlu0 %v845, 12
      %v911 = vpop.permute.xlu0 %910
      %912 = vrot.lane.b32.xlu0 %v846, 12
      %v913 = vpop.permute.xlu0 %912
      %914 = vrot.lane.b32.xlu0 %v847, 12
      %v915 = vpop.permute.xlu0 %914
      %916 = vrot.lane.b32.xlu0 %v848, 12
      %v917 = vpop.permute.xlu0 %916
      %918 = vrot.lane.b32.xlu0 %v849, 12
      %v919 = vpop.permute.xlu0 %918
      %920 = vrot.lane.b32.xlu0 %v850, 12
      %v921 = vpop.permute.xlu0 %920
      %922 = vrot.lane.b32.xlu0 %v851, 12
      %v923 = vpop.permute.xlu0 %922
      %924 = vrot.lane.b32.xlu0 %v852, 12
      %v925 = vpop.permute.xlu0 %924
      %926 = vrot.lane.b32.xlu0 %v853, 12
      %v927 = vpop.permute.xlu0 %926
      %928 = vrot.lane.b32.xlu0 %v854, 12
      %v929 = vpop.permute.xlu0 %928
      %930 = vrot.lane.b32.xlu0 %v855, 12
      %v931 = vpop.permute.xlu0 %930
      %932 = vrot.lane.b32.xlu0 %v856, 12
      %v933 = vpop.permute.xlu0 %932
      %934 = vrot.lane.b32.xlu0 %v857, 12
      %v935 = vpop.permute.xlu0 %934
      %936 = vrot.lane.b32.xlu0 %v858, 12
      %v937 = vpop.permute.xlu0 %936
      %938 = vrot.lane.b32.xlu0 %v859, 12
      %v939 = vpop.permute.xlu0 %938
      %940 = vrot.lane.b32.xlu0 %v860, 12
      %v941 = vpop.permute.xlu0 %940
      %942 = vrot.lane.b32.xlu0 %v861, 12
      %v943 = vpop.permute.xlu0 %942
      %944 = vrot.lane.b32.xlu0 %v862, 12
      %v945 = vpop.permute.xlu0 %944
      %946 = vrot.lane.b32.xlu0 %v863, 12
      %v947 = vpop.permute.xlu0 %946
      %948 = vrot.lane.b32.xlu0 %v864, 12
      %v949 = vpop.permute.xlu0 %948
      %950 = vrot.lane.b32.xlu0 %v865, 12
      %v951 = vpop.permute.xlu0 %950
      %952 = vrot.lane.b32.xlu0 %v866, 12
      %v953 = vpop.permute.xlu0 %952
      %954 = vrot.lane.b32.xlu0 %v867, 12
      %v955 = vpop.permute.xlu0 %954
      %956 = vrot.lane.b32.xlu0 %v868, 12
      %v957 = vpop.permute.xlu0 %956
      %958 = vrot.lane.b32.xlu0 %v869, 12
      %v959 = vpop.permute.xlu0 %958
      %960 = vrot.lane.b32.xlu0 %v870, 12
      %v961 = vpop.permute.xlu0 %960
      %962 = vrot.lane.b32.xlu0 %v871, 12
      %v963 = vpop.permute.xlu0 %962
      %964 = vrot.lane.b32.xlu0 %v872, 12
      %v965 = vpop.permute.xlu0 %964
      %966 = vrot.lane.b32.xlu0 %v873, 12
      %v967 = vpop.permute.xlu0 %966
      %968 = vrot.lane.b32.xlu0 %v874, 12
      %v969 = vpop.permute.xlu0 %968
      %970 = vrot.lane.b32.xlu0 %v875, 12
      %v971 = vpop.permute.xlu0 %970
      %vm1004 = vcmask 121952
      %1005 = vst.msk [vmem:[#allocation2] sm:$0xff] %vm1004, %v909
      %1006 = vst.msk [vmem:[#allocation2 + $0x8] sm:$0xff] %vm1004, %v911
      %1007 = vst.msk [vmem:[#allocation2 + $0x10] sm:$0xff] %vm1004, %v913
      %1008 = vst.msk [vmem:[#allocation2 + $0x18] sm:$0xff] %vm1004, %v915
      %1009 = vst.msk [vmem:[#allocation2 + $0x20] sm:$0xff] %vm1004, %v917
      %1010 = vst.msk [vmem:[#allocation2 + $0x28] sm:$0xff] %vm1004, %v919
      %1011 = vst.msk [vmem:[#allocation2 + $0x30] sm:$0xff] %vm1004, %v921
      %1012 = vst.msk [vmem:[#allocation2 + $0x38] sm:$0xff] %vm1004, %v923
      %1013 = vst.msk [vmem:[#allocation2 + $0x40] sm:$0xff] %vm1004, %v925
      %1014 = vst.msk [vmem:[#allocation2 + $0x48] sm:$0xff] %vm1004, %v927
      %1015 = vst.msk [vmem:[#allocation2 + $0x50] sm:$0xff] %vm1004, %v929
      %1016 = vst.msk [vmem:[#allocation2 + $0x58] sm:$0xff] %vm1004, %v931
      %1017 = vst.msk [vmem:[#allocation2 + $0x60] sm:$0xff] %vm1004, %v933
      %1018 = vst.msk [vmem:[#allocation2 + $0x68] sm:$0xff] %vm1004, %v935
      %1019 = vst.msk [vmem:[#allocation2 + $0x70] sm:$0xff] %vm1004, %v937
      %1020 = vst.msk [vmem:[#allocation2 + $0x78] sm:$0xff] %vm1004, %v939
      %1021 = vst.msk [vmem:[#allocation2 + $0x80] sm:$0xff] %vm1004, %v941
      %1022 = vst.msk [vmem:[#allocation2 + $0x88] sm:$0xff] %vm1004, %v943
      %1023 = vst.msk [vmem:[#allocation2 + $0x90] sm:$0xff] %vm1004, %v945
      %1024 = vst.msk [vmem:[#allocation2 + $0x98] sm:$0xff] %vm1004, %v947
      %1025 = vst.msk [vmem:[#allocation2 + $0xa0] sm:$0xff] %vm1004, %v949
      %1026 = vst.msk [vmem:[#allocation2 + $0xa8] sm:$0xff] %vm1004, %v951
      %1027 = vst.msk [vmem:[#allocation2 + $0xb0] sm:$0xff] %vm1004, %v953
      %1028 = vst.msk [vmem:[#allocation2 + $0xb8] sm:$0xff] %vm1004, %v955
      %1029 = vst.msk [vmem:[#allocation2 + $0xc0] sm:$0xff] %vm1004, %v957
      %1030 = vst.msk [vmem:[#allocation2 + $0xc8] sm:$0xff] %vm1004, %v959
      %1031 = vst.msk [vmem:[#allocation2 + $0xd0] sm:$0xff] %vm1004, %v961
      %1032 = vst.msk [vmem:[#allocation2 + $0xd8] sm:$0xff] %vm1004, %v963
      %1033 = vst.msk [vmem:[#allocation2 + $0xe0] sm:$0xff] %vm1004, %v965
      %1034 = vst.msk [vmem:[#allocation2 + $0xe8] sm:$0xff] %vm1004, %v967
      %1035 = vst.msk [vmem:[#allocation2 + $0xf0] sm:$0xff] %vm1004, %v969
      %1036 = vst.msk [vmem:[#allocation2 + $0xf8] sm:$0xff] %vm1004, %v971
      %v1037 = vld [vmem:[%s650 + $0x2] sm:$0xff]
      %v1038 = vld [vmem:[%s650 + $0xa] sm:$0xff]
      %v1039 = vld [vmem:[%s650 + $0x1a] sm:$0xff]
      %v1040 = vld [vmem:[%s650 + $0x22] sm:$0xff]
      %v1041 = vld [vmem:[%s650 + $0x32] sm:$0xff]
      %v1042 = vld [vmem:[%s650 + $0x3a] sm:$0xff]
      %v1043 = vld [vmem:[%s650 + $0x4a] sm:$0xff]
      %v1044 = vld [vmem:[%s650 + $0x52] sm:$0xff]
      %v1045 = vld [vmem:[%s650 + $0x62] sm:$0xff]
      %v1046 = vld [vmem:[%s650 + $0x6a] sm:$0xff]
      %v1047 = vld [vmem:[%s650 + $0x7a] sm:$0xff]
      %v1048 = vld [vmem:[%s650 + $0x82] sm:$0xff]
      %v1049 = vld [vmem:[%s650 + $0x92] sm:$0xff]
      %v1050 = vld [vmem:[%s650 + $0x9a] sm:$0xff]
      %v1051 = vld [vmem:[%s650 + $0xaa] sm:$0xff]
      %v1052 = vld [vmem:[%s650 + $0xb2] sm:$0xff]
      %v1053 = vld [vmem:[%s650 + $0xc2] sm:$0xff]
      %v1054 = vld [vmem:[%s650 + $0xca] sm:$0xff]
      %v1055 = vld [vmem:[%s650 + $0xda] sm:$0xff]
      %v1056 = vld [vmem:[%s650 + $0xe2] sm:$0xff]
      %v1057 = vld [vmem:[%s650 + $0xf2] sm:$0xff]
      %v1058 = vld [vmem:[%s650 + $0xfa] sm:$0xff]
      %v1059 = vld [vmem:[%s650 + $0x10a] sm:$0xff]
      %v1060 = vld [vmem:[%s650 + $0x112] sm:$0xff]
      %v1061 = vld [vmem:[%s650 + $0x122] sm:$0xff]
      %v1062 = vld [vmem:[%s650 + $0x12a] sm:$0xff]
      %v1063 = vld [vmem:[%s650 + $0x13a] sm:$0xff]
      %v1064 = vld [vmem:[%s650 + $0x142] sm:$0xff]
      %v1065 = vld [vmem:[%s650 + $0x152] sm:$0xff]
      %v1066 = vld [vmem:[%s650 + $0x15a] sm:$0xff]
      %v1067 = vld [vmem:[%s650 + $0x16a] sm:$0xff]
      %v1068 = vld [vmem:[%s650 + $0x172] sm:$0xff]
      %1101 = vrot.lane.b32.xlu0 %v1037, 15
      %v1102 = vpop.permute.xlu0 %1101
      %1103 = vrot.lane.b32.xlu0 %v1038, 15
      %v1104 = vpop.permute.xlu0 %1103
      %1105 = vrot.lane.b32.xlu0 %v1039, 15
      %v1106 = vpop.permute.xlu0 %1105
      %1107 = vrot.lane.b32.xlu0 %v1040, 15
      %v1108 = vpop.permute.xlu0 %1107
      %1109 = vrot.lane.b32.xlu0 %v1041, 15
      %v1110 = vpop.permute.xlu0 %1109
      %1111 = vrot.lane.b32.xlu0 %v1042, 15
      %v1112 = vpop.permute.xlu0 %1111
      %1113 = vrot.lane.b32.xlu0 %v1043, 15
      %v1114 = vpop.permute.xlu0 %1113
      %1115 = vrot.lane.b32.xlu0 %v1044, 15
      %v1116 = vpop.permute.xlu0 %1115
      %1117 = vrot.lane.b32.xlu0 %v1045, 15
      %v1118 = vpop.permute.xlu0 %1117
      %1119 = vrot.lane.b32.xlu0 %v1046, 15
      %v1120 = vpop.permute.xlu0 %1119
      %1121 = vrot.lane.b32.xlu0 %v1047, 15
      %v1122 = vpop.permute.xlu0 %1121
      %1123 = vrot.lane.b32.xlu0 %v1048, 15
      %v1124 = vpop.permute.xlu0 %1123
      %1125 = vrot.lane.b32.xlu0 %v1049, 15
      %v1126 = vpop.permute.xlu0 %1125
      %1127 = vrot.lane.b32.xlu0 %v1050, 15
      %v1128 = vpop.permute.xlu0 %1127
      %1129 = vrot.lane.b32.xlu0 %v1051, 15
      %v1130 = vpop.permute.xlu0 %1129
      %1131 = vrot.lane.b32.xlu0 %v1052, 15
      %v1132 = vpop.permute.xlu0 %1131
      %1133 = vrot.lane.b32.xlu0 %v1053, 15
      %v1134 = vpop.permute.xlu0 %1133
      %1135 = vrot.lane.b32.xlu0 %v1054, 15
      %v1136 = vpop.permute.xlu0 %1135
      %1137 = vrot.lane.b32.xlu0 %v1055, 15
      %v1138 = vpop.permute.xlu0 %1137
      %1139 = vrot.lane.b32.xlu0 %v1056, 15
      %v1140 = vpop.permute.xlu0 %1139
      %1141 = vrot.lane.b32.xlu0 %v1057, 15
      %v1142 = vpop.permute.xlu0 %1141
      %1143 = vrot.lane.b32.xlu0 %v1058, 15
      %v1144 = vpop.permute.xlu0 %1143
      %1145 = vrot.lane.b32.xlu0 %v1059, 15
      %v1146 = vpop.permute.xlu0 %1145
      %1147 = vrot.lane.b32.xlu0 %v1060, 15
      %v1148 = vpop.permute.xlu0 %1147
      %1149 = vrot.lane.b32.xlu0 %v1061, 15
      %v1150 = vpop.permute.xlu0 %1149
      %1151 = vrot.lane.b32.xlu0 %v1062, 15
      %v1152 = vpop.permute.xlu0 %1151
      %1153 = vrot.lane.b32.xlu0 %v1063, 15
      %v1154 = vpop.permute.xlu0 %1153
      %1155 = vrot.lane.b32.xlu0 %v1064, 15
      %v1156 = vpop.permute.xlu0 %1155
      %1157 = vrot.lane.b32.xlu0 %v1065, 15
      %v1158 = vpop.permute.xlu0 %1157
      %1159 = vrot.lane.b32.xlu0 %v1066, 15
      %v1160 = vpop.permute.xlu0 %1159
      %1161 = vrot.lane.b32.xlu0 %v1067, 15
      %v1162 = vpop.permute.xlu0 %1161
      %1163 = vrot.lane.b32.xlu0 %v1068, 15
      %v1164 = vpop.permute.xlu0 %1163
      %vm1197 = vcmask 146552
      %1198 = vst.msk [vmem:[#allocation2] sm:$0xff] %vm1197, %v1102
      %1199 = vst.msk [vmem:[#allocation2 + $0x8] sm:$0xff] %vm1197, %v1104
      %1200 = vst.msk [vmem:[#allocation2 + $0x10] sm:$0xff] %vm1197, %v1106
      %1201 = vst.msk [vmem:[#allocation2 + $0x18] sm:$0xff] %vm1197, %v1108
      %1202 = vst.msk [vmem:[#allocation2 + $0x20] sm:$0xff] %vm1197, %v1110
      %1203 = vst.msk [vmem:[#allocation2 + $0x28] sm:$0xff] %vm1197, %v1112
      %1204 = vst.msk [vmem:[#allocation2 + $0x30] sm:$0xff] %vm1197, %v1114
      %1205 = vst.msk [vmem:[#allocation2 + $0x38] sm:$0xff] %vm1197, %v1116
      %1206 = vst.msk [vmem:[#allocation2 + $0x40] sm:$0xff] %vm1197, %v1118
      %1207 = vst.msk [vmem:[#allocation2 + $0x48] sm:$0xff] %vm1197, %v1120
      %1208 = vst.msk [vmem:[#allocation2 + $0x50] sm:$0xff] %vm1197, %v1122
      %1209 = vst.msk [vmem:[#allocation2 + $0x58] sm:$0xff] %vm1197, %v1124
      %1210 = vst.msk [vmem:[#allocation2 + $0x60] sm:$0xff] %vm1197, %v1126
      %1211 = vst.msk [vmem:[#allocation2 + $0x68] sm:$0xff] %vm1197, %v1128
      %1212 = vst.msk [vmem:[#allocation2 + $0x70] sm:$0xff] %vm1197, %v1130
      %1213 = vst.msk [vmem:[#allocation2 + $0x78] sm:$0xff] %vm1197, %v1132
      %1214 = vst.msk [vmem:[#allocation2 + $0x80] sm:$0xff] %vm1197, %v1134
      %1215 = vst.msk [vmem:[#allocation2 + $0x88] sm:$0xff] %vm1197, %v1136
      %1216 = vst.msk [vmem:[#allocation2 + $0x90] sm:$0xff] %vm1197, %v1138
      %1217 = vst.msk [vmem:[#allocation2 + $0x98] sm:$0xff] %vm1197, %v1140
      %1218 = vst.msk [vmem:[#allocation2 + $0xa0] sm:$0xff] %vm1197, %v1142
      %1219 = vst.msk [vmem:[#allocation2 + $0xa8] sm:$0xff] %vm1197, %v1144
      %1220 = vst.msk [vmem:[#allocation2 + $0xb0] sm:$0xff] %vm1197, %v1146
      %1221 = vst.msk [vmem:[#allocation2 + $0xb8] sm:$0xff] %vm1197, %v1148
      %1222 = vst.msk [vmem:[#allocation2 + $0xc0] sm:$0xff] %vm1197, %v1150
      %1223 = vst.msk [vmem:[#allocation2 + $0xc8] sm:$0xff] %vm1197, %v1152
      %1224 = vst.msk [vmem:[#allocation2 + $0xd0] sm:$0xff] %vm1197, %v1154
      %1225 = vst.msk [vmem:[#allocation2 + $0xd8] sm:$0xff] %vm1197, %v1156
      %1226 = vst.msk [vmem:[#allocation2 + $0xe0] sm:$0xff] %vm1197, %v1158
      %1227 = vst.msk [vmem:[#allocation2 + $0xe8] sm:$0xff] %vm1197, %v1160
      %1228 = vst.msk [vmem:[#allocation2 + $0xf0] sm:$0xff] %vm1197, %v1162
      %1229 = vst.msk [vmem:[#allocation2 + $0xf8] sm:$0xff] %vm1197, %v1164
      %s1230 = sadd.s32 %s194, 2
      %s1231 = smul.u32 %s1230, 24
      %s1232 = scalar_lea.vmem %s183, %s1231
      %v1233 = vld [vmem:[%s1232] sm:$0xff]
      %v1234 = vld [vmem:[%s1232 + $0x8] sm:$0xff]
      %v1235 = vld [vmem:[%s1232 + $0x18] sm:$0xff]
      %v1236 = vld [vmem:[%s1232 + $0x20] sm:$0xff]
      %v1237 = vld [vmem:[%s1232 + $0x30] sm:$0xff]
      %v1238 = vld [vmem:[%s1232 + $0x38] sm:$0xff]
      %v1239 = vld [vmem:[%s1232 + $0x48] sm:$0xff]
      %v1240 = vld [vmem:[%s1232 + $0x50] sm:$0xff]
      %v1241 = vld [vmem:[%s1232 + $0x60] sm:$0xff]
      %v1242 = vld [vmem:[%s1232 + $0x68] sm:$0xff]
      %v1243 = vld [vmem:[%s1232 + $0x78] sm:$0xff]
      %v1244 = vld [vmem:[%s1232 + $0x80] sm:$0xff]
      %v1245 = vld [vmem:[%s1232 + $0x90] sm:$0xff]
      %v1246 = vld [vmem:[%s1232 + $0x98] sm:$0xff]
      %v1247 = vld [vmem:[%s1232 + $0xa8] sm:$0xff]
      %v1248 = vld [vmem:[%s1232 + $0xb0] sm:$0xff]
      %v1249 = vld [vmem:[%s1232 + $0xc0] sm:$0xff]
      %v1250 = vld [vmem:[%s1232 + $0xc8] sm:$0xff]
      %v1251 = vld [vmem:[%s1232 + $0xd8] sm:$0xff]
      %v1252 = vld [vmem:[%s1232 + $0xe0] sm:$0xff]
      %v1253 = vld [vmem:[%s1232 + $0xf0] sm:$0xff]
      %v1254 = vld [vmem:[%s1232 + $0xf8] sm:$0xff]
      %v1255 = vld [vmem:[%s1232 + $0x108] sm:$0xff]
      %v1256 = vld [vmem:[%s1232 + $0x110] sm:$0xff]
      %v1257 = vld [vmem:[%s1232 + $0x120] sm:$0xff]
      %v1258 = vld [vmem:[%s1232 + $0x128] sm:$0xff]
      %v1259 = vld [vmem:[%s1232 + $0x138] sm:$0xff]
      %v1260 = vld [vmem:[%s1232 + $0x140] sm:$0xff]
      %v1261 = vld [vmem:[%s1232 + $0x150] sm:$0xff]
      %v1262 = vld [vmem:[%s1232 + $0x158] sm:$0xff]
      %v1263 = vld [vmem:[%s1232 + $0x168] sm:$0xff]
      %v1264 = vld [vmem:[%s1232 + $0x170] sm:$0xff]
      %1297 = vrot.lane.b32.xlu0 %v1233, 18
      %v1298 = vpop.permute.xlu0 %1297
      %1299 = vrot.lane.b32.xlu0 %v1234, 18
      %v1300 = vpop.permute.xlu0 %1299
      %1301 = vrot.lane.b32.xlu0 %v1235, 18
      %v1302 = vpop.permute.xlu0 %1301
      %1303 = vrot.lane.b32.xlu0 %v1236, 18
      %v1304 = vpop.permute.xlu0 %1303
      %1305 = vrot.lane.b32.xlu0 %v1237, 18
      %v1306 = vpop.permute.xlu0 %1305
      %1307 = vrot.lane.b32.xlu0 %v1238, 18
      %v1308 = vpop.permute.xlu0 %1307
      %1309 = vrot.lane.b32.xlu0 %v1239, 18
      %v1310 = vpop.permute.xlu0 %1309
      %1311 = vrot.lane.b32.xlu0 %v1240, 18
      %v1312 = vpop.permute.xlu0 %1311
      %1313 = vrot.lane.b32.xlu0 %v1241, 18
      %v1314 = vpop.permute.xlu0 %1313
      %1315 = vrot.lane.b32.xlu0 %v1242, 18
      %v1316 = vpop.permute.xlu0 %1315
      %1317 = vrot.lane.b32.xlu0 %v1243, 18
      %v1318 = vpop.permute.xlu0 %1317
      %1319 = vrot.lane.b32.xlu0 %v1244, 18
      %v1320 = vpop.permute.xlu0 %1319
      %1321 = vrot.lane.b32.xlu0 %v1245, 18
      %v1322 = vpop.permute.xlu0 %1321
      %1323 = vrot.lane.b32.xlu0 %v1246, 18
      %v1324 = vpop.permute.xlu0 %1323
      %1325 = vrot.lane.b32.xlu0 %v1247, 18
      %v1326 = vpop.permute.xlu0 %1325
      %1327 = vrot.lane.b32.xlu0 %v1248, 18
      %v1328 = vpop.permute.xlu0 %1327
      %1329 = vrot.lane.b32.xlu0 %v1249, 18
      %v1330 = vpop.permute.xlu0 %1329
      %1331 = vrot.lane.b32.xlu0 %v1250, 18
      %v1332 = vpop.permute.xlu0 %1331
      %1333 = vrot.lane.b32.xlu0 %v1251, 18
      %v1334 = vpop.permute.xlu0 %1333
      %1335 = vrot.lane.b32.xlu0 %v1252, 18
      %v1336 = vpop.permute.xlu0 %1335
      %1337 = vrot.lane.b32.xlu0 %v1253, 18
      %v1338 = vpop.permute.xlu0 %1337
      %1339 = vrot.lane.b32.xlu0 %v1254, 18
      %v1340 = vpop.permute.xlu0 %1339
      %1341 = vrot.lane.b32.xlu0 %v1255, 18
      %v1342 = vpop.permute.xlu0 %1341
      %1343 = vrot.lane.b32.xlu0 %v1256, 18
      %v1344 = vpop.permute.xlu0 %1343
      %1345 = vrot.lane.b32.xlu0 %v1257, 18
      %v1346 = vpop.permute.xlu0 %1345
      %1347 = vrot.lane.b32.xlu0 %v1258, 18
      %v1348 = vpop.permute.xlu0 %1347
      %1349 = vrot.lane.b32.xlu0 %v1259, 18
      %v1350 = vpop.permute.xlu0 %1349
      %1351 = vrot.lane.b32.xlu0 %v1260, 18
      %v1352 = vpop.permute.xlu0 %1351
      %1353 = vrot.lane.b32.xlu0 %v1261, 18
      %v1354 = vpop.permute.xlu0 %1353
      %1355 = vrot.lane.b32.xlu0 %v1262, 18
      %v1356 = vpop.permute.xlu0 %1355
      %1357 = vrot.lane.b32.xlu0 %v1263, 18
      %v1358 = vpop.permute.xlu0 %1357
      %1359 = vrot.lane.b32.xlu0 %v1264, 18
      %v1360 = vpop.permute.xlu0 %1359
      %vm1393 = vcmask 171152
      %1394 = vst.msk [vmem:[#allocation2] sm:$0xff] %vm1393, %v1298
      %1395 = vst.msk [vmem:[#allocation2 + $0x8] sm:$0xff] %vm1393, %v1300
      %1396 = vst.msk [vmem:[#allocation2 + $0x10] sm:$0xff] %vm1393, %v1302
      %1397 = vst.msk [vmem:[#allocation2 + $0x18] sm:$0xff] %vm1393, %v1304
      %1398 = vst.msk [vmem:[#allocation2 + $0x20] sm:$0xff] %vm1393, %v1306
      %1399 = vst.msk [vmem:[#allocation2 + $0x28] sm:$0xff] %vm1393, %v1308
      %1400 = vst.msk [vmem:[#allocation2 + $0x30] sm:$0xff] %vm1393, %v1310
      %1401 = vst.msk [vmem:[#allocation2 + $0x38] sm:$0xff] %vm1393, %v1312
      %1402 = vst.msk [vmem:[#allocation2 + $0x40] sm:$0xff] %vm1393, %v1314
      %1403 = vst.msk [vmem:[#allocation2 + $0x48] sm:$0xff] %vm1393, %v1316
      %1404 = vst.msk [vmem:[#allocation2 + $0x50] sm:$0xff] %vm1393, %v1318
      %1405 = vst.msk [vmem:[#allocation2 + $0x58] sm:$0xff] %vm1393, %v1320
      %1406 = vst.msk [vmem:[#allocation2 + $0x60] sm:$0xff] %vm1393, %v1322
      %1407 = vst.msk [vmem:[#allocation2 + $0x68] sm:$0xff] %vm1393, %v1324
      %1408 = vst.msk [vmem:[#allocation2 + $0x70] sm:$0xff] %vm1393, %v1326
      %1409 = vst.msk [vmem:[#allocation2 + $0x78] sm:$0xff] %vm1393, %v1328
      %1410 = vst.msk [vmem:[#allocation2 + $0x80] sm:$0xff] %vm1393, %v1330
      %1411 = vst.msk [vmem:[#allocation2 + $0x88] sm:$0xff] %vm1393, %v1332
      %1412 = vst.msk [vmem:[#allocation2 + $0x90] sm:$0xff] %vm1393, %v1334
      %1413 = vst.msk [vmem:[#allocation2 + $0x98] sm:$0xff] %vm1393, %v1336
      %1414 = vst.msk [vmem:[#allocation2 + $0xa0] sm:$0xff] %vm1393, %v1338
      %1415 = vst.msk [vmem:[#allocation2 + $0xa8] sm:$0xff] %vm1393, %v1340
      %1416 = vst.msk [vmem:[#allocation2 + $0xb0] sm:$0xff] %vm1393, %v1342
      %1417 = vst.msk [vmem:[#allocation2 + $0xb8] sm:$0xff] %vm1393, %v1344
      %1418 = vst.msk [vmem:[#allocation2 + $0xc0] sm:$0xff] %vm1393, %v1346
      %1419 = vst.msk [vmem:[#allocation2 + $0xc8] sm:$0xff] %vm1393, %v1348
      %1420 = vst.msk [vmem:[#allocation2 + $0xd0] sm:$0xff] %vm1393, %v1350
      %1421 = vst.msk [vmem:[#allocation2 + $0xd8] sm:$0xff] %vm1393, %v1352
      %1422 = vst.msk [vmem:[#allocation2 + $0xe0] sm:$0xff] %vm1393, %v1354
      %1423 = vst.msk [vmem:[#allocation2 + $0xe8] sm:$0xff] %vm1393, %v1356
      %1424 = vst.msk [vmem:[#allocation2 + $0xf0] sm:$0xff] %vm1393, %v1358
      %1425 = vst.msk [vmem:[#allocation2 + $0xf8] sm:$0xff] %vm1393, %v1360
      %v1426 = vld [vmem:[%s1232 + $0x1] sm:$0xff]
      %v1427 = vld [vmem:[%s1232 + $0x9] sm:$0xff]
      %v1428 = vld [vmem:[%s1232 + $0x19] sm:$0xff]
      %v1429 = vld [vmem:[%s1232 + $0x21] sm:$0xff]
      %v1430 = vld [vmem:[%s1232 + $0x31] sm:$0xff]
      %v1431 = vld [vmem:[%s1232 + $0x39] sm:$0xff]
      %v1432 = vld [vmem:[%s1232 + $0x49] sm:$0xff]
      %v1433 = vld [vmem:[%s1232 + $0x51] sm:$0xff]
      %v1434 = vld [vmem:[%s1232 + $0x61] sm:$0xff]
      %v1435 = vld [vmem:[%s1232 + $0x69] sm:$0xff]
      %v1436 = vld [vmem:[%s1232 + $0x79] sm:$0xff]
      %v1437 = vld [vmem:[%s1232 + $0x81] sm:$0xff]
      %v1438 = vld [vmem:[%s1232 + $0x91] sm:$0xff]
      %v1439 = vld [vmem:[%s1232 + $0x99] sm:$0xff]
      %v1440 = vld [vmem:[%s1232 + $0xa9] sm:$0xff]
      %v1441 = vld [vmem:[%s1232 + $0xb1] sm:$0xff]
      %v1442 = vld [vmem:[%s1232 + $0xc1] sm:$0xff]
      %v1443 = vld [vmem:[%s1232 + $0xc9] sm:$0xff]
      %v1444 = vld [vmem:[%s1232 + $0xd9] sm:$0xff]
      %v1445 = vld [vmem:[%s1232 + $0xe1] sm:$0xff]
      %v1446 = vld [vmem:[%s1232 + $0xf1] sm:$0xff]
      %v1447 = vld [vmem:[%s1232 + $0xf9] sm:$0xff]
      %v1448 = vld [vmem:[%s1232 + $0x109] sm:$0xff]
      %v1449 = vld [vmem:[%s1232 + $0x111] sm:$0xff]
      %v1450 = vld [vmem:[%s1232 + $0x121] sm:$0xff]
      %v1451 = vld [vmem:[%s1232 + $0x129] sm:$0xff]
      %v1452 = vld [vmem:[%s1232 + $0x139] sm:$0xff]
      %v1453 = vld [vmem:[%s1232 + $0x141] sm:$0xff]
      %v1454 = vld [vmem:[%s1232 + $0x151] sm:$0xff]
      %v1455 = vld [vmem:[%s1232 + $0x159] sm:$0xff]
      %v1456 = vld [vmem:[%s1232 + $0x169] sm:$0xff]
      %v1457 = vld [vmem:[%s1232 + $0x171] sm:$0xff]
      %1490 = vrot.lane.b32.xlu0 %v1426, 21
      %v1491 = vpop.permute.xlu0 %1490
      %1492 = vrot.lane.b32.xlu0 %v1427, 21
      %v1493 = vpop.permute.xlu0 %1492
      %1494 = vrot.lane.b32.xlu0 %v1428, 21
      %v1495 = vpop.permute.xlu0 %1494
      %1496 = vrot.lane.b32.xlu0 %v1429, 21
      %v1497 = vpop.permute.xlu0 %1496
      %1498 = vrot.lane.b32.xlu0 %v1430, 21
      %v1499 = vpop.permute.xlu0 %1498
      %1500 = vrot.lane.b32.xlu0 %v1431, 21
      %v1501 = vpop.permute.xlu0 %1500
      %1502 = vrot.lane.b32.xlu0 %v1432, 21
      %v1503 = vpop.permute.xlu0 %1502
      %1504 = vrot.lane.b32.xlu0 %v1433, 21
      %v1505 = vpop.permute.xlu0 %1504
      %1506 = vrot.lane.b32.xlu0 %v1434, 21
      %v1507 = vpop.permute.xlu0 %1506
      %1508 = vrot.lane.b32.xlu0 %v1435, 21
      %v1509 = vpop.permute.xlu0 %1508
      %1510 = vrot.lane.b32.xlu0 %v1436, 21
      %v1511 = vpop.permute.xlu0 %1510
      %1512 = vrot.lane.b32.xlu0 %v1437, 21
      %v1513 = vpop.permute.xlu0 %1512
      %1514 = vrot.lane.b32.xlu0 %v1438, 21
      %v1515 = vpop.permute.xlu0 %1514
      %1516 = vrot.lane.b32.xlu0 %v1439, 21
      %v1517 = vpop.permute.xlu0 %1516
      %1518 = vrot.lane.b32.xlu0 %v1440, 21
      %v1519 = vpop.permute.xlu0 %1518
      %1520 = vrot.lane.b32.xlu0 %v1441, 21
      %v1521 = vpop.permute.xlu0 %1520
      %1522 = vrot.lane.b32.xlu0 %v1442, 21
      %v1523 = vpop.permute.xlu0 %1522
      %1524 = vrot.lane.b32.xlu0 %v1443, 21
      %v1525 = vpop.permute.xlu0 %1524
      %1526 = vrot.lane.b32.xlu0 %v1444, 21
      %v1527 = vpop.permute.xlu0 %1526
      %1528 = vrot.lane.b32.xlu0 %v1445, 21
      %v1529 = vpop.permute.xlu0 %1528
      %1530 = vrot.lane.b32.xlu0 %v1446, 21
      %v1531 = vpop.permute.xlu0 %1530
      %1532 = vrot.lane.b32.xlu0 %v1447, 21
      %v1533 = vpop.permute.xlu0 %1532
      %1534 = vrot.lane.b32.xlu0 %v1448, 21
      %v1535 = vpop.permute.xlu0 %1534
      %1536 = vrot.lane.b32.xlu0 %v1449, 21
      %v1537 = vpop.permute.xlu0 %1536
      %1538 = vrot.lane.b32.xlu0 %v1450, 21
      %v1539 = vpop.permute.xlu0 %1538
      %1540 = vrot.lane.b32.xlu0 %v1451, 21
      %v1541 = vpop.permute.xlu0 %1540
      %1542 = vrot.lane.b32.xlu0 %v1452, 21
      %v1543 = vpop.permute.xlu0 %1542
      %1544 = vrot.lane.b32.xlu0 %v1453, 21
      %v1545 = vpop.permute.xlu0 %1544
      %1546 = vrot.lane.b32.xlu0 %v1454, 21
      %v1547 = vpop.permute.xlu0 %1546
      %1548 = vrot.lane.b32.xlu0 %v1455, 21
      %v1549 = vpop.permute.xlu0 %1548
      %1550 = vrot.lane.b32.xlu0 %v1456, 21
      %v1551 = vpop.permute.xlu0 %1550
      %1552 = vrot.lane.b32.xlu0 %v1457, 21
      %v1553 = vpop.permute.xlu0 %1552
      %vm1586 = vcmask 195752
      %1587 = vst.msk [vmem:[#allocation2] sm:$0xff] %vm1586, %v1491
      %1588 = vst.msk [vmem:[#allocation2 + $0x8] sm:$0xff] %vm1586, %v1493
      %1589 = vst.msk [vmem:[#allocation2 + $0x10] sm:$0xff] %vm1586, %v1495
      %1590 = vst.msk [vmem:[#allocation2 + $0x18] sm:$0xff] %vm1586, %v1497
      %1591 = vst.msk [vmem:[#allocation2 + $0x20] sm:$0xff] %vm1586, %v1499
      %1592 = vst.msk [vmem:[#allocation2 + $0x28] sm:$0xff] %vm1586, %v1501
      %1593 = vst.msk [vmem:[#allocation2 + $0x30] sm:$0xff] %vm1586, %v1503
      %1594 = vst.msk [vmem:[#allocation2 + $0x38] sm:$0xff] %vm1586, %v1505
      %1595 = vst.msk [vmem:[#allocation2 + $0x40] sm:$0xff] %vm1586, %v1507
      %1596 = vst.msk [vmem:[#allocation2 + $0x48] sm:$0xff] %vm1586, %v1509
      %1597 = vst.msk [vmem:[#allocation2 + $0x50] sm:$0xff] %vm1586, %v1511
      %1598 = vst.msk [vmem:[#allocation2 + $0x58] sm:$0xff] %vm1586, %v1513
      %1599 = vst.msk [vmem:[#allocation2 + $0x60] sm:$0xff] %vm1586, %v1515
      %1600 = vst.msk [vmem:[#allocation2 + $0x68] sm:$0xff] %vm1586, %v1517
      %1601 = vst.msk [vmem:[#allocation2 + $0x70] sm:$0xff] %vm1586, %v1519
      %1602 = vst.msk [vmem:[#allocation2 + $0x78] sm:$0xff] %vm1586, %v1521
      %1603 = vst.msk [vmem:[#allocation2 + $0x80] sm:$0xff] %vm1586, %v1523
      %1604 = vst.msk [vmem:[#allocation2 + $0x88] sm:$0xff] %vm1586, %v1525
      %1605 = vst.msk [vmem:[#allocation2 + $0x90] sm:$0xff] %vm1586, %v1527
      %1606 = vst.msk [vmem:[#allocation2 + $0x98] sm:$0xff] %vm1586, %v1529
      %1607 = vst.msk [vmem:[#allocation2 + $0xa0] sm:$0xff] %vm1586, %v1531
      %1608 = vst.msk [vmem:[#allocation2 + $0xa8] sm:$0xff] %vm1586, %v1533
      %1609 = vst.msk [vmem:[#allocation2 + $0xb0] sm:$0xff] %vm1586, %v1535
      %1610 = vst.msk [vmem:[#allocation2 + $0xb8] sm:$0xff] %vm1586, %v1537
      %1611 = vst.msk [vmem:[#allocation2 + $0xc0] sm:$0xff] %vm1586, %v1539
      %1612 = vst.msk [vmem:[#allocation2 + $0xc8] sm:$0xff] %vm1586, %v1541
      %1613 = vst.msk [vmem:[#allocation2 + $0xd0] sm:$0xff] %vm1586, %v1543
      %1614 = vst.msk [vmem:[#allocation2 + $0xd8] sm:$0xff] %vm1586, %v1545
      %1615 = vst.msk [vmem:[#allocation2 + $0xe0] sm:$0xff] %vm1586, %v1547
      %1616 = vst.msk [vmem:[#allocation2 + $0xe8] sm:$0xff] %vm1586, %v1549
      %1617 = vst.msk [vmem:[#allocation2 + $0xf0] sm:$0xff] %vm1586, %v1551
      %1618 = vst.msk [vmem:[#allocation2 + $0xf8] sm:$0xff] %vm1586, %v1553
      %v1619 = vld [vmem:[%s1232 + $0x2] sm:$0xff]
      %v1620 = vld [vmem:[%s1232 + $0xa] sm:$0xff]
      %v1621 = vld [vmem:[%s1232 + $0x1a] sm:$0xff]
      %v1622 = vld [vmem:[%s1232 + $0x22] sm:$0xff]
      %v1623 = vld [vmem:[%s1232 + $0x32] sm:$0xff]
      %v1624 = vld [vmem:[%s1232 + $0x3a] sm:$0xff]
      %v1625 = vld [vmem:[%s1232 + $0x4a] sm:$0xff]
      %v1626 = vld [vmem:[%s1232 + $0x52] sm:$0xff]
      %v1627 = vld [vmem:[%s1232 + $0x62] sm:$0xff]
      %v1628 = vld [vmem:[%s1232 + $0x6a] sm:$0xff]
      %v1629 = vld [vmem:[%s1232 + $0x7a] sm:$0xff]
      %v1630 = vld [vmem:[%s1232 + $0x82] sm:$0xff]
      %v1631 = vld [vmem:[%s1232 + $0x92] sm:$0xff]
      %v1632 = vld [vmem:[%s1232 + $0x9a] sm:$0xff]
      %v1633 = vld [vmem:[%s1232 + $0xaa] sm:$0xff]
      %v1634 = vld [vmem:[%s1232 + $0xb2] sm:$0xff]
      %v1635 = vld [vmem:[%s1232 + $0xc2] sm:$0xff]
      %v1636 = vld [vmem:[%s1232 + $0xca] sm:$0xff]
      %v1637 = vld [vmem:[%s1232 + $0xda] sm:$0xff]
      %v1638 = vld [vmem:[%s1232 + $0xe2] sm:$0xff]
      %v1639 = vld [vmem:[%s1232 + $0xf2] sm:$0xff]
      %v1640 = vld [vmem:[%s1232 + $0xfa] sm:$0xff]
      %v1641 = vld [vmem:[%s1232 + $0x10a] sm:$0xff]
      %v1642 = vld [vmem:[%s1232 + $0x112] sm:$0xff]
      %v1643 = vld [vmem:[%s1232 + $0x122] sm:$0xff]
      %v1644 = vld [vmem:[%s1232 + $0x12a] sm:$0xff]
      %v1645 = vld [vmem:[%s1232 + $0x13a] sm:$0xff]
      %v1646 = vld [vmem:[%s1232 + $0x142] sm:$0xff]
      %v1647 = vld [vmem:[%s1232 + $0x152] sm:$0xff]
      %v1648 = vld [vmem:[%s1232 + $0x15a] sm:$0xff]
      %v1649 = vld [vmem:[%s1232 + $0x16a] sm:$0xff]
      %v1650 = vld [vmem:[%s1232 + $0x172] sm:$0xff]
      %1683 = vrot.lane.b32.xlu0 %v1619, 24
      %v1684 = vpop.permute.xlu0 %1683
      %1685 = vrot.lane.b32.xlu0 %v1620, 24
      %v1686 = vpop.permute.xlu0 %1685
      %1687 = vrot.lane.b32.xlu0 %v1621, 24
      %v1688 = vpop.permute.xlu0 %1687
      %1689 = vrot.lane.b32.xlu0 %v1622, 24
      %v1690 = vpop.permute.xlu0 %1689
      %1691 = vrot.lane.b32.xlu0 %v1623, 24
      %v1692 = vpop.permute.xlu0 %1691
      %1693 = vrot.lane.b32.xlu0 %v1624, 24
      %v1694 = vpop.permute.xlu0 %1693
      %1695 = vrot.lane.b32.xlu0 %v1625, 24
      %v1696 = vpop.permute.xlu0 %1695
      %1697 = vrot.lane.b32.xlu0 %v1626, 24
      %v1698 = vpop.permute.xlu0 %1697
      %1699 = vrot.lane.b32.xlu0 %v1627, 24
      %v1700 = vpop.permute.xlu0 %1699
      %1701 = vrot.lane.b32.xlu0 %v1628, 24
      %v1702 = vpop.permute.xlu0 %1701
      %1703 = vrot.lane.b32.xlu0 %v1629, 24
      %v1704 = vpop.permute.xlu0 %1703
      %1705 = vrot.lane.b32.xlu0 %v1630, 24
      %v1706 = vpop.permute.xlu0 %1705
      %1707 = vrot.lane.b32.xlu0 %v1631, 24
      %v1708 = vpop.permute.xlu0 %1707
      %1709 = vrot.lane.b32.xlu0 %v1632, 24
      %v1710 = vpop.permute.xlu0 %1709
      %1711 = vrot.lane.b32.xlu0 %v1633, 24
      %v1712 = vpop.permute.xlu0 %1711
      %1713 = vrot.lane.b32.xlu0 %v1634, 24
      %v1714 = vpop.permute.xlu0 %1713
      %1715 = vrot.lane.b32.xlu0 %v1635, 24
      %v1716 = vpop.permute.xlu0 %1715
      %1717 = vrot.lane.b32.xlu0 %v1636, 24
      %v1718 = vpop.permute.xlu0 %1717
      %1719 = vrot.lane.b32.xlu0 %v1637, 24
      %v1720 = vpop.permute.xlu0 %1719
      %1721 = vrot.lane.b32.xlu0 %v1638, 24
      %v1722 = vpop.permute.xlu0 %1721
      %1723 = vrot.lane.b32.xlu0 %v1639, 24
      %v1724 = vpop.permute.xlu0 %1723
      %1725 = vrot.lane.b32.xlu0 %v1640, 24
      %v1726 = vpop.permute.xlu0 %1725
      %1727 = vrot.lane.b32.xlu0 %v1641, 24
      %v1728 = vpop.permute.xlu0 %1727
      %1729 = vrot.lane.b32.xlu0 %v1642, 24
      %v1730 = vpop.permute.xlu0 %1729
      %1731 = vrot.lane.b32.xlu0 %v1643, 24
      %v1732 = vpop.permute.xlu0 %1731
      %1733 = vrot.lane.b32.xlu0 %v1644, 24
      %v1734 = vpop.permute.xlu0 %1733
      %1735 = vrot.lane.b32.xlu0 %v1645, 24
      %v1736 = vpop.permute.xlu0 %1735
      %1737 = vrot.lane.b32.xlu0 %v1646, 24
      %v1738 = vpop.permute.xlu0 %1737
      %1739 = vrot.lane.b32.xlu0 %v1647, 24
      %v1740 = vpop.permute.xlu0 %1739
      %1741 = vrot.lane.b32.xlu0 %v1648, 24
      %v1742 = vpop.permute.xlu0 %1741
      %1743 = vrot.lane.b32.xlu0 %v1649, 24
      %v1744 = vpop.permute.xlu0 %1743
      %1745 = vrot.lane.b32.xlu0 %v1650, 24
      %v1746 = vpop.permute.xlu0 %1745
      %vm1779 = vcmask 220352
      %1780 = vst.msk [vmem:[#allocation2] sm:$0xff] %vm1779, %v1684
      %1781 = vst.msk [vmem:[#allocation2 + $0x8] sm:$0xff] %vm1779, %v1686
      %1782 = vst.msk [vmem:[#allocation2 + $0x10] sm:$0xff] %vm1779, %v1688
      %1783 = vst.msk [vmem:[#allocation2 + $0x18] sm:$0xff] %vm1779, %v1690
      %1784 = vst.msk [vmem:[#allocation2 + $0x20] sm:$0xff] %vm1779, %v1692
      %1785 = vst.msk [vmem:[#allocation2 + $0x28] sm:$0xff] %vm1779, %v1694
      %1786 = vst.msk [vmem:[#allocation2 + $0x30] sm:$0xff] %vm1779, %v1696
      %1787 = vst.msk [vmem:[#allocation2 + $0x38] sm:$0xff] %vm1779, %v1698
      %1788 = vst.msk [vmem:[#allocation2 + $0x40] sm:$0xff] %vm1779, %v1700
      %1789 = vst.msk [vmem:[#allocation2 + $0x48] sm:$0xff] %vm1779, %v1702
      %1790 = vst.msk [vmem:[#allocation2 + $0x50] sm:$0xff] %vm1779, %v1704
      %1791 = vst.msk [vmem:[#allocation2 + $0x58] sm:$0xff] %vm1779, %v1706
      %1792 = vst.msk [vmem:[#allocation2 + $0x60] sm:$0xff] %vm1779, %v1708
      %1793 = vst.msk [vmem:[#allocation2 + $0x68] sm:$0xff] %vm1779, %v1710
      %1794 = vst.msk [vmem:[#allocation2 + $0x70] sm:$0xff] %vm1779, %v1712
      %1795 = vst.msk [vmem:[#allocation2 + $0x78] sm:$0xff] %vm1779, %v1714
      %1796 = vst.msk [vmem:[#allocation2 + $0x80] sm:$0xff] %vm1779, %v1716
      %1797 = vst.msk [vmem:[#allocation2 + $0x88] sm:$0xff] %vm1779, %v1718
      %1798 = vst.msk [vmem:[#allocation2 + $0x90] sm:$0xff] %vm1779, %v1720
      %1799 = vst.msk [vmem:[#allocation2 + $0x98] sm:$0xff] %vm1779, %v1722
      %1800 = vst.msk [vmem:[#allocation2 + $0xa0] sm:$0xff] %vm1779, %v1724
      %1801 = vst.msk [vmem:[#allocation2 + $0xa8] sm:$0xff] %vm1779, %v1726
      %1802 = vst.msk [vmem:[#allocation2 + $0xb0] sm:$0xff] %vm1779, %v1728
      %1803 = vst.msk [vmem:[#allocation2 + $0xb8] sm:$0xff] %vm1779, %v1730
      %1804 = vst.msk [vmem:[#allocation2 + $0xc0] sm:$0xff] %vm1779, %v1732
      %1805 = vst.msk [vmem:[#allocation2 + $0xc8] sm:$0xff] %vm1779, %v1734
      %1806 = vst.msk [vmem:[#allocation2 + $0xd0] sm:$0xff] %vm1779, %v1736
      %1807 = vst.msk [vmem:[#allocation2 + $0xd8] sm:$0xff] %vm1779, %v1738
      %1808 = vst.msk [vmem:[#allocation2 + $0xe0] sm:$0xff] %vm1779, %v1740
      %1809 = vst.msk [vmem:[#allocation2 + $0xe8] sm:$0xff] %vm1779, %v1742
      %1810 = vst.msk [vmem:[#allocation2 + $0xf0] sm:$0xff] %vm1779, %v1744
      %1811 = vst.msk [vmem:[#allocation2 + $0xf8] sm:$0xff] %vm1779, %v1746
      %v1812 = vld [vmem:[%s1] sm:$0xff]
      %v1813 = vld [vmem:[#allocation2] sm:$0xff]
      %v1814 = vld [vmem:[#allocation2 + $0x8] sm:$0xff]
      %v1815 = vld [vmem:[#allocation2 + $0x10] sm:$0xff]
      %v1816 = vld [vmem:[#allocation2 + $0x18] sm:$0xff]
      %v1817 = vld [vmem:[#allocation2 + $0x20] sm:$0xff]
      %v1818 = vld [vmem:[#allocation2 + $0x28] sm:$0xff]
      %v1819 = vld [vmem:[#allocation2 + $0x30] sm:$0xff]
      %v1820 = vld [vmem:[#allocation2 + $0x38] sm:$0xff]
      %v1821 = vld [vmem:[#allocation2 + $0x40] sm:$0xff]
      %v1822 = vld [vmem:[#allocation2 + $0x48] sm:$0xff]
      %v1823 = vld [vmem:[#allocation2 + $0x50] sm:$0xff]
      %v1824 = vld [vmem:[#allocation2 + $0x58] sm:$0xff]
      %v1825 = vld [vmem:[#allocation2 + $0x60] sm:$0xff]
      %v1826 = vld [vmem:[#allocation2 + $0x68] sm:$0xff]
      %v1827 = vld [vmem:[#allocation2 + $0x70] sm:$0xff]
      %v1828 = vld [vmem:[#allocation2 + $0x78] sm:$0xff]
      %v1829 = vld [vmem:[#allocation2 + $0x80] sm:$0xff]
      %v1830 = vld [vmem:[#allocation2 + $0x88] sm:$0xff]
      %v1831 = vld [vmem:[#allocation2 + $0x90] sm:$0xff]
      %v1832 = vld [vmem:[#allocation2 + $0x98] sm:$0xff]
      %v1833 = vld [vmem:[#allocation2 + $0xa0] sm:$0xff]
      %v1834 = vld [vmem:[#allocation2 + $0xa8] sm:$0xff]
      %v1835 = vld [vmem:[#allocation2 + $0xb0] sm:$0xff]
      %v1836 = vld [vmem:[#allocation2 + $0xb8] sm:$0xff]
      %v1837 = vld [vmem:[#allocation2 + $0xc0] sm:$0xff]
      %v1838 = vld [vmem:[#allocation2 + $0xc8] sm:$0xff]
      %v1839 = vld [vmem:[#allocation2 + $0xd0] sm:$0xff]
      %v1840 = vld [vmem:[#allocation2 + $0xd8] sm:$0xff]
      %v1841 = vld [vmem:[#allocation2 + $0xe0] sm:$0xff]
      %v1842 = vld [vmem:[#allocation2 + $0xe8] sm:$0xff]
      %v1843 = vld [vmem:[#allocation2 + $0xf0] sm:$0xff]
      %v1844 = vld [vmem:[#allocation2 + $0xf8] sm:$0xff]
      %v1845 = vld [vmem:[%s2] sm:$0xff]
      %1847 = vset.pattern.permute.xlu0 0
      %1848 = vperm.xlu0 %1847, %v1845
      %v1849 = vpop.permute.xlu0 %1848
      %vm1851 = vcmask 220160
      %v1853 = vsel %vm1851, %v1812, 0
      %v1856 = vsel %vm1851, %v1813, 0
      %v1859 = vsel %vm1851, %v1814, 0
      %v1862 = vsel %vm1851, %v1815, 0
      %v1865 = vsel %vm1851, %v1816, 0
      %v1868 = vsel %vm1851, %v1817, 0
      %v1871 = vsel %vm1851, %v1818, 0
      %v1874 = vsel %vm1851, %v1819, 0
      %v1877 = vsel %vm1851, %v1820, 0
      %v1880 = vsel %vm1851, %v1821, 0
      %v1883 = vsel %vm1851, %v1822, 0
      %v1886 = vsel %vm1851, %v1823, 0
      %v1889 = vsel %vm1851, %v1824, 0
      %v1892 = vsel %vm1851, %v1825, 0
      %v1895 = vsel %vm1851, %v1826, 0
      %v1898 = vsel %vm1851, %v1827, 0
      %v1901 = vsel %vm1851, %v1828, 0
      %v1904 = vsel %vm1851, %v1829, 0
      %v1907 = vsel %vm1851, %v1830, 0
      %v1910 = vsel %vm1851, %v1831, 0
      %v1913 = vsel %vm1851, %v1832, 0
      %v1916 = vsel %vm1851, %v1833, 0
      %v1919 = vsel %vm1851, %v1834, 0
      %v1922 = vsel %vm1851, %v1835, 0
      %v1925 = vsel %vm1851, %v1836, 0
      %v1928 = vsel %vm1851, %v1837, 0
      %v1931 = vsel %vm1851, %v1838, 0
      %v1934 = vsel %vm1851, %v1839, 0
      %v1937 = vsel %vm1851, %v1840, 0
      %v1940 = vsel %vm1851, %v1841, 0
      %v1943 = vsel %vm1851, %v1842, 0
      %v1946 = vsel %vm1851, %v1843, 0
      %v1949 = vsel %vm1851, %v1844, 0
      %1951 = vmatprep.subr.mxu0 0.0
      %1952 = vmatpush1.xpose.msra.mxu0 %v1856
      %1953 = vmatprep.subr.mxu0 0.0
      %1954 = vmatpush1.xpose.msra.mxu0 %v1859
      %1955 = vmatprep.subr.mxu0 0.0
      %1956 = vmatpush1.xpose.msra.mxu0 %v1862
      %1957 = vmatprep.subr.mxu0 0.0
      %1958 = vmatpush1.xpose.msra.mxu0 %v1865
      %1959 = vmatprep.subr.mxu0 0.0
      %1960 = vmatpush1.xpose.msra.mxu0 %v1868
      %1961 = vmatprep.subr.mxu0 0.0
      %1962 = vmatpush1.xpose.msra.mxu0 %v1871
      %1963 = vmatprep.subr.mxu0 0.0
      %1964 = vmatpush1.xpose.msra.mxu0 %v1874
      %1965 = vmatprep.subr.mxu0 0.0
      %1966 = vmatpush1.xpose.msra.mxu0 %v1877
      %1967 = vmatprep.subr.mxu0 0.0
      %1968 = vmatpush1.xpose.msra.mxu0 %v1880
      %1969 = vmatprep.subr.mxu0 0.0
      %1970 = vmatpush1.xpose.msra.mxu0 %v1883
      %1971 = vmatprep.subr.mxu0 0.0
      %1972 = vmatpush1.xpose.msra.mxu0 %v1886
      %1973 = vmatprep.subr.mxu0 0.0
      %1974 = vmatpush1.xpose.msra.mxu0 %v1889
      %1975 = vmatprep.subr.mxu0 0.0
      %1976 = vmatpush1.xpose.msra.mxu0 %v1892
      %1977 = vmatprep.subr.mxu0 0.0
      %1978 = vmatpush1.xpose.msra.mxu0 %v1895
      %1979 = vmatprep.subr.mxu0 0.0
      %1980 = vmatpush1.xpose.msra.mxu0 %v1898
      %1981 = vmatprep.subr.mxu0 0.0
      %1982 = vmatpush1.xpose.msra.mxu0 %v1901
      %1983 = vmatprep.subr.mxu0 0.0
      %1984 = vmatpush1.xpose.msra.mxu0 %v1904
      %1985 = vmatprep.subr.mxu0 0.0
      %1986 = vmatpush1.xpose.msra.mxu0 %v1907
      %1987 = vmatprep.subr.mxu0 0.0
      %1988 = vmatpush1.xpose.msra.mxu0 %v1910
      %1989 = vmatprep.subr.mxu0 0.0
      %1990 = vmatpush1.xpose.msra.mxu0 %v1913
      %1991 = vmatprep.subr.mxu0 0.0
      %1992 = vmatpush1.xpose.msra.mxu0 %v1916
      %1993 = vmatprep.subr.mxu0 0.0
      %1994 = vmatpush1.xpose.msra.mxu0 %v1919
      %1995 = vmatprep.subr.mxu0 0.0
      %1996 = vmatpush1.xpose.msra.mxu0 %v1922
      %1997 = vmatprep.subr.mxu0 0.0
      %1998 = vmatpush1.xpose.msra.mxu0 %v1925
      %1999 = vmatprep.subr.mxu0 0.0
      %2000 = vmatpush1.xpose.msra.mxu0 %v1928
      %2001 = vmatprep.subr.mxu0 0.0
      %2002 = vmatpush1.xpose.msra.mxu0 %v1931
      %2003 = vmatprep.subr.mxu0 0.0
      %2004 = vmatpush1.xpose.msra.mxu0 %v1934
      %2005 = vmatprep.subr.mxu0 0.0
      %2006 = vmatpush1.xpose.msra.mxu0 %v1937
      %2007 = vmatprep.subr.mxu0 0.0
      %2008 = vmatpush1.xpose.msra.mxu0 %v1940
      %2009 = vmatprep.subr.mxu0 0.0
      %2010 = vmatpush1.xpose.msra.mxu0 %v1943
      %2011 = vmatprep.subr.mxu0 0.0
      %2012 = vmatpush1.xpose.msra.mxu0 %v1946
      %2013 = vmatprep.subr.mxu0 0.0
      %2014 = vmatpush1.xpose.msra.mxu0 %v1949
      %2015 = vmatprep.mubr.f32.mxu0 0.0
      %2016 = vmatmul.mubr.f32.gmra.mrb[0].mxu0 %v1853
      %v2017 = vpop.f32.mrb[0].mxu0
      %v2018 = vadd.f32 %v1849, %v2017
      %v2019 = vpop.f32.mrb[0].mxu0
      %v2020 = vadd.f32 %v1849, %v2019
      %2021 = vdwg.mxu0
      %v2022 = vmax.f32 %v2018, 0.0
      %v2023 = vmax.f32 %v2020, 0.0
      %2024 = vst [vmem:[%s192] sm:$0xff] %v2022
      %2025 = vst [vmem:[%s192 + $0x8] sm:$0xff] %v2023
      %s2026 = smul.u32 2, %s19
      %p2027 = scmp.lt.s32.totalorder %s18, 3
      %s2028 = scalar_select %p2027, %s18, 3
      %p2029 = scmp.lt.s32.totalorder %s2026, 1
      %s2030 = scalar_select %p2029, %s2026, 1
      %s2031 = smul.addr %s2028, 2
      %s2032 = sadd.s32 %s2030, %s2031
      %s2033 = smul.addr %s2032, 8
      %s2034 = scalar_lea.vmem %s3, %s2033
      // Predicated region
      $region33: #{cobi_rgb_loss.7} parent=31 // pred_check
        %p2035 = pneg %p114
      $region34: #{cobi_rgb_loss.7} parent=31 // pred_check_branch
        %2037 = sbr.rel (%p2035) target = $region36
      $region35: #{cobi_rgb_loss.7} parent=31 // pred_region
        %s2038 = smul.u32 2, %s19
      $region36: #{cobi_rgb_loss.7} parent=31 // pred_fallthru
        _
    $region32: #{cobi_rgb_loss.7} parent=5 // pred_fallthru
      _
    %p2039 = scmp.le.s32.totalorder 2, %s9
    // Predicated region
    $region37: #{cobi_rgb_loss.7} parent=5 // pred_check
      %p2040 = pneg %p2039
    $region38: #{cobi_rgb_loss.7} parent=5 // pred_check_branch
      %2042 = sbr.rel (%p2040) target = $region40
    $region39: #{cobi_rgb_loss.7} parent=5 // pred_region
      %s2043 = ssub.s32 %s9, 2
      // Predicated region
      $region41: #{cobi_rgb_loss.7} parent=39 // pred_check
        %p2044 = pneg %p120
      $region42: #{cobi_rgb_loss.7} parent=39 // pred_check_branch
        %2046 = sbr.rel (%p2044) target = $region44
      $region43: #{cobi_rgb_loss.7} parent=39 // pred_region
        %s2047 = smul.u32 2, %s21
        %p2048 = scmp.lt.s32.totalorder %s20, 3
        %s2049 = scalar_select %p2048, %s20, 3
        %p2050 = scmp.lt.s32.totalorder %s2047, 1
        %s2051 = scalar_select %p2050, %s2047, 1
        %s2052 = smul.addr %s2049, 2
        %s2053 = sadd.s32 %s2051, %s2052
        %s2054 = smul.addr %s2053, 8
        %s2055 = scalar_lea.vmem %s3, %s2054
      $region44: #{cobi_rgb_loss.7} parent=39 // pred_fallthru
        _
    $region40: #{cobi_rgb_loss.7} parent=5 // pred_fallthru
      _
  $region6: #{cobi_rgb_loss.7} parent=0 // loop_footer
    %s13 = sadd.s32 1, %s9
  $region7: #{cobi_rgb_loss.7} parent=0 // loop_footer_branch
    %8 = sbr.rel target = $region3
  $region8: #{cobi_rgb_loss.7} parent=0 // loop_exit
    _

// kernel: cobi_rgb_loss.8
$region0: #{cobi_rgb_loss.8}
  #allocation0 [shape = 'u32[]', space=smem, size = 0x4, offset = 0x4, fixed_abs, tag = 'smem constant byte address 0x4 - core index']
  #allocation1 [shape = 'u32[144,128]{1,0:T(1,128)}', space=vmem, size = 0x12000, scoped, tag = 'internal scratch']
  #allocation2 [shape = 'f32[64,72]{1,0:T(8,128)}', space=vmem, size = 0x8000, scoped, tag = 'scratch operand']
  %s0 = inlined_call_operand.vmem [shape: f32[4,10,10,8], index: 0, kind: input, shape index: {}]
  %s1 = inlined_call_operand.vmem [shape: f32[16,72], index: 1, kind: input, shape index: {}]
  %s2 = inlined_call_operand.vmem [shape: f32[16,1], index: 2, kind: input, shape index: {}]
  %s3 = inlined_call_operand.vmem [shape: f32[4,16,64], index: 3, kind: output, shape index: {}]
  %s4 = sld [smem:[#allocation0]]
  $region45: #{cobi_rgb_loss.8} parent=0
    _
  %s6 = ssub.s32 1, %s4
  %s7 = scalar_select 0, %s6, %s4
  loop: start=0, step=1, limit=6
  $region2: #{cobi_rgb_loss.8} parent=0 // loop_pre_header
    _
  $region3: #{cobi_rgb_loss.8} parent=0 // loop_header
    %s9 = sphi 0, %s13
    %p10 = scmp.ge.s32.totalorder %s9, 6
    %s16 = sphi 0, %s28
    %s17 = sphi 0, %s24
    %s18 = sphi 0, %s16
    %s19 = sphi 0, %s17
    %s20 = sphi 0, %s18
    %s21 = sphi 0, %s19
    %s31 = sphi 0, %s33
    %s34 = sphi 0, %s31
    %s35 = sphi 0, %s34
    %s51 = sphi 0, %s35
    %s55 = sphi 0, %s55
    %s57 = sphi 0, %s55
    %s58 = sphi 0, %s57
    %s72 = sphi 0, %s58
    %s76 = sphi 0, %s76
    %s78 = sphi 0, %s76
    %s79 = sphi 0, %s78
    %s93 = sphi 0, %s79
    %s101 = sphi 0, %s103
    %s104 = sphi 0, %s101
    %s105 = sphi 0, %s104
    %s121 = sphi 0, %s105
  $region4: #{cobi_rgb_loss.8} parent=0 // loop_header_branch
    %12 = sbr.rel (%p10) target = $region8
  $region5: #{cobi_rgb_loss.8} parent=0 // loop_body
    %s14 = ssub.s32 %s9, 1
    %s15 = ssub.s32 %s9, 2
    %s22 = sadd.s32 1, %s17
    %p23 = scmp.ge.s32.totalorder %s22, 1
    %s24 = scalar_select %p23, 0, %s22
    %s25 = sadd.s32 1, %s16
    %s26 = scalar_select %p23, %s25, %s16
    %p27 = scmp.ge.s32.totalorder %s26, 4
    %s28 = scalar_select %p27, 0, %s26
    %s29 = ssub.s32 %s16, %s28
    %p30 = scmp.eq.s32.totalorder %s29, 0
    %s32 = sadd.s32 %s31, 1
    %s33 = scalar_select %p30, %s31, %s32
    %p36 = pneg %p30
    %p37 = scmp.eq.s32.totalorder %s9, 3
    %p38 = por %p36, %p37
    %p39 = scmp.ne.s32.totalorder %s31, %s34
    %p40 = scmp.eq.s32.totalorder %s9, 0
    %p41 = por %p39, %p40
    %p42 = scmp.ne.s32.totalorder %s31, %s34
    %p43 = scmp.eq.s32.totalorder %s14, 3
    %p44 = por %p42, %p43
    %p45 = scmp.ne.s32.totalorder %s34, %s35
    %p46 = scmp.eq.s32.totalorder %s14, 0
    %p47 = por %p45, %p46
    %p48 = scmp.ne.s32.totalorder %s34, %s35
    %p49 = scmp.eq.s32.totalorder %s15, 3
    %p50 = por %p48, %p49
    %p52 = scmp.ne.s32.totalorder %s35, %s51
    %p53 = scmp.eq.s32.totalorder %s15, 0
    %p54 = por %p52, %p53
    %s56 = sadd.s32 %s55, 1
    %p59 = scmp.eq.s32.totalorder %s9, 3
    %p60 = scmp.ne.s32.totalorder %s55, %s57
    %p61 = scmp.eq.s32.totalorder %s9, 0
    %p62 = por %p60, %p61
    %p63 = scmp.ne.s32.totalorder %s55, %s57
    %p64 = scmp.eq.s32.totalorder %s14, 3
    %p65 = por %p63, %p64
    %p66 = scmp.ne.s32.totalorder %s57, %s58
    %p67 = scmp.eq.s32.totalorder %s14, 0
    %p68 = por %p66, %p67
    %p69 = scmp.ne.s32.totalorder %s57, %s58
    %p70 = scmp.eq.s32.totalorder %s15, 3
    %p71 = por %p69, %p70
    %p73 = scmp.ne.s32.totalorder %s58, %s72
    %p74 = scmp.eq.s32.totalorder %s15, 0
    %p75 = por %p73, %p74
    %s77 = sadd.s32 %s76, 1
    %p80 = scmp.eq.s32.totalorder %s9, 3
    %p81 = scmp.ne.s32.totalorder %s76, %s78
    %p82 = scmp.eq.s32.totalorder %s9, 0
    %p83 = por %p81, %p82
    %p84 = scmp.ne.s32.totalorder %s76, %s78
    %p85 = scmp.eq.s32.totalorder %s14, 3
    %p86 = por %p84, %p85
    %p87 = scmp.ne.s32.totalorder %s78, %s79
    %p88 = scmp.eq.s32.totalorder %s14, 0
    %p89 = por %p87, %p88
    %p90 = scmp.ne.s32.totalorder %s78, %s79
    %p91 = scmp.eq.s32.totalorder %s15, 3
    %p92 = por %p90, %p91
    %p94 = scmp.ne.s32.totalorder %s79, %s93
    %p95 = scmp.eq.s32.totalorder %s15, 0
    %p96 = por %p94, %p95
    %s97 = ssub.s32 %s16, %s28
    %s98 = ssub.s32 %s17, %s24
    %s99 = sor.u32 %s97, %s98
    %p100 = scmp.eq.s32.totalorder %s99, 0
    %s102 = sadd.s32 %s101, 1
    %s103 = scalar_select %p100, %s101, %s102
    %p106 = pneg %p100
    %p107 = scmp.eq.s32.totalorder %s9, 3
    %p108 = por %p106, %p107
    %p109 = scmp.ne.s32.totalorder %s101, %s104
    %p110 = scmp.eq.s32.totalorder %s9, 0
    %p111 = por %p109, %p110
    %p112 = scmp.ne.s32.totalorder %s101, %s104
    %p113 = scmp.eq.s32.totalorder %s14, 3
    %p114 = por %p112, %p113
    %p115 = scmp.ne.s32.totalorder %s104, %s105
    %p116 = scmp.eq.s32.totalorder %s14, 0
    %p117 = por %p115, %p116
    %p118 = scmp.ne.s32.totalorder %s104, %s105
    %p119 = scmp.eq.s32.totalorder %s15, 3
    %p120 = por %p118, %p119
    %p122 = scmp.ne.s32.totalorder %s105, %s121
    %p123 = scmp.eq.s32.totalorder %s15, 0
    %p124 = por %p122, %p123
    %p125 = scmp.le.s32.totalorder 1, %s9
    %p126 = scmp.lt.s32.totalorder %s9, 5
    %p127 = pnand %p125, %p126
    %p128 = pneg %p127
    // Predicated region
    $region9: #{cobi_rgb_loss.8} parent=5 // pred_check
      _
    $region10: #{cobi_rgb_loss.8} parent=5 // pred_check_branch
      %130 = sbr.rel (%p127) target = $region12
    $region11: #{cobi_rgb_loss.8} parent=5 // pred_region
      %s131 = ssub.s32 %s9, 1
      // Predicated region
      $region13: #{cobi_rgb_loss.8} parent=11 // pred_check
        %p132 = pneg %p68
      $region14: #{cobi_rgb_loss.8} parent=11 // pred_check_branch
        %134 = sbr.rel (%p132) target = $region16
      $region15: #{cobi_rgb_loss.8} parent=11 // pred_region
        _
      $region16: #{cobi_rgb_loss.8} parent=11 // pred_fallthru
        _
      // Predicated region
      $region17: #{cobi_rgb_loss.8} parent=11 // pred_check
        %p135 = pneg %p89
      $region18: #{cobi_rgb_loss.8} parent=11 // pred_check_branch
        %137 = sbr.rel (%p135) target = $region20
      $region19: #{cobi_rgb_loss.8} parent=11 // pred_region
        _
      $region20: #{cobi_rgb_loss.8} parent=11 // pred_fallthru
        _
    $region12: #{cobi_rgb_loss.8} parent=5 // pred_fallthru
      _
    %p138 = scmp.lt.s32.totalorder %s9, 4
    // Predicated region
    $region21: #{cobi_rgb_loss.8} parent=5 // pred_check
      %p139 = pneg %p138
    $region22: #{cobi_rgb_loss.8} parent=5 // pred_check_branch
      %141 = sbr.rel (%p139) target = $region24
    $region23: #{cobi_rgb_loss.8} parent=5 // pred_region
      // Predicated region
      $region25: #{cobi_rgb_loss.8} parent=23 // pred_check
        %p142 = pneg %p41
      $region26: #{cobi_rgb_loss.8} parent=23 // pred_check_branch
        %144 = sbr.rel (%p142) target = $region28
      $region27: #{cobi_rgb_loss.8} parent=23 // pred_region
        %p145 = scmp.lt.s32.totalorder %s16, 3
        %s146 = scalar_select %p145, %s16, 3
        %s147 = smul.addr %s146, 20
        %s148 = smul.addr %s147, 8
        %s149 = scalar_lea.vmem %s0, %s148
      $region28: #{cobi_rgb_loss.8} parent=23 // pred_fallthru
        _
    $region24: #{cobi_rgb_loss.8} parent=5 // pred_fallthru
      _
    %p150 = scmp.le.s32.totalorder 1, %s9
    %p151 = scmp.lt.s32.totalorder %s9, 5
    %p152 = pnand %p150, %p151
    %p153 = pneg %p152
    // Predicated region
    $region29: #{cobi_rgb_loss.8} parent=5 // pred_check
      _
    $region30: #{cobi_rgb_loss.8} parent=5 // pred_check_branch
      %155 = sbr.rel (%p152) target = $region32
    $region31: #{cobi_rgb_loss.8} parent=5 // pred_region
      %s156 = ssub.s32 %s9, 1
      %p157 = scmp.lt.s32.totalorder %s18, 3
      %s158 = scalar_select %p157, %s18, 3
      %s159 = smul.addr %s158, 20
      %s160 = smul.addr %s159, 8
      %s161 = scalar_lea.vmem %s0, %s160
      %p162 = pneg %p47
      %p163 = pneg %p44
      %p164 = pneg %p68
      %p165 = pneg %p65
      %p166 = pneg %p89
      %p167 = pneg %p86
      %p168 = pneg %p117
      %p169 = pneg %p114
      %p170 = scmp.lt.s32.totalorder %s18, 3
      %s171 = scalar_select %p170, %s18, 3
      %p172 = scmp.lt.s32.totalorder %s19, 0
      %s173 = scalar_select %p172, %s19, 0
      %s174 = smul.addr %s171, 2
      %s175 = sadd.s32 %s173, %s174
      %s176 = smul.addr %s175, 8
      %s177 = scalar_lea.vmem %s3, %s176
      %p178 = scmp.lt.s32.totalorder %s18, 3
      %s179 = scalar_select %p178, %s18, 3
      %s180 = smul.addr %s179, 20
      %s181 = smul.addr %s180, 8
      %s182 = scalar_lea.vmem %s0, %s181
      %p183 = scmp.lt.s32.totalorder %s18, 3
      %s184 = scalar_select %p183, %s18, 3
      %p185 = scmp.lt.s32.totalorder %s19, 0
      %s186 = scalar_select %p185, %s19, 0
      %s187 = smul.addr %s184, 2
      %s188 = sadd.s32 %s186, %s187
      %s189 = smul.addr %s188, 8
      %s190 = scalar_lea.vmem %s3, %s189
      %s191 = smul.u32 %s19, 8
      %s192 = smul.u32 %s191, 16
      %s193 = scalar_lea.vmem %s182, %s192
      %v194 = vld [vmem:[%s193] sm:$0xff]
      %v195 = vld [vmem:[%s193 + $0x10] sm:$0xff]
      %v196 = vld [vmem:[%s193 + $0x20] sm:$0xff]
      %v197 = vld [vmem:[%s193 + $0x30] sm:$0xff]
      %v198 = vld [vmem:[%s193 + $0x40] sm:$0xff]
      %v199 = vld [vmem:[%s193 + $0x50] sm:$0xff]
      %v200 = vld [vmem:[%s193 + $0x60] sm:$0xff]
      %v201 = vld [vmem:[%s193 + $0x70] sm:$0xff]
      %vm202 = vcmask 64512
      %203 = vst.msk [vmem:[#allocation2] sm:$0xff] %vm202, %v194
      %204 = vst.msk [vmem:[#allocation2 + $0x8] sm:$0xff] %vm202, %v195
      %205 = vst.msk [vmem:[#allocation2 + $0x10] sm:$0xff] %vm202, %v196
      %206 = vst.msk [vmem:[#allocation2 + $0x18] sm:$0xff] %vm202, %v197
      %207 = vst.msk [vmem:[#allocation2 + $0x20] sm:$0xff] %vm202, %v198
      %208 = vst.msk [vmem:[#allocation2 + $0x28] sm:$0xff] %vm202, %v199
      %209 = vst.msk [vmem:[#allocation2 + $0x30] sm:$0xff] %vm202, %v200
      %210 = vst.msk [vmem:[#allocation2 + $0x38] sm:$0xff] %vm202, %v201
      %v211 = vld [vmem:[%s193 + $0x1] sm:$0xff]
      %v212 = vld [vmem:[%s193 + $0x11] sm:$0xff]
      %v213 = vld [vmem:[%s193 + $0x21] sm:$0xff]
      %v214 = vld [vmem:[%s193 + $0x31] sm:$0xff]
      %v215 = vld [vmem:[%s193 + $0x41] sm:$0xff]
      %v216 = vld [vmem:[%s193 + $0x51] sm:$0xff]
      %v217 = vld [vmem:[%s193 + $0x61] sm:$0xff]
      %v218 = vld [vmem:[%s193 + $0x71] sm:$0xff]
      %227 = vrot.lane.b32.xlu0 %v211, 8
      %v228 = vpop.permute.xlu0 %227
      %229 = vrot.lane.b32.xlu0 %v212, 8
      %v230 = vpop.permute.xlu0 %229
      %231 = vrot.lane.b32.xlu0 %v213, 8
      %v232 = vpop.permute.xlu0 %231
      %233 = vrot.lane.b32.xlu0 %v214, 8
      %v234 = vpop.permute.xlu0 %233
      %235 = vrot.lane.b32.xlu0 %v215, 8
      %v236 = vpop.permute.xlu0 %235
      %237 = vrot.lane.b32.xlu0 %v216, 8
      %v238 = vpop.permute.xlu0 %237
      %239 = vrot.lane.b32.xlu0 %v217, 8
      %v240 = vpop.permute.xlu0 %239
      %241 = vrot.lane.b32.xlu0 %v218, 8
      %v242 = vpop.permute.xlu0 %241
      %vm251 = vcmask 130112
      %252 = vst.msk [vmem:[#allocation2] sm:$0xff] %vm251, %v228
      %253 = vst.msk [vmem:[#allocation2 + $0x8] sm:$0xff] %vm251, %v230
      %254 = vst.msk [vmem:[#allocation2 + $0x10] sm:$0xff] %vm251, %v232
      %255 = vst.msk [vmem:[#allocation2 + $0x18] sm:$0xff] %vm251, %v234
      %256 = vst.msk [vmem:[#allocation2 + $0x20] sm:$0xff] %vm251, %v236
      %257 = vst.msk [vmem:[#allocation2 + $0x28] sm:$0xff] %vm251, %v238
      %258 = vst.msk [vmem:[#allocation2 + $0x30] sm:$0xff] %vm251, %v240
      %259 = vst.msk [vmem:[#allocation2 + $0x38] sm:$0xff] %vm251, %v242
      %v260 = vld [vmem:[%s193 + $0x2] sm:$0xff]
      %v261 = vld [vmem:[%s193 + $0x12] sm:$0xff]
      %v262 = vld [vmem:[%s193 + $0x22] sm:$0xff]
      %v263 = vld [vmem:[%s193 + $0x32] sm:$0xff]
      %v264 = vld [vmem:[%s193 + $0x42] sm:$0xff]
      %v265 = vld [vmem:[%s193 + $0x52] sm:$0xff]
      %v266 = vld [vmem:[%s193 + $0x62] sm:$0xff]
      %v267 = vld [vmem:[%s193 + $0x72] sm:$0xff]
      %276 = vrot.lane.b32.xlu0 %v260, 16
      %v277 = vpop.permute.xlu0 %276
      %278 = vrot.lane.b32.xlu0 %v261, 16
      %v279 = vpop.permute.xlu0 %278
      %280 = vrot.lane.b32.xlu0 %v262, 16
      %v281 = vpop.permute.xlu0 %280
      %282 = vrot.lane.b32.xlu0 %v263, 16
      %v283 = vpop.permute.xlu0 %282
      %284 = vrot.lane.b32.xlu0 %v264, 16
      %v285 = vpop.permute.xlu0 %284
      %286 = vrot.lane.b32.xlu0 %v265, 16
      %v287 = vpop.permute.xlu0 %286
      %288 = vrot.lane.b32.xlu0 %v266, 16
      %v289 = vpop.permute.xlu0 %288
      %290 = vrot.lane.b32.xlu0 %v267, 16
      %v291 = vpop.permute.xlu0 %290
      %vm300 = vcmask 195712
      %301 = vst.msk [vmem:[#allocation2] sm:$0xff] %vm300, %v277
      %302 = vst.msk [vmem:[#allocation2 + $0x8] sm:$0xff] %vm300, %v279
      %303 = vst.msk [vmem:[#allocation2 + $0x10] sm:$0xff] %vm300, %v281
      %304 = vst.msk [vmem:[#allocation2 + $0x18] sm:$0xff] %vm300, %v283
      %305 = vst.msk [vmem:[#allocation2 + $0x20] sm:$0xff] %vm300, %v285
      %306 = vst.msk [vmem:[#allocation2 + $0x28] sm:$0xff] %vm300, %v287
      %307 = vst.msk [vmem:[#allocation2 + $0x30] sm:$0xff] %vm300, %v289
      %308 = vst.msk [vmem:[#allocation2 + $0x38] sm:$0xff] %vm300, %v291
      %s309 = sadd.s32 %s191, 1
      %s310 = smul.u32 %s309, 16
      %s311 = scalar_lea.vmem %s182, %s310
      %v312 = vld [vmem:[%s311] sm:$0xff]
      %v313 = vld [vmem:[%s311 + $0x10] sm:$0xff]
      %v314 = vld [vmem:[%s311 + $0x20] sm:$0xff]
      %v315 = vld [vmem:[%s311 + $0x30] sm:$0xff]
      %v316 = vld [vmem:[%s311 + $0x40] sm:$0xff]
      %v317 = vld [vmem:[%s311 + $0x50] sm:$0xff]
      %v318 = vld [vmem:[%s311 + $0x60] sm:$0xff]
      %v319 = vld [vmem:[%s311 + $0x70] sm:$0xff]
      %328 = vrot.lane.b32.xlu0 %v312, 24
      %v329 = vpop.permute.xlu0 %328
      %330 = vrot.lane.b32.xlu0 %v313, 24
      %v331 = vpop.permute.xlu0 %330
      %332 = vrot.lane.b32.xlu0 %v314, 24
      %v333 = vpop.permute.xlu0 %332
      %334 = vrot.lane.b32.xlu0 %v315, 24
      %v335 = vpop.permute.xlu0 %334
      %336 = vrot.lane.b32.xlu0 %v316, 24
      %v337 = vpop.permute.xlu0 %336
      %338 = vrot.lane.b32.xlu0 %v317, 24
      %v339 = vpop.permute.xlu0 %338
      %340 = vrot.lane.b32.xlu0 %v318, 24
      %v341 = vpop.permute.xlu0 %340
      %342 = vrot.lane.b32.xlu0 %v319, 24
      %v343 = vpop.permute.xlu0 %342
      %vm352 = vcmask 261312
      %353 = vst.msk [vmem:[#allocation2] sm:$0xff] %vm352, %v329
      %354 = vst.msk [vmem:[#allocation2 + $0x8] sm:$0xff] %vm352, %v331
      %355 = vst.msk [vmem:[#allocation2 + $0x10] sm:$0xff] %vm352, %v333
      %356 = vst.msk [vmem:[#allocation2 + $0x18] sm:$0xff] %vm352, %v335
      %357 = vst.msk [vmem:[#allocation2 + $0x20] sm:$0xff] %vm352, %v337
      %358 = vst.msk [vmem:[#allocation2 + $0x28] sm:$0xff] %vm352, %v339
      %359 = vst.msk [vmem:[#allocation2 + $0x30] sm:$0xff] %vm352, %v341
      %360 = vst.msk [vmem:[#allocation2 + $0x38] sm:$0xff] %vm352, %v343
      %v361 = vld [vmem:[%s311 + $0x1] sm:$0xff]
      %v362 = vld [vmem:[%s311 + $0x11] sm:$0xff]
      %v363 = vld [vmem:[%s311 + $0x21] sm:$0xff]
      %v364 = vld [vmem:[%s311 + $0x31] sm:$0xff]
      %v365 = vld [vmem:[%s311 + $0x41] sm:$0xff]
      %v366 = vld [vmem:[%s311 + $0x51] sm:$0xff]
      %v367 = vld [vmem:[%s311 + $0x61] sm:$0xff]
      %v368 = vld [vmem:[%s311 + $0x71] sm:$0xff]
      %377 = vrot.lane.b32.xlu0 %v361, 32
      %v378 = vpop.permute.xlu0 %377
      %379 = vrot.lane.b32.xlu0 %v362, 32
      %v380 = vpop.permute.xlu0 %379
      %381 = vrot.lane.b32.xlu0 %v363, 32
      %v382 = vpop.permute.xlu0 %381
      %383 = vrot.lane.b32.xlu0 %v364, 32
      %v384 = vpop.permute.xlu0 %383
      %385 = vrot.lane.b32.xlu0 %v365, 32
      %v386 = vpop.permute.xlu0 %385
      %387 = vrot.lane.b32.xlu0 %v366, 32
      %v388 = vpop.permute.xlu0 %387
      %389 = vrot.lane.b32.xlu0 %v367, 32
      %v390 = vpop.permute.xlu0 %389
      %391 = vrot.lane.b32.xlu0 %v368, 32
      %v392 = vpop.permute.xlu0 %391
      %vm401 = vcmask 326912
      %402 = vst.msk [vmem:[#allocation2] sm:$0xff] %vm401, %v378
      %403 = vst.msk [vmem:[#allocation2 + $0x8] sm:$0xff] %vm401, %v380
      %404 = vst.msk [vmem:[#allocation2 + $0x10] sm:$0xff] %vm401, %v382
      %405 = vst.msk [vmem:[#allocation2 + $0x18] sm:$0xff] %vm401, %v384
      %406 = vst.msk [vmem:[#allocation2 + $0x20] sm:$0xff] %vm401, %v386
      %407 = vst.msk [vmem:[#allocation2 + $0x28] sm:$0xff] %vm401, %v388
      %408 = vst.msk [vmem:[#allocation2 + $0x30] sm:$0xff] %vm401, %v390
      %409 = vst.msk [vmem:[#allocation2 + $0x38] sm:$0xff] %vm401, %v392
      %v410 = vld [vmem:[%s311 + $0x2] sm:$0xff]
      %v411 = vld [vmem:[%s311 + $0x12] sm:$0xff]
      %v412 = vld [vmem:[%s311 + $0x22] sm:$0xff]
      %v413 = vld [vmem:[%s311 + $0x32] sm:$0xff]
      %v414 = vld [vmem:[%s311 + $0x42] sm:$0xff]
      %v415 = vld [vmem:[%s311 + $0x52] sm:$0xff]
      %v416 = vld [vmem:[%s311 + $0x62] sm:$0xff]
      %v417 = vld [vmem:[%s311 + $0x72] sm:$0xff]
      %426 = vrot.lane.b32.xlu0 %v410, 40
      %v427 = vpop.permute.xlu0 %426
      %428 = vrot.lane.b32.xlu0 %v411, 40
      %v429 = vpop.permute.xlu0 %428
      %430 = vrot.lane.b32.xlu0 %v412, 40
      %v431 = vpop.permute.xlu0 %430
      %432 = vrot.lane.b32.xlu0 %v413, 40
      %v433 = vpop.permute.xlu0 %432
      %434 = vrot.lane.b32.xlu0 %v414, 40
      %v435 = vpop.permute.xlu0 %434
      %436 = vrot.lane.b32.xlu0 %v415, 40
      %v437 = vpop.permute.xlu0 %436
      %438 = vrot.lane.b32.xlu0 %v416, 40
      %v439 = vpop.permute.xlu0 %438
      %440 = vrot.lane.b32.xlu0 %v417, 40
      %v441 = vpop.permute.xlu0 %440
      %vm450 = vcmask 392512
      %451 = vst.msk [vmem:[#allocation2] sm:$0xff] %vm450, %v427
      %452 = vst.msk [vmem:[#allocation2 + $0x8] sm:$0xff] %vm450, %v429
      %453 = vst.msk [vmem:[#allocation2 + $0x10] sm:$0xff] %vm450, %v431
      %454 = vst.msk [vmem:[#allocation2 + $0x18] sm:$0xff] %vm450, %v433
      %455 = vst.msk [vmem:[#allocation2 + $0x20] sm:$0xff] %vm450, %v435
      %456 = vst.msk [vmem:[#allocation2 + $0x28] sm:$0xff] %vm450, %v437
      %457 = vst.msk [vmem:[#allocation2 + $0x30] sm:$0xff] %vm450, %v439
      %458 = vst.msk [vmem:[#allocation2 + $0x38] sm:$0xff] %vm450, %v441
      %s459 = sadd.s32 %s191, 2
      %s460 = smul.u32 %s459, 16
      %s461 = scalar_lea.vmem %s182, %s460
      %v462 = vld [vmem:[%s461] sm:$0xff]
      %v463 = vld [vmem:[%s461 + $0x10] sm:$0xff]
      %v464 = vld [vmem:[%s461 + $0x20] sm:$0xff]
      %v465 = vld [vmem:[%s461 + $0x30] sm:$0xff]
      %v466 = vld [vmem:[%s461 + $0x40] sm:$0xff]
      %v467 = vld [vmem:[%s461 + $0x50] sm:$0xff]
      %v468 = vld [vmem:[%s461 + $0x60] sm:$0xff]
      %v469 = vld [vmem:[%s461 + $0x70] sm:$0xff]
      %478 = vrot.lane.b32.xlu0 %v462, 48
      %v479 = vpop.permute.xlu0 %478
      %480 = vrot.lane.b32.xlu0 %v463, 48
      %v481 = vpop.permute.xlu0 %480
      %482 = vrot.lane.b32.xlu0 %v464, 48
      %v483 = vpop.permute.xlu0 %482
      %484 = vrot.lane.b32.xlu0 %v465, 48
      %v485 = vpop.permute.xlu0 %484
      %486 = vrot.lane.b32.xlu0 %v466, 48
      %v487 = vpop.permute.xlu0 %486
      %488 = vrot.lane.b32.xlu0 %v467, 48
      %v489 = vpop.permute.xlu0 %488
      %490 = vrot.lane.b32.xlu0 %v468, 48
      %v491 = vpop.permute.xlu0 %490
      %492 = vrot.lane.b32.xlu0 %v469, 48
      %v493 = vpop.permute.xlu0 %492
      %vm502 = vcmask 458112
      %503 = vst.msk [vmem:[#allocation2] sm:$0xff] %vm502, %v479
      %504 = vst.msk [vmem:[#allocation2 + $0x8] sm:$0xff] %vm502, %v481
      %505 = vst.msk [vmem:[#allocation2 + $0x10] sm:$0xff] %vm502, %v483
      %506 = vst.msk [vmem:[#allocation2 + $0x18] sm:$0xff] %vm502, %v485
      %507 = vst.msk [vmem:[#allocation2 + $0x20] sm:$0xff] %vm502, %v487
      %508 = vst.msk [vmem:[#allocation2 + $0x28] sm:$0xff] %vm502, %v489
      %509 = vst.msk [vmem:[#allocation2 + $0x30] sm:$0xff] %vm502, %v491
      %510 = vst.msk [vmem:[#allocation2 + $0x38] sm:$0xff] %vm502, %v493
      %v511 = vld [vmem:[%s461 + $0x1] sm:$0xff]
      %v512 = vld [vmem:[%s461 + $0x11] sm:$0xff]
      %v513 = vld [vmem:[%s461 + $0x21] sm:$0xff]
      %v514 = vld [vmem:[%s461 + $0x31] sm:$0xff]
      %v515 = vld [vmem:[%s461 + $0x41] sm:$0xff]
      %v516 = vld [vmem:[%s461 + $0x51] sm:$0xff]
      %v517 = vld [vmem:[%s461 + $0x61] sm:$0xff]
      %v518 = vld [vmem:[%s461 + $0x71] sm:$0xff]
      %527 = vrot.lane.b32.xlu0 %v511, 56
      %v528 = vpop.permute.xlu0 %527
      %529 = vrot.lane.b32.xlu0 %v512, 56
      %v530 = vpop.permute.xlu0 %529
      %531 = vrot.lane.b32.xlu0 %v513, 56
      %v532 = vpop.permute.xlu0 %531
      %533 = vrot.lane.b32.xlu0 %v514, 56
      %v534 = vpop.permute.xlu0 %533
      %535 = vrot.lane.b32.xlu0 %v515, 56
      %v536 = vpop.permute.xlu0 %535
      %537 = vrot.lane.b32.xlu0 %v516, 56
      %v538 = vpop.permute.xlu0 %537
      %539 = vrot.lane.b32.xlu0 %v517, 56
      %v540 = vpop.permute.xlu0 %539
      %541 = vrot.lane.b32.xlu0 %v518, 56
      %v542 = vpop.permute.xlu0 %541
      %vm551 = vcmask 523712
      %552 = vst.msk [vmem:[#allocation2] sm:$0xff] %vm551, %v528
      %553 = vst.msk [vmem:[#allocation2 + $0x8] sm:$0xff] %vm551, %v530
      %554 = vst.msk [vmem:[#allocation2 + $0x10] sm:$0xff] %vm551, %v532
      %555 = vst.msk [vmem:[#allocation2 + $0x18] sm:$0xff] %vm551, %v534
      %556 = vst.msk [vmem:[#allocation2 + $0x20] sm:$0xff] %vm551, %v536
      %557 = vst.msk [vmem:[#allocation2 + $0x28] sm:$0xff] %vm551, %v538
      %558 = vst.msk [vmem:[#allocation2 + $0x30] sm:$0xff] %vm551, %v540
      %559 = vst.msk [vmem:[#allocation2 + $0x38] sm:$0xff] %vm551, %v542
      %v560 = vld [vmem:[%s461 + $0x2] sm:$0xff]
      %v561 = vld [vmem:[%s461 + $0x12] sm:$0xff]
      %v562 = vld [vmem:[%s461 + $0x22] sm:$0xff]
      %v563 = vld [vmem:[%s461 + $0x32] sm:$0xff]
      %v564 = vld [vmem:[%s461 + $0x42] sm:$0xff]
      %v565 = vld [vmem:[%s461 + $0x52] sm:$0xff]
      %v566 = vld [vmem:[%s461 + $0x62] sm:$0xff]
      %v567 = vld [vmem:[%s461 + $0x72] sm:$0xff]
      %576 = vrot.lane.b32.xlu0 %v560, 64
      %v577 = vpop.permute.xlu0 %576
      %578 = vrot.lane.b32.xlu0 %v561, 64
      %v579 = vpop.permute.xlu0 %578
      %580 = vrot.lane.b32.xlu0 %v562, 64
      %v581 = vpop.permute.xlu0 %580
      %582 = vrot.lane.b32.xlu0 %v563, 64
      %v583 = vpop.permute.xlu0 %582
      %584 = vrot.lane.b32.xlu0 %v564, 64
      %v585 = vpop.permute.xlu0 %584
      %586 = vrot.lane.b32.xlu0 %v565, 64
      %v587 = vpop.permute.xlu0 %586
      %588 = vrot.lane.b32.xlu0 %v566, 64
      %v589 = vpop.permute.xlu0 %588
      %590 = vrot.lane.b32.xlu0 %v567, 64
      %v591 = vpop.permute.xlu0 %590
      %vm600 = vcmask 589312
      %601 = vst.msk [vmem:[#allocation2] sm:$0xff] %vm600, %v577
      %602 = vst.msk [vmem:[#allocation2 + $0x8] sm:$0xff] %vm600, %v579
      %603 = vst.msk [vmem:[#allocation2 + $0x10] sm:$0xff] %vm600, %v581
      %604 = vst.msk [vmem:[#allocation2 + $0x18] sm:$0xff] %vm600, %v583
      %605 = vst.msk [vmem:[#allocation2 + $0x20] sm:$0xff] %vm600, %v585
      %606 = vst.msk [vmem:[#allocation2 + $0x28] sm:$0xff] %vm600, %v587
      %607 = vst.msk [vmem:[#allocation2 + $0x30] sm:$0xff] %vm600, %v589
      %608 = vst.msk [vmem:[#allocation2 + $0x38] sm:$0xff] %vm600, %v591
      %v609 = vld [vmem:[%s1] sm:$0xff]
      %v610 = vld [vmem:[%s1 + $0x8] sm:$0xff]
      %v611 = vld [vmem:[#allocation2] sm:$0xff]
      %v612 = vld [vmem:[#allocation2 + $0x8] sm:$0xff]
      %v613 = vld [vmem:[#allocation2 + $0x10] sm:$0xff]
      %v614 = vld [vmem:[#allocation2 + $0x18] sm:$0xff]
      %v615 = vld [vmem:[#allocation2 + $0x20] sm:$0xff]
      %v616 = vld [vmem:[#allocation2 + $0x28] sm:$0xff]
      %v617 = vld [vmem:[#allocation2 + $0x30] sm:$0xff]
      %v618 = vld [vmem:[#allocation2 + $0x38] sm:$0xff]
      %v619 = vld [vmem:[%s2] sm:$0xff]
      %v620 = vld [vmem:[%s2 + $0x8] sm:$0xff]
      %622 = vset.pattern.permute.xlu0 0
      %623 = vperm.xlu0 %622, %v619
      %v624 = vpop.permute.xlu0 %623
      %627 = vset.pattern.permute.xlu0 0
      %628 = vperm.xlu0 %627, %v620
      %v629 = vpop.permute.xlu0 %628
      %vm631 = vcmask 588800
      %v633 = vsel %vm631, %v609, 0
      %v636 = vsel %vm631, %v610, 0
      %v639 = vsel %vm631, %v611, 0
      %v642 = vsel %vm631, %v612, 0
      %v645 = vsel %vm631, %v613, 0
      %v648 = vsel %vm631, %v614, 0
      %v651 = vsel %vm631, %v615, 0
      %v654 = vsel %vm631, %v616, 0
      %v657 = vsel %vm631, %v617, 0
      %v660 = vsel %vm631, %v618, 0
      %662 = vmatprep.subr.mxu0 0.0
      %663 = vmatpush1.xpose.msra.mxu0 %v639
      %664 = vmatprep.subr.mxu0 0.0
      %665 = vmatpush1.xpose.msra.mxu0 %v642
      %666 = vmatprep.subr.mxu0 0.0
      %667 = vmatpush1.xpose.msra.mxu0 %v645
      %668 = vmatprep.subr.mxu0 0.0
      %669 = vmatpush1.xpose.msra.mxu0 %v648
      %670 = vmatprep.subr.mxu0 0.0
      %671 = vmatpush1.xpose.msra.mxu0 %v651
      %672 = vmatprep.subr.mxu0 0.0
      %673 = vmatpush1.xpose.msra.mxu0 %v654
      %674 = vmatprep.subr.mxu0 0.0
      %675 = vmatpush1.xpose.msra.mxu0 %v657
      %676 = vmatprep.subr.mxu0 0.0
      %677 = vmatpush1.xpose.msra.mxu0 %v660
      %678 = vmatprep.subr.mxu0 0.0
      %679 = vmatpush1.xpose.msra.mxu0 0.0
      %680 = vmatprep.subr.mxu0 0.0
      %681 = vmatpush1.xpose.msra.mxu0 0.0
      %682 = vmatprep.subr.mxu0 0.0
      %683 = vmatpush1.xpose.msra.mxu0 0.0
      %684 = vmatprep.subr.mxu0 0.0
      %685 = vmatpush1.xpose.msra.mxu0 0.0
      %686 = vmatprep.subr.mxu0 0.0
      %687 = vmatpush1.xpose.msra.mxu0 0.0
      %688 = vmatprep.subr.mxu0 0.0
      %689 = vmatpush1.xpose.msra.mxu0 0.0
      %690 = vmatprep.subr.mxu0 0.0
      %691 = vmatpush1.xpose.msra.mxu0 0.0
      %692 = vmatprep.subr.mxu0 0.0
      %693 = vmatpush1.xpose.msra.mxu0 0.0
      %694 = vmatprep.subr.mxu0 0.0
      %695 = vmatpush1.xpose.msra.mxu0 0.0
      %696 = vmatprep.subr.mxu0 0.0
      %697 = vmatpush1.xpose.msra.mxu0 0.0
      %698 = vmatprep.subr.mxu0 0.0
      %699 = vmatpush1.xpose.msra.mxu0 0.0
      %700 = vmatprep.subr.mxu0 0.0
      %701 = vmatpush1.xpose.msra.mxu0 0.0
      %702 = vmatprep.subr.mxu0 0.0
      %703 = vmatpush1.xpose.msra.mxu0 0.0
      %704 = vmatprep.subr.mxu0 0.0
      %705 = vmatpush1.xpose.msra.mxu0 0.0
      %706 = vmatprep.subr.mxu0 0.0
      %707 = vmatpush1.xpose.msra.mxu0 0.0
      %708 = vmatprep.subr.mxu0 0.0
      %709 = vmatpush1.xpose.msra.mxu0 0.0
      %710 = vmatprep.subr.mxu0 0.0
      %711 = vmatpush1.xpose.msra.mxu0 0.0
      %712 = vmatprep.subr.mxu0 0.0
      %713 = vmatpush1.xpose.msra.mxu0 0.0
      %714 = vmatprep.subr.mxu0 0.0
      %715 = vmatpush1.xpose.msra.mxu0 0.0
      %716 = vmatprep.subr.mxu0 0.0
      %717 = vmatpush1.xpose.msra.mxu0 0.0
      %718 = vmatprep.subr.mxu0 0.0
      %719 = vmatpush1.xpose.msra.mxu0 0.0
      %720 = vmatprep.subr.mxu0 0.0
      %721 = vmatpush1.xpose.msra.mxu0 0.0
      %722 = vmatprep.subr.mxu0 0.0
      %723 = vmatpush1.xpose.msra.mxu0 0.0
      %724 = vmatprep.subr.mxu0 0.0
      %725 = vmatpush1.xpose.msra.mxu0 0.0
      %726 = vmatprep.mubr.f32.mxu0 0.0
      %727 = vmatmul.mubr.f32.gmra.mrb[0].mxu0 %v633
      %v728 = vpop.f32.mrb[0].mxu0
      %v729 = vadd.f32 %v624, %v728
      %v730 = vpop.f32.mrb[0].mxu0
      %731 = vmatprep.mubr.f32.mxu0 0.0
      %732 = vmatmul.mubr.f32.gmra.mrb[0].mxu0 %v636
      %v733 = vpop.f32.mrb[0].mxu0
      %v734 = vadd.f32 %v629, %v733
      %v735 = vpop.f32.mrb[0].mxu0
      %736 = vdwg.mxu0
      %v737 = vmax.f32 %v729, 0.0
      %v738 = vmax.f32 %v734, 0.0
      %vm739 = vcmask 523264
      %740 = vst.msk [vmem:[%s190] sm:$0xff] %vm739, %v737
      %741 = vst.msk [vmem:[%s190 + $0x8] sm:$0xff] %vm739, %v738
      %p742 = scmp.lt.s32.totalorder %s18, 3
      %s743 = scalar_select %p742, %s18, 3
      %p744 = scmp.lt.s32.totalorder %s19, 0
      %s745 = scalar_select %p744, %s19, 0
      %s746 = smul.addr %s743, 2
      %s747 = sadd.s32 %s745, %s746
      %s748 = smul.addr %s747, 8
      %s749 = scalar_lea.vmem %s3, %s748
      // Predicated region
      $region33: #{cobi_rgb_loss.8} parent=31 // pred_check
        %p750 = pneg %p114
      $region34: #{cobi_rgb_loss.8} parent=31 // pred_check_branch
        %752 = sbr.rel (%p750) target = $region36
      $region35: #{cobi_rgb_loss.8} parent=31 // pred_region
        _
      $region36: #{cobi_rgb_loss.8} parent=31 // pred_fallthru
        _
    $region32: #{cobi_rgb_loss.8} parent=5 // pred_fallthru
      _
    %p753 = scmp.le.s32.totalorder 2, %s9
    // Predicated region
    $region37: #{cobi_rgb_loss.8} parent=5 // pred_check
      %p754 = pneg %p753
    $region38: #{cobi_rgb_loss.8} parent=5 // pred_check_branch
      %756 = sbr.rel (%p754) target = $region40
    $region39: #{cobi_rgb_loss.8} parent=5 // pred_region
      %s757 = ssub.s32 %s9, 2
      // Predicated region
      $region41: #{cobi_rgb_loss.8} parent=39 // pred_check
        %p758 = pneg %p120
      $region42: #{cobi_rgb_loss.8} parent=39 // pred_check_branch
        %760 = sbr.rel (%p758) target = $region44
      $region43: #{cobi_rgb_loss.8} parent=39 // pred_region
        %p761 = scmp.lt.s32.totalorder %s20, 3
        %s762 = scalar_select %p761, %s20, 3
        %p763 = scmp.lt.s32.totalorder %s21, 0
        %s764 = scalar_select %p763, %s21, 0
        %s765 = smul.addr %s762, 2
        %s766 = sadd.s32 %s764, %s765
        %s767 = smul.addr %s766, 8
        %s768 = scalar_lea.vmem %s3, %s767
      $region44: #{cobi_rgb_loss.8} parent=39 // pred_fallthru
        _
    $region40: #{cobi_rgb_loss.8} parent=5 // pred_fallthru
      _
  $region6: #{cobi_rgb_loss.8} parent=0 // loop_footer
    %s13 = sadd.s32 1, %s9
  $region7: #{cobi_rgb_loss.8} parent=0 // loop_footer_branch
    %8 = sbr.rel target = $region3
  $region8: #{cobi_rgb_loss.8} parent=0 // loop_exit
    _

// kernel: cobi_rgb_loss.9
$region0: #{cobi_rgb_loss.9}
  #allocation0 [shape = 'u32[]', space=smem, size = 0x4, offset = 0x4, fixed_abs, tag = 'smem constant byte address 0x4 - core index']
  #allocation1 [shape = 'u32[144,128]{1,0:T(1,128)}', space=vmem, size = 0x12000, scoped, tag = 'internal scratch']
  #allocation2 [shape = 'f32[16,144]{1,0:T(8,128)}', space=vmem, size = 0x4000, scoped, tag = 'scratch operand']
  %s0 = inlined_call_operand.vmem [shape: f32[4,6,6,16], index: 0, kind: input, shape index: {}]
  %s1 = inlined_call_operand.vmem [shape: f32[32,144], index: 1, kind: input, shape index: {}]
  %s2 = inlined_call_operand.vmem [shape: f32[32,1], index: 2, kind: input, shape index: {}]
  %s3 = inlined_call_operand.vmem [shape: f32[4,32,16], index: 3, kind: output, shape index: {}]
  %s4 = sld [smem:[#allocation0]]
  $region45: #{cobi_rgb_loss.9} parent=0
    _
  %s6 = ssub.s32 1, %s4
  %s7 = scalar_select 0, %s6, %s4
  loop: start=0, step=1, limit=6
  $region2: #{cobi_rgb_loss.9} parent=0 // loop_pre_header
    _
  $region3: #{cobi_rgb_loss.9} parent=0 // loop_header
    %s9 = sphi 0, %s13
    %p10 = scmp.ge.s32.totalorder %s9, 6
    %s16 = sphi 0, %s28
    %s17 = sphi 0, %s24
    %s18 = sphi 0, %s16
    %s19 = sphi 0, %s17
    %s20 = sphi 0, %s18
    %s21 = sphi 0, %s19
    %s31 = sphi 0, %s33
    %s34 = sphi 0, %s31
    %s35 = sphi 0, %s34
    %s51 = sphi 0, %s35
    %s55 = sphi 0, %s55
    %s57 = sphi 0, %s55
    %s58 = sphi 0, %s57
    %s72 = sphi 0, %s58
    %s76 = sphi 0, %s76
    %s78 = sphi 0, %s76
    %s79 = sphi 0, %s78
    %s93 = sphi 0, %s79
    %s101 = sphi 0, %s103
    %s104 = sphi 0, %s101
    %s105 = sphi 0, %s104
    %s121 = sphi 0, %s105
  $region4: #{cobi_rgb_loss.9} parent=0 // loop_header_branch
    %12 = sbr.rel (%p10) target = $region8
  $region5: #{cobi_rgb_loss.9} parent=0 // loop_body
    %s14 = ssub.s32 %s9, 1
    %s15 = ssub.s32 %s9, 2
    %s22 = sadd.s32 1, %s17
    %p23 = scmp.ge.s32.totalorder %s22, 1
    %s24 = scalar_select %p23, 0, %s22
    %s25 = sadd.s32 1, %s16
    %s26 = scalar_select %p23, %s25, %s16
    %p27 = scmp.ge.s32.totalorder %s26, 4
    %s28 = scalar_select %p27, 0, %s26
    %s29 = ssub.s32 %s16, %s28
    %p30 = scmp.eq.s32.totalorder %s29, 0
    %s32 = sadd.s32 %s31, 1
    %s33 = scalar_select %p30, %s31, %s32
    %p36 = pneg %p30
    %p37 = scmp.eq.s32.totalorder %s9, 3
    %p38 = por %p36, %p37
    %p39 = scmp.ne.s32.totalorder %s31, %s34
    %p40 = scmp.eq.s32.totalorder %s9, 0
    %p41 = por %p39, %p40
    %p42 = scmp.ne.s32.totalorder %s31, %s34
    %p43 = scmp.eq.s32.totalorder %s14, 3
    %p44 = por %p42, %p43
    %p45 = scmp.ne.s32.totalorder %s34, %s35
    %p46 = scmp.eq.s32.totalorder %s14, 0
    %p47 = por %p45, %p46
    %p48 = scmp.ne.s32.totalorder %s34, %s35
    %p49 = scmp.eq.s32.totalorder %s15, 3
    %p50 = por %p48, %p49
    %p52 = scmp.ne.s32.totalorder %s35, %s51
    %p53 = scmp.eq.s32.totalorder %s15, 0
    %p54 = por %p52, %p53
    %s56 = sadd.s32 %s55, 1
    %p59 = scmp.eq.s32.totalorder %s9, 3
    %p60 = scmp.ne.s32.totalorder %s55, %s57
    %p61 = scmp.eq.s32.totalorder %s9, 0
    %p62 = por %p60, %p61
    %p63 = scmp.ne.s32.totalorder %s55, %s57
    %p64 = scmp.eq.s32.totalorder %s14, 3
    %p65 = por %p63, %p64
    %p66 = scmp.ne.s32.totalorder %s57, %s58
    %p67 = scmp.eq.s32.totalorder %s14, 0
    %p68 = por %p66, %p67
    %p69 = scmp.ne.s32.totalorder %s57, %s58
    %p70 = scmp.eq.s32.totalorder %s15, 3
    %p71 = por %p69, %p70
    %p73 = scmp.ne.s32.totalorder %s58, %s72
    %p74 = scmp.eq.s32.totalorder %s15, 0
    %p75 = por %p73, %p74
    %s77 = sadd.s32 %s76, 1
    %p80 = scmp.eq.s32.totalorder %s9, 3
    %p81 = scmp.ne.s32.totalorder %s76, %s78
    %p82 = scmp.eq.s32.totalorder %s9, 0
    %p83 = por %p81, %p82
    %p84 = scmp.ne.s32.totalorder %s76, %s78
    %p85 = scmp.eq.s32.totalorder %s14, 3
    %p86 = por %p84, %p85
    %p87 = scmp.ne.s32.totalorder %s78, %s79
    %p88 = scmp.eq.s32.totalorder %s14, 0
    %p89 = por %p87, %p88
    %p90 = scmp.ne.s32.totalorder %s78, %s79
    %p91 = scmp.eq.s32.totalorder %s15, 3
    %p92 = por %p90, %p91
    %p94 = scmp.ne.s32.totalorder %s79, %s93
    %p95 = scmp.eq.s32.totalorder %s15, 0
    %p96 = por %p94, %p95
    %s97 = ssub.s32 %s16, %s28
    %s98 = ssub.s32 %s17, %s24
    %s99 = sor.u32 %s97, %s98
    %p100 = scmp.eq.s32.totalorder %s99, 0
    %s102 = sadd.s32 %s101, 1
    %s103 = scalar_select %p100, %s101, %s102
    %p106 = pneg %p100
    %p107 = scmp.eq.s32.totalorder %s9, 3
    %p108 = por %p106, %p107
    %p109 = scmp.ne.s32.totalorder %s101, %s104
    %p110 = scmp.eq.s32.totalorder %s9, 0
    %p111 = por %p109, %p110
    %p112 = scmp.ne.s32.totalorder %s101, %s104
    %p113 = scmp.eq.s32.totalorder %s14, 3
    %p114 = por %p112, %p113
    %p115 = scmp.ne.s32.totalorder %s104, %s105
    %p116 = scmp.eq.s32.totalorder %s14, 0
    %p117 = por %p115, %p116
    %p118 = scmp.ne.s32.totalorder %s104, %s105
    %p119 = scmp.eq.s32.totalorder %s15, 3
    %p120 = por %p118, %p119
    %p122 = scmp.ne.s32.totalorder %s105, %s121
    %p123 = scmp.eq.s32.totalorder %s15, 0
    %p124 = por %p122, %p123
    %p125 = scmp.le.s32.totalorder 1, %s9
    %p126 = scmp.lt.s32.totalorder %s9, 5
    %p127 = pnand %p125, %p126
    %p128 = pneg %p127
    // Predicated region
    $region9: #{cobi_rgb_loss.9} parent=5 // pred_check
      _
    $region10: #{cobi_rgb_loss.9} parent=5 // pred_check_branch
      %130 = sbr.rel (%p127) target = $region12
    $region11: #{cobi_rgb_loss.9} parent=5 // pred_region
      %s131 = ssub.s32 %s9, 1
      // Predicated region
      $region13: #{cobi_rgb_loss.9} parent=11 // pred_check
        %p132 = pneg %p68
      $region14: #{cobi_rgb_loss.9} parent=11 // pred_check_branch
        %134 = sbr.rel (%p132) target = $region16
      $region15: #{cobi_rgb_loss.9} parent=11 // pred_region
        _
      $region16: #{cobi_rgb_loss.9} parent=11 // pred_fallthru
        _
      // Predicated region
      $region17: #{cobi_rgb_loss.9} parent=11 // pred_check
        %p135 = pneg %p89
      $region18: #{cobi_rgb_loss.9} parent=11 // pred_check_branch
        %137 = sbr.rel (%p135) target = $region20
      $region19: #{cobi_rgb_loss.9} parent=11 // pred_region
        _
      $region20: #{cobi_rgb_loss.9} parent=11 // pred_fallthru
        _
    $region12: #{cobi_rgb_loss.9} parent=5 // pred_fallthru
      _
    %p138 = scmp.lt.s32.totalorder %s9, 4
    // Predicated region
    $region21: #{cobi_rgb_loss.9} parent=5 // pred_check
      %p139 = pneg %p138
    $region22: #{cobi_rgb_loss.9} parent=5 // pred_check_branch
      %141 = sbr.rel (%p139) target = $region24
    $region23: #{cobi_rgb_loss.9} parent=5 // pred_region
      // Predicated region
      $region25: #{cobi_rgb_loss.9} parent=23 // pred_check
        %p142 = pneg %p41
      $region26: #{cobi_rgb_loss.9} parent=23 // pred_check_branch
        %144 = sbr.rel (%p142) target = $region28
      $region27: #{cobi_rgb_loss.9} parent=23 // pred_region
        %p145 = scmp.lt.s32.totalorder %s16, 3
        %s146 = scalar_select %p145, %s16, 3
        %s147 = smul.addr %s146, 6
        %s148 = smul.addr %s147, 8
        %s149 = scalar_lea.vmem %s0, %s148
      $region28: #{cobi_rgb_loss.9} parent=23 // pred_fallthru
        _
    $region24: #{cobi_rgb_loss.9} parent=5 // pred_fallthru
      _
    %p150 = scmp.le.s32.totalorder 1, %s9
    %p151 = scmp.lt.s32.totalorder %s9, 5
    %p152 = pnand %p150, %p151
    %p153 = pneg %p152
    // Predicated region
    $region29: #{cobi_rgb_loss.9} parent=5 // pred_check
      _
    $region30: #{cobi_rgb_loss.9} parent=5 // pred_check_branch
      %155 = sbr.rel (%p152) target = $region32
    $region31: #{cobi_rgb_loss.9} parent=5 // pred_region
      %s156 = ssub.s32 %s9, 1
      %p157 = scmp.lt.s32.totalorder %s18, 3
      %s158 = scalar_select %p157, %s18, 3
      %s159 = smul.addr %s158, 6
      %s160 = smul.addr %s159, 8
      %s161 = scalar_lea.vmem %s0, %s160
      %p162 = pneg %p47
      %p163 = pneg %p44
      %p164 = pneg %p68
      %p165 = pneg %p65
      %p166 = pneg %p89
      %p167 = pneg %p86
      %p168 = pneg %p117
      %p169 = pneg %p114
      %p170 = scmp.lt.s32.totalorder %s18, 3
      %s171 = scalar_select %p170, %s18, 3
      %p172 = scmp.lt.s32.totalorder %s19, 0
      %s173 = scalar_select %p172, %s19, 0
      %s174 = smul.addr %s171, 4
      %s175 = sadd.s32 %s173, %s174
      %s176 = smul.addr %s175, 8
      %s177 = scalar_lea.vmem %s3, %s176
      %p178 = scmp.lt.s32.totalorder %s18, 3
      %s179 = scalar_select %p178, %s18, 3
      %s180 = smul.addr %s179, 6
      %s181 = smul.addr %s180, 8
      %s182 = scalar_lea.vmem %s0, %s181
      %p183 = scmp.lt.s32.totalorder %s18, 3
      %s184 = scalar_select %p183, %s18, 3
      %p185 = scmp.lt.s32.totalorder %s19, 0
      %s186 = scalar_select %p185, %s19, 0
      %s187 = smul.addr %s184, 4
      %s188 = sadd.s32 %s186, %s187
      %s189 = smul.addr %s188, 8
      %s190 = scalar_lea.vmem %s3, %s189
      %s191 = smul.u32 %s19, 4
      %s192 = smul.u32 %s191, 8
      %s193 = scalar_lea.vmem %s182, %s192
      %v194 = vld [vmem:[%s193] sm:$0xf]
      %v195 = vld [vmem:[%s193 + $0x8] sm:$0xf]
      %v196 = vld [vmem:[%s193 + $0x10] sm:$0xf]
      %v197 = vld [vmem:[%s193 + $0x18] sm:$0xf]
      %v202 = vcombine.low %v194, %v195
      %v203 = vcombine.low %v196, %v197
      %vm206 = vcmask 130048
      %207 = vst.msk [vmem:[#allocation2] sm:$0xff] %vm206, %v202
      %208 = vst.msk [vmem:[#allocation2 + $0x10] sm:$0xff] %vm206, %v203
      %v209 = vld [vmem:[%s193 + $0x1] sm:$0xf]
      %v210 = vld [vmem:[%s193 + $0x9] sm:$0xf]
      %v211 = vld [vmem:[%s193 + $0x11] sm:$0xf]
      %v212 = vld [vmem:[%s193 + $0x19] sm:$0xf]
      %v217 = vcombine.low %v209, %v210
      %v218 = vcombine.low %v211, %v212
      %219 = vrot.lane.b32.xlu0 %v217, 16
      %v220 = vpop.permute.xlu0 %219
      %221 = vrot.lane.b32.xlu0 %v218, 16
      %v222 = vpop.permute.xlu0 %221
      %vm225 = vcmask 261248
      %226 = vst.msk [vmem:[#allocation2] sm:$0xff] %vm225, %v220
      %227 = vst.msk [vmem:[#allocation2 + $0x10] sm:$0xff] %vm225, %v222
      %v228 = vld [vmem:[%s193 + $0x2] sm:$0xf]
      %v229 = vld [vmem:[%s193 + $0xa] sm:$0xf]
      %v230 = vld [vmem:[%s193 + $0x12] sm:$0xf]
      %v231 = vld [vmem:[%s193 + $0x1a] sm:$0xf]
      %v236 = vcombine.low %v228, %v229
      %v237 = vcombine.low %v230, %v231
      %238 = vrot.lane.b32.xlu0 %v236, 32
      %v239 = vpop.permute.xlu0 %238
      %240 = vrot.lane.b32.xlu0 %v237, 32
      %v241 = vpop.permute.xlu0 %240
      %vm244 = vcmask 392448
      %245 = vst.msk [vmem:[#allocation2] sm:$0xff] %vm244, %v239
      %246 = vst.msk [vmem:[#allocation2 + $0x10] sm:$0xff] %vm244, %v241
      %s247 = sadd.s32 %s191, 1
      %s248 = smul.u32 %s247, 8
      %s249 = scalar_lea.vmem %s182, %s248
      %v250 = vld [vmem:[%s249] sm:$0xf]
      %v251 = vld [vmem:[%s249 + $0x8] sm:$0xf]
      %v252 = vld [vmem:[%s249 + $0x10] sm:$0xf]
      %v253 = vld [vmem:[%s249 + $0x18] sm:$0xf]
      %v258 = vcombine.low %v250, %v251
      %v259 = vcombine.low %v252, %v253
      %260 = vrot.lane.b32.xlu0 %v258, 48
      %v261 = vpop.permute.xlu0 %260
      %262 = vrot.lane.b32.xlu0 %v259, 48
      %v263 = vpop.permute.xlu0 %262
      %vm266 = vcmask 523648
      %267 = vst.msk [vmem:[#allocation2] sm:$0xff] %vm266, %v261
      %268 = vst.msk [vmem:[#allocation2 + $0x10] sm:$0xff] %vm266, %v263
      %v269 = vld [vmem:[%s249 + $0x1] sm:$0xf]
      %v270 = vld [vmem:[%s249 + $0x9] sm:$0xf]
      %v271 = vld [vmem:[%s249 + $0x11] sm:$0xf]
      %v272 = vld [vmem:[%s249 + $0x19] sm:$0xf]
      %v277 = vcombine.low %v269, %v270
      %v278 = vcombine.low %v271, %v272
      %279 = vrot.lane.b32.xlu0 %v277, 64
      %v280 = vpop.permute.xlu0 %279
      %281 = vrot.lane.b32.xlu0 %v278, 64
      %v282 = vpop.permute.xlu0 %281
      %vm285 = vcmask 654848
      %286 = vst.msk [vmem:[#allocation2] sm:$0xff] %vm285, %v280
      %287 = vst.msk [vmem:[#allocation2 + $0x10] sm:$0xff] %vm285, %v282
      %v288 = vld [vmem:[%s249 + $0x2] sm:$0xf]
      %v289 = vld [vmem:[%s249 + $0xa] sm:$0xf]
      %v290 = vld [vmem:[%s249 + $0x12] sm:$0xf]
      %v291 = vld [vmem:[%s249 + $0x1a] sm:$0xf]
      %v296 = vcombine.low %v288, %v289
      %v297 = vcombine.low %v290, %v291
      %298 = vrot.lane.b32.xlu0 %v296, 80
      %v299 = vpop.permute.xlu0 %298
      %300 = vrot.lane.b32.xlu0 %v297, 80
      %v301 = vpop.permute.xlu0 %300
      %vm304 = vcmask 786048
      %305 = vst.msk [vmem:[#allocation2] sm:$0xff] %vm304, %v299
      %306 = vst.msk [vmem:[#allocation2 + $0x10] sm:$0xff] %vm304, %v301
      %s307 = sadd.s32 %s191, 2
      %s308 = smul.u32 %s307, 8
      %s309 = scalar_lea.vmem %s182, %s308
      %v310 = vld [vmem:[%s309] sm:$0xf]
      %v311 = vld [vmem:[%s309 + $0x8] sm:$0xf]
      %v312 = vld [vmem:[%s309 + $0x10] sm:$0xf]
      %v313 = vld [vmem:[%s309 + $0x18] sm:$0xf]
      %v318 = vcombine.low %v310, %v311
      %v319 = vcombine.low %v312, %v313
      %320 = vrot.lane.b32.xlu0 %v318, 96
      %v321 = vpop.permute.xlu0 %320
      %322 = vrot.lane.b32.xlu0 %v319, 96
      %v323 = vpop.permute.xlu0 %322
      %vm326 = vcmask 917248
      %327 = vst.msk [vmem:[#allocation2] sm:$0xff] %vm326, %v321
      %328 = vst.msk [vmem:[#allocation2 + $0x10] sm:$0xff] %vm326, %v323
      %v329 = vld [vmem:[%s309 + $0x1] sm:$0xf]
      %v330 = vld [vmem:[%s309 + $0x9] sm:$0xf]
      %v331 = vld [vmem:[%s309 + $0x11] sm:$0xf]
      %v332 = vld [vmem:[%s309 + $0x19] sm:$0xf]
      %v337 = vcombine.low %v329, %v330
      %v338 = vcombine.low %v331, %v332
      %339 = vrot.lane.b32.xlu0 %v337, 112
      %v340 = vpop.permute.xlu0 %339
      %341 = vrot.lane.b32.xlu0 %v338, 112
      %v342 = vpop.permute.xlu0 %341
      %vm345 = vcmask 1048448
      %346 = vst.msk [vmem:[#allocation2] sm:$0xff] %vm345, %v340
      %347 = vst.msk [vmem:[#allocation2 + $0x10] sm:$0xff] %vm345, %v342
      %v348 = vld [vmem:[%s309 + $0x2] sm:$0xf]
      %v349 = vld [vmem:[%s309 + $0xa] sm:$0xf]
      %v350 = vld [vmem:[%s309 + $0x12] sm:$0xf]
      %v351 = vld [vmem:[%s309 + $0x1a] sm:$0xf]
      %v356 = vcombine.low %v348, %v349
      %v357 = vcombine.low %v350, %v351
      %360 = vst.msk [vmem:[#allocation2 + $0x8] sm:$0xff] %vm206, %v356
      %361 = vst.msk [vmem:[#allocation2 + $0x18] sm:$0xff] %vm206, %v357
      %v362 = vld [vmem:[%s1] sm:$0xff]
      %v363 = vld [vmem:[%s1 + $0x8] sm:$0xff]
      %v364 = vld [vmem:[%s1 + $0x10] sm:$0xff]
      %v365 = vld [vmem:[%s1 + $0x18] sm:$0xff]
      %v366 = vld [vmem:[%s1 + $0x20] sm:$0xff]
      %v367 = vld [vmem:[%s1 + $0x28] sm:$0xff]
      %v368 = vld [vmem:[%s1 + $0x30] sm:$0xff]
      %v369 = vld [vmem:[%s1 + $0x38] sm:$0xff]
      %v370 = vld [vmem:[#allocation2] sm:$0xff]
      %v371 = vld [vmem:[#allocation2 + $0x8] sm:$0xff]
      %v372 = vld [vmem:[#allocation2 + $0x10] sm:$0xff]
      %v373 = vld [vmem:[#allocation2 + $0x18] sm:$0xff]
      %v374 = vld [vmem:[%s2] sm:$0xff]
      %v375 = vld [vmem:[%s2 + $0x8] sm:$0xff]
      %v376 = vld [vmem:[%s2 + $0x10] sm:$0xff]
      %v377 = vld [vmem:[%s2 + $0x18] sm:$0xff]
      %379 = vset.pattern.permute.xlu0 0
      %380 = vperm.xlu0 %379, %v374
      %v381 = vpop.permute.xlu0 %380
      %384 = vset.pattern.permute.xlu0 0
      %385 = vperm.xlu0 %384, %v375
      %v386 = vpop.permute.xlu0 %385
      %389 = vset.pattern.permute.xlu0 0
      %390 = vperm.xlu0 %389, %v376
      %v391 = vpop.permute.xlu0 %390
      %394 = vset.pattern.permute.xlu0 0
      %395 = vperm.xlu0 %394, %v377
      %v396 = vpop.permute.xlu0 %395
      %v399 = vsel %vm206, %v363, 0
      %v402 = vsel %vm206, %v365, 0
      %v405 = vsel %vm206, %v367, 0
      %v408 = vsel %vm206, %v369, 0
      %v411 = vsel %vm206, %v371, 0
      %v414 = vsel %vm206, %v373, 0
      %416 = vmatprep.subr.mxu0 %v411
      %417 = vmatpush1.xpose.msra.mxu0 %v370
      %418 = vmatprep.subr.mxu0 %v414
      %419 = vmatpush1.xpose.msra.mxu0 %v372
      %420 = vmatprep.subr.mxu0 0.0
      %421 = vmatpush1.xpose.msra.mxu0 0.0
      %422 = vmatprep.subr.mxu0 0.0
      %423 = vmatpush1.xpose.msra.mxu0 0.0
      %424 = vmatprep.subr.mxu0 0.0
      %425 = vmatpush1.xpose.msra.mxu0 0.0
      %426 = vmatprep.subr.mxu0 0.0
      %427 = vmatpush1.xpose.msra.mxu0 0.0
      %428 = vmatprep.subr.mxu0 0.0
      %429 = vmatpush1.xpose.msra.mxu0 0.0
      %430 = vmatprep.subr.mxu0 0.0
      %431 = vmatpush1.xpose.msra.mxu0 0.0
      %432 = vmatprep.subr.mxu0 0.0
      %433 = vmatpush1.xpose.msra.mxu0 0.0
      %434 = vmatprep.subr.mxu0 0.0
      %435 = vmatpush1.xpose.msra.mxu0 0.0
      %436 = vmatprep.subr.mxu0 0.0
      %437 = vmatpush1.xpose.msra.mxu0 0.0
      %438 = vmatprep.subr.mxu0 0.0
      %439 = vmatpush1.xpose.msra.mxu0 0.0
      %440 = vmatprep.subr.mxu0 0.0
      %441 = vmatpush1.xpose.msra.mxu0 0.0
      %442 = vmatprep.subr.mxu0 0.0
      %443 = vmatpush1.xpose.msra.mxu0 0.0
      %444 = vmatprep.subr.mxu0 0.0
      %445 = vmatpush1.xpose.msra.mxu0 0.0
      %446 = vmatprep.subr.mxu0 0.0
      %447 = vmatpush1.xpose.msra.mxu0 0.0
      %448 = vmatprep.subr.mxu0 0.0
      %449 = vmatpush1.xpose.msra.mxu0 0.0
      %450 = vmatprep.subr.mxu0 0.0
      %451 = vmatpush1.xpose.msra.mxu0 0.0
      %452 = vmatprep.subr.mxu0 0.0
      %453 = vmatpush1.xpose.msra.mxu0 0.0
      %454 = vmatprep.subr.mxu0 0.0
      %455 = vmatpush1.xpose.msra.mxu0 0.0
      %456 = vmatprep.subr.mxu0 0.0
      %457 = vmatpush1.xpose.msra.mxu0 0.0
      %458 = vmatprep.subr.mxu0 0.0
      %459 = vmatpush1.xpose.msra.mxu0 0.0
      %460 = vmatprep.subr.mxu0 0.0
      %461 = vmatpush1.xpose.msra.mxu0 0.0
      %462 = vmatprep.subr.mxu0 0.0
      %463 = vmatpush1.xpose.msra.mxu0 0.0
      %464 = vmatprep.subr.mxu0 0.0
      %465 = vmatpush1.xpose.msra.mxu0 0.0
      %466 = vmatprep.subr.mxu0 0.0
      %467 = vmatpush1.xpose.msra.mxu0 0.0
      %468 = vmatprep.subr.mxu0 0.0
      %469 = vmatpush1.xpose.msra.mxu0 0.0
      %470 = vmatprep.subr.mxu0 0.0
      %471 = vmatpush1.xpose.msra.mxu0 0.0
      %472 = vmatprep.subr.mxu0 0.0
      %473 = vmatpush1.xpose.msra.mxu0 0.0
      %474 = vmatprep.subr.mxu0 0.0
      %475 = vmatpush1.xpose.msra.mxu0 0.0
      %476 = vmatprep.subr.mxu0 0.0
      %477 = vmatpush1.xpose.msra.mxu0 0.0
      %478 = vmatprep.subr.mxu0 0.0
      %479 = vmatpush1.xpose.msra.mxu0 0.0
      %480 = vmatprep.mubr.f32.mxu0 %v399
      %481 = vmatmul.mubr.f32.gmra.mrb[0].mxu0 %v362
      %v482 = vpop.f32.mrb[0].mxu0
      %v483 = vadd.f32 %v381, %v482
      %v484 = vpop.f32.mrb[0].mxu0
      %485 = vmatprep.mubr.f32.mxu0 %v402
      %486 = vmatmul.mubr.f32.gmra.mrb[0].mxu0 %v364
      %v487 = vpop.f32.mrb[0].mxu0
      %v488 = vadd.f32 %v386, %v487
      %v489 = vpop.f32.mrb[0].mxu0
      %490 = vmatprep.mubr.f32.mxu0 %v405
      %491 = vmatmul.mubr.f32.gmra.mrb[0].mxu0 %v366
      %v492 = vpop.f32.mrb[0].mxu0
      %v493 = vadd.f32 %v391, %v492
      %v494 = vpop.f32.mrb[0].mxu0
      %495 = vmatprep.mubr.f32.mxu0 %v408
      %496 = vmatmul.mubr.f32.gmra.mrb[0].mxu0 %v368
      %v497 = vpop.f32.mrb[0].mxu0
      %v498 = vadd.f32 %v396, %v497
      %v499 = vpop.f32.mrb[0].mxu0
      %500 = vdwg.mxu0
      %v501 = vmax.f32 %v483, 0.0
      %v502 = vmax.f32 %v488, 0.0
      %v503 = vmax.f32 %v493, 0.0
      %v504 = vmax.f32 %v498, 0.0
      %505 = vst.msk [vmem:[%s190] sm:$0xff] %vm206, %v501
      %506 = vst.msk [vmem:[%s190 + $0x8] sm:$0xff] %vm206, %v502
      %507 = vst.msk [vmem:[%s190 + $0x10] sm:$0xff] %vm206, %v503
      %508 = vst.msk [vmem:[%s190 + $0x18] sm:$0xff] %vm206, %v504
      %p509 = scmp.lt.s32.totalorder %s18, 3
      %s510 = scalar_select %p509, %s18, 3
      %p511 = scmp.lt.s32.totalorder %s19, 0
      %s512 = scalar_select %p511, %s19, 0
      %s513 = smul.addr %s510, 4
      %s514 = sadd.s32 %s512, %s513
      %s515 = smul.addr %s514, 8
      %s516 = scalar_lea.vmem %s3, %s515
      // Predicated region
      $region33: #{cobi_rgb_loss.9} parent=31 // pred_check
        %p517 = pneg %p114
      $region34: #{cobi_rgb_loss.9} parent=31 // pred_check_branch
        %519 = sbr.rel (%p517) target = $region36
      $region35: #{cobi_rgb_loss.9} parent=31 // pred_region
        _
      $region36: #{cobi_rgb_loss.9} parent=31 // pred_fallthru
        _
    $region32: #{cobi_rgb_loss.9} parent=5 // pred_fallthru
      _
    %p520 = scmp.le.s32.totalorder 2, %s9
    // Predicated region
    $region37: #{cobi_rgb_loss.9} parent=5 // pred_check
      %p521 = pneg %p520
    $region38: #{cobi_rgb_loss.9} parent=5 // pred_check_branch
      %523 = sbr.rel (%p521) target = $region40
    $region39: #{cobi_rgb_loss.9} parent=5 // pred_region
      %s524 = ssub.s32 %s9, 2
      // Predicated region
      $region41: #{cobi_rgb_loss.9} parent=39 // pred_check
        %p525 = pneg %p120
      $region42: #{cobi_rgb_loss.9} parent=39 // pred_check_branch
        %527 = sbr.rel (%p525) target = $region44
      $region43: #{cobi_rgb_loss.9} parent=39 // pred_region
        %p528 = scmp.lt.s32.totalorder %s20, 3
        %s529 = scalar_select %p528, %s20, 3
        %p530 = scmp.lt.s32.totalorder %s21, 0
        %s531 = scalar_select %p530, %s21, 0
        %s532 = smul.addr %s529, 4
        %s533 = sadd.s32 %s531, %s532
        %s534 = smul.addr %s533, 8
        %s535 = scalar_lea.vmem %s3, %s534
      $region44: #{cobi_rgb_loss.9} parent=39 // pred_fallthru
        _
    $region40: #{cobi_rgb_loss.9} parent=5 // pred_fallthru
      _
  $region6: #{cobi_rgb_loss.9} parent=0 // loop_footer
    %s13 = sadd.s32 1, %s9
  $region7: #{cobi_rgb_loss.9} parent=0 // loop_footer_branch
    %8 = sbr.rel target = $region3
  $region8: #{cobi_rgb_loss.9} parent=0 // loop_exit
    _

// kernel: cobi_rgb_loss.12
$region0: #{cobi_rgb_loss.12}
  #allocation0 [shape = 'u32[]', space=smem, size = 0x4, offset = 0x4, fixed_abs, tag = 'smem constant byte address 0x4 - core index']
  #allocation1 [shape = 'u32[144,128]{1,0:T(1,128)}', space=vmem, size = 0x12000, scoped, tag = 'internal scratch']
  #allocation2 [shape = 'f32[16,16]{1,0:T(8,128)}', space=vmem, size = 0x2000, scoped, tag = 'scratch operand']
  %s0 = inlined_call_operand.vmem [shape: bf16[2,16,32], index: 0, kind: input, shape index: {}]
  %s1 = inlined_call_operand.vmem [shape: bf16[2,32,16], index: 1, kind: input, shape index: {}]
  %s2 = inlined_call_operand.vmem [shape: f32[2,1,1,1], index: 2, kind: output, shape index: {}]
  %s3 = sld [smem:[#allocation0]]
  $region49: #{cobi_rgb_loss.12} parent=0
    _
  %s5 = ssub.s32 1, %s3
  %s6 = scalar_select 0, %s5, %s3
  loop: start=0, step=1, limit=4
  $region2: #{cobi_rgb_loss.12} parent=0 // loop_pre_header
    _
  $region3: #{cobi_rgb_loss.12} parent=0 // loop_header
    %s8 = sphi 0, %s12
    %p9 = scmp.ge.s32.totalorder %s8, 4
    %s15 = sphi 0, %s34
    %s16 = sphi 0, %s30
    %s17 = sphi 0, %s26
    %s18 = sphi 0, %s15
    %s19 = sphi 0, %s16
    %s20 = sphi 0, %s17
    %s21 = sphi 0, %s18
    %s22 = sphi 0, %s19
    %s23 = sphi 0, %s20
    %s41 = sphi 0, %s43
    %s44 = sphi 0, %s41
    %s45 = sphi 0, %s44
    %s61 = sphi 0, %s45
    %s69 = sphi 0, %s71
    %s72 = sphi 0, %s69
    %s73 = sphi 0, %s72
    %s89 = sphi 0, %s73
    %s97 = sphi 0, %s99
    %s100 = sphi 0, %s97
    %s101 = sphi 0, %s100
    %s117 = sphi 0, %s101
  $region4: #{cobi_rgb_loss.12} parent=0 // loop_header_branch
    %11 = sbr.rel (%p9) target = $region8
  $region5: #{cobi_rgb_loss.12} parent=0 // loop_body
    %s13 = ssub.s32 %s8, 1
    %s14 = ssub.s32 %s8, 2
    %s24 = sadd.s32 1, %s17
    %p25 = scmp.ge.s32.totalorder %s24, 1
    %s26 = scalar_select %p25, 0, %s24
    %s27 = sadd.s32 1, %s16
    %s28 = scalar_select %p25, %s27, %s16
    %p29 = scmp.ge.s32.totalorder %s28, 1
    %s30 = scalar_select %p29, 0, %s28
    %s31 = sadd.s32 1, %s15
    %s32 = scalar_select %p29, %s31, %s15
    %p33 = scmp.ge.s32.totalorder %s32, 2
    %s34 = scalar_select %p33, 0, %s32
    %s35 = ssub.s32 %s15, %s34
    %s36 = ssub.s32 %s16, %s30
    %s37 = sor.u32 %s35, %s36
    %s38 = ssub.s32 %s17, %s26
    %s39 = sor.u32 %s37, %s38
    %p40 = scmp.eq.s32.totalorder %s39, 0
    %s42 = sadd.s32 %s41, 1
    %s43 = scalar_select %p40, %s41, %s42
    %p46 = pneg %p40
    %p47 = scmp.eq.s32.totalorder %s8, 1
    %p48 = por %p46, %p47
    %p49 = scmp.ne.s32.totalorder %s41, %s44
    %p50 = scmp.eq.s32.totalorder %s8, 0
    %p51 = por %p49, %p50
    %p52 = scmp.ne.s32.totalorder %s41, %s44
    %p53 = scmp.eq.s32.totalorder %s13, 1
    %p54 = por %p52, %p53
    %p55 = scmp.ne.s32.totalorder %s44, %s45
    %p56 = scmp.eq.s32.totalorder %s13, 0
    %p57 = por %p55, %p56
    %p58 = scmp.ne.s32.totalorder %s44, %s45
    %p59 = scmp.eq.s32.totalorder %s14, 1
    %p60 = por %p58, %p59
    %p62 = scmp.ne.s32.totalorder %s45, %s61
    %p63 = scmp.eq.s32.totalorder %s14, 0
    %p64 = por %p62, %p63
    %s65 = ssub.s32 %s15, %s34
    %s66 = ssub.s32 %s17, %s26
    %s67 = sor.u32 %s65, %s66
    %p68 = scmp.eq.s32.totalorder %s67, 0
    %s70 = sadd.s32 %s69, 1
    %s71 = scalar_select %p68, %s69, %s70
    %p74 = pneg %p68
    %p75 = scmp.eq.s32.totalorder %s8, 1
    %p76 = por %p74, %p75
    %p77 = scmp.ne.s32.totalorder %s69, %s72
    %p78 = scmp.eq.s32.totalorder %s8, 0
    %p79 = por %p77, %p78
    %p80 = scmp.ne.s32.totalorder %s69, %s72
    %p81 = scmp.eq.s32.totalorder %s13, 1
    %p82 = por %p80, %p81
    %p83 = scmp.ne.s32.totalorder %s72, %s73
    %p84 = scmp.eq.s32.totalorder %s13, 0
    %p85 = por %p83, %p84
    %p86 = scmp.ne.s32.totalorder %s72, %s73
    %p87 = scmp.eq.s32.totalorder %s14, 1
    %p88 = por %p86, %p87
    %p90 = scmp.ne.s32.totalorder %s73, %s89
    %p91 = scmp.eq.s32.totalorder %s14, 0
    %p92 = por %p90, %p91
    %s93 = ssub.s32 %s15, %s34
    %s94 = ssub.s32 %s16, %s30
    %s95 = sor.u32 %s93, %s94
    %p96 = scmp.eq.s32.totalorder %s95, 0
    %s98 = sadd.s32 %s97, 1
    %s99 = scalar_select %p96, %s97, %s98
    %p102 = pneg %p96
    %p103 = scmp.eq.s32.totalorder %s8, 1
    %p104 = por %p102, %p103
    %p105 = scmp.ne.s32.totalorder %s97, %s100
    %p106 = scmp.eq.s32.totalorder %s8, 0
    %p107 = por %p105, %p106
    %p108 = scmp.ne.s32.totalorder %s97, %s100
    %p109 = scmp.eq.s32.totalorder %s13, 1
    %p110 = por %p108, %p109
    %p111 = scmp.ne.s32.totalorder %s100, %s101
    %p112 = scmp.eq.s32.totalorder %s13, 0
    %p113 = por %p111, %p112
    %p114 = scmp.ne.s32.totalorder %s100, %s101
    %p115 = scmp.eq.s32.totalorder %s14, 1
    %p116 = por %p114, %p115
    %p118 = scmp.ne.s32.totalorder %s101, %s117
    %p119 = scmp.eq.s32.totalorder %s14, 0
    %p120 = por %p118, %p119
    %p121 = scmp.le.s32.totalorder 1, %s8
    %p122 = scmp.lt.s32.totalorder %s8, 3
    %p123 = pnand %p121, %p122
    %p124 = pneg %p123
    // Predicated region
    $region9: #{cobi_rgb_loss.12} parent=5 // pred_check
      _
    $region10: #{cobi_rgb_loss.12} parent=5 // pred_check_branch
      %126 = sbr.rel (%p123) target = $region12
    $region11: #{cobi_rgb_loss.12} parent=5 // pred_region
      %s127 = ssub.s32 %s8, 1
    $region12: #{cobi_rgb_loss.12} parent=5 // pred_fallthru
      _
    %p128 = scmp.lt.s32.totalorder %s8, 2
    // Predicated region
    $region13: #{cobi_rgb_loss.12} parent=5 // pred_check
      %p129 = pneg %p128
    $region14: #{cobi_rgb_loss.12} parent=5 // pred_check_branch
      %131 = sbr.rel (%p129) target = $region16
    $region15: #{cobi_rgb_loss.12} parent=5 // pred_region
      // Predicated region
      $region17: #{cobi_rgb_loss.12} parent=15 // pred_check
        %p132 = pneg %p51
      $region18: #{cobi_rgb_loss.12} parent=15 // pred_check_branch
        %134 = sbr.rel (%p132) target = $region20
      $region19: #{cobi_rgb_loss.12} parent=15 // pred_region
        %s135 = smul.u32 2, %s16
        %p136 = scmp.lt.s32.totalorder %s15, 1
        %s137 = scalar_select %p136, %s15, 1
        %p138 = scmp.lt.s32.totalorder %s135, 1
        %s139 = scalar_select %p138, %s135, 1
        %p140 = scmp.lt.s32.totalorder %s17, 0
        %s141 = scalar_select %p140, %s17, 0
        %s142 = sadd.s32 %s141, %s139
        %s143 = smul.addr %s137, 2
        %s144 = sadd.s32 %s142, %s143
        %s145 = smul.addr %s144, 4
        %s146 = scalar_lea.vmem %s0, %s145
        %s147 = smul.u32 2, %s16
      $region20: #{cobi_rgb_loss.12} parent=15 // pred_fallthru
        _
      // Predicated region
      $region21: #{cobi_rgb_loss.12} parent=15 // pred_check
        %p148 = pneg %p79
      $region22: #{cobi_rgb_loss.12} parent=15 // pred_check_branch
        %150 = sbr.rel (%p148) target = $region24
      $region23: #{cobi_rgb_loss.12} parent=15 // pred_region
        %s151 = smul.u32 4, %s17
        %p152 = scmp.lt.s32.totalorder %s15, 1
        %s153 = scalar_select %p152, %s15, 1
        %p154 = scmp.lt.s32.totalorder %s151, 3
        %s155 = scalar_select %p154, %s151, 3
        %s156 = smul.addr %s153, 4
        %s157 = sadd.s32 %s155, %s156
        %s158 = smul.addr %s157, 4
        %s159 = scalar_lea.vmem %s1, %s158
        %s160 = smul.u32 4, %s17
      $region24: #{cobi_rgb_loss.12} parent=15 // pred_fallthru
        _
    $region16: #{cobi_rgb_loss.12} parent=5 // pred_fallthru
      _
    %p161 = scmp.le.s32.totalorder 1, %s8
    %p162 = scmp.lt.s32.totalorder %s8, 3
    %p163 = pnand %p161, %p162
    %p164 = pneg %p163
    // Predicated region
    $region25: #{cobi_rgb_loss.12} parent=5 // pred_check
      _
    $region26: #{cobi_rgb_loss.12} parent=5 // pred_check_branch
      %166 = sbr.rel (%p163) target = $region28
    $region27: #{cobi_rgb_loss.12} parent=5 // pred_region
      %s167 = ssub.s32 %s8, 1
      %s168 = smul.u32 2, %s19
      %p169 = scmp.lt.s32.totalorder %s18, 1
      %s170 = scalar_select %p169, %s18, 1
      %p171 = scmp.lt.s32.totalorder %s168, 1
      %s172 = scalar_select %p171, %s168, 1
      %p173 = scmp.lt.s32.totalorder %s20, 0
      %s174 = scalar_select %p173, %s20, 0
      %s175 = sadd.s32 %s174, %s172
      %s176 = smul.addr %s170, 2
      %s177 = sadd.s32 %s175, %s176
      %s178 = smul.addr %s177, 4
      %s179 = scalar_lea.vmem %s0, %s178
      %p180 = pneg %p57
      %p181 = pneg %p54
      %s182 = smul.u32 4, %s20
      %p183 = scmp.lt.s32.totalorder %s18, 1
      %s184 = scalar_select %p183, %s18, 1
      %p185 = scmp.lt.s32.totalorder %s182, 3
      %s186 = scalar_select %p185, %s182, 3
      %s187 = smul.addr %s184, 4
      %s188 = sadd.s32 %s186, %s187
      %s189 = smul.addr %s188, 4
      %s190 = scalar_lea.vmem %s1, %s189
      %p191 = pneg %p85
      %p192 = pneg %p82
      %p193 = pneg %p113
      %p194 = pneg %p110
      %p195 = scmp.lt.s32.totalorder %s18, 1
      %s196 = scalar_select %p195, %s18, 1
      %p197 = scmp.lt.s32.totalorder %s19, 0
      %s198 = scalar_select %p197, %s19, 0
      %s199 = sadd.s32 %s198, %s196
      %s200 = scalar_lea.vmem %s2, %s199
      %s201 = smul.u32 2, %s19
      %p202 = scmp.lt.s32.totalorder %s18, 1
      %s203 = scalar_select %p202, %s18, 1
      %p204 = scmp.lt.s32.totalorder %s201, 1
      %s205 = scalar_select %p204, %s201, 1
      %p206 = scmp.lt.s32.totalorder %s20, 0
      %s207 = scalar_select %p206, %s20, 0
      %s208 = sadd.s32 %s207, %s205
      %s209 = smul.addr %s203, 2
      %s210 = sadd.s32 %s208, %s209
      %s211 = smul.addr %s210, 4
      %s212 = scalar_lea.vmem %s0, %s211
      %s213 = smul.u32 2, %s19
      %s214 = smul.u32 4, %s20
      %p215 = scmp.lt.s32.totalorder %s18, 1
      %s216 = scalar_select %p215, %s18, 1
      %p217 = scmp.lt.s32.totalorder %s214, 3
      %s218 = scalar_select %p217, %s214, 3
      %s219 = smul.addr %s216, 4
      %s220 = sadd.s32 %s218, %s219
      %s221 = smul.addr %s220, 4
      %s222 = scalar_lea.vmem %s1, %s221
      %s223 = smul.u32 4, %s20
      %p224 = scmp.lt.s32.totalorder %s18, 1
      %s225 = scalar_select %p224, %s18, 1
      %p226 = scmp.lt.s32.totalorder %s19, 0
      %s227 = scalar_select %p226, %s19, 0
      %s228 = sadd.s32 %s227, %s225
      %s229 = scalar_lea.vmem %s2, %s228
      %p231 = scmp.eq.s32.totalorder %s20, 0
      // Predicated region
      $region29: #{cobi_rgb_loss.12} parent=27 // pred_check
        %p232 = pneg %p231
      $region30: #{cobi_rgb_loss.12} parent=27 // pred_check_branch
        %234 = sbr.rel (%p232) target = $region32
      $region31: #{cobi_rgb_loss.12} parent=27 // pred_region
        %vm235 = vcmask 130048
        %236 = vst.msk [vmem:[#allocation2] sm:$0xff] %vm235, 0.0
        %237 = vst.msk [vmem:[#allocation2 + $0x8] sm:$0xff] %vm235, 0.0
      $region32: #{cobi_rgb_loss.12} parent=27 // pred_fallthru
        _
      %v238 = vld [vmem:[#allocation2] sm:$0xff]
      %v239 = vld [vmem:[#allocation2 + $0x8] sm:$0xff]
      %v240 = vld [vmem:[%s212] sm:$0xf]
      %v241 = vld [vmem:[%s212 + $0x4] sm:$0xf]
      %v242 = vld [vmem:[%s222] sm:$0xf]
      %v243 = vld [vmem:[%s222 + $0x4] sm:$0xf]
      %v244 = vld [vmem:[%s222 + $0x8] sm:$0xf]
      %v245 = vld [vmem:[%s222 + $0xc] sm:$0xf]
      %v248 = vunpack.c.l.b16 %v240
      %v249 = vunpack.c.l.b16 %v241
      %v250 = vpack.c.b16 %v249, %v248
      %v255 = vunpack.c.l.b16 %v242
      %v256 = vunpack.c.l.b16 %v243
      %v257 = vunpack.c.l.b16 %v244
      %v258 = vunpack.c.l.b16 %v245
      %v259 = vpack.c.b16 %v256, %v255
      %v260 = vpack.c.b16 %v258, %v257
      %vm263 = vcmask 261120
      %v265 = vsel %vm263, %v250, 0
      %267 = vmatprep.subr.bf16.mxu0 0
      %268 = vmatpush1.bf16.msra.mxu0 %v259
      %269 = vmatprep.subr.bf16.mxu0 0
      %270 = vmatpush1.bf16.msra.mxu0 %v260
      %271 = vmatprep.subr.bf16.mxu0 0
      %272 = vmatpush1.bf16.msra.mxu0 0
      %273 = vmatprep.subr.bf16.mxu0 0
      %274 = vmatpush1.bf16.msra.mxu0 0
      %275 = vmatprep.subr.bf16.mxu0 0
      %276 = vmatpush1.bf16.msra.mxu0 0
      %277 = vmatprep.subr.bf16.mxu0 0
      %278 = vmatpush1.bf16.msra.mxu0 0
      %279 = vmatprep.subr.bf16.mxu0 0
      %280 = vmatpush1.bf16.msra.mxu0 0
      %281 = vmatprep.subr.bf16.mxu0 0
      %282 = vmatpush1.bf16.msra.mxu0 0
      %283 = vmatprep.subr.bf16.mxu0 0
      %284 = vmatpush1.bf16.msra.mxu0 0
      %285 = vmatprep.subr.bf16.mxu0 0
      %286 = vmatpush1.bf16.msra.mxu0 0
      %287 = vmatprep.subr.bf16.mxu0 0
      %288 = vmatpush1.bf16.msra.mxu0 0
      %289 = vmatprep.subr.bf16.mxu0 0
      %290 = vmatpush1.bf16.msra.mxu0 0
      %291 = vmatprep.subr.bf16.mxu0 0
      %292 = vmatpush1.bf16.msra.mxu0 0
      %293 = vmatprep.subr.bf16.mxu0 0
      %294 = vmatpush1.bf16.msra.mxu0 0
      %295 = vmatprep.subr.bf16.mxu0 0
      %296 = vmatpush1.bf16.msra.mxu0 0
      %297 = vmatprep.subr.bf16.mxu0 0
      %298 = vmatpush1.bf16.msra.mxu0 0
      %299 = vmatprep.mubr.bf16.mxu0 0
      %300 = vmatmul.mubr.bf16.gmra.mrb[0].mxu0 %v265
      %v301 = vpop.f32.mrb[0].mxu0
      %v302 = vadd.f32 0.0, %v301
      %v303 = vpop.f32.mrb[0].mxu0
      %v304 = vpop.f32.mrb[0].mxu0
      %v305 = vadd.f32 0.0, %v304
      %v306 = vpop.f32.mrb[0].mxu0
      %307 = vdwg.mxu0
      %v308 = vadd.f32 %v238, %v302
      %v309 = vadd.f32 %v239, %v305
      %vm310 = vcmask 130048
      %311 = vst.msk [vmem:[#allocation2] sm:$0xff] %vm310, %v308
      %312 = vst.msk [vmem:[#allocation2 + $0x8] sm:$0xff] %vm310, %v309
      // Predicated region
      $region33: #{cobi_rgb_loss.12} parent=27 // pred_check
        %p313 = pneg %p231
      $region34: #{cobi_rgb_loss.12} parent=27 // pred_check_branch
        %315 = sbr.rel (%p313) target = $region36
      $region35: #{cobi_rgb_loss.12} parent=27 // pred_region
        %v316 = vld [vmem:[#allocation2] sm:$0xff]
        %v317 = vld [vmem:[#allocation2 + $0x8] sm:$0xff]
        %v318 = vsel %vm310, %v316, -inf
        %319 = vmax.xlane.f32.xlu0 %v318
        %v320 = vpop.xlane.xlu0 %319
        %v321 = vsel %vm310, %v317, -inf
        %322 = vmax.xlane.f32.xlu0 %v321
        %v323 = vpop.xlane.xlu0 %322
        %v324 = vsub.f32 1.0, %v320
        %v325 = vsub.f32 1.0, %v323
        %v326 = vmax.f32 %v324, 0.0
        %v327 = vmax.f32 %v325, 0.0
        %v328 = vadd.f32 %v326, 1e-05
        %v329 = vadd.f32 %v327, 1e-05
        %v330 = vrcp.pop %v328
        %v331 = vmul.f32 2.0, %v330
        %v332 = vrcp.pop %v329
        %v333 = vmul.f32 2.0, %v332
        %v334 = vsub.f32 %v316, %v320
        %v335 = vsub.f32 %v317, %v323
        %v336 = vmul.f32 %v331, %v334
        %v337 = vmul.f32 %v333, %v335
        %v338 = vmul.f32 %v336, 1.442695
        %v339 = vpow.pop %v338
        %v340 = vmul.f32 %v337, 1.442695
        %v341 = vpow.pop %v340
        %v342 = vsel %vm310, %v339, 0.0
        %343 = vadd.xlane.f32.xlu0 %v342
        %v344 = vpop.xlane.xlu0 %343
        %v345 = vsel %vm310, %v341, 0.0
        %346 = vadd.xlane.f32.xlu0 %v345
        %v347 = vpop.xlane.xlu0 %346
        %v348 = vrcp.pop %v344
        %v349 = vrcp.pop %v347
        %s350 = smul.u32 %s19, 16
        %v351 = vlaneseq
        %v352 = vshrl.u32 %v351, 7
        %v353 = vadd.s32 %v352, 8
        %v354 = vstv %s350
        %v355 = vadd.s32 %v354, %v352
        %v356 = vadd.s32 %v354, %v353
        %vm357 = vcmp.lt.s32.totalorder %v355, 16
        %vm358 = vcmp.lt.s32.totalorder %v356, 16
        %v359 = vsel %vm357, %v348, 0.0
        %v360 = vsel %vm358, %v349, 0.0
        %vm361 = vcmask 7168
        %v362 = vsel %vm361, %v359, 0.0
        %v363 = vsel %vm361, %v360, 0.0
        %v364 = vadd.f32 %v362, %v363
        %365 = vadd.xlane.f32.xlu0 %v364
        %v366 = vpop.xlane.xlu0 %365
        %v367 = vrot.slane %v366, 4
        %v368 = vadd.f32 %v366, %v367
        %v369 = vrot.slane %v368, 2
        %v370 = vadd.f32 %v368, %v369
        %v371 = vrot.slane %v370, 1
        %v372 = vadd.f32 %v370, %v371
        %s373 = vtos %v372
        %v374 = vstv %s373
        %vm375 = vcmask 0
        %376 = vst.msk [vmem:[%s229] sm:$0x1] %vm375, %v374
      $region36: #{cobi_rgb_loss.12} parent=27 // pred_fallthru
        _
      %p377 = scmp.lt.s32.totalorder %s18, 1
      %s378 = scalar_select %p377, %s18, 1
      %p379 = scmp.lt.s32.totalorder %s19, 0
      %s380 = scalar_select %p379, %s19, 0
      %s381 = sadd.s32 %s380, %s378
      %s382 = scalar_lea.vmem %s2, %s381
      // Predicated region
      $region37: #{cobi_rgb_loss.12} parent=27 // pred_check
        %p383 = pneg %p110
      $region38: #{cobi_rgb_loss.12} parent=27 // pred_check_branch
        %385 = sbr.rel (%p383) target = $region40
      $region39: #{cobi_rgb_loss.12} parent=27 // pred_region
        _
      $region40: #{cobi_rgb_loss.12} parent=27 // pred_fallthru
        _
    $region28: #{cobi_rgb_loss.12} parent=5 // pred_fallthru
      _
    %p386 = scmp.le.s32.totalorder 2, %s8
    // Predicated region
    $region41: #{cobi_rgb_loss.12} parent=5 // pred_check
      %p387 = pneg %p386
    $region42: #{cobi_rgb_loss.12} parent=5 // pred_check_branch
      %389 = sbr.rel (%p387) target = $region44
    $region43: #{cobi_rgb_loss.12} parent=5 // pred_region
      %s390 = ssub.s32 %s8, 2
      // Predicated region
      $region45: #{cobi_rgb_loss.12} parent=43 // pred_check
        %p391 = pneg %p116
      $region46: #{cobi_rgb_loss.12} parent=43 // pred_check_branch
        %393 = sbr.rel (%p391) target = $region48
      $region47: #{cobi_rgb_loss.12} parent=43 // pred_region
        %p394 = scmp.lt.s32.totalorder %s21, 1
        %s395 = scalar_select %p394, %s21, 1
        %p396 = scmp.lt.s32.totalorder %s22, 0
        %s397 = scalar_select %p396, %s22, 0
        %s398 = sadd.s32 %s397, %s395
        %s399 = scalar_lea.vmem %s2, %s398
      $region48: #{cobi_rgb_loss.12} parent=43 // pred_fallthru
        _
    $region44: #{cobi_rgb_loss.12} parent=5 // pred_fallthru
      _
  $region6: #{cobi_rgb_loss.12} parent=0 // loop_footer
    %s12 = sadd.s32 1, %s8
  $region7: #{cobi_rgb_loss.12} parent=0 // loop_footer_branch
    %7 = sbr.rel target = $region3
  $region8: #{cobi_rgb_loss.12} parent=0 // loop_exit
    _

// kernel: cobi_rgb_loss.11
$region0: #{cobi_rgb_loss.11}
  #allocation0 [shape = 'u32[]', space=smem, size = 0x4, offset = 0x4, fixed_abs, tag = 'smem constant byte address 0x4 - core index']
  #allocation1 [shape = 'u32[144,128]{1,0:T(1,128)}', space=vmem, size = 0x12000, scoped, tag = 'internal scratch']
  #allocation2 [shape = 'f32[64,64]{1,0:T(8,128)}', space=vmem, size = 0x8000, scoped, tag = 'scratch operand']
  %s0 = inlined_call_operand.vmem [shape: bf16[2,64,16], index: 0, kind: input, shape index: {}]
  %s1 = inlined_call_operand.vmem [shape: bf16[2,16,64], index: 1, kind: input, shape index: {}]
  %s2 = inlined_call_operand.vmem [shape: f32[2,1,1,1], index: 2, kind: output, shape index: {}]
  %s3 = sld [smem:[#allocation0]]
  $region49: #{cobi_rgb_loss.11} parent=0
    _
  %s5 = ssub.s32 1, %s3
  %s6 = scalar_select 0, %s5, %s3
  loop: start=0, step=1, limit=4
  $region2: #{cobi_rgb_loss.11} parent=0 // loop_pre_header
    _
  $region3: #{cobi_rgb_loss.11} parent=0 // loop_header
    %s8 = sphi 0, %s12
    %p9 = scmp.ge.s32.totalorder %s8, 4
    %s15 = sphi 0, %s34
    %s16 = sphi 0, %s30
    %s17 = sphi 0, %s26
    %s18 = sphi 0, %s15
    %s19 = sphi 0, %s16
    %s20 = sphi 0, %s17
    %s21 = sphi 0, %s18
    %s22 = sphi 0, %s19
    %s23 = sphi 0, %s20
    %s41 = sphi 0, %s43
    %s44 = sphi 0, %s41
    %s45 = sphi 0, %s44
    %s61 = sphi 0, %s45
    %s69 = sphi 0, %s71
    %s72 = sphi 0, %s69
    %s73 = sphi 0, %s72
    %s89 = sphi 0, %s73
    %s97 = sphi 0, %s99
    %s100 = sphi 0, %s97
    %s101 = sphi 0, %s100
    %s117 = sphi 0, %s101
  $region4: #{cobi_rgb_loss.11} parent=0 // loop_header_branch
    %11 = sbr.rel (%p9) target = $region8
  $region5: #{cobi_rgb_loss.11} parent=0 // loop_body
    %s13 = ssub.s32 %s8, 1
    %s14 = ssub.s32 %s8, 2
    %s24 = sadd.s32 1, %s17
    %p25 = scmp.ge.s32.totalorder %s24, 1
    %s26 = scalar_select %p25, 0, %s24
    %s27 = sadd.s32 1, %s16
    %s28 = scalar_select %p25, %s27, %s16
    %p29 = scmp.ge.s32.totalorder %s28, 1
    %s30 = scalar_select %p29, 0, %s28
    %s31 = sadd.s32 1, %s15
    %s32 = scalar_select %p29, %s31, %s15
    %p33 = scmp.ge.s32.totalorder %s32, 2
    %s34 = scalar_select %p33, 0, %s32
    %s35 = ssub.s32 %s15, %s34
    %s36 = ssub.s32 %s16, %s30
    %s37 = sor.u32 %s35, %s36
    %s38 = ssub.s32 %s17, %s26
    %s39 = sor.u32 %s37, %s38
    %p40 = scmp.eq.s32.totalorder %s39, 0
    %s42 = sadd.s32 %s41, 1
    %s43 = scalar_select %p40, %s41, %s42
    %p46 = pneg %p40
    %p47 = scmp.eq.s32.totalorder %s8, 1
    %p48 = por %p46, %p47
    %p49 = scmp.ne.s32.totalorder %s41, %s44
    %p50 = scmp.eq.s32.totalorder %s8, 0
    %p51 = por %p49, %p50
    %p52 = scmp.ne.s32.totalorder %s41, %s44
    %p53 = scmp.eq.s32.totalorder %s13, 1
    %p54 = por %p52, %p53
    %p55 = scmp.ne.s32.totalorder %s44, %s45
    %p56 = scmp.eq.s32.totalorder %s13, 0
    %p57 = por %p55, %p56
    %p58 = scmp.ne.s32.totalorder %s44, %s45
    %p59 = scmp.eq.s32.totalorder %s14, 1
    %p60 = por %p58, %p59
    %p62 = scmp.ne.s32.totalorder %s45, %s61
    %p63 = scmp.eq.s32.totalorder %s14, 0
    %p64 = por %p62, %p63
    %s65 = ssub.s32 %s15, %s34
    %s66 = ssub.s32 %s17, %s26
    %s67 = sor.u32 %s65, %s66
    %p68 = scmp.eq.s32.totalorder %s67, 0
    %s70 = sadd.s32 %s69, 1
    %s71 = scalar_select %p68, %s69, %s70
    %p74 = pneg %p68
    %p75 = scmp.eq.s32.totalorder %s8, 1
    %p76 = por %p74, %p75
    %p77 = scmp.ne.s32.totalorder %s69, %s72
    %p78 = scmp.eq.s32.totalorder %s8, 0
    %p79 = por %p77, %p78
    %p80 = scmp.ne.s32.totalorder %s69, %s72
    %p81 = scmp.eq.s32.totalorder %s13, 1
    %p82 = por %p80, %p81
    %p83 = scmp.ne.s32.totalorder %s72, %s73
    %p84 = scmp.eq.s32.totalorder %s13, 0
    %p85 = por %p83, %p84
    %p86 = scmp.ne.s32.totalorder %s72, %s73
    %p87 = scmp.eq.s32.totalorder %s14, 1
    %p88 = por %p86, %p87
    %p90 = scmp.ne.s32.totalorder %s73, %s89
    %p91 = scmp.eq.s32.totalorder %s14, 0
    %p92 = por %p90, %p91
    %s93 = ssub.s32 %s15, %s34
    %s94 = ssub.s32 %s16, %s30
    %s95 = sor.u32 %s93, %s94
    %p96 = scmp.eq.s32.totalorder %s95, 0
    %s98 = sadd.s32 %s97, 1
    %s99 = scalar_select %p96, %s97, %s98
    %p102 = pneg %p96
    %p103 = scmp.eq.s32.totalorder %s8, 1
    %p104 = por %p102, %p103
    %p105 = scmp.ne.s32.totalorder %s97, %s100
    %p106 = scmp.eq.s32.totalorder %s8, 0
    %p107 = por %p105, %p106
    %p108 = scmp.ne.s32.totalorder %s97, %s100
    %p109 = scmp.eq.s32.totalorder %s13, 1
    %p110 = por %p108, %p109
    %p111 = scmp.ne.s32.totalorder %s100, %s101
    %p112 = scmp.eq.s32.totalorder %s13, 0
    %p113 = por %p111, %p112
    %p114 = scmp.ne.s32.totalorder %s100, %s101
    %p115 = scmp.eq.s32.totalorder %s14, 1
    %p116 = por %p114, %p115
    %p118 = scmp.ne.s32.totalorder %s101, %s117
    %p119 = scmp.eq.s32.totalorder %s14, 0
    %p120 = por %p118, %p119
    %p121 = scmp.le.s32.totalorder 1, %s8
    %p122 = scmp.lt.s32.totalorder %s8, 3
    %p123 = pnand %p121, %p122
    %p124 = pneg %p123
    // Predicated region
    $region9: #{cobi_rgb_loss.11} parent=5 // pred_check
      _
    $region10: #{cobi_rgb_loss.11} parent=5 // pred_check_branch
      %126 = sbr.rel (%p123) target = $region12
    $region11: #{cobi_rgb_loss.11} parent=5 // pred_region
      %s127 = ssub.s32 %s8, 1
    $region12: #{cobi_rgb_loss.11} parent=5 // pred_fallthru
      _
    %p128 = scmp.lt.s32.totalorder %s8, 2
    // Predicated region
    $region13: #{cobi_rgb_loss.11} parent=5 // pred_check
      %p129 = pneg %p128
    $region14: #{cobi_rgb_loss.11} parent=5 // pred_check_branch
      %131 = sbr.rel (%p129) target = $region16
    $region15: #{cobi_rgb_loss.11} parent=5 // pred_region
      // Predicated region
      $region17: #{cobi_rgb_loss.11} parent=15 // pred_check
        %p132 = pneg %p51
      $region18: #{cobi_rgb_loss.11} parent=15 // pred_check_branch
        %134 = sbr.rel (%p132) target = $region20
      $region19: #{cobi_rgb_loss.11} parent=15 // pred_region
        %s135 = smul.u32 8, %s16
        %p136 = scmp.lt.s32.totalorder %s15, 1
        %s137 = scalar_select %p136, %s15, 1
        %p138 = scmp.lt.s32.totalorder %s135, 7
        %s139 = scalar_select %p138, %s135, 7
        %p140 = scmp.lt.s32.totalorder %s17, 0
        %s141 = scalar_select %p140, %s17, 0
        %s142 = sadd.s32 %s141, %s139
        %s143 = smul.addr %s137, 8
        %s144 = sadd.s32 %s142, %s143
        %s145 = smul.addr %s144, 4
        %s146 = scalar_lea.vmem %s0, %s145
        %s147 = smul.u32 8, %s16
      $region20: #{cobi_rgb_loss.11} parent=15 // pred_fallthru
        _
      // Predicated region
      $region21: #{cobi_rgb_loss.11} parent=15 // pred_check
        %p148 = pneg %p79
      $region22: #{cobi_rgb_loss.11} parent=15 // pred_check_branch
        %150 = sbr.rel (%p148) target = $region24
      $region23: #{cobi_rgb_loss.11} parent=15 // pred_region
        %s151 = smul.u32 2, %s17
        %p152 = scmp.lt.s32.totalorder %s15, 1
        %s153 = scalar_select %p152, %s15, 1
        %p154 = scmp.lt.s32.totalorder %s151, 1
        %s155 = scalar_select %p154, %s151, 1
        %s156 = smul.addr %s153, 2
        %s157 = sadd.s32 %s155, %s156
        %s158 = smul.addr %s157, 4
        %s159 = scalar_lea.vmem %s1, %s158
        %s160 = smul.u32 2, %s17
      $region24: #{cobi_rgb_loss.11} parent=15 // pred_fallthru
        _
    $region16: #{cobi_rgb_loss.11} parent=5 // pred_fallthru
      _
    %p161 = scmp.le.s32.totalorder 1, %s8
    %p162 = scmp.lt.s32.totalorder %s8, 3
    %p163 = pnand %p161, %p162
    %p164 = pneg %p163
    // Predicated region
    $region25: #{cobi_rgb_loss.11} parent=5 // pred_check
      _
    $region26: #{cobi_rgb_loss.11} parent=5 // pred_check_branch
      %166 = sbr.rel (%p163) target = $region28
    $region27: #{cobi_rgb_loss.11} parent=5 // pred_region
      %s167 = ssub.s32 %s8, 1
      %s168 = smul.u32 8, %s19
      %p169 = scmp.lt.s32.totalorder %s18, 1
      %s170 = scalar_select %p169, %s18, 1
      %p171 = scmp.lt.s32.totalorder %s168, 7
      %s172 = scalar_select %p171, %s168, 7
      %p173 = scmp.lt.s32.totalorder %s20, 0
      %s174 = scalar_select %p173, %s20, 0
      %s175 = sadd.s32 %s174, %s172
      %s176 = smul.addr %s170, 8
      %s177 = sadd.s32 %s175, %s176
      %s178 = smul.addr %s177, 4
      %s179 = scalar_lea.vmem %s0, %s178
      %p180 = pneg %p57
      %p181 = pneg %p54
      %s182 = smul.u32 2, %s20
      %p183 = scmp.lt.s32.totalorder %s18, 1
      %s184 = scalar_select %p183, %s18, 1
      %p185 = scmp.lt.s32.totalorder %s182, 1
      %s186 = scalar_select %p185, %s182, 1
      %s187 = smul.addr %s184, 2
      %s188 = sadd.s32 %s186, %s187
      %s189 = smul.addr %s188, 4
      %s190 = scalar_lea.vmem %s1, %s189
      %p191 = pneg %p85
      %p192 = pneg %p82
      %p193 = pneg %p113
      %p194 = pneg %p110
      %p195 = scmp.lt.s32.totalorder %s18, 1
      %s196 = scalar_select %p195, %s18, 1
      %p197 = scmp.lt.s32.totalorder %s19, 0
      %s198 = scalar_select %p197, %s19, 0
      %s199 = sadd.s32 %s198, %s196
      %s200 = scalar_lea.vmem %s2, %s199
      %s201 = smul.u32 8, %s19
      %p202 = scmp.lt.s32.totalorder %s18, 1
      %s203 = scalar_select %p202, %s18, 1
      %p204 = scmp.lt.s32.totalorder %s201, 7
      %s205 = scalar_select %p204, %s201, 7
      %p206 = scmp.lt.s32.totalorder %s20, 0
      %s207 = scalar_select %p206, %s20, 0
      %s208 = sadd.s32 %s207, %s205
      %s209 = smul.addr %s203, 8
      %s210 = sadd.s32 %s208, %s209
      %s211 = smul.addr %s210, 4
      %s212 = scalar_lea.vmem %s0, %s211
      %s213 = smul.u32 8, %s19
      %s214 = smul.u32 2, %s20
      %p215 = scmp.lt.s32.totalorder %s18, 1
      %s216 = scalar_select %p215, %s18, 1
      %p217 = scmp.lt.s32.totalorder %s214, 1
      %s218 = scalar_select %p217, %s214, 1
      %s219 = smul.addr %s216, 2
      %s220 = sadd.s32 %s218, %s219
      %s221 = smul.addr %s220, 4
      %s222 = scalar_lea.vmem %s1, %s221
      %s223 = smul.u32 2, %s20
      %p224 = scmp.lt.s32.totalorder %s18, 1
      %s225 = scalar_select %p224, %s18, 1
      %p226 = scmp.lt.s32.totalorder %s19, 0
      %s227 = scalar_select %p226, %s19, 0
      %s228 = sadd.s32 %s227, %s225
      %s229 = scalar_lea.vmem %s2, %s228
      %p231 = scmp.eq.s32.totalorder %s20, 0
      // Predicated region
      $region29: #{cobi_rgb_loss.11} parent=27 // pred_check
        %p232 = pneg %p231
      $region30: #{cobi_rgb_loss.11} parent=27 // pred_check_branch
        %234 = sbr.rel (%p232) target = $region32
      $region31: #{cobi_rgb_loss.11} parent=27 // pred_region
        %vm235 = vcmask 523264
        %236 = vst.msk [vmem:[#allocation2] sm:$0xff] %vm235, 0.0
        %237 = vst.msk [vmem:[#allocation2 + $0x8] sm:$0xff] %vm235, 0.0
        %238 = vst.msk [vmem:[#allocation2 + $0x10] sm:$0xff] %vm235, 0.0
        %239 = vst.msk [vmem:[#allocation2 + $0x18] sm:$0xff] %vm235, 0.0
        %240 = vst.msk [vmem:[#allocation2 + $0x20] sm:$0xff] %vm235, 0.0
        %241 = vst.msk [vmem:[#allocation2 + $0x28] sm:$0xff] %vm235, 0.0
        %242 = vst.msk [vmem:[#allocation2 + $0x30] sm:$0xff] %vm235, 0.0
        %243 = vst.msk [vmem:[#allocation2 + $0x38] sm:$0xff] %vm235, 0.0
      $region32: #{cobi_rgb_loss.11} parent=27 // pred_fallthru
        _
      %v244 = vld [vmem:[#allocation2] sm:$0xff]
      %v245 = vld [vmem:[#allocation2 + $0x8] sm:$0xff]
      %v246 = vld [vmem:[#allocation2 + $0x10] sm:$0xff]
      %v247 = vld [vmem:[#allocation2 + $0x18] sm:$0xff]
      %v248 = vld [vmem:[#allocation2 + $0x20] sm:$0xff]
      %v249 = vld [vmem:[#allocation2 + $0x28] sm:$0xff]
      %v250 = vld [vmem:[#allocation2 + $0x30] sm:$0xff]
      %v251 = vld [vmem:[#allocation2 + $0x38] sm:$0xff]
      %v252 = vld [vmem:[%s212] sm:$0xf]
      %v253 = vld [vmem:[%s212 + $0x4] sm:$0xf]
      %v254 = vld [vmem:[%s212 + $0x8] sm:$0xf]
      %v255 = vld [vmem:[%s212 + $0xc] sm:$0xf]
      %v256 = vld [vmem:[%s212 + $0x10] sm:$0xf]
      %v257 = vld [vmem:[%s212 + $0x14] sm:$0xf]
      %v258 = vld [vmem:[%s212 + $0x18] sm:$0xf]
      %v259 = vld [vmem:[%s212 + $0x1c] sm:$0xf]
      %v260 = vld [vmem:[%s222] sm:$0xf]
      %v261 = vld [vmem:[%s222 + $0x4] sm:$0xf]
      %v270 = vunpack.c.l.b16 %v252
      %v271 = vunpack.c.l.b16 %v253
      %v272 = vunpack.c.l.b16 %v254
      %v273 = vunpack.c.l.b16 %v255
      %v274 = vunpack.c.l.b16 %v256
      %v275 = vunpack.c.l.b16 %v257
      %v276 = vunpack.c.l.b16 %v258
      %v277 = vunpack.c.l.b16 %v259
      %v278 = vpack.c.b16 %v271, %v270
      %v279 = vpack.c.b16 %v273, %v272
      %v280 = vpack.c.b16 %v275, %v274
      %v281 = vpack.c.b16 %v277, %v276
      %v284 = vunpack.c.l.b16 %v260
      %v285 = vunpack.c.l.b16 %v261
      %v286 = vpack.c.b16 %v285, %v284
      %vm288 = vcmask 130048
      %v290 = vsel %vm288, %v278, 0
      %v293 = vsel %vm288, %v279, 0
      %v296 = vsel %vm288, %v280, 0
      %v299 = vsel %vm288, %v281, 0
      %301 = vmatprep.subr.bf16.mxu0 0
      %302 = vmatpush1.bf16.msra.mxu0 %v286
      %303 = vmatprep.subr.bf16.mxu0 0
      %304 = vmatpush1.bf16.msra.mxu0 0
      %305 = vmatprep.subr.bf16.mxu0 0
      %306 = vmatpush1.bf16.msra.mxu0 0
      %307 = vmatprep.subr.bf16.mxu0 0
      %308 = vmatpush1.bf16.msra.mxu0 0
      %309 = vmatprep.subr.bf16.mxu0 0
      %310 = vmatpush1.bf16.msra.mxu0 0
      %311 = vmatprep.subr.bf16.mxu0 0
      %312 = vmatpush1.bf16.msra.mxu0 0
      %313 = vmatprep.subr.bf16.mxu0 0
      %314 = vmatpush1.bf16.msra.mxu0 0
      %315 = vmatprep.subr.bf16.mxu0 0
      %316 = vmatpush1.bf16.msra.mxu0 0
      %317 = vmatprep.subr.bf16.mxu0 0
      %318 = vmatpush1.bf16.msra.mxu0 0
      %319 = vmatprep.subr.bf16.mxu0 0
      %320 = vmatpush1.bf16.msra.mxu0 0
      %321 = vmatprep.subr.bf16.mxu0 0
      %322 = vmatpush1.bf16.msra.mxu0 0
      %323 = vmatprep.subr.bf16.mxu0 0
      %324 = vmatpush1.bf16.msra.mxu0 0
      %325 = vmatprep.subr.bf16.mxu0 0
      %326 = vmatpush1.bf16.msra.mxu0 0
      %327 = vmatprep.subr.bf16.mxu0 0
      %328 = vmatpush1.bf16.msra.mxu0 0
      %329 = vmatprep.subr.bf16.mxu0 0
      %330 = vmatpush1.bf16.msra.mxu0 0
      %331 = vmatprep.subr.bf16.mxu0 0
      %332 = vmatpush1.bf16.msra.mxu0 0
      %333 = vmatprep.mubr.bf16.mxu0 0
      %334 = vmatmul.mubr.bf16.gmra.mrb[0].mxu0 %v290
      %v335 = vpop.f32.mrb[0].mxu0
      %v336 = vadd.f32 0.0, %v335
      %v337 = vpop.f32.mrb[0].mxu0
      %v338 = vpop.f32.mrb[0].mxu0
      %v339 = vadd.f32 0.0, %v338
      %v340 = vpop.f32.mrb[0].mxu0
      %341 = vmatprep.mubr.bf16.mxu0 0
      %342 = vmatmul.mubr.bf16.gmra.mrb[0].mxu0 %v293
      %v343 = vpop.f32.mrb[0].mxu0
      %v344 = vadd.f32 0.0, %v343
      %v345 = vpop.f32.mrb[0].mxu0
      %v346 = vpop.f32.mrb[0].mxu0
      %v347 = vadd.f32 0.0, %v346
      %v348 = vpop.f32.mrb[0].mxu0
      %349 = vmatprep.mubr.bf16.mxu0 0
      %350 = vmatmul.mubr.bf16.gmra.mrb[0].mxu0 %v296
      %v351 = vpop.f32.mrb[0].mxu0
      %v352 = vadd.f32 0.0, %v351
      %v353 = vpop.f32.mrb[0].mxu0
      %v354 = vpop.f32.mrb[0].mxu0
      %v355 = vadd.f32 0.0, %v354
      %v356 = vpop.f32.mrb[0].mxu0
      %357 = vmatprep.mubr.bf16.mxu0 0
      %358 = vmatmul.mubr.bf16.gmra.mrb[0].mxu0 %v299
      %v359 = vpop.f32.mrb[0].mxu0
      %v360 = vadd.f32 0.0, %v359
      %v361 = vpop.f32.mrb[0].mxu0
      %v362 = vpop.f32.mrb[0].mxu0
      %v363 = vadd.f32 0.0, %v362
      %v364 = vpop.f32.mrb[0].mxu0
      %365 = vdwg.mxu0
      %v366 = vadd.f32 %v244, %v336
      %v367 = vadd.f32 %v245, %v339
      %v368 = vadd.f32 %v246, %v344
      %v369 = vadd.f32 %v247, %v347
      %v370 = vadd.f32 %v248, %v352
      %v371 = vadd.f32 %v249, %v355
      %v372 = vadd.f32 %v250, %v360
      %v373 = vadd.f32 %v251, %v363
      %vm374 = vcmask 523264
      %375 = vst.msk [vmem:[#allocation2] sm:$0xff] %vm374, %v366
      %376 = vst.msk [vmem:[#allocation2 + $0x8] sm:$0xff] %vm374, %v367
      %377 = vst.msk [vmem:[#allocation2 + $0x10] sm:$0xff] %vm374, %v368
      %378 = vst.msk [vmem:[#allocation2 + $0x18] sm:$0xff] %vm374, %v369
      %379 = vst.msk [vmem:[#allocation2 + $0x20] sm:$0xff] %vm374, %v370
      %380 = vst.msk [vmem:[#allocation2 + $0x28] sm:$0xff] %vm374, %v371
      %381 = vst.msk [vmem:[#allocation2 + $0x30] sm:$0xff] %vm374, %v372
      %382 = vst.msk [vmem:[#allocation2 + $0x38] sm:$0xff] %vm374, %v373
      // Predicated region
      $region33: #{cobi_rgb_loss.11} parent=27 // pred_check
        %p383 = pneg %p231
      $region34: #{cobi_rgb_loss.11} parent=27 // pred_check_branch
        %385 = sbr.rel (%p383) target = $region36
      $region35: #{cobi_rgb_loss.11} parent=27 // pred_region
        %v386 = vld [vmem:[#allocation2] sm:$0xff]
        %v387 = vld [vmem:[#allocation2 + $0x8] sm:$0xff]
        %v388 = vld [vmem:[#allocation2 + $0x10] sm:$0xff]
        %v389 = vld [vmem:[#allocation2 + $0x18] sm:$0xff]
        %v390 = vld [vmem:[#allocation2 + $0x20] sm:$0xff]
        %v391 = vld [vmem:[#allocation2 + $0x28] sm:$0xff]
        %v392 = vld [vmem:[#allocation2 + $0x30] sm:$0xff]
        %v393 = vld [vmem:[#allocation2 + $0x38] sm:$0xff]
        %v394 = vsel %vm374, %v386, -inf
        %395 = vmax.xlane.f32.xlu0 %v394
        %v396 = vpop.xlane.xlu0 %395
        %v397 = vsel %vm374, %v387, -inf
        %398 = vmax.xlane.f32.xlu0 %v397
        %v399 = vpop.xlane.xlu0 %398
        %v400 = vsel %vm374, %v388, -inf
        %401 = vmax.xlane.f32.xlu0 %v400
        %v402 = vpop.xlane.xlu0 %401
        %v403 = vsel %vm374, %v389, -inf
        %404 = vmax.xlane.f32.xlu0 %v403
        %v405 = vpop.xlane.xlu0 %404
        %v406 = vsel %vm374, %v390, -inf
        %407 = vmax.xlane.f32.xlu0 %v406
        %v408 = vpop.xlane.xlu0 %407
        %v409 = vsel %vm374, %v391, -inf
        %410 = vmax.xlane.f32.xlu0 %v409
        %v411 = vpop.xlane.xlu0 %410
        %v412 = vsel %vm374, %v392, -inf
        %413 = vmax.xlane.f32.xlu0 %v412
        %v414 = vpop.xlane.xlu0 %413
        %v415 = vsel %vm374, %v393, -inf
        %416 = vmax.xlane.f32.xlu0 %v415
        %v417 = vpop.xlane.xlu0 %416
        %v418 = vsub.f32 1.0, %v396
        %v419 = vsub.f32 1.0, %v399
        %v420 = vsub.f32 1.0, %v402
        %v421 = vsub.f32 1.0, %v405
        %v422 = vsub.f32 1.0, %v408
        %v423 = vsub.f32 1.0, %v411
        %v424 = vsub.f32 1.0, %v414
        %v425 = vsub.f32 1.0, %v417
        %v426 = vmax.f32 %v418, 0.0
        %v427 = vmax.f32 %v419, 0.0
        %v428 = vmax.f32 %v420, 0.0
        %v429 = vmax.f32 %v421, 0.0
        %v430 = vmax.f32 %v422, 0.0
        %v431 = vmax.f32 %v423, 0.0
        %v432 = vmax.f32 %v424, 0.0
        %v433 = vmax.f32 %v425, 0.0
        %v434 = vadd.f32 %v426, 1e-05
        %v435 = vadd.f32 %v427, 1e-05
        %v436 = vadd.f32 %v428, 1e-05
        %v437 = vadd.f32 %v429, 1e-05
        %v438 = vadd.f32 %v430, 1e-05
        %v439 = vadd.f32 %v431, 1e-05
        %v440 = vadd.f32 %v432, 1e-05
        %v441 = vadd.f32 %v433, 1e-05
        %v442 = vrcp.pop %v434
        %v443 = vmul.f32 2.0, %v442
        %v444 = vrcp.pop %v435
        %v445 = vmul.f32 2.0, %v444
        %v446 = vrcp.pop %v436
        %v447 = vmul.f32 2.0, %v446
        %v448 = vrcp.pop %v437
        %v449 = vmul.f32 2.0, %v448
        %v450 = vrcp.pop %v438
        %v451 = vmul.f32 2.0, %v450
        %v452 = vrcp.pop %v439
        %v453 = vmul.f32 2.0, %v452
        %v454 = vrcp.pop %v440
        %v455 = vmul.f32 2.0, %v454
        %v456 = vrcp.pop %v441
        %v457 = vmul.f32 2.0, %v456
        %v458 = vsub.f32 %v386, %v396
        %v459 = vsub.f32 %v387, %v399
        %v460 = vsub.f32 %v388, %v402
        %v461 = vsub.f32 %v389, %v405
        %v462 = vsub.f32 %v390, %v408
        %v463 = vsub.f32 %v391, %v411
        %v464 = vsub.f32 %v392, %v414
        %v465 = vsub.f32 %v393, %v417
        %v466 = vmul.f32 %v443, %v458
        %v467 = vmul.f32 %v445, %v459
        %v468 = vmul.f32 %v447, %v460
        %v469 = vmul.f32 %v449, %v461
        %v470 = vmul.f32 %v451, %v462
        %v471 = vmul.f32 %v453, %v463
        %v472 = vmul.f32 %v455, %v464
        %v473 = vmul.f32 %v457, %v465
        %v474 = vmul.f32 %v466, 1.442695
        %v475 = vpow.pop %v474
        %v476 = vmul.f32 %v467, 1.442695
        %v477 = vpow.pop %v476
        %v478 = vmul.f32 %v468, 1.442695
        %v479 = vpow.pop %v478
        %v480 = vmul.f32 %v469, 1.442695
        %v481 = vpow.pop %v480
        %v482 = vmul.f32 %v470, 1.442695
        %v483 = vpow.pop %v482
        %v484 = vmul.f32 %v471, 1.442695
        %v485 = vpow.pop %v484
        %v486 = vmul.f32 %v472, 1.442695
        %v487 = vpow.pop %v486
        %v488 = vmul.f32 %v473, 1.442695
        %v489 = vpow.pop %v488
        %v490 = vsel %vm374, %v475, 0.0
        %491 = vadd.xlane.f32.xlu0 %v490
        %v492 = vpop.xlane.xlu0 %491
        %v493 = vsel %vm374, %v477, 0.0
        %494 = vadd.xlane.f32.xlu0 %v493
        %v495 = vpop.xlane.xlu0 %494
        %v496 = vsel %vm374, %v479, 0.0
        %497 = vadd.xlane.f32.xlu0 %v496
        %v498 = vpop.xlane.xlu0 %497
        %v499 = vsel %vm374, %v481, 0.0
        %500 = vadd.xlane.f32.xlu0 %v499
        %v501 = vpop.xlane.xlu0 %500
        %v502 = vsel %vm374, %v483, 0.0
        %503 = vadd.xlane.f32.xlu0 %v502
        %v504 = vpop.xlane.xlu0 %503
        %v505 = vsel %vm374, %v485, 0.0
        %506 = vadd.xlane.f32.xlu0 %v505
        %v507 = vpop.xlane.xlu0 %506
        %v508 = vsel %vm374, %v487, 0.0
        %509 = vadd.xlane.f32.xlu0 %v508
        %v510 = vpop.xlane.xlu0 %509
        %v511 = vsel %vm374, %v489, 0.0
        %512 = vadd.xlane.f32.xlu0 %v511
        %v513 = vpop.xlane.xlu0 %512
        %v514 = vrcp.pop %v492
        %v515 = vrcp.pop %v495
        %v516 = vrcp.pop %v498
        %v517 = vrcp.pop %v501
        %v518 = vrcp.pop %v504
        %v519 = vrcp.pop %v507
        %v520 = vrcp.pop %v510
        %v521 = vrcp.pop %v513
        %s522 = smul.u32 %s19, 64
        %v523 = vlaneseq
        %v524 = vshrl.u32 %v523, 7
        %v525 = vadd.s32 %v524, 8
        %v526 = vadd.s32 %v524, 16
        %v527 = vadd.s32 %v524, 24
        %v528 = vadd.s32 %v524, 32
        %v529 = vadd.s32 %v524, 40
        %v530 = vadd.s32 %v524, 48
        %v531 = vadd.s32 %v524, 56
        %v532 = vstv %s522
        %v533 = vadd.s32 %v532, %v524
        %v534 = vadd.s32 %v532, %v525
        %v535 = vadd.s32 %v532, %v526
        %v536 = vadd.s32 %v532, %v527
        %v537 = vadd.s32 %v532, %v528
        %v538 = vadd.s32 %v532, %v529
        %v539 = vadd.s32 %v532, %v530
        %v540 = vadd.s32 %v532, %v531
        %vm541 = vcmp.lt.s32.totalorder %v533, 64
        %vm542 = vcmp.lt.s32.totalorder %v534, 64
        %vm543 = vcmp.lt.s32.totalorder %v535, 64
        %vm544 = vcmp.lt.s32.totalorder %v536, 64
        %vm545 = vcmp.lt.s32.totalorder %v537, 64
        %vm546 = vcmp.lt.s32.totalorder %v538, 64
        %vm547 = vcmp.lt.s32.totalorder %v539, 64
        %vm548 = vcmp.lt.s32.totalorder %v540, 64
        %v549 = vsel %vm541, %v514, 0.0
        %v550 = vsel %vm542, %v515, 0.0
        %v551 = vsel %vm543, %v516, 0.0
        %v552 = vsel %vm544, %v517, 0.0
        %v553 = vsel %vm545, %v518, 0.0
        %v554 = vsel %vm546, %v519, 0.0
        %v555 = vsel %vm547, %v520, 0.0
        %v556 = vsel %vm548, %v521, 0.0
        %vm557 = vcmask 7168
        %v558 = vsel %vm557, %v549, 0.0
        %v559 = vsel %vm557, %v550, 0.0
        %v560 = vadd.f32 %v558, %v559
        %v561 = vsel %vm557, %v551, 0.0
        %v562 = vadd.f32 %v560, %v561
        %v563 = vsel %vm557, %v552, 0.0
        %v564 = vadd.f32 %v562, %v563
        %v565 = vsel %vm557, %v553, 0.0
        %v566 = vadd.f32 %v564, %v565
        %v567 = vsel %vm557, %v554, 0.0
        %v568 = vadd.f32 %v566, %v567
        %v569 = vsel %vm557, %v555, 0.0
        %v570 = vadd.f32 %v568, %v569
        %v571 = vsel %vm557, %v556, 0.0
        %v572 = vadd.f32 %v570, %v571
        %573 = vadd.xlane.f32.xlu0 %v572
        %v574 = vpop.xlane.xlu0 %573
        %v575 = vrot.slane %v574, 4
        %v576 = vadd.f32 %v574, %v575
        %v577 = vrot.slane %v576, 2
        %v578 = vadd.f32 %v576, %v577
        %v579 = vrot.slane %v578, 1
        %v580 = vadd.f32 %v578, %v579
        %s581 = vtos %v580
        %v582 = vstv %s581
        %vm583 = vcmask 0
        %584 = vst.msk [vmem:[%s229] sm:$0x1] %vm583, %v582
      $region36: #{cobi_rgb_loss.11} parent=27 // pred_fallthru
        _
      %p585 = scmp.lt.s32.totalorder %s18, 1
      %s586 = scalar_select %p585, %s18, 1
      %p587 = scmp.lt.s32.totalorder %s19, 0
      %s588 = scalar_select %p587, %s19, 0
      %s589 = sadd.s32 %s588, %s586
      %s590 = scalar_lea.vmem %s2, %s589
      // Predicated region
      $region37: #{cobi_rgb_loss.11} parent=27 // pred_check
        %p591 = pneg %p110
      $region38: #{cobi_rgb_loss.11} parent=27 // pred_check_branch
        %593 = sbr.rel (%p591) target = $region40
      $region39: #{cobi_rgb_loss.11} parent=27 // pred_region
        _
      $region40: #{cobi_rgb_loss.11} parent=27 // pred_fallthru
        _
    $region28: #{cobi_rgb_loss.11} parent=5 // pred_fallthru
      _
    %p594 = scmp.le.s32.totalorder 2, %s8
    // Predicated region
    $region41: #{cobi_rgb_loss.11} parent=5 // pred_check
      %p595 = pneg %p594
    $region42: #{cobi_rgb_loss.11} parent=5 // pred_check_branch
      %597 = sbr.rel (%p595) target = $region44
    $region43: #{cobi_rgb_loss.11} parent=5 // pred_region
      %s598 = ssub.s32 %s8, 2
      // Predicated region
      $region45: #{cobi_rgb_loss.11} parent=43 // pred_check
        %p599 = pneg %p116
      $region46: #{cobi_rgb_loss.11} parent=43 // pred_check_branch
        %601 = sbr.rel (%p599) target = $region48
      $region47: #{cobi_rgb_loss.11} parent=43 // pred_region
        %p602 = scmp.lt.s32.totalorder %s21, 1
        %s603 = scalar_select %p602, %s21, 1
        %p604 = scmp.lt.s32.totalorder %s22, 0
        %s605 = scalar_select %p604, %s22, 0
        %s606 = sadd.s32 %s605, %s603
        %s607 = scalar_lea.vmem %s2, %s606
      $region48: #{cobi_rgb_loss.11} parent=43 // pred_fallthru
        _
    $region44: #{cobi_rgb_loss.11} parent=5 // pred_fallthru
      _
  $region6: #{cobi_rgb_loss.11} parent=0 // loop_footer
    %s12 = sadd.s32 1, %s8
  $region7: #{cobi_rgb_loss.11} parent=0 // loop_footer_branch
    %7 = sbr.rel target = $region3
  $region8: #{cobi_rgb_loss.11} parent=0 // loop_exit
    _

// kernel: cobi_rgb_loss.10
$region0: #{cobi_rgb_loss.10}
  #allocation0 [shape = 'u32[]', space=smem, size = 0x4, offset = 0x4, fixed_abs, tag = 'smem constant byte address 0x4 - core index']
  #allocation1 [shape = 'u32[144,128]{1,0:T(1,128)}', space=vmem, size = 0x12000, scoped, tag = 'internal scratch']
  #allocation2 [shape = 'f32[128,256]{1,0:T(8,128)}', space=vmem, size = 0x20000, scoped, tag = 'scratch operand']
  %s0 = inlined_call_operand.vmem [shape: bf16[2,256,8], index: 0, kind: input, shape index: {}]
  %s1 = inlined_call_operand.vmem [shape: bf16[2,8,256], index: 1, kind: input, shape index: {}]
  %s2 = inlined_call_operand.vmem [shape: f32[2,2,1,1], index: 2, kind: output, shape index: {}]
  %s3 = sld [smem:[#allocation0]]
  $region49: #{cobi_rgb_loss.10} parent=0
    _
  %s5 = ssub.s32 1, %s3
  %s6 = scalar_select 0, %s5, %s3
  loop: start=0, step=1, limit=6
  $region2: #{cobi_rgb_loss.10} parent=0 // loop_pre_header
    _
  $region3: #{cobi_rgb_loss.10} parent=0 // loop_header
    %s8 = sphi 0, %s12
    %p9 = scmp.ge.s32.totalorder %s8, 6
    %s15 = sphi 0, %s34
    %s16 = sphi 0, %s30
    %s17 = sphi 0, %s26
    %s18 = sphi 0, %s15
    %s19 = sphi 0, %s16
    %s20 = sphi 0, %s17
    %s21 = sphi 0, %s18
    %s22 = sphi 0, %s19
    %s23 = sphi 0, %s20
    %s41 = sphi 0, %s43
    %s44 = sphi 0, %s41
    %s45 = sphi 0, %s44
    %s61 = sphi 0, %s45
    %s69 = sphi 0, %s71
    %s72 = sphi 0, %s69
    %s73 = sphi 0, %s72
    %s89 = sphi 0, %s73
    %s97 = sphi 0, %s99
    %s100 = sphi 0, %s97
    %s101 = sphi 0, %s100
    %s117 = sphi 0, %s101
  $region4: #{cobi_rgb_loss.10} parent=0 // loop_header_branch
    %11 = sbr.rel (%p9) target = $region8
  $region5: #{cobi_rgb_loss.10} parent=0 // loop_body
    %s13 = ssub.s32 %s8, 1
    %s14 = ssub.s32 %s8, 2
    %s24 = sadd.s32 1, %s17
    %p25 = scmp.ge.s32.totalorder %s24, 1
    %s26 = scalar_select %p25, 0, %s24
    %s27 = sadd.s32 1, %s16
    %s28 = scalar_select %p25, %s27, %s16
    %p29 = scmp.ge.s32.totalorder %s28, 2
    %s30 = scalar_select %p29, 0, %s28
    %s31 = sadd.s32 1, %s15
    %s32 = scalar_select %p29, %s31, %s15
    %p33 = scmp.ge.s32.totalorder %s32, 2
    %s34 = scalar_select %p33, 0, %s32
    %s35 = ssub.s32 %s15, %s34
    %s36 = ssub.s32 %s16, %s30
    %s37 = sor.u32 %s35, %s36
    %s38 = ssub.s32 %s17, %s26
    %s39 = sor.u32 %s37, %s38
    %p40 = scmp.eq.s32.totalorder %s39, 0
    %s42 = sadd.s32 %s41, 1
    %s43 = scalar_select %p40, %s41, %s42
    %p46 = pneg %p40
    %p47 = scmp.eq.s32.totalorder %s8, 3
    %p48 = por %p46, %p47
    %p49 = scmp.ne.s32.totalorder %s41, %s44
    %p50 = scmp.eq.s32.totalorder %s8, 0
    %p51 = por %p49, %p50
    %p52 = scmp.ne.s32.totalorder %s41, %s44
    %p53 = scmp.eq.s32.totalorder %s13, 3
    %p54 = por %p52, %p53
    %p55 = scmp.ne.s32.totalorder %s44, %s45
    %p56 = scmp.eq.s32.totalorder %s13, 0
    %p57 = por %p55, %p56
    %p58 = scmp.ne.s32.totalorder %s44, %s45
    %p59 = scmp.eq.s32.totalorder %s14, 3
    %p60 = por %p58, %p59
    %p62 = scmp.ne.s32.totalorder %s45, %s61
    %p63 = scmp.eq.s32.totalorder %s14, 0
    %p64 = por %p62, %p63
    %s65 = ssub.s32 %s15, %s34
    %s66 = ssub.s32 %s17, %s26
    %s67 = sor.u32 %s65, %s66
    %p68 = scmp.eq.s32.totalorder %s67, 0
    %s70 = sadd.s32 %s69, 1
    %s71 = scalar_select %p68, %s69, %s70
    %p74 = pneg %p68
    %p75 = scmp.eq.s32.totalorder %s8, 3
    %p76 = por %p74, %p75
    %p77 = scmp.ne.s32.totalorder %s69, %s72
    %p78 = scmp.eq.s32.totalorder %s8, 0
    %p79 = por %p77, %p78
    %p80 = scmp.ne.s32.totalorder %s69, %s72
    %p81 = scmp.eq.s32.totalorder %s13, 3
    %p82 = por %p80, %p81
    %p83 = scmp.ne.s32.totalorder %s72, %s73
    %p84 = scmp.eq.s32.totalorder %s13, 0
    %p85 = por %p83, %p84
    %p86 = scmp.ne.s32.totalorder %s72, %s73
    %p87 = scmp.eq.s32.totalorder %s14, 3
    %p88 = por %p86, %p87
    %p90 = scmp.ne.s32.totalorder %s73, %s89
    %p91 = scmp.eq.s32.totalorder %s14, 0
    %p92 = por %p90, %p91
    %s93 = ssub.s32 %s15, %s34
    %s94 = ssub.s32 %s16, %s30
    %s95 = sor.u32 %s93, %s94
    %p96 = scmp.eq.s32.totalorder %s95, 0
    %s98 = sadd.s32 %s97, 1
    %s99 = scalar_select %p96, %s97, %s98
    %p102 = pneg %p96
    %p103 = scmp.eq.s32.totalorder %s8, 3
    %p104 = por %p102, %p103
    %p105 = scmp.ne.s32.totalorder %s97, %s100
    %p106 = scmp.eq.s32.totalorder %s8, 0
    %p107 = por %p105, %p106
    %p108 = scmp.ne.s32.totalorder %s97, %s100
    %p109 = scmp.eq.s32.totalorder %s13, 3
    %p110 = por %p108, %p109
    %p111 = scmp.ne.s32.totalorder %s100, %s101
    %p112 = scmp.eq.s32.totalorder %s13, 0
    %p113 = por %p111, %p112
    %p114 = scmp.ne.s32.totalorder %s100, %s101
    %p115 = scmp.eq.s32.totalorder %s14, 3
    %p116 = por %p114, %p115
    %p118 = scmp.ne.s32.totalorder %s101, %s117
    %p119 = scmp.eq.s32.totalorder %s14, 0
    %p120 = por %p118, %p119
    %p121 = scmp.le.s32.totalorder 1, %s8
    %p122 = scmp.lt.s32.totalorder %s8, 5
    %p123 = pnand %p121, %p122
    %p124 = pneg %p123
    // Predicated region
    $region9: #{cobi_rgb_loss.10} parent=5 // pred_check
      _
    $region10: #{cobi_rgb_loss.10} parent=5 // pred_check_branch
      %126 = sbr.rel (%p123) target = $region12
    $region11: #{cobi_rgb_loss.10} parent=5 // pred_region
      %s127 = ssub.s32 %s8, 1
    $region12: #{cobi_rgb_loss.10} parent=5 // pred_fallthru
      _
    %p128 = scmp.lt.s32.totalorder %s8, 4
    // Predicated region
    $region13: #{cobi_rgb_loss.10} parent=5 // pred_check
      %p129 = pneg %p128
    $region14: #{cobi_rgb_loss.10} parent=5 // pred_check_branch
      %131 = sbr.rel (%p129) target = $region16
    $region15: #{cobi_rgb_loss.10} parent=5 // pred_region
      // Predicated region
      $region17: #{cobi_rgb_loss.10} parent=15 // pred_check
        %p132 = pneg %p51
      $region18: #{cobi_rgb_loss.10} parent=15 // pred_check_branch
        %134 = sbr.rel (%p132) target = $region20
      $region19: #{cobi_rgb_loss.10} parent=15 // pred_region
        %s135 = smul.u32 16, %s16
        %p136 = scmp.lt.s32.totalorder %s15, 1
        %s137 = scalar_select %p136, %s15, 1
        %p138 = scmp.lt.s32.totalorder %s135, 31
        %s139 = scalar_select %p138, %s135, 31
        %p140 = scmp.lt.s32.totalorder %s17, 0
        %s141 = scalar_select %p140, %s17, 0
        %s142 = sadd.s32 %s141, %s139
        %s143 = smul.addr %s137, 32
        %s144 = sadd.s32 %s142, %s143
        %s145 = smul.addr %s144, 4
        %s146 = scalar_lea.vmem %s0, %s145
        %s147 = smul.u32 16, %s16
      $region20: #{cobi_rgb_loss.10} parent=15 // pred_fallthru
        _
      // Predicated region
      $region21: #{cobi_rgb_loss.10} parent=15 // pred_check
        %p148 = pneg %p79
      $region22: #{cobi_rgb_loss.10} parent=15 // pred_check_branch
        %150 = sbr.rel (%p148) target = $region24
      $region23: #{cobi_rgb_loss.10} parent=15 // pred_region
        %p151 = scmp.lt.s32.totalorder %s15, 1
        %s152 = scalar_select %p151, %s15, 1
        %p153 = scmp.lt.s32.totalorder %s17, 0
        %s154 = scalar_select %p153, %s17, 0
        %s155 = smul.addr %s154, 2
        %s156 = smul.addr %s152, 2
        %s157 = sadd.s32 %s155, %s156
        %s158 = smul.addr %s157, 4
        %s159 = scalar_lea.vmem %s1, %s158
      $region24: #{cobi_rgb_loss.10} parent=15 // pred_fallthru
        _
    $region16: #{cobi_rgb_loss.10} parent=5 // pred_fallthru
      _
    %p160 = scmp.le.s32.totalorder 1, %s8
    %p161 = scmp.lt.s32.totalorder %s8, 5
    %p162 = pnand %p160, %p161
    %p163 = pneg %p162
    // Predicated region
    $region25: #{cobi_rgb_loss.10} parent=5 // pred_check
      _
    $region26: #{cobi_rgb_loss.10} parent=5 // pred_check_branch
      %165 = sbr.rel (%p162) target = $region28
    $region27: #{cobi_rgb_loss.10} parent=5 // pred_region
      %s166 = ssub.s32 %s8, 1
      %s167 = smul.u32 16, %s19
      %p168 = scmp.lt.s32.totalorder %s18, 1
      %s169 = scalar_select %p168, %s18, 1
      %p170 = scmp.lt.s32.totalorder %s167, 31
      %s171 = scalar_select %p170, %s167, 31
      %p172 = scmp.lt.s32.totalorder %s20, 0
      %s173 = scalar_select %p172, %s20, 0
      %s174 = sadd.s32 %s173, %s171
      %s175 = smul.addr %s169, 32
      %s176 = sadd.s32 %s174, %s175
      %s177 = smul.addr %s176, 4
      %s178 = scalar_lea.vmem %s0, %s177
      %p179 = pneg %p57
      %p180 = pneg %p54
      %p181 = scmp.lt.s32.totalorder %s18, 1
      %s182 = scalar_select %p181, %s18, 1
      %p183 = scmp.lt.s32.totalorder %s20, 0
      %s184 = scalar_select %p183, %s20, 0
      %s185 = smul.addr %s184, 2
      %s186 = smul.addr %s182, 2
      %s187 = sadd.s32 %s185, %s186
      %s188 = smul.addr %s187, 4
      %s189 = scalar_lea.vmem %s1, %s188
      %p190 = pneg %p85
      %p191 = pneg %p82
      %p192 = pneg %p113
      %p193 = pneg %p110
      %p194 = scmp.lt.s32.totalorder %s18, 1
      %s195 = scalar_select %p194, %s18, 1
      %p196 = scmp.lt.s32.totalorder %s19, 1
      %s197 = scalar_select %p196, %s19, 1
      %s198 = smul.addr %s195, 2
      %s199 = sadd.s32 %s197, %s198
      %s200 = scalar_lea.vmem %s2, %s199
      %s201 = smul.u32 16, %s19
      %p202 = scmp.lt.s32.totalorder %s18, 1
      %s203 = scalar_select %p202, %s18, 1
      %p204 = scmp.lt.s32.totalorder %s201, 31
      %s205 = scalar_select %p204, %s201, 31
      %p206 = scmp.lt.s32.totalorder %s20, 0
      %s207 = scalar_select %p206, %s20, 0
      %s208 = sadd.s32 %s207, %s205
      %s209 = smul.addr %s203, 32
      %s210 = sadd.s32 %s208, %s209
      %s211 = smul.addr %s210, 4
      %s212 = scalar_lea.vmem %s0, %s211
      %s213 = smul.u32 16, %s19
      %p214 = scmp.lt.s32.totalorder %s18, 1
      %s215 = scalar_select %p214, %s18, 1
      %p216 = scmp.lt.s32.totalorder %s20, 0
      %s217 = scalar_select %p216, %s20, 0
      %s218 = smul.addr %s217, 2
      %s219 = smul.addr %s215, 2
      %s220 = sadd.s32 %s218, %s219
      %s221 = smul.addr %s220, 4
      %s222 = scalar_lea.vmem %s1, %s221
      %p223 = scmp.lt.s32.totalorder %s18, 1
      %s224 = scalar_select %p223, %s18, 1
      %p225 = scmp.lt.s32.totalorder %s19, 1
      %s226 = scalar_select %p225, %s19, 1
      %s227 = smul.addr %s224, 2
      %s228 = sadd.s32 %s226, %s227
      %s229 = scalar_lea.vmem %s2, %s228
      %p231 = scmp.eq.s32.totalorder %s20, 0
      // Predicated region
      $region29: #{cobi_rgb_loss.10} parent=27 // pred_check
        %p232 = pneg %p231
      $region30: #{cobi_rgb_loss.10} parent=27 // pred_check_branch
        %234 = sbr.rel (%p232) target = $region32
      $region31: #{cobi_rgb_loss.10} parent=27 // pred_region
        %235 = vst [vmem:[#allocation2] sm:$0xff] 0.0
        %236 = vst [vmem:[#allocation2 + $0x8] sm:$0xff] 0.0
        %237 = vst [vmem:[#allocation2 + $0x10] sm:$0xff] 0.0
        %238 = vst [vmem:[#allocation2 + $0x18] sm:$0xff] 0.0
        %239 = vst [vmem:[#allocation2 + $0x20] sm:$0xff] 0.0
        %240 = vst [vmem:[#allocation2 + $0x28] sm:$0xff] 0.0
        %241 = vst [vmem:[#allocation2 + $0x30] sm:$0xff] 0.0
        %242 = vst [vmem:[#allocation2 + $0x38] sm:$0xff] 0.0
        %243 = vst [vmem:[#allocation2 + $0x40] sm:$0xff] 0.0
        %244 = vst [vmem:[#allocation2 + $0x48] sm:$0xff] 0.0
        %245 = vst [vmem:[#allocation2 + $0x50] sm:$0xff] 0.0
        %246 = vst [vmem:[#allocation2 + $0x58] sm:$0xff] 0.0
        %247 = vst [vmem:[#allocation2 + $0x60] sm:$0xff] 0.0
        %248 = vst [vmem:[#allocation2 + $0x68] sm:$0xff] 0.0
        %249 = vst [vmem:[#allocation2 + $0x70] sm:$0xff] 0.0
        %250 = vst [vmem:[#allocation2 + $0x78] sm:$0xff] 0.0
        %251 = vst [vmem:[#allocation2 + $0x80] sm:$0xff] 0.0
        %252 = vst [vmem:[#allocation2 + $0x88] sm:$0xff] 0.0
        %253 = vst [vmem:[#allocation2 + $0x90] sm:$0xff] 0.0
        %254 = vst [vmem:[#allocation2 + $0x98] sm:$0xff] 0.0
        %255 = vst [vmem:[#allocation2 + $0xa0] sm:$0xff] 0.0
        %256 = vst [vmem:[#allocation2 + $0xa8] sm:$0xff] 0.0
        %257 = vst [vmem:[#allocation2 + $0xb0] sm:$0xff] 0.0
        %258 = vst [vmem:[#allocation2 + $0xb8] sm:$0xff] 0.0
        %259 = vst [vmem:[#allocation2 + $0xc0] sm:$0xff] 0.0
        %260 = vst [vmem:[#allocation2 + $0xc8] sm:$0xff] 0.0
        %261 = vst [vmem:[#allocation2 + $0xd0] sm:$0xff] 0.0
        %262 = vst [vmem:[#allocation2 + $0xd8] sm:$0xff] 0.0
        %263 = vst [vmem:[#allocation2 + $0xe0] sm:$0xff] 0.0
        %264 = vst [vmem:[#allocation2 + $0xe8] sm:$0xff] 0.0
        %265 = vst [vmem:[#allocation2 + $0xf0] sm:$0xff] 0.0
        %266 = vst [vmem:[#allocation2 + $0xf8] sm:$0xff] 0.0
      $region32: #{cobi_rgb_loss.10} parent=27 // pred_fallthru
        _
      %v267 = vld [vmem:[#allocation2] sm:$0xff]
      %v268 = vld [vmem:[#allocation2 + $0x8] sm:$0xff]
      %v269 = vld [vmem:[#allocation2 + $0x10] sm:$0xff]
      %v270 = vld [vmem:[#allocation2 + $0x18] sm:$0xff]
      %v271 = vld [vmem:[#allocation2 + $0x20] sm:$0xff]
      %v272 = vld [vmem:[#allocation2 + $0x28] sm:$0xff]
      %v273 = vld [vmem:[#allocation2 + $0x30] sm:$0xff]
      %v274 = vld [vmem:[#allocation2 + $0x38] sm:$0xff]
      %v275 = vld [vmem:[#allocation2 + $0x40] sm:$0xff]
      %v276 = vld [vmem:[#allocation2 + $0x48] sm:$0xff]
      %v277 = vld [vmem:[#allocation2 + $0x50] sm:$0xff]
      %v278 = vld [vmem:[#allocation2 + $0x58] sm:$0xff]
      %v279 = vld [vmem:[#allocation2 + $0x60] sm:$0xff]
      %v280 = vld [vmem:[#allocation2 + $0x68] sm:$0xff]
      %v281 = vld [vmem:[#allocation2 + $0x70] sm:$0xff]
      %v282 = vld [vmem:[#allocation2 + $0x78] sm:$0xff]
      %v283 = vld [vmem:[#allocation2 + $0x80] sm:$0xff]
      %v284 = vld [vmem:[#allocation2 + $0x88] sm:$0xff]
      %v285 = vld [vmem:[#allocation2 + $0x90] sm:$0xff]
      %v286 = vld [vmem:[#allocation2 + $0x98] sm:$0xff]
      %v287 = vld [vmem:[#allocation2 + $0xa0] sm:$0xff]
      %v288 = vld [vmem:[#allocation2 + $0xa8] sm:$0xff]
      %v289 = vld [vmem:[#allocation2 + $0xb0] sm:$0xff]
      %v290 = vld [vmem:[#allocation2 + $0xb8] sm:$0xff]
      %v291 = vld [vmem:[#allocation2 + $0xc0] sm:$0xff]
      %v292 = vld [vmem:[#allocation2 + $0xc8] sm:$0xff]
      %v293 = vld [vmem:[#allocation2 + $0xd0] sm:$0xff]
      %v294 = vld [vmem:[#allocation2 + $0xd8] sm:$0xff]
      %v295 = vld [vmem:[#allocation2 + $0xe0] sm:$0xff]
      %v296 = vld [vmem:[#allocation2 + $0xe8] sm:$0xff]
      %v297 = vld [vmem:[#allocation2 + $0xf0] sm:$0xff]
      %v298 = vld [vmem:[#allocation2 + $0xf8] sm:$0xff]
      %v299 = vld [vmem:[%s212] sm:$0xf]
      %v300 = vld [vmem:[%s212 + $0x4] sm:$0xf]
      %v301 = vld [vmem:[%s212 + $0x8] sm:$0xf]
      %v302 = vld [vmem:[%s212 + $0xc] sm:$0xf]
      %v303 = vld [vmem:[%s212 + $0x10] sm:$0xf]
      %v304 = vld [vmem:[%s212 + $0x14] sm:$0xf]
      %v305 = vld [vmem:[%s212 + $0x18] sm:$0xf]
      %v306 = vld [vmem:[%s212 + $0x1c] sm:$0xf]
      %v307 = vld [vmem:[%s212 + $0x20] sm:$0xf]
      %v308 = vld [vmem:[%s212 + $0x24] sm:$0xf]
      %v309 = vld [vmem:[%s212 + $0x28] sm:$0xf]
      %v310 = vld [vmem:[%s212 + $0x2c] sm:$0xf]
      %v311 = vld [vmem:[%s212 + $0x30] sm:$0xf]
      %v312 = vld [vmem:[%s212 + $0x34] sm:$0xf]
      %v313 = vld [vmem:[%s212 + $0x38] sm:$0xf]
      %v314 = vld [vmem:[%s212 + $0x3c] sm:$0xf]
      %v315 = vld [vmem:[%s222] sm:$0xff]
      %v332 = vunpack.c.l.b16 %v299
      %v333 = vunpack.c.l.b16 %v300
      %v334 = vunpack.c.l.b16 %v301
      %v335 = vunpack.c.l.b16 %v302
      %v336 = vunpack.c.l.b16 %v303
      %v337 = vunpack.c.l.b16 %v304
      %v338 = vunpack.c.l.b16 %v305
      %v339 = vunpack.c.l.b16 %v306
      %v340 = vunpack.c.l.b16 %v307
      %v341 = vunpack.c.l.b16 %v308
      %v342 = vunpack.c.l.b16 %v309
      %v343 = vunpack.c.l.b16 %v310
      %v344 = vunpack.c.l.b16 %v311
      %v345 = vunpack.c.l.b16 %v312
      %v346 = vunpack.c.l.b16 %v313
      %v347 = vunpack.c.l.b16 %v314
      %v348 = vpack.c.b16 %v333, %v332
      %v349 = vpack.c.b16 %v335, %v334
      %v350 = vpack.c.b16 %v337, %v336
      %v351 = vpack.c.b16 %v339, %v338
      %v352 = vpack.c.b16 %v341, %v340
      %v353 = vpack.c.b16 %v343, %v342
      %v354 = vpack.c.b16 %v345, %v344
      %v355 = vpack.c.b16 %v347, %v346
      %v357 = vunpack.c.l.b16 %v315
      %v358 = vunpack.c.h.b16 %v315
      %v359 = vpack.c.b16 %v357, %v357
      %v360 = vpack.c.b16 %v358, %v358
      %vm361 = vcmask 64512
      %v363 = vsel %vm361, %v348, 0
      %v366 = vsel %vm361, %v349, 0
      %v369 = vsel %vm361, %v350, 0
      %v372 = vsel %vm361, %v351, 0
      %v375 = vsel %vm361, %v352, 0
      %v378 = vsel %vm361, %v353, 0
      %v381 = vsel %vm361, %v354, 0
      %v384 = vsel %vm361, %v355, 0
      %vm386 = vcmask 1043456
      %v388 = vsel %vm386, %v359, 0
      %v391 = vsel %vm386, %v360, 0
      %393 = vmatprep.subr.bf16.mxu0 %v391
      %394 = vmatpush1.bf16.msra.mxu0 %v388
      %395 = vmatprep.subr.bf16.mxu0 0
      %396 = vmatpush1.bf16.msra.mxu0 0
      %397 = vmatprep.subr.bf16.mxu0 0
      %398 = vmatpush1.bf16.msra.mxu0 0
      %399 = vmatprep.subr.bf16.mxu0 0
      %400 = vmatpush1.bf16.msra.mxu0 0
      %401 = vmatprep.subr.bf16.mxu0 0
      %402 = vmatpush1.bf16.msra.mxu0 0
      %403 = vmatprep.subr.bf16.mxu0 0
      %404 = vmatpush1.bf16.msra.mxu0 0
      %405 = vmatprep.subr.bf16.mxu0 0
      %406 = vmatpush1.bf16.msra.mxu0 0
      %407 = vmatprep.subr.bf16.mxu0 0
      %408 = vmatpush1.bf16.msra.mxu0 0
      %409 = vmatprep.subr.bf16.mxu0 0
      %410 = vmatpush1.bf16.msra.mxu0 0
      %411 = vmatprep.subr.bf16.mxu0 0
      %412 = vmatpush1.bf16.msra.mxu0 0
      %413 = vmatprep.subr.bf16.mxu0 0
      %414 = vmatpush1.bf16.msra.mxu0 0
      %415 = vmatprep.subr.bf16.mxu0 0
      %416 = vmatpush1.bf16.msra.mxu0 0
      %417 = vmatprep.subr.bf16.mxu0 0
      %418 = vmatpush1.bf16.msra.mxu0 0
      %419 = vmatprep.subr.bf16.mxu0 0
      %420 = vmatpush1.bf16.msra.mxu0 0
      %421 = vmatprep.subr.bf16.mxu0 0
      %422 = vmatpush1.bf16.msra.mxu0 0
      %423 = vmatprep.subr.bf16.mxu0 0
      %424 = vmatpush1.bf16.msra.mxu0 0
      %425 = vmatprep.mubr.bf16.mxu0 0
      %426 = vmatmul.mubr.bf16.gmra.mrb[0].mxu0 %v363
      %v427 = vpop.f32.mrb[0].mxu0
      %v428 = vadd.f32 0.0, %v427
      %v429 = vpop.f32.mrb[0].mxu0
      %v430 = vadd.f32 0.0, %v429
      %v431 = vpop.f32.mrb[0].mxu0
      %v432 = vadd.f32 0.0, %v431
      %v433 = vpop.f32.mrb[0].mxu0
      %v434 = vadd.f32 0.0, %v433
      %435 = vmatprep.mubr.bf16.mxu0 0
      %436 = vmatmul.mubr.bf16.gmra.mrb[0].mxu0 %v366
      %v437 = vpop.f32.mrb[0].mxu0
      %v438 = vadd.f32 0.0, %v437
      %v439 = vpop.f32.mrb[0].mxu0
      %v440 = vadd.f32 0.0, %v439
      %v441 = vpop.f32.mrb[0].mxu0
      %v442 = vadd.f32 0.0, %v441
      %v443 = vpop.f32.mrb[0].mxu0
      %v444 = vadd.f32 0.0, %v443
      %445 = vmatprep.mubr.bf16.mxu0 0
      %446 = vmatmul.mubr.bf16.gmra.mrb[0].mxu0 %v369
      %v447 = vpop.f32.mrb[0].mxu0
      %v448 = vadd.f32 0.0, %v447
      %v449 = vpop.f32.mrb[0].mxu0
      %v450 = vadd.f32 0.0, %v449
      %v451 = vpop.f32.mrb[0].mxu0
      %v452 = vadd.f32 0.0, %v451
      %v453 = vpop.f32.mrb[0].mxu0
      %v454 = vadd.f32 0.0, %v453
      %455 = vmatprep.mubr.bf16.mxu0 0
      %456 = vmatmul.mubr.bf16.gmra.mrb[0].mxu0 %v372
      %v457 = vpop.f32.mrb[0].mxu0
      %v458 = vadd.f32 0.0, %v457
      %v459 = vpop.f32.mrb[0].mxu0
      %v460 = vadd.f32 0.0, %v459
      %v461 = vpop.f32.mrb[0].mxu0
      %v462 = vadd.f32 0.0, %v461
      %v463 = vpop.f32.mrb[0].mxu0
      %v464 = vadd.f32 0.0, %v463
      %465 = vmatprep.mubr.bf16.mxu0 0
      %466 = vmatmul.mubr.bf16.gmra.mrb[0].mxu0 %v375
      %v467 = vpop.f32.mrb[0].mxu0
      %v468 = vadd.f32 0.0, %v467
      %v469 = vpop.f32.mrb[0].mxu0
      %v470 = vadd.f32 0.0, %v469
      %v471 = vpop.f32.mrb[0].mxu0
      %v472 = vadd.f32 0.0, %v471
      %v473 = vpop.f32.mrb[0].mxu0
      %v474 = vadd.f32 0.0, %v473
      %475 = vmatprep.mubr.bf16.mxu0 0
      %476 = vmatmul.mubr.bf16.gmra.mrb[0].mxu0 %v378
      %v477 = vpop.f32.mrb[0].mxu0
      %v478 = vadd.f32 0.0, %v477
      %v479 = vpop.f32.mrb[0].mxu0
      %v480 = vadd.f32 0.0, %v479
      %v481 = vpop.f32.mrb[0].mxu0
      %v482 = vadd.f32 0.0, %v481
      %v483 = vpop.f32.mrb[0].mxu0
      %v484 = vadd.f32 0.0, %v483
      %485 = vmatprep.mubr.bf16.mxu0 0
      %486 = vmatmul.mubr.bf16.gmra.mrb[0].mxu0 %v381
      %v487 = vpop.f32.mrb[0].mxu0
      %v488 = vadd.f32 0.0, %v487
      %v489 = vpop.f32.mrb[0].mxu0
      %v490 = vadd.f32 0.0, %v489
      %v491 = vpop.f32.mrb[0].mxu0
      %v492 = vadd.f32 0.0, %v491
      %v493 = vpop.f32.mrb[0].mxu0
      %v494 = vadd.f32 0.0, %v493
      %495 = vmatprep.mubr.bf16.mxu0 0
      %496 = vmatmul.mubr.bf16.gmra.mrb[0].mxu0 %v384
      %v497 = vpop.f32.mrb[0].mxu0
      %v498 = vadd.f32 0.0, %v497
      %v499 = vpop.f32.mrb[0].mxu0
      %v500 = vadd.f32 0.0, %v499
      %v501 = vpop.f32.mrb[0].mxu0
      %v502 = vadd.f32 0.0, %v501
      %v503 = vpop.f32.mrb[0].mxu0
      %v504 = vadd.f32 0.0, %v503
      %505 = vdwg.mxu0
      %v506 = vadd.f32 %v267, %v428
      %v507 = vadd.f32 %v268, %v430
      %v508 = vadd.f32 %v269, %v432
      %v509 = vadd.f32 %v270, %v434
      %v510 = vadd.f32 %v271, %v438
      %v511 = vadd.f32 %v272, %v440
      %v512 = vadd.f32 %v273, %v442
      %v513 = vadd.f32 %v274, %v444
      %v514 = vadd.f32 %v275, %v448
      %v515 = vadd.f32 %v276, %v450
      %v516 = vadd.f32 %v277, %v452
      %v517 = vadd.f32 %v278, %v454
      %v518 = vadd.f32 %v279, %v458
      %v519 = vadd.f32 %v280, %v460
      %v520 = vadd.f32 %v281, %v462
      %v521 = vadd.f32 %v282, %v464
      %v522 = vadd.f32 %v283, %v468
      %v523 = vadd.f32 %v284, %v470
      %v524 = vadd.f32 %v285, %v472
      %v525 = vadd.f32 %v286, %v474
      %v526 = vadd.f32 %v287, %v478
      %v527 = vadd.f32 %v288, %v480
      %v528 = vadd.f32 %v289, %v482
      %v529 = vadd.f32 %v290, %v484
      %v530 = vadd.f32 %v291, %v488
      %v531 = vadd.f32 %v292, %v490
      %v532 = vadd.f32 %v293, %v492
      %v533 = vadd.f32 %v294, %v494
      %v534 = vadd.f32 %v295, %v498
      %v535 = vadd.f32 %v296, %v500
      %v536 = vadd.f32 %v297, %v502
      %v537 = vadd.f32 %v298, %v504
      %538 = vst [vmem:[#allocation2] sm:$0xff] %v506
      %539 = vst [vmem:[#allocation2 + $0x8] sm:$0xff] %v507
      %540 = vst [vmem:[#allocation2 + $0x10] sm:$0xff] %v508
      %541 = vst [vmem:[#allocation2 + $0x18] sm:$0xff] %v509
      %542 = vst [vmem:[#allocation2 + $0x20] sm:$0xff] %v510
      %543 = vst [vmem:[#allocation2 + $0x28] sm:$0xff] %v511
      %544 = vst [vmem:[#allocation2 + $0x30] sm:$0xff] %v512
      %545 = vst [vmem:[#allocation2 + $0x38] sm:$0xff] %v513
      %546 = vst [vmem:[#allocation2 + $0x40] sm:$0xff] %v514
      %547 = vst [vmem:[#allocation2 + $0x48] sm:$0xff] %v515
      %548 = vst [vmem:[#allocation2 + $0x50] sm:$0xff] %v516
      %549 = vst [vmem:[#allocation2 + $0x58] sm:$0xff] %v517
      %550 = vst [vmem:[#allocation2 + $0x60] sm:$0xff] %v518
      %551 = vst [vmem:[#allocation2 + $0x68] sm:$0xff] %v519
      %552 = vst [vmem:[#allocation2 + $0x70] sm:$0xff] %v520
      %553 = vst [vmem:[#allocation2 + $0x78] sm:$0xff] %v521
      %554 = vst [vmem:[#allocation2 + $0x80] sm:$0xff] %v522
      %555 = vst [vmem:[#allocation2 + $0x88] sm:$0xff] %v523
      %556 = vst [vmem:[#allocation2 + $0x90] sm:$0xff] %v524
      %557 = vst [vmem:[#allocation2 + $0x98] sm:$0xff] %v525
      %558 = vst [vmem:[#allocation2 + $0xa0] sm:$0xff] %v526
      %559 = vst [vmem:[#allocation2 + $0xa8] sm:$0xff] %v527
      %560 = vst [vmem:[#allocation2 + $0xb0] sm:$0xff] %v528
      %561 = vst [vmem:[#allocation2 + $0xb8] sm:$0xff] %v529
      %562 = vst [vmem:[#allocation2 + $0xc0] sm:$0xff] %v530
      %563 = vst [vmem:[#allocation2 + $0xc8] sm:$0xff] %v531
      %564 = vst [vmem:[#allocation2 + $0xd0] sm:$0xff] %v532
      %565 = vst [vmem:[#allocation2 + $0xd8] sm:$0xff] %v533
      %566 = vst [vmem:[#allocation2 + $0xe0] sm:$0xff] %v534
      %567 = vst [vmem:[#allocation2 + $0xe8] sm:$0xff] %v535
      %568 = vst [vmem:[#allocation2 + $0xf0] sm:$0xff] %v536
      %569 = vst [vmem:[#allocation2 + $0xf8] sm:$0xff] %v537
      // Predicated region
      $region33: #{cobi_rgb_loss.10} parent=27 // pred_check
        %p570 = pneg %p231
      $region34: #{cobi_rgb_loss.10} parent=27 // pred_check_branch
        %572 = sbr.rel (%p570) target = $region36
      $region35: #{cobi_rgb_loss.10} parent=27 // pred_region
        %v573 = vld [vmem:[#allocation2] sm:$0xff]
        %v574 = vld [vmem:[#allocation2 + $0x8] sm:$0xff]
        %v575 = vld [vmem:[#allocation2 + $0x10] sm:$0xff]
        %v576 = vld [vmem:[#allocation2 + $0x18] sm:$0xff]
        %v577 = vld [vmem:[#allocation2 + $0x20] sm:$0xff]
        %v578 = vld [vmem:[#allocation2 + $0x28] sm:$0xff]
        %v579 = vld [vmem:[#allocation2 + $0x30] sm:$0xff]
        %v580 = vld [vmem:[#allocation2 + $0x38] sm:$0xff]
        %v581 = vld [vmem:[#allocation2 + $0x40] sm:$0xff]
        %v582 = vld [vmem:[#allocation2 + $0x48] sm:$0xff]
        %v583 = vld [vmem:[#allocation2 + $0x50] sm:$0xff]
        %v584 = vld [vmem:[#allocation2 + $0x58] sm:$0xff]
        %v585 = vld [vmem:[#allocation2 + $0x60] sm:$0xff]
        %v586 = vld [vmem:[#allocation2 + $0x68] sm:$0xff]
        %v587 = vld [vmem:[#allocation2 + $0x70] sm:$0xff]
        %v588 = vld [vmem:[#allocation2 + $0x78] sm:$0xff]
        %v589 = vld [vmem:[#allocation2 + $0x80] sm:$0xff]
        %v590 = vld [vmem:[#allocation2 + $0x88] sm:$0xff]
        %v591 = vld [vmem:[#allocation2 + $0x90] sm:$0xff]
        %v592 = vld [vmem:[#allocation2 + $0x98] sm:$0xff]
        %v593 = vld [vmem:[#allocation2 + $0xa0] sm:$0xff]
        %v594 = vld [vmem:[#allocation2 + $0xa8] sm:$0xff]
        %v595 = vld [vmem:[#allocation2 + $0xb0] sm:$0xff]
        %v596 = vld [vmem:[#allocation2 + $0xb8] sm:$0xff]
        %v597 = vld [vmem:[#allocation2 + $0xc0] sm:$0xff]
        %v598 = vld [vmem:[#allocation2 + $0xc8] sm:$0xff]
        %v599 = vld [vmem:[#allocation2 + $0xd0] sm:$0xff]
        %v600 = vld [vmem:[#allocation2 + $0xd8] sm:$0xff]
        %v601 = vld [vmem:[#allocation2 + $0xe0] sm:$0xff]
        %v602 = vld [vmem:[#allocation2 + $0xe8] sm:$0xff]
        %v603 = vld [vmem:[#allocation2 + $0xf0] sm:$0xff]
        %v604 = vld [vmem:[#allocation2 + $0xf8] sm:$0xff]
        %v605 = vmax.f32 %v573, %v574
        %606 = vmax.xlane.f32.xlu0 %v605
        %v607 = vpop.xlane.xlu0 %606
        %v608 = vmax.f32 %v575, %v576
        %609 = vmax.xlane.f32.xlu0 %v608
        %v610 = vpop.xlane.xlu0 %609
        %v611 = vmax.f32 %v577, %v578
        %612 = vmax.xlane.f32.xlu0 %v611
        %v613 = vpop.xlane.xlu0 %612
        %v614 = vmax.f32 %v579, %v580
        %615 = vmax.xlane.f32.xlu0 %v614
        %v616 = vpop.xlane.xlu0 %615
        %v617 = vmax.f32 %v581, %v582
        %618 = vmax.xlane.f32.xlu0 %v617
        %v619 = vpop.xlane.xlu0 %618
        %v620 = vmax.f32 %v583, %v584
        %621 = vmax.xlane.f32.xlu0 %v620
        %v622 = vpop.xlane.xlu0 %621
        %v623 = vmax.f32 %v585, %v586
        %624 = vmax.xlane.f32.xlu0 %v623
        %v625 = vpop.xlane.xlu0 %624
        %v626 = vmax.f32 %v587, %v588
        %627 = vmax.xlane.f32.xlu0 %v626
        %v628 = vpop.xlane.xlu0 %627
        %v629 = vmax.f32 %v589, %v590
        %630 = vmax.xlane.f32.xlu0 %v629
        %v631 = vpop.xlane.xlu0 %630
        %v632 = vmax.f32 %v591, %v592
        %633 = vmax.xlane.f32.xlu0 %v632
        %v634 = vpop.xlane.xlu0 %633
        %v635 = vmax.f32 %v593, %v594
        %636 = vmax.xlane.f32.xlu0 %v635
        %v637 = vpop.xlane.xlu0 %636
        %v638 = vmax.f32 %v595, %v596
        %639 = vmax.xlane.f32.xlu0 %v638
        %v640 = vpop.xlane.xlu0 %639
        %v641 = vmax.f32 %v597, %v598
        %642 = vmax.xlane.f32.xlu0 %v641
        %v643 = vpop.xlane.xlu0 %642
        %v644 = vmax.f32 %v599, %v600
        %645 = vmax.xlane.f32.xlu0 %v644
        %v646 = vpop.xlane.xlu0 %645
        %v647 = vmax.f32 %v601, %v602
        %648 = vmax.xlane.f32.xlu0 %v647
        %v649 = vpop.xlane.xlu0 %648
        %v650 = vmax.f32 %v603, %v604
        %651 = vmax.xlane.f32.xlu0 %v650
        %v652 = vpop.xlane.xlu0 %651
        %v653 = vsub.f32 1.0, %v607
        %v654 = vsub.f32 1.0, %v610
        %v655 = vsub.f32 1.0, %v613
        %v656 = vsub.f32 1.0, %v616
        %v657 = vsub.f32 1.0, %v619
        %v658 = vsub.f32 1.0, %v622
        %v659 = vsub.f32 1.0, %v625
        %v660 = vsub.f32 1.0, %v628
        %v661 = vsub.f32 1.0, %v631
        %v662 = vsub.f32 1.0, %v634
        %v663 = vsub.f32 1.0, %v637
        %v664 = vsub.f32 1.0, %v640
        %v665 = vsub.f32 1.0, %v643
        %v666 = vsub.f32 1.0, %v646
        %v667 = vsub.f32 1.0, %v649
        %v668 = vsub.f32 1.0, %v652
        %v669 = vmax.f32 %v653, 0.0
        %v670 = vmax.f32 %v654, 0.0
        %v671 = vmax.f32 %v655, 0.0
        %v672 = vmax.f32 %v656, 0.0
        %v673 = vmax.f32 %v657, 0.0
        %v674 = vmax.f32 %v658, 0.0
        %v675 = vmax.f32 %v659, 0.0
        %v676 = vmax.f32 %v660, 0.0
        %v677 = vmax.f32 %v661, 0.0
        %v678 = vmax.f32 %v662, 0.0
        %v679 = vmax.f32 %v663, 0.0
        %v680 = vmax.f32 %v664, 0.0
        %v681 = vmax.f32 %v665, 0.0
        %v682 = vmax.f32 %v666, 0.0
        %v683 = vmax.f32 %v667, 0.0
        %v684 = vmax.f32 %v668, 0.0
        %v685 = vadd.f32 %v669, 1e-05
        %v686 = vadd.f32 %v670, 1e-05
        %v687 = vadd.f32 %v671, 1e-05
        %v688 = vadd.f32 %v672, 1e-05
        %v689 = vadd.f32 %v673, 1e-05
        %v690 = vadd.f32 %v674, 1e-05
        %v691 = vadd.f32 %v675, 1e-05
        %v692 = vadd.f32 %v676, 1e-05
        %v693 = vadd.f32 %v677, 1e-05
        %v694 = vadd.f32 %v678, 1e-05
        %v695 = vadd.f32 %v679, 1e-05
        %v696 = vadd.f32 %v680, 1e-05
        %v697 = vadd.f32 %v681, 1e-05
        %v698 = vadd.f32 %v682, 1e-05
        %v699 = vadd.f32 %v683, 1e-05
        %v700 = vadd.f32 %v684, 1e-05
        %v701 = vrcp.pop %v685
        %v702 = vmul.f32 2.0, %v701
        %v703 = vrcp.pop %v686
        %v704 = vmul.f32 2.0, %v703
        %v705 = vrcp.pop %v687
        %v706 = vmul.f32 2.0, %v705
        %v707 = vrcp.pop %v688
        %v708 = vmul.f32 2.0, %v707
        %v709 = vrcp.pop %v689
        %v710 = vmul.f32 2.0, %v709
        %v711 = vrcp.pop %v690
        %v712 = vmul.f32 2.0, %v711
        %v713 = vrcp.pop %v691
        %v714 = vmul.f32 2.0, %v713
        %v715 = vrcp.pop %v692
        %v716 = vmul.f32 2.0, %v715
        %v717 = vrcp.pop %v693
        %v718 = vmul.f32 2.0, %v717
        %v719 = vrcp.pop %v694
        %v720 = vmul.f32 2.0, %v719
        %v721 = vrcp.pop %v695
        %v722 = vmul.f32 2.0, %v721
        %v723 = vrcp.pop %v696
        %v724 = vmul.f32 2.0, %v723
        %v725 = vrcp.pop %v697
        %v726 = vmul.f32 2.0, %v725
        %v727 = vrcp.pop %v698
        %v728 = vmul.f32 2.0, %v727
        %v729 = vrcp.pop %v699
        %v730 = vmul.f32 2.0, %v729
        %v731 = vrcp.pop %v700
        %v732 = vmul.f32 2.0, %v731
        %v733 = vsub.f32 %v573, %v607
        %v734 = vsub.f32 %v574, %v607
        %v735 = vsub.f32 %v575, %v610
        %v736 = vsub.f32 %v576, %v610
        %v737 = vsub.f32 %v577, %v613
        %v738 = vsub.f32 %v578, %v613
        %v739 = vsub.f32 %v579, %v616
        %v740 = vsub.f32 %v580, %v616
        %v741 = vsub.f32 %v581, %v619
        %v742 = vsub.f32 %v582, %v619
        %v743 = vsub.f32 %v583, %v622
        %v744 = vsub.f32 %v584, %v622
        %v745 = vsub.f32 %v585, %v625
        %v746 = vsub.f32 %v586, %v625
        %v747 = vsub.f32 %v587, %v628
        %v748 = vsub.f32 %v588, %v628
        %v749 = vsub.f32 %v589, %v631
        %v750 = vsub.f32 %v590, %v631
        %v751 = vsub.f32 %v591, %v634
        %v752 = vsub.f32 %v592, %v634
        %v753 = vsub.f32 %v593, %v637
        %v754 = vsub.f32 %v594, %v637
        %v755 = vsub.f32 %v595, %v640
        %v756 = vsub.f32 %v596, %v640
        %v757 = vsub.f32 %v597, %v643
        %v758 = vsub.f32 %v598, %v643
        %v759 = vsub.f32 %v599, %v646
        %v760 = vsub.f32 %v600, %v646
        %v761 = vsub.f32 %v601, %v649
        %v762 = vsub.f32 %v602, %v649
        %v763 = vsub.f32 %v603, %v652
        %v764 = vsub.f32 %v604, %v652
        %v765 = vmul.f32 %v702, %v733
        %v766 = vmul.f32 %v702, %v734
        %v767 = vmul.f32 %v704, %v735
        %v768 = vmul.f32 %v704, %v736
        %v769 = vmul.f32 %v706, %v737
        %v770 = vmul.f32 %v706, %v738
        %v771 = vmul.f32 %v708, %v739
        %v772 = vmul.f32 %v708, %v740
        %v773 = vmul.f32 %v710, %v741
        %v774 = vmul.f32 %v710, %v742
        %v775 = vmul.f32 %v712, %v743
        %v776 = vmul.f32 %v712, %v744
        %v777 = vmul.f32 %v714, %v745
        %v778 = vmul.f32 %v714, %v746
        %v779 = vmul.f32 %v716, %v747
        %v780 = vmul.f32 %v716, %v748
        %v781 = vmul.f32 %v718, %v749
        %v782 = vmul.f32 %v718, %v750
        %v783 = vmul.f32 %v720, %v751
        %v784 = vmul.f32 %v720, %v752
        %v785 = vmul.f32 %v722, %v753
        %v786 = vmul.f32 %v722, %v754
        %v787 = vmul.f32 %v724, %v755
        %v788 = vmul.f32 %v724, %v756
        %v789 = vmul.f32 %v726, %v757
        %v790 = vmul.f32 %v726, %v758
        %v791 = vmul.f32 %v728, %v759
        %v792 = vmul.f32 %v728, %v760
        %v793 = vmul.f32 %v730, %v761
        %v794 = vmul.f32 %v730, %v762
        %v795 = vmul.f32 %v732, %v763
        %v796 = vmul.f32 %v732, %v764
        %v797 = vmul.f32 %v765, 1.442695
        %v798 = vpow.pop %v797
        %v799 = vmul.f32 %v766, 1.442695
        %v800 = vpow.pop %v799
        %v801 = vmul.f32 %v767, 1.442695
        %v802 = vpow.pop %v801
        %v803 = vmul.f32 %v768, 1.442695
        %v804 = vpow.pop %v803
        %v805 = vmul.f32 %v769, 1.442695
        %v806 = vpow.pop %v805
        %v807 = vmul.f32 %v770, 1.442695
        %v808 = vpow.pop %v807
        %v809 = vmul.f32 %v771, 1.442695
        %v810 = vpow.pop %v809
        %v811 = vmul.f32 %v772, 1.442695
        %v812 = vpow.pop %v811
        %v813 = vmul.f32 %v773, 1.442695
        %v814 = vpow.pop %v813
        %v815 = vmul.f32 %v774, 1.442695
        %v816 = vpow.pop %v815
        %v817 = vmul.f32 %v775, 1.442695
        %v818 = vpow.pop %v817
        %v819 = vmul.f32 %v776, 1.442695
        %v820 = vpow.pop %v819
        %v821 = vmul.f32 %v777, 1.442695
        %v822 = vpow.pop %v821
        %v823 = vmul.f32 %v778, 1.442695
        %v824 = vpow.pop %v823
        %v825 = vmul.f32 %v779, 1.442695
        %v826 = vpow.pop %v825
        %v827 = vmul.f32 %v780, 1.442695
        %v828 = vpow.pop %v827
        %v829 = vmul.f32 %v781, 1.442695
        %v830 = vpow.pop %v829
        %v831 = vmul.f32 %v782, 1.442695
        %v832 = vpow.pop %v831
        %v833 = vmul.f32 %v783, 1.442695
        %v834 = vpow.pop %v833
        %v835 = vmul.f32 %v784, 1.442695
        %v836 = vpow.pop %v835
        %v837 = vmul.f32 %v785, 1.442695
        %v838 = vpow.pop %v837
        %v839 = vmul.f32 %v786, 1.442695
        %v840 = vpow.pop %v839
        %v841 = vmul.f32 %v787, 1.442695
        %v842 = vpow.pop %v841
        %v843 = vmul.f32 %v788, 1.442695
        %v844 = vpow.pop %v843
        %v845 = vmul.f32 %v789, 1.442695
        %v846 = vpow.pop %v845
        %v847 = vmul.f32 %v790, 1.442695
        %v848 = vpow.pop %v847
        %v849 = vmul.f32 %v791, 1.442695
        %v850 = vpow.pop %v849
        %v851 = vmul.f32 %v792, 1.442695
        %v852 = vpow.pop %v851
        %v853 = vmul.f32 %v793, 1.442695
        %v854 = vpow.pop %v853
        %v855 = vmul.f32 %v794, 1.442695
        %v856 = vpow.pop %v855
        %v857 = vmul.f32 %v795, 1.442695
        %v858 = vpow.pop %v857
        %v859 = vmul.f32 %v796, 1.442695
        %v860 = vpow.pop %v859
        %v861 = vadd.f32 %v798, %v800
        %862 = vadd.xlane.f32.xlu0 %v861
        %v863 = vpop.xlane.xlu0 %862
        %v864 = vadd.f32 %v802, %v804
        %865 = vadd.xlane.f32.xlu0 %v864
        %v866 = vpop.xlane.xlu0 %865
        %v867 = vadd.f32 %v806, %v808
        %868 = vadd.xlane.f32.xlu0 %v867
        %v869 = vpop.xlane.xlu0 %868
        %v870 = vadd.f32 %v810, %v812
        %871 = vadd.xlane.f32.xlu0 %v870
        %v872 = vpop.xlane.xlu0 %871
        %v873 = vadd.f32 %v814, %v816
        %874 = vadd.xlane.f32.xlu0 %v873
        %v875 = vpop.xlane.xlu0 %874
        %v876 = vadd.f32 %v818, %v820
        %877 = vadd.xlane.f32.xlu0 %v876
        %v878 = vpop.xlane.xlu0 %877
        %v879 = vadd.f32 %v822, %v824
        %880 = vadd.xlane.f32.xlu0 %v879
        %v881 = vpop.xlane.xlu0 %880
        %v882 = vadd.f32 %v826, %v828
        %883 = vadd.xlane.f32.xlu0 %v882
        %v884 = vpop.xlane.xlu0 %883
        %v885 = vadd.f32 %v830, %v832
        %886 = vadd.xlane.f32.xlu0 %v885
        %v887 = vpop.xlane.xlu0 %886
        %v888 = vadd.f32 %v834, %v836
        %889 = vadd.xlane.f32.xlu0 %v888
        %v890 = vpop.xlane.xlu0 %889
        %v891 = vadd.f32 %v838, %v840
        %892 = vadd.xlane.f32.xlu0 %v891
        %v893 = vpop.xlane.xlu0 %892
        %v894 = vadd.f32 %v842, %v844
        %895 = vadd.xlane.f32.xlu0 %v894
        %v896 = vpop.xlane.xlu0 %895
        %v897 = vadd.f32 %v846, %v848
        %898 = vadd.xlane.f32.xlu0 %v897
        %v899 = vpop.xlane.xlu0 %898
        %v900 = vadd.f32 %v850, %v852
        %901 = vadd.xlane.f32.xlu0 %v900
        %v902 = vpop.xlane.xlu0 %901
        %v903 = vadd.f32 %v854, %v856
        %904 = vadd.xlane.f32.xlu0 %v903
        %v905 = vpop.xlane.xlu0 %904
        %v906 = vadd.f32 %v858, %v860
        %907 = vadd.xlane.f32.xlu0 %v906
        %v908 = vpop.xlane.xlu0 %907
        %v909 = vrcp.pop %v863
        %v910 = vrcp.pop %v866
        %v911 = vrcp.pop %v869
        %v912 = vrcp.pop %v872
        %v913 = vrcp.pop %v875
        %v914 = vrcp.pop %v878
        %v915 = vrcp.pop %v881
        %v916 = vrcp.pop %v884
        %v917 = vrcp.pop %v887
        %v918 = vrcp.pop %v890
        %v919 = vrcp.pop %v893
        %v920 = vrcp.pop %v896
        %v921 = vrcp.pop %v899
        %v922 = vrcp.pop %v902
        %v923 = vrcp.pop %v905
        %v924 = vrcp.pop %v908
        %s925 = smul.u32 %s19, 128
        %v926 = vlaneseq
        %v927 = vshrl.u32 %v926, 7
        %v928 = vadd.s32 %v927, 8
        %v929 = vadd.s32 %v927, 16
        %v930 = vadd.s32 %v927, 24
        %v931 = vadd.s32 %v927, 32
        %v932 = vadd.s32 %v927, 40
        %v933 = vadd.s32 %v927, 48
        %v934 = vadd.s32 %v927, 56
        %v935 = vadd.s32 %v927, 64
        %v936 = vadd.s32 %v927, 72
        %v937 = vadd.s32 %v927, 80
        %v938 = vadd.s32 %v927, 88
        %v939 = vadd.s32 %v927, 96
        %v940 = vadd.s32 %v927, 104
        %v941 = vadd.s32 %v927, 112
        %v942 = vadd.s32 %v927, 120
        %v943 = vstv %s925
        %v944 = vadd.s32 %v943, %v927
        %v945 = vadd.s32 %v943, %v928
        %v946 = vadd.s32 %v943, %v929
        %v947 = vadd.s32 %v943, %v930
        %v948 = vadd.s32 %v943, %v931
        %v949 = vadd.s32 %v943, %v932
        %v950 = vadd.s32 %v943, %v933
        %v951 = vadd.s32 %v943, %v934
        %v952 = vadd.s32 %v943, %v935
        %v953 = vadd.s32 %v943, %v936
        %v954 = vadd.s32 %v943, %v937
        %v955 = vadd.s32 %v943, %v938
        %v956 = vadd.s32 %v943, %v939
        %v957 = vadd.s32 %v943, %v940
        %v958 = vadd.s32 %v943, %v941
        %v959 = vadd.s32 %v943, %v942
        %vm960 = vcmp.lt.s32.totalorder %v944, 256
        %vm961 = vcmp.lt.s32.totalorder %v945, 256
        %vm962 = vcmp.lt.s32.totalorder %v946, 256
        %vm963 = vcmp.lt.s32.totalorder %v947, 256
        %vm964 = vcmp.lt.s32.totalorder %v948, 256
        %vm965 = vcmp.lt.s32.totalorder %v949, 256
        %vm966 = vcmp.lt.s32.totalorder %v950, 256
        %vm967 = vcmp.lt.s32.totalorder %v951, 256
        %vm968 = vcmp.lt.s32.totalorder %v952, 256
        %vm969 = vcmp.lt.s32.totalorder %v953, 256
        %vm970 = vcmp.lt.s32.totalorder %v954, 256
        %vm971 = vcmp.lt.s32.totalorder %v955, 256
        %vm972 = vcmp.lt.s32.totalorder %v956, 256
        %vm973 = vcmp.lt.s32.totalorder %v957, 256
        %vm974 = vcmp.lt.s32.totalorder %v958, 256
        %vm975 = vcmp.lt.s32.totalorder %v959, 256
        %v976 = vsel %vm960, %v909, 0.0
        %v977 = vsel %vm961, %v910, 0.0
        %v978 = vsel %vm962, %v911, 0.0
        %v979 = vsel %vm963, %v912, 0.0
        %v980 = vsel %vm964, %v913, 0.0
        %v981 = vsel %vm965, %v914, 0.0
        %v982 = vsel %vm966, %v915, 0.0
        %v983 = vsel %vm967, %v916, 0.0
        %v984 = vsel %vm968, %v917, 0.0
        %v985 = vsel %vm969, %v918, 0.0
        %v986 = vsel %vm970, %v919, 0.0
        %v987 = vsel %vm971, %v920, 0.0
        %v988 = vsel %vm972, %v921, 0.0
        %v989 = vsel %vm973, %v922, 0.0
        %v990 = vsel %vm974, %v923, 0.0
        %v991 = vsel %vm975, %v924, 0.0
        %vm992 = vcmask 7168
        %v993 = vsel %vm992, %v976, 0.0
        %v994 = vsel %vm992, %v977, 0.0
        %v995 = vadd.f32 %v993, %v994
        %v996 = vsel %vm992, %v978, 0.0
        %v997 = vadd.f32 %v995, %v996
        %v998 = vsel %vm992, %v979, 0.0
        %v999 = vadd.f32 %v997, %v998
        %v1000 = vsel %vm992, %v980, 0.0
        %v1001 = vadd.f32 %v999, %v1000
        %v1002 = vsel %vm992, %v981, 0.0
        %v1003 = vadd.f32 %v1001, %v1002
        %v1004 = vsel %vm992, %v982, 0.0
        %v1005 = vadd.f32 %v1003, %v1004
        %v1006 = vsel %vm992, %v983, 0.0
        %v1007 = vadd.f32 %v1005, %v1006
        %v1008 = vsel %vm992, %v984, 0.0
        %v1009 = vadd.f32 %v1007, %v1008
        %v1010 = vsel %vm992, %v985, 0.0
        %v1011 = vadd.f32 %v1009, %v1010
        %v1012 = vsel %vm992, %v986, 0.0
        %v1013 = vadd.f32 %v1011, %v1012
        %v1014 = vsel %vm992, %v987, 0.0
        %v1015 = vadd.f32 %v1013, %v1014
        %v1016 = vsel %vm992, %v988, 0.0
        %v1017 = vadd.f32 %v1015, %v1016
        %v1018 = vsel %vm992, %v989, 0.0
        %v1019 = vadd.f32 %v1017, %v1018
        %v1020 = vsel %vm992, %v990, 0.0
        %v1021 = vadd.f32 %v1019, %v1020
        %v1022 = vsel %vm992, %v991, 0.0
        %v1023 = vadd.f32 %v1021, %v1022
        %1024 = vadd.xlane.f32.xlu0 %v1023
        %v1025 = vpop.xlane.xlu0 %1024
        %v1026 = vrot.slane %v1025, 4
        %v1027 = vadd.f32 %v1025, %v1026
        %v1028 = vrot.slane %v1027, 2
        %v1029 = vadd.f32 %v1027, %v1028
        %v1030 = vrot.slane %v1029, 1
        %v1031 = vadd.f32 %v1029, %v1030
        %s1032 = vtos %v1031
        %v1033 = vstv %s1032
        %vm1034 = vcmask 0
        %1035 = vst.msk [vmem:[%s229] sm:$0x1] %vm1034, %v1033
      $region36: #{cobi_rgb_loss.10} parent=27 // pred_fallthru
        _
      %p1036 = scmp.lt.s32.totalorder %s18, 1
      %s1037 = scalar_select %p1036, %s18, 1
      %p1038 = scmp.lt.s32.totalorder %s19, 1
      %s1039 = scalar_select %p1038, %s19, 1
      %s1040 = smul.addr %s1037, 2
      %s1041 = sadd.s32 %s1039, %s1040
      %s1042 = scalar_lea.vmem %s2, %s1041
      // Predicated region
      $region37: #{cobi_rgb_loss.10} parent=27 // pred_check
        %p1043 = pneg %p110
      $region38: #{cobi_rgb_loss.10} parent=27 // pred_check_branch
        %1045 = sbr.rel (%p1043) target = $region40
      $region39: #{cobi_rgb_loss.10} parent=27 // pred_region
        _
      $region40: #{cobi_rgb_loss.10} parent=27 // pred_fallthru
        _
    $region28: #{cobi_rgb_loss.10} parent=5 // pred_fallthru
      _
    %p1046 = scmp.le.s32.totalorder 2, %s8
    // Predicated region
    $region41: #{cobi_rgb_loss.10} parent=5 // pred_check
      %p1047 = pneg %p1046
    $region42: #{cobi_rgb_loss.10} parent=5 // pred_check_branch
      %1049 = sbr.rel (%p1047) target = $region44
    $region43: #{cobi_rgb_loss.10} parent=5 // pred_region
      %s1050 = ssub.s32 %s8, 2
      // Predicated region
      $region45: #{cobi_rgb_loss.10} parent=43 // pred_check
        %p1051 = pneg %p116
      $region46: #{cobi_rgb_loss.10} parent=43 // pred_check_branch
        %1053 = sbr.rel (%p1051) target = $region48
      $region47: #{cobi_rgb_loss.10} parent=43 // pred_region
        %p1054 = scmp.lt.s32.totalorder %s21, 1
        %s1055 = scalar_select %p1054, %s21, 1
        %p1056 = scmp.lt.s32.totalorder %s22, 1
        %s1057 = scalar_select %p1056, %s22, 1
        %s1058 = smul.addr %s1055, 2
        %s1059 = sadd.s32 %s1057, %s1058
        %s1060 = scalar_lea.vmem %s2, %s1059
      $region48: #{cobi_rgb_loss.10} parent=43 // pred_fallthru
        _
    $region44: #{cobi_rgb_loss.10} parent=5 // pred_fallthru
      _
  $region6: #{cobi_rgb_loss.10} parent=0 // loop_footer
    %s12 = sadd.s32 1, %s8
  $region7: #{cobi_rgb_loss.10} parent=0 // loop_footer_branch
    %7 = sbr.rel target = $region3
  $region8: #{cobi_rgb_loss.10} parent=0 // loop_exit
    _

</llo_original>
